<compile_context>
chip_gen: v7x
topology: tpu7x:2x2x1
jax: 0.10.0
libtpu: 0.0.40
codegen_flags: <defaults>
</compile_context>

<pallas_src>
import jax
import jax.numpy as jnp
from jax.experimental import pallas as pl
from jax.experimental.pallas import tpu as pltpu


def mac_forward(x, w1, b1, w2, b2, w3, b3):
    """MACModule forward. x: (B,C,H,W); w*: (C,C,3,3) OIHW; b*: (C,)."""
    B, C, H, W = x.shape
    C_out = w1.shape[0]
    Wp = W + 6                # width  padding: 3 + 3
    Hp = H + 7                # height padding: 3 top, 4 bottom (extra zero row
                              # keeps every tap's flat slice in-bounds)
    L = Hp * Wp               # flattened padded spatial length
    n = H * Wp                # per-tap slice length == accumulator lane width

    # Pad once, flatten spatial dims (row-major reshape is free at XLA level).
    xp = jnp.pad(x, ((0, 0), (0, 0), (3, 4), (3, 3)))
    xf = xp.reshape(B, C, L)

    # Per-tap channel-mixing matrices, tap order t = d_idx*9 + ky*3 + kx.
    w_taps = jnp.concatenate(
        [jnp.transpose(w, (2, 3, 0, 1)).reshape(9, C_out, C)
         for w in (w1, w2, w3)], axis=0)                       # (27, C_out, C)
    b_sum = (b1 + b2 + b3).reshape(C_out, 1).astype(jnp.float32)

    # Flat start offset of each tap's shifted window in the padded row.
    starts = []
    for d in (1, 2, 3):
        for ky in range(3):
            for kx in range(3):
                starts.append((3 + d * (ky - 1)) * Wp + (3 + d * (kx - 1)))
    starts = tuple(starts)

    def kernel(x_ref, w_ref, b_ref, o_ref, acc_ref):
        # x_ref : (1, C, L)      flattened padded input, current batch element
        # w_ref : (27, C_out, C) per-tap channel-mixing weights
        # b_ref : (C_out, 1)     summed conv biases
        # o_ref : (1, C_out, H, W)
        # acc_ref: VMEM (C_out, H*Wp) f32 accumulator
        acc_ref[...] = jnp.broadcast_to(b_ref[...], acc_ref.shape)
        for t, s in enumerate(starts):          # 27 static taps, MXU matmuls
            acc_ref[...] += jnp.dot(
                w_ref[t],                        # (C_out, C_in)
                x_ref[0, :, pl.ds(s, n)],        # (C_in, H*Wp) contiguous lanes
                preferred_element_type=jnp.float32)
        # Store the W valid columns of each output row (junk columns between
        # rows of the padded-width accumulator are simply never stored).
        for y in range(H):
            o_ref[0, :, y, :] = acc_ref[:, pl.ds(y * Wp, W)].astype(o_ref.dtype)

    # Scheduler hints: this kernel is 27 small-K matmuls per batch element.
    flops = 2 * B * len(starts) * C_out * C * n
    bytes_accessed = 4 * (B * C * L + B * C_out * H * W + 27 * C_out * C + C_out)
    cost = pl.CostEstimate(flops=flops, transcendentals=0,
                           bytes_accessed=bytes_accessed)

    # VMEM budget: double-buffered in/out blocks + weights + accumulator with
    # margin; floor 16 MiB (<= scoped default on all gens), cap 48 MiB so the
    # blocks still fit v7x's 64 MiB physical VMEM.
    itemsize = 4
    need = (2 * (C * L + C_out * H * W) + 2 * (27 * C_out * C + C_out)
            + C_out * n) * itemsize
    vmem_limit = int(min(max(4 * need, 16 * 1024 * 1024), 48 * 1024 * 1024))

    out = pl.pallas_call(
        kernel,
        out_shape=jax.ShapeDtypeStruct((B, C_out, H, W), x.dtype),
        grid_spec=pltpu.PrefetchScalarGridSpec(
            num_scalar_prefetch=0,
            grid=(B,),
            in_specs=[
                pl.BlockSpec((1, C, L), lambda b: (b, 0, 0)),
                pl.BlockSpec((27, C_out, C), lambda b: (0, 0, 0)),
                pl.BlockSpec((C_out, 1), lambda b: (0, 0)),
            ],
            out_specs=pl.BlockSpec((1, C_out, H, W), lambda b: (b, 0, 0, 0)),
            scratch_shapes=[pltpu.VMEM((C_out, n), jnp.float32)],
        ),
        compiler_params=pltpu.CompilerParams(
            dimension_semantics=("parallel",),
            vmem_limit_bytes=vmem_limit),
        cost_estimate=cost,
    )(xf, w_taps, b_sum)
    return out


def mac_ref(x, w1, b1, w2, b2, w3, b3):
    """Pure-JAX reference matching the PyTorch MACModule forward."""
    def conv(w, b, d):
        y = jax.lax.conv_general_dilated(
            x, w, window_strides=(1, 1), padding=((d, d), (d, d)),
            rhs_dilation=(d, d),
            dimension_numbers=("NCHW", "OIHW", "NCHW"),
            precision=jax.lax.Precision.HIGHEST)
        return y + b[None, :, None, None]
    return conv(w1, b1, 1) + conv(w2, b2, 2) + conv(w3, b3, 3)


if __name__ == "__main__":
    B, C, H, W = 2, 8, 16, 16

    key = jax.random.PRNGKey(0)
    kx, k1, k2, k3, kb1, kb2, kb3 = jax.random.split(key, 7)

    x = jax.random.normal(kx, (B, C, H, W), dtype=jnp.float32)
    wscale = 1.0 / (3.0 * float(C) ** 0.5)
    w1 = jax.random.normal(k1, (C, C, 3, 3), dtype=jnp.float32) * wscale
    w2 = jax.random.normal(k2, (C, C, 3, 3), dtype=jnp.float32) * wscale
    w3 = jax.random.normal(k3, (C, C, 3, 3), dtype=jnp.float32) * wscale
    b1 = jax.random.normal(kb1, (C,), dtype=jnp.float32) * 0.1
    b2 = jax.random.normal(kb2, (C,), dtype=jnp.float32) * 0.1
    b3 = jax.random.normal(kb3, (C,), dtype=jnp.float32) * 0.1

    out = mac_forward(x, w1, b1, w2, b2, w3, b3)
    out = jax.block_until_ready(out)

    ref = mac_ref(x, w1, b1, w2, b2, w3, b3)
    assert out.shape == (B, C, H, W)
    max_diff = float(jnp.max(jnp.abs(out - ref)))
    assert jnp.allclose(out, ref, atol=5e-3, rtol=5e-3), (
        f"mismatch vs reference, max |diff| = {max_diff}")

    print("KERNEL_OK")
</pallas_src>

<mosaic_0001>
module attributes {stable_mosaic.version = 11 : i64} {
  func.func @kernel(%arg0: i32, %arg1: memref<1x8x506xf32, #tpu.memory_space<vmem>>, %arg2: memref<27x8x8xf32, #tpu.memory_space<vmem>>, %arg3: memref<8x1xf32, #tpu.memory_space<vmem>>, %arg4: memref<1x8x16x16xf32, #tpu.memory_space<vmem>>, %arg5: memref<8x352xf32, #tpu.memory_space<vmem>>) attributes {dimension_semantics = [#tpu.dimension_semantics<parallel>], iteration_bounds = array<i64: 2>, scalar_prefetch = 0 : i64, scratch_operands = 1 : i64, tpu.core_type = #tpu.core_type<tc>, window_params = [{transform_indices = @transform_0, window_bounds = array<i64: 1, 8, 506>}, {pipeline_mode = #tpu.pipeline_mode<synchronous>, transform_indices = @transform_1, window_bounds = array<i64: 27, 8, 8>}, {pipeline_mode = #tpu.pipeline_mode<synchronous>, transform_indices = @transform_2, window_bounds = array<i64: 8, 1>}, {transform_indices = @transform_3, window_bounds = array<i64: 1, 8, 16, 16>}]} {
    %c0 = arith.constant 0 : index
    %c0_0 = arith.constant 0 : index
    %0 = vector.load %arg3[%c0, %c0_0] : memref<8x1xf32, #tpu.memory_space<vmem>>, vector<8x1xf32>
    %1 = vector.shape_cast %0 : vector<8x1xf32> to vector<8x1xf32>
    %2 = vector.broadcast %1 : vector<8x1xf32> to vector<8x352xf32>
    %c0_1 = arith.constant 0 : index
    %c0_2 = arith.constant 0 : index
    %3 = vector.load %arg5[%c0_1, %c0_2] : memref<8x352xf32, #tpu.memory_space<vmem>>, vector<8x352xf32>
    tpu.vector_store %arg5[%c0_1, %c0_2], %2 {strides = array<i32>} : memref<8x352xf32, #tpu.memory_space<vmem>>, vector<8x352xf32>,
    %c0_3 = arith.constant 0 : index
    %c0_4 = arith.constant 0 : index
    %4 = vector.load %arg5[%c0_3, %c0_4] : memref<8x352xf32, #tpu.memory_space<vmem>>, vector<8x352xf32>
    %c0_5 = arith.constant 0 : index
    %c0_6 = arith.constant 0 : index
    %c0_7 = arith.constant 0 : index
    %5 = vector.load %arg2[%c0_5, %c0_6, %c0_7] : memref<27x8x8xf32, #tpu.memory_space<vmem>>, vector<1x8x8xf32>
    %6 = vector.shape_cast %5 : vector<1x8x8xf32> to vector<8x8xf32>
    %c0_8 = arith.constant 0 : index
    %c0_9 = arith.constant 0 : index
    %c46 = arith.constant 46 : index
    %7 = vector.load %arg1[%c0_8, %c0_9, %c46] : memref<1x8x506xf32, #tpu.memory_space<vmem>>, vector<1x8x352xf32>
    %8 = vector.shape_cast %7 : vector<1x8x352xf32> to vector<8x352xf32>
    %cst = arith.constant dense<0.000000e+00> : vector<8x352xf32>
    %9 = tpu.matmul %6, %8, %cst {dimension_numbers = #tpu.dot_dimension_numbers<[1], [0], [0], [1], [0, 0, 1, 1], [], []>} : vector<8x8xf32>, vector<8x352xf32>, vector<8x352xf32> -> vector<8x352xf32>
    %10 = arith.addf %4, %9 : vector<8x352xf32>
    %c0_10 = arith.constant 0 : index
    %c0_11 = arith.constant 0 : index
    %11 = vector.load %arg5[%c0_10, %c0_11] : memref<8x352xf32, #tpu.memory_space<vmem>>, vector<8x352xf32>
    tpu.vector_store %arg5[%c0_10, %c0_11], %10 {strides = array<i32>} : memref<8x352xf32, #tpu.memory_space<vmem>>, vector<8x352xf32>,
    %c0_12 = arith.constant 0 : index
    %c0_13 = arith.constant 0 : index
    %12 = vector.load %arg5[%c0_12, %c0_13] : memref<8x352xf32, #tpu.memory_space<vmem>>, vector<8x352xf32>
    %c1 = arith.constant 1 : index
    %c0_14 = arith.constant 0 : index
    %c0_15 = arith.constant 0 : index
    %13 = vector.load %arg2[%c1, %c0_14, %c0_15] : memref<27x8x8xf32, #tpu.memory_space<vmem>>, vector<1x8x8xf32>
    %14 = vector.shape_cast %13 : vector<1x8x8xf32> to vector<8x8xf32>
    %c0_16 = arith.constant 0 : index
    %c0_17 = arith.constant 0 : index
    %c47 = arith.constant 47 : index
    %15 = vector.load %arg1[%c0_16, %c0_17, %c47] : memref<1x8x506xf32, #tpu.memory_space<vmem>>, vector<1x8x352xf32>
    %16 = vector.shape_cast %15 : vector<1x8x352xf32> to vector<8x352xf32>
    %cst_18 = arith.constant dense<0.000000e+00> : vector<8x352xf32>
    %17 = tpu.matmul %14, %16, %cst_18 {dimension_numbers = #tpu.dot_dimension_numbers<[1], [0], [0], [1], [0, 0, 1, 1], [], []>} : vector<8x8xf32>, vector<8x352xf32>, vector<8x352xf32> -> vector<8x352xf32>
    %18 = arith.addf %12, %17 : vector<8x352xf32>
    %c0_19 = arith.constant 0 : index
    %c0_20 = arith.constant 0 : index
    %19 = vector.load %arg5[%c0_19, %c0_20] : memref<8x352xf32, #tpu.memory_space<vmem>>, vector<8x352xf32>
    tpu.vector_store %arg5[%c0_19, %c0_20], %18 {strides = array<i32>} : memref<8x352xf32, #tpu.memory_space<vmem>>, vector<8x352xf32>,
    %c0_21 = arith.constant 0 : index
    %c0_22 = arith.constant 0 : index
    %20 = vector.load %arg5[%c0_21, %c0_22] : memref<8x352xf32, #tpu.memory_space<vmem>>, vector<8x352xf32>
    %c2 = arith.constant 2 : index
    %c0_23 = arith.constant 0 : index
    %c0_24 = arith.constant 0 : index
    %21 = vector.load %arg2[%c2, %c0_23, %c0_24] : memref<27x8x8xf32, #tpu.memory_space<vmem>>, vector<1x8x8xf32>
    %22 = vector.shape_cast %21 : vector<1x8x8xf32> to vector<8x8xf32>
    %c0_25 = arith.constant 0 : index
    %c0_26 = arith.constant 0 : index
    %c48 = arith.constant 48 : index
    %23 = vector.load %arg1[%c0_25, %c0_26, %c48] : memref<1x8x506xf32, #tpu.memory_space<vmem>>, vector<1x8x352xf32>
    %24 = vector.shape_cast %23 : vector<1x8x352xf32> to vector<8x352xf32>
    %cst_27 = arith.constant dense<0.000000e+00> : vector<8x352xf32>
    %25 = tpu.matmul %22, %24, %cst_27 {dimension_numbers = #tpu.dot_dimension_numbers<[1], [0], [0], [1], [0, 0, 1, 1], [], []>} : vector<8x8xf32>, vector<8x352xf32>, vector<8x352xf32> -> vector<8x352xf32>
    %26 = arith.addf %20, %25 : vector<8x352xf32>
    %c0_28 = arith.constant 0 : index
    %c0_29 = arith.constant 0 : index
    %27 = vector.load %arg5[%c0_28, %c0_29] : memref<8x352xf32, #tpu.memory_space<vmem>>, vector<8x352xf32>
    tpu.vector_store %arg5[%c0_28, %c0_29], %26 {strides = array<i32>} : memref<8x352xf32, #tpu.memory_space<vmem>>, vector<8x352xf32>,
    %c0_30 = arith.constant 0 : index
    %c0_31 = arith.constant 0 : index
    %28 = vector.load %arg5[%c0_30, %c0_31] : memref<8x352xf32, #tpu.memory_space<vmem>>, vector<8x352xf32>
    %c3 = arith.constant 3 : index
    %c0_32 = arith.constant 0 : index
    %c0_33 = arith.constant 0 : index
    %29 = vector.load %arg2[%c3, %c0_32, %c0_33] : memref<27x8x8xf32, #tpu.memory_space<vmem>>, vector<1x8x8xf32>
    %30 = vector.shape_cast %29 : vector<1x8x8xf32> to vector<8x8xf32>
    %c0_34 = arith.constant 0 : index
    %c0_35 = arith.constant 0 : index
    %c68 = arith.constant 68 : index
    %31 = vector.load %arg1[%c0_34, %c0_35, %c68] : memref<1x8x506xf32, #tpu.memory_space<vmem>>, vector<1x8x352xf32>
    %32 = vector.shape_cast %31 : vector<1x8x352xf32> to vector<8x352xf32>
    %cst_36 = arith.constant dense<0.000000e+00> : vector<8x352xf32>
    %33 = tpu.matmul %30, %32, %cst_36 {dimension_numbers = #tpu.dot_dimension_numbers<[1], [0], [0], [1], [0, 0, 1, 1], [], []>} : vector<8x8xf32>, vector<8x352xf32>, vector<8x352xf32> -> vector<8x352xf32>
    %34 = arith.addf %28, %33 : vector<8x352xf32>
    %c0_37 = arith.constant 0 : index
    %c0_38 = arith.constant 0 : index
    %35 = vector.load %arg5[%c0_37, %c0_38] : memref<8x352xf32, #tpu.memory_space<vmem>>, vector<8x352xf32>
    tpu.vector_store %arg5[%c0_37, %c0_38], %34 {strides = array<i32>} : memref<8x352xf32, #tpu.memory_space<vmem>>, vector<8x352xf32>,
    %c0_39 = arith.constant 0 : index
    %c0_40 = arith.constant 0 : index
    %36 = vector.load %arg5[%c0_39, %c0_40] : memref<8x352xf32, #tpu.memory_space<vmem>>, vector<8x352xf32>
    %c4 = arith.constant 4 : index
    %c0_41 = arith.constant 0 : index
    %c0_42 = arith.constant 0 : index
    %37 = vector.load %arg2[%c4, %c0_41, %c0_42] : memref<27x8x8xf32, #tpu.memory_space<vmem>>, vector<1x8x8xf32>
    %38 = vector.shape_cast %37 : vector<1x8x8xf32> to vector<8x8xf32>
    %c0_43 = arith.constant 0 : index
    %c0_44 = arith.constant 0 : index
    %c69 = arith.constant 69 : index
    %39 = vector.load %arg1[%c0_43, %c0_44, %c69] : memref<1x8x506xf32, #tpu.memory_space<vmem>>, vector<1x8x352xf32>
    %40 = vector.shape_cast %39 : vector<1x8x352xf32> to vector<8x352xf32>
    %cst_45 = arith.constant dense<0.000000e+00> : vector<8x352xf32>
    %41 = tpu.matmul %38, %40, %cst_45 {dimension_numbers = #tpu.dot_dimension_numbers<[1], [0], [0], [1], [0, 0, 1, 1], [], []>} : vector<8x8xf32>, vector<8x352xf32>, vector<8x352xf32> -> vector<8x352xf32>
    %42 = arith.addf %36, %41 : vector<8x352xf32>
    %c0_46 = arith.constant 0 : index
    %c0_47 = arith.constant 0 : index
    %43 = vector.load %arg5[%c0_46, %c0_47] : memref<8x352xf32, #tpu.memory_space<vmem>>, vector<8x352xf32>
    tpu.vector_store %arg5[%c0_46, %c0_47], %42 {strides = array<i32>} : memref<8x352xf32, #tpu.memory_space<vmem>>, vector<8x352xf32>,
    %c0_48 = arith.constant 0 : index
    %c0_49 = arith.constant 0 : index
    %44 = vector.load %arg5[%c0_48, %c0_49] : memref<8x352xf32, #tpu.memory_space<vmem>>, vector<8x352xf32>
    %c5 = arith.constant 5 : index
    %c0_50 = arith.constant 0 : index
    %c0_51 = arith.constant 0 : index
    %45 = vector.load %arg2[%c5, %c0_50, %c0_51] : memref<27x8x8xf32, #tpu.memory_space<vmem>>, vector<1x8x8xf32>
    %46 = vector.shape_cast %45 : vector<1x8x8xf32> to vector<8x8xf32>
    %c0_52 = arith.constant 0 : index
    %c0_53 = arith.constant 0 : index
    %c70 = arith.constant 70 : index
    %47 = vector.load %arg1[%c0_52, %c0_53, %c70] : memref<1x8x506xf32, #tpu.memory_space<vmem>>, vector<1x8x352xf32>
    %48 = vector.shape_cast %47 : vector<1x8x352xf32> to vector<8x352xf32>
    %cst_54 = arith.constant dense<0.000000e+00> : vector<8x352xf32>
    %49 = tpu.matmul %46, %48, %cst_54 {dimension_numbers = #tpu.dot_dimension_numbers<[1], [0], [0], [1], [0, 0, 1, 1], [], []>} : vector<8x8xf32>, vector<8x352xf32>, vector<8x352xf32> -> vector<8x352xf32>
    %50 = arith.addf %44, %49 : vector<8x352xf32>
    %c0_55 = arith.constant 0 : index
    %c0_56 = arith.constant 0 : index
    %51 = vector.load %arg5[%c0_55, %c0_56] : memref<8x352xf32, #tpu.memory_space<vmem>>, vector<8x352xf32>
    tpu.vector_store %arg5[%c0_55, %c0_56], %50 {strides = array<i32>} : memref<8x352xf32, #tpu.memory_space<vmem>>, vector<8x352xf32>,
    %c0_57 = arith.constant 0 : index
    %c0_58 = arith.constant 0 : index
    %52 = vector.load %arg5[%c0_57, %c0_58] : memref<8x352xf32, #tpu.memory_space<vmem>>, vector<8x352xf32>
    %c6 = arith.constant 6 : index
    %c0_59 = arith.constant 0 : index
    %c0_60 = arith.constant 0 : index
    %53 = vector.load %arg2[%c6, %c0_59, %c0_60] : memref<27x8x8xf32, #tpu.memory_space<vmem>>, vector<1x8x8xf32>
    %54 = vector.shape_cast %53 : vector<1x8x8xf32> to vector<8x8xf32>
    %c0_61 = arith.constant 0 : index
    %c0_62 = arith.constant 0 : index
    %c90 = arith.constant 90 : index
    %55 = vector.load %arg1[%c0_61, %c0_62, %c90] : memref<1x8x506xf32, #tpu.memory_space<vmem>>, vector<1x8x352xf32>
    %56 = vector.shape_cast %55 : vector<1x8x352xf32> to vector<8x352xf32>
    %cst_63 = arith.constant dense<0.000000e+00> : vector<8x352xf32>
    %57 = tpu.matmul %54, %56, %cst_63 {dimension_numbers = #tpu.dot_dimension_numbers<[1], [0], [0], [1], [0, 0, 1, 1], [], []>} : vector<8x8xf32>, vector<8x352xf32>, vector<8x352xf32> -> vector<8x352xf32>
    %58 = arith.addf %52, %57 : vector<8x352xf32>
    %c0_64 = arith.constant 0 : index
    %c0_65 = arith.constant 0 : index
    %59 = vector.load %arg5[%c0_64, %c0_65] : memref<8x352xf32, #tpu.memory_space<vmem>>, vector<8x352xf32>
    tpu.vector_store %arg5[%c0_64, %c0_65], %58 {strides = array<i32>} : memref<8x352xf32, #tpu.memory_space<vmem>>, vector<8x352xf32>,
    %c0_66 = arith.constant 0 : index
    %c0_67 = arith.constant 0 : index
    %60 = vector.load %arg5[%c0_66, %c0_67] : memref<8x352xf32, #tpu.memory_space<vmem>>, vector<8x352xf32>
    %c7 = arith.constant 7 : index
    %c0_68 = arith.constant 0 : index
    %c0_69 = arith.constant 0 : index
    %61 = vector.load %arg2[%c7, %c0_68, %c0_69] : memref<27x8x8xf32, #tpu.memory_space<vmem>>, vector<1x8x8xf32>
    %62 = vector.shape_cast %61 : vector<1x8x8xf32> to vector<8x8xf32>
    %c0_70 = arith.constant 0 : index
    %c0_71 = arith.constant 0 : index
    %c91 = arith.constant 91 : index
    %63 = vector.load %arg1[%c0_70, %c0_71, %c91] : memref<1x8x506xf32, #tpu.memory_space<vmem>>, vector<1x8x352xf32>
    %64 = vector.shape_cast %63 : vector<1x8x352xf32> to vector<8x352xf32>
    %cst_72 = arith.constant dense<0.000000e+00> : vector<8x352xf32>
    %65 = tpu.matmul %62, %64, %cst_72 {dimension_numbers = #tpu.dot_dimension_numbers<[1], [0], [0], [1], [0, 0, 1, 1], [], []>} : vector<8x8xf32>, vector<8x352xf32>, vector<8x352xf32> -> vector<8x352xf32>
    %66 = arith.addf %60, %65 : vector<8x352xf32>
    %c0_73 = arith.constant 0 : index
    %c0_74 = arith.constant 0 : index
    %67 = vector.load %arg5[%c0_73, %c0_74] : memref<8x352xf32, #tpu.memory_space<vmem>>, vector<8x352xf32>
    tpu.vector_store %arg5[%c0_73, %c0_74], %66 {strides = array<i32>} : memref<8x352xf32, #tpu.memory_space<vmem>>, vector<8x352xf32>,
    %c0_75 = arith.constant 0 : index
    %c0_76 = arith.constant 0 : index
    %68 = vector.load %arg5[%c0_75, %c0_76] : memref<8x352xf32, #tpu.memory_space<vmem>>, vector<8x352xf32>
    %c8 = arith.constant 8 : index
    %c0_77 = arith.constant 0 : index
    %c0_78 = arith.constant 0 : index
    %69 = vector.load %arg2[%c8, %c0_77, %c0_78] : memref<27x8x8xf32, #tpu.memory_space<vmem>>, vector<1x8x8xf32>
    %70 = vector.shape_cast %69 : vector<1x8x8xf32> to vector<8x8xf32>
    %c0_79 = arith.constant 0 : index
    %c0_80 = arith.constant 0 : index
    %c92 = arith.constant 92 : index
    %71 = vector.load %arg1[%c0_79, %c0_80, %c92] : memref<1x8x506xf32, #tpu.memory_space<vmem>>, vector<1x8x352xf32>
    %72 = vector.shape_cast %71 : vector<1x8x352xf32> to vector<8x352xf32>
    %cst_81 = arith.constant dense<0.000000e+00> : vector<8x352xf32>
    %73 = tpu.matmul %70, %72, %cst_81 {dimension_numbers = #tpu.dot_dimension_numbers<[1], [0], [0], [1], [0, 0, 1, 1], [], []>} : vector<8x8xf32>, vector<8x352xf32>, vector<8x352xf32> -> vector<8x352xf32>
    %74 = arith.addf %68, %73 : vector<8x352xf32>
    %c0_82 = arith.constant 0 : index
    %c0_83 = arith.constant 0 : index
    %75 = vector.load %arg5[%c0_82, %c0_83] : memref<8x352xf32, #tpu.memory_space<vmem>>, vector<8x352xf32>
    tpu.vector_store %arg5[%c0_82, %c0_83], %74 {strides = array<i32>} : memref<8x352xf32, #tpu.memory_space<vmem>>, vector<8x352xf32>,
    %c0_84 = arith.constant 0 : index
    %c0_85 = arith.constant 0 : index
    %76 = vector.load %arg5[%c0_84, %c0_85] : memref<8x352xf32, #tpu.memory_space<vmem>>, vector<8x352xf32>
    %c9 = arith.constant 9 : index
    %c0_86 = arith.constant 0 : index
    %c0_87 = arith.constant 0 : index
    %77 = vector.load %arg2[%c9, %c0_86, %c0_87] : memref<27x8x8xf32, #tpu.memory_space<vmem>>, vector<1x8x8xf32>
    %78 = vector.shape_cast %77 : vector<1x8x8xf32> to vector<8x8xf32>
    %c0_88 = arith.constant 0 : index
    %c0_89 = arith.constant 0 : index
    %c23 = arith.constant 23 : index
    %79 = vector.load %arg1[%c0_88, %c0_89, %c23] : memref<1x8x506xf32, #tpu.memory_space<vmem>>, vector<1x8x352xf32>
    %80 = vector.shape_cast %79 : vector<1x8x352xf32> to vector<8x352xf32>
    %cst_90 = arith.constant dense<0.000000e+00> : vector<8x352xf32>
    %81 = tpu.matmul %78, %80, %cst_90 {dimension_numbers = #tpu.dot_dimension_numbers<[1], [0], [0], [1], [0, 0, 1, 1], [], []>} : vector<8x8xf32>, vector<8x352xf32>, vector<8x352xf32> -> vector<8x352xf32>
    %82 = arith.addf %76, %81 : vector<8x352xf32>
    %c0_91 = arith.constant 0 : index
    %c0_92 = arith.constant 0 : index
    %83 = vector.load %arg5[%c0_91, %c0_92] : memref<8x352xf32, #tpu.memory_space<vmem>>, vector<8x352xf32>
    tpu.vector_store %arg5[%c0_91, %c0_92], %82 {strides = array<i32>} : memref<8x352xf32, #tpu.memory_space<vmem>>, vector<8x352xf32>,
    %c0_93 = arith.constant 0 : index
    %c0_94 = arith.constant 0 : index
    %84 = vector.load %arg5[%c0_93, %c0_94] : memref<8x352xf32, #tpu.memory_space<vmem>>, vector<8x352xf32>
    %c10 = arith.constant 10 : index
    %c0_95 = arith.constant 0 : index
    %c0_96 = arith.constant 0 : index
    %85 = vector.load %arg2[%c10, %c0_95, %c0_96] : memref<27x8x8xf32, #tpu.memory_space<vmem>>, vector<1x8x8xf32>
    %86 = vector.shape_cast %85 : vector<1x8x8xf32> to vector<8x8xf32>
    %c0_97 = arith.constant 0 : index
    %c0_98 = arith.constant 0 : index
    %c25 = arith.constant 25 : index
    %87 = vector.load %arg1[%c0_97, %c0_98, %c25] : memref<1x8x506xf32, #tpu.memory_space<vmem>>, vector<1x8x352xf32>
    %88 = vector.shape_cast %87 : vector<1x8x352xf32> to vector<8x352xf32>
    %cst_99 = arith.constant dense<0.000000e+00> : vector<8x352xf32>
    %89 = tpu.matmul %86, %88, %cst_99 {dimension_numbers = #tpu.dot_dimension_numbers<[1], [0], [0], [1], [0, 0, 1, 1], [], []>} : vector<8x8xf32>, vector<8x352xf32>, vector<8x352xf32> -> vector<8x352xf32>
    %90 = arith.addf %84, %89 : vector<8x352xf32>
    %c0_100 = arith.constant 0 : index
    %c0_101 = arith.constant 0 : index
    %91 = vector.load %arg5[%c0_100, %c0_101] : memref<8x352xf32, #tpu.memory_space<vmem>>, vector<8x352xf32>
    tpu.vector_store %arg5[%c0_100, %c0_101], %90 {strides = array<i32>} : memref<8x352xf32, #tpu.memory_space<vmem>>, vector<8x352xf32>,
    %c0_102 = arith.constant 0 : index
    %c0_103 = arith.constant 0 : index
    %92 = vector.load %arg5[%c0_102, %c0_103] : memref<8x352xf32, #tpu.memory_space<vmem>>, vector<8x352xf32>
    %c11 = arith.constant 11 : index
    %c0_104 = arith.constant 0 : index
    %c0_105 = arith.constant 0 : index
    %93 = vector.load %arg2[%c11, %c0_104, %c0_105] : memref<27x8x8xf32, #tpu.memory_space<vmem>>, vector<1x8x8xf32>
    %94 = vector.shape_cast %93 : vector<1x8x8xf32> to vector<8x8xf32>
    %c0_106 = arith.constant 0 : index
    %c0_107 = arith.constant 0 : index
    %c27 = arith.constant 27 : index
    %95 = vector.load %arg1[%c0_106, %c0_107, %c27] : memref<1x8x506xf32, #tpu.memory_space<vmem>>, vector<1x8x352xf32>
    %96 = vector.shape_cast %95 : vector<1x8x352xf32> to vector<8x352xf32>
    %cst_108 = arith.constant dense<0.000000e+00> : vector<8x352xf32>
    %97 = tpu.matmul %94, %96, %cst_108 {dimension_numbers = #tpu.dot_dimension_numbers<[1], [0], [0], [1], [0, 0, 1, 1], [], []>} : vector<8x8xf32>, vector<8x352xf32>, vector<8x352xf32> -> vector<8x352xf32>
    %98 = arith.addf %92, %97 : vector<8x352xf32>
    %c0_109 = arith.constant 0 : index
    %c0_110 = arith.constant 0 : index
    %99 = vector.load %arg5[%c0_109, %c0_110] : memref<8x352xf32, #tpu.memory_space<vmem>>, vector<8x352xf32>
    tpu.vector_store %arg5[%c0_109, %c0_110], %98 {strides = array<i32>} : memref<8x352xf32, #tpu.memory_space<vmem>>, vector<8x352xf32>,
    %c0_111 = arith.constant 0 : index
    %c0_112 = arith.constant 0 : index
    %100 = vector.load %arg5[%c0_111, %c0_112] : memref<8x352xf32, #tpu.memory_space<vmem>>, vector<8x352xf32>
    %c12 = arith.constant 12 : index
    %c0_113 = arith.constant 0 : index
    %c0_114 = arith.constant 0 : index
    %101 = vector.load %arg2[%c12, %c0_113, %c0_114] : memref<27x8x8xf32, #tpu.memory_space<vmem>>, vector<1x8x8xf32>
    %102 = vector.shape_cast %101 : vector<1x8x8xf32> to vector<8x8xf32>
    %c0_115 = arith.constant 0 : index
    %c0_116 = arith.constant 0 : index
    %c67 = arith.constant 67 : index
    %103 = vector.load %arg1[%c0_115, %c0_116, %c67] : memref<1x8x506xf32, #tpu.memory_space<vmem>>, vector<1x8x352xf32>
    %104 = vector.shape_cast %103 : vector<1x8x352xf32> to vector<8x352xf32>
    %cst_117 = arith.constant dense<0.000000e+00> : vector<8x352xf32>
    %105 = tpu.matmul %102, %104, %cst_117 {dimension_numbers = #tpu.dot_dimension_numbers<[1], [0], [0], [1], [0, 0, 1, 1], [], []>} : vector<8x8xf32>, vector<8x352xf32>, vector<8x352xf32> -> vector<8x352xf32>
    %106 = arith.addf %100, %105 : vector<8x352xf32>
    %c0_118 = arith.constant 0 : index
    %c0_119 = arith.constant 0 : index
    %107 = vector.load %arg5[%c0_118, %c0_119] : memref<8x352xf32, #tpu.memory_space<vmem>>, vector<8x352xf32>
    tpu.vector_store %arg5[%c0_118, %c0_119], %106 {strides = array<i32>} : memref<8x352xf32, #tpu.memory_space<vmem>>, vector<8x352xf32>,
    %c0_120 = arith.constant 0 : index
    %c0_121 = arith.constant 0 : index
    %108 = vector.load %arg5[%c0_120, %c0_121] : memref<8x352xf32, #tpu.memory_space<vmem>>, vector<8x352xf32>
    %c13 = arith.constant 13 : index
    %c0_122 = arith.constant 0 : index
    %c0_123 = arith.constant 0 : index
    %109 = vector.load %arg2[%c13, %c0_122, %c0_123] : memref<27x8x8xf32, #tpu.memory_space<vmem>>, vector<1x8x8xf32>
    %110 = vector.shape_cast %109 : vector<1x8x8xf32> to vector<8x8xf32>
    %c0_124 = arith.constant 0 : index
    %c0_125 = arith.constant 0 : index
    %c69_126 = arith.constant 69 : index
    %111 = vector.load %arg1[%c0_124, %c0_125, %c69_126] : memref<1x8x506xf32, #tpu.memory_space<vmem>>, vector<1x8x352xf32>
    %112 = vector.shape_cast %111 : vector<1x8x352xf32> to vector<8x352xf32>
    %cst_127 = arith.constant dense<0.000000e+00> : vector<8x352xf32>
    %113 = tpu.matmul %110, %112, %cst_127 {dimension_numbers = #tpu.dot_dimension_numbers<[1], [0], [0], [1], [0, 0, 1, 1], [], []>} : vector<8x8xf32>, vector<8x352xf32>, vector<8x352xf32> -> vector<8x352xf32>
    %114 = arith.addf %108, %113 : vector<8x352xf32>
    %c0_128 = arith.constant 0 : index
    %c0_129 = arith.constant 0 : index
    %115 = vector.load %arg5[%c0_128, %c0_129] : memref<8x352xf32, #tpu.memory_space<vmem>>, vector<8x352xf32>
    tpu.vector_store %arg5[%c0_128, %c0_129], %114 {strides = array<i32>} : memref<8x352xf32, #tpu.memory_space<vmem>>, vector<8x352xf32>,
    %c0_130 = arith.constant 0 : index
    %c0_131 = arith.constant 0 : index
    %116 = vector.load %arg5[%c0_130, %c0_131] : memref<8x352xf32, #tpu.memory_space<vmem>>, vector<8x352xf32>
    %c14 = arith.constant 14 : index
    %c0_132 = arith.constant 0 : index
    %c0_133 = arith.constant 0 : index
    %117 = vector.load %arg2[%c14, %c0_132, %c0_133] : memref<27x8x8xf32, #tpu.memory_space<vmem>>, vector<1x8x8xf32>
    %118 = vector.shape_cast %117 : vector<1x8x8xf32> to vector<8x8xf32>
    %c0_134 = arith.constant 0 : index
    %c0_135 = arith.constant 0 : index
    %c71 = arith.constant 71 : index
    %119 = vector.load %arg1[%c0_134, %c0_135, %c71] : memref<1x8x506xf32, #tpu.memory_space<vmem>>, vector<1x8x352xf32>
    %120 = vector.shape_cast %119 : vector<1x8x352xf32> to vector<8x352xf32>
    %cst_136 = arith.constant dense<0.000000e+00> : vector<8x352xf32>
    %121 = tpu.matmul %118, %120, %cst_136 {dimension_numbers = #tpu.dot_dimension_numbers<[1], [0], [0], [1], [0, 0, 1, 1], [], []>} : vector<8x8xf32>, vector<8x352xf32>, vector<8x352xf32> -> vector<8x352xf32>
    %122 = arith.addf %116, %121 : vector<8x352xf32>
    %c0_137 = arith.constant 0 : index
    %c0_138 = arith.constant 0 : index
    %123 = vector.load %arg5[%c0_137, %c0_138] : memref<8x352xf32, #tpu.memory_space<vmem>>, vector<8x352xf32>
    tpu.vector_store %arg5[%c0_137, %c0_138], %122 {strides = array<i32>} : memref<8x352xf32, #tpu.memory_space<vmem>>, vector<8x352xf32>,
    %c0_139 = arith.constant 0 : index
    %c0_140 = arith.constant 0 : index
    %124 = vector.load %arg5[%c0_139, %c0_140] : memref<8x352xf32, #tpu.memory_space<vmem>>, vector<8x352xf32>
    %c15 = arith.constant 15 : index
    %c0_141 = arith.constant 0 : index
    %c0_142 = arith.constant 0 : index
    %125 = vector.load %arg2[%c15, %c0_141, %c0_142] : memref<27x8x8xf32, #tpu.memory_space<vmem>>, vector<1x8x8xf32>
    %126 = vector.shape_cast %125 : vector<1x8x8xf32> to vector<8x8xf32>
    %c0_143 = arith.constant 0 : index
    %c0_144 = arith.constant 0 : index
    %c111 = arith.constant 111 : index
    %127 = vector.load %arg1[%c0_143, %c0_144, %c111] : memref<1x8x506xf32, #tpu.memory_space<vmem>>, vector<1x8x352xf32>
    %128 = vector.shape_cast %127 : vector<1x8x352xf32> to vector<8x352xf32>
    %cst_145 = arith.constant dense<0.000000e+00> : vector<8x352xf32>
    %129 = tpu.matmul %126, %128, %cst_145 {dimension_numbers = #tpu.dot_dimension_numbers<[1], [0], [0], [1], [0, 0, 1, 1], [], []>} : vector<8x8xf32>, vector<8x352xf32>, vector<8x352xf32> -> vector<8x352xf32>
    %130 = arith.addf %124, %129 : vector<8x352xf32>
    %c0_146 = arith.constant 0 : index
    %c0_147 = arith.constant 0 : index
    %131 = vector.load %arg5[%c0_146, %c0_147] : memref<8x352xf32, #tpu.memory_space<vmem>>, vector<8x352xf32>
    tpu.vector_store %arg5[%c0_146, %c0_147], %130 {strides = array<i32>} : memref<8x352xf32, #tpu.memory_space<vmem>>, vector<8x352xf32>,
    %c0_148 = arith.constant 0 : index
    %c0_149 = arith.constant 0 : index
    %132 = vector.load %arg5[%c0_148, %c0_149] : memref<8x352xf32, #tpu.memory_space<vmem>>, vector<8x352xf32>
    %c16 = arith.constant 16 : index
    %c0_150 = arith.constant 0 : index
    %c0_151 = arith.constant 0 : index
    %133 = vector.load %arg2[%c16, %c0_150, %c0_151] : memref<27x8x8xf32, #tpu.memory_space<vmem>>, vector<1x8x8xf32>
    %134 = vector.shape_cast %133 : vector<1x8x8xf32> to vector<8x8xf32>
    %c0_152 = arith.constant 0 : index
    %c0_153 = arith.constant 0 : index
    %c113 = arith.constant 113 : index
    %135 = vector.load %arg1[%c0_152, %c0_153, %c113] : memref<1x8x506xf32, #tpu.memory_space<vmem>>, vector<1x8x352xf32>
    %136 = vector.shape_cast %135 : vector<1x8x352xf32> to vector<8x352xf32>
    %cst_154 = arith.constant dense<0.000000e+00> : vector<8x352xf32>
    %137 = tpu.matmul %134, %136, %cst_154 {dimension_numbers = #tpu.dot_dimension_numbers<[1], [0], [0], [1], [0, 0, 1, 1], [], []>} : vector<8x8xf32>, vector<8x352xf32>, vector<8x352xf32> -> vector<8x352xf32>
    %138 = arith.addf %132, %137 : vector<8x352xf32>
    %c0_155 = arith.constant 0 : index
    %c0_156 = arith.constant 0 : index
    %139 = vector.load %arg5[%c0_155, %c0_156] : memref<8x352xf32, #tpu.memory_space<vmem>>, vector<8x352xf32>
    tpu.vector_store %arg5[%c0_155, %c0_156], %138 {strides = array<i32>} : memref<8x352xf32, #tpu.memory_space<vmem>>, vector<8x352xf32>,
    %c0_157 = arith.constant 0 : index
    %c0_158 = arith.constant 0 : index
    %140 = vector.load %arg5[%c0_157, %c0_158] : memref<8x352xf32, #tpu.memory_space<vmem>>, vector<8x352xf32>
    %c17 = arith.constant 17 : index
    %c0_159 = arith.constant 0 : index
    %c0_160 = arith.constant 0 : index
    %141 = vector.load %arg2[%c17, %c0_159, %c0_160] : memref<27x8x8xf32, #tpu.memory_space<vmem>>, vector<1x8x8xf32>
    %142 = vector.shape_cast %141 : vector<1x8x8xf32> to vector<8x8xf32>
    %c0_161 = arith.constant 0 : index
    %c0_162 = arith.constant 0 : index
    %c115 = arith.constant 115 : index
    %143 = vector.load %arg1[%c0_161, %c0_162, %c115] : memref<1x8x506xf32, #tpu.memory_space<vmem>>, vector<1x8x352xf32>
    %144 = vector.shape_cast %143 : vector<1x8x352xf32> to vector<8x352xf32>
    %cst_163 = arith.constant dense<0.000000e+00> : vector<8x352xf32>
    %145 = tpu.matmul %142, %144, %cst_163 {dimension_numbers = #tpu.dot_dimension_numbers<[1], [0], [0], [1], [0, 0, 1, 1], [], []>} : vector<8x8xf32>, vector<8x352xf32>, vector<8x352xf32> -> vector<8x352xf32>
    %146 = arith.addf %140, %145 : vector<8x352xf32>
    %c0_164 = arith.constant 0 : index
    %c0_165 = arith.constant 0 : index
    %147 = vector.load %arg5[%c0_164, %c0_165] : memref<8x352xf32, #tpu.memory_space<vmem>>, vector<8x352xf32>
    tpu.vector_store %arg5[%c0_164, %c0_165], %146 {strides = array<i32>} : memref<8x352xf32, #tpu.memory_space<vmem>>, vector<8x352xf32>,
    %c0_166 = arith.constant 0 : index
    %c0_167 = arith.constant 0 : index
    %148 = vector.load %arg5[%c0_166, %c0_167] : memref<8x352xf32, #tpu.memory_space<vmem>>, vector<8x352xf32>
    %c18 = arith.constant 18 : index
    %c0_168 = arith.constant 0 : index
    %c0_169 = arith.constant 0 : index
    %149 = vector.load %arg2[%c18, %c0_168, %c0_169] : memref<27x8x8xf32, #tpu.memory_space<vmem>>, vector<1x8x8xf32>
    %150 = vector.shape_cast %149 : vector<1x8x8xf32> to vector<8x8xf32>
    %c0_170 = arith.constant 0 : index
    %c0_171 = arith.constant 0 : index
    %c0_172 = arith.constant 0 : index
    %151 = vector.load %arg1[%c0_170, %c0_171, %c0_172] : memref<1x8x506xf32, #tpu.memory_space<vmem>>, vector<1x8x352xf32>
    %152 = vector.shape_cast %151 : vector<1x8x352xf32> to vector<8x352xf32>
    %cst_173 = arith.constant dense<0.000000e+00> : vector<8x352xf32>
    %153 = tpu.matmul %150, %152, %cst_173 {dimension_numbers = #tpu.dot_dimension_numbers<[1], [0], [0], [1], [0, 0, 1, 1], [], []>} : vector<8x8xf32>, vector<8x352xf32>, vector<8x352xf32> -> vector<8x352xf32>
    %154 = arith.addf %148, %153 : vector<8x352xf32>
    %c0_174 = arith.constant 0 : index
    %c0_175 = arith.constant 0 : index
    %155 = vector.load %arg5[%c0_174, %c0_175] : memref<8x352xf32, #tpu.memory_space<vmem>>, vector<8x352xf32>
    tpu.vector_store %arg5[%c0_174, %c0_175], %154 {strides = array<i32>} : memref<8x352xf32, #tpu.memory_space<vmem>>, vector<8x352xf32>,
    %c0_176 = arith.constant 0 : index
    %c0_177 = arith.constant 0 : index
    %156 = vector.load %arg5[%c0_176, %c0_177] : memref<8x352xf32, #tpu.memory_space<vmem>>, vector<8x352xf32>
    %c19 = arith.constant 19 : index
    %c0_178 = arith.constant 0 : index
    %c0_179 = arith.constant 0 : index
    %157 = vector.load %arg2[%c19, %c0_178, %c0_179] : memref<27x8x8xf32, #tpu.memory_space<vmem>>, vector<1x8x8xf32>
    %158 = vector.shape_cast %157 : vector<1x8x8xf32> to vector<8x8xf32>
    %c0_180 = arith.constant 0 : index
    %c0_181 = arith.constant 0 : index
    %c3_182 = arith.constant 3 : index
    %159 = vector.load %arg1[%c0_180, %c0_181, %c3_182] : memref<1x8x506xf32, #tpu.memory_space<vmem>>, vector<1x8x352xf32>
    %160 = vector.shape_cast %159 : vector<1x8x352xf32> to vector<8x352xf32>
    %cst_183 = arith.constant dense<0.000000e+00> : vector<8x352xf32>
    %161 = tpu.matmul %158, %160, %cst_183 {dimension_numbers = #tpu.dot_dimension_numbers<[1], [0], [0], [1], [0, 0, 1, 1], [], []>} : vector<8x8xf32>, vector<8x352xf32>, vector<8x352xf32> -> vector<8x352xf32>
    %162 = arith.addf %156, %161 : vector<8x352xf32>
    %c0_184 = arith.constant 0 : index
    %c0_185 = arith.constant 0 : index
    %163 = vector.load %arg5[%c0_184, %c0_185] : memref<8x352xf32, #tpu.memory_space<vmem>>, vector<8x352xf32>
    tpu.vector_store %arg5[%c0_184, %c0_185], %162 {strides = array<i32>} : memref<8x352xf32, #tpu.memory_space<vmem>>, vector<8x352xf32>,
    %c0_186 = arith.constant 0 : index
    %c0_187 = arith.constant 0 : index
    %164 = vector.load %arg5[%c0_186, %c0_187] : memref<8x352xf32, #tpu.memory_space<vmem>>, vector<8x352xf32>
    %c20 = arith.constant 20 : index
    %c0_188 = arith.constant 0 : index
    %c0_189 = arith.constant 0 : index
    %165 = vector.load %arg2[%c20, %c0_188, %c0_189] : memref<27x8x8xf32, #tpu.memory_space<vmem>>, vector<1x8x8xf32>
    %166 = vector.shape_cast %165 : vector<1x8x8xf32> to vector<8x8xf32>
    %c0_190 = arith.constant 0 : index
    %c0_191 = arith.constant 0 : index
    %c6_192 = arith.constant 6 : index
    %167 = vector.load %arg1[%c0_190, %c0_191, %c6_192] : memref<1x8x506xf32, #tpu.memory_space<vmem>>, vector<1x8x352xf32>
    %168 = vector.shape_cast %167 : vector<1x8x352xf32> to vector<8x352xf32>
    %cst_193 = arith.constant dense<0.000000e+00> : vector<8x352xf32>
    %169 = tpu.matmul %166, %168, %cst_193 {dimension_numbers = #tpu.dot_dimension_numbers<[1], [0], [0], [1], [0, 0, 1, 1], [], []>} : vector<8x8xf32>, vector<8x352xf32>, vector<8x352xf32> -> vector<8x352xf32>
    %170 = arith.addf %164, %169 : vector<8x352xf32>
    %c0_194 = arith.constant 0 : index
    %c0_195 = arith.constant 0 : index
    %171 = vector.load %arg5[%c0_194, %c0_195] : memref<8x352xf32, #tpu.memory_space<vmem>>, vector<8x352xf32>
    tpu.vector_store %arg5[%c0_194, %c0_195], %170 {strides = array<i32>} : memref<8x352xf32, #tpu.memory_space<vmem>>, vector<8x352xf32>,
    %c0_196 = arith.constant 0 : index
    %c0_197 = arith.constant 0 : index
    %172 = vector.load %arg5[%c0_196, %c0_197] : memref<8x352xf32, #tpu.memory_space<vmem>>, vector<8x352xf32>
    %c21 = arith.constant 21 : index
    %c0_198 = arith.constant 0 : index
    %c0_199 = arith.constant 0 : index
    %173 = vector.load %arg2[%c21, %c0_198, %c0_199] : memref<27x8x8xf32, #tpu.memory_space<vmem>>, vector<1x8x8xf32>
    %174 = vector.shape_cast %173 : vector<1x8x8xf32> to vector<8x8xf32>
    %c0_200 = arith.constant 0 : index
    %c0_201 = arith.constant 0 : index
    %c66 = arith.constant 66 : index
    %175 = vector.load %arg1[%c0_200, %c0_201, %c66] : memref<1x8x506xf32, #tpu.memory_space<vmem>>, vector<1x8x352xf32>
    %176 = vector.shape_cast %175 : vector<1x8x352xf32> to vector<8x352xf32>
    %cst_202 = arith.constant dense<0.000000e+00> : vector<8x352xf32>
    %177 = tpu.matmul %174, %176, %cst_202 {dimension_numbers = #tpu.dot_dimension_numbers<[1], [0], [0], [1], [0, 0, 1, 1], [], []>} : vector<8x8xf32>, vector<8x352xf32>, vector<8x352xf32> -> vector<8x352xf32>
    %178 = arith.addf %172, %177 : vector<8x352xf32>
    %c0_203 = arith.constant 0 : index
    %c0_204 = arith.constant 0 : index
    %179 = vector.load %arg5[%c0_203, %c0_204] : memref<8x352xf32, #tpu.memory_space<vmem>>, vector<8x352xf32>
    tpu.vector_store %arg5[%c0_203, %c0_204], %178 {strides = array<i32>} : memref<8x352xf32, #tpu.memory_space<vmem>>, vector<8x352xf32>,
    %c0_205 = arith.constant 0 : index
    %c0_206 = arith.constant 0 : index
    %180 = vector.load %arg5[%c0_205, %c0_206] : memref<8x352xf32, #tpu.memory_space<vmem>>, vector<8x352xf32>
    %c22 = arith.constant 22 : index
    %c0_207 = arith.constant 0 : index
    %c0_208 = arith.constant 0 : index
    %181 = vector.load %arg2[%c22, %c0_207, %c0_208] : memref<27x8x8xf32, #tpu.memory_space<vmem>>, vector<1x8x8xf32>
    %182 = vector.shape_cast %181 : vector<1x8x8xf32> to vector<8x8xf32>
    %c0_209 = arith.constant 0 : index
    %c0_210 = arith.constant 0 : index
    %c69_211 = arith.constant 69 : index
    %183 = vector.load %arg1[%c0_209, %c0_210, %c69_211] : memref<1x8x506xf32, #tpu.memory_space<vmem>>, vector<1x8x352xf32>
    %184 = vector.shape_cast %183 : vector<1x8x352xf32> to vector<8x352xf32>
    %cst_212 = arith.constant dense<0.000000e+00> : vector<8x352xf32>
    %185 = tpu.matmul %182, %184, %cst_212 {dimension_numbers = #tpu.dot_dimension_numbers<[1], [0], [0], [1], [0, 0, 1, 1], [], []>} : vector<8x8xf32>, vector<8x352xf32>, vector<8x352xf32> -> vector<8x352xf32>
    %186 = arith.addf %180, %185 : vector<8x352xf32>
    %c0_213 = arith.constant 0 : index
    %c0_214 = arith.constant 0 : index
    %187 = vector.load %arg5[%c0_213, %c0_214] : memref<8x352xf32, #tpu.memory_space<vmem>>, vector<8x352xf32>
    tpu.vector_store %arg5[%c0_213, %c0_214], %186 {strides = array<i32>} : memref<8x352xf32, #tpu.memory_space<vmem>>, vector<8x352xf32>,
    %c0_215 = arith.constant 0 : index
    %c0_216 = arith.constant 0 : index
    %188 = vector.load %arg5[%c0_215, %c0_216] : memref<8x352xf32, #tpu.memory_space<vmem>>, vector<8x352xf32>
    %c23_217 = arith.constant 23 : index
    %c0_218 = arith.constant 0 : index
    %c0_219 = arith.constant 0 : index
    %189 = vector.load %arg2[%c23_217, %c0_218, %c0_219] : memref<27x8x8xf32, #tpu.memory_space<vmem>>, vector<1x8x8xf32>
    %190 = vector.shape_cast %189 : vector<1x8x8xf32> to vector<8x8xf32>
    %c0_220 = arith.constant 0 : index
    %c0_221 = arith.constant 0 : index
    %c72 = arith.constant 72 : index
    %191 = vector.load %arg1[%c0_220, %c0_221, %c72] : memref<1x8x506xf32, #tpu.memory_space<vmem>>, vector<1x8x352xf32>
    %192 = vector.shape_cast %191 : vector<1x8x352xf32> to vector<8x352xf32>
    %cst_222 = arith.constant dense<0.000000e+00> : vector<8x352xf32>
    %193 = tpu.matmul %190, %192, %cst_222 {dimension_numbers = #tpu.dot_dimension_numbers<[1], [0], [0], [1], [0, 0, 1, 1], [], []>} : vector<8x8xf32>, vector<8x352xf32>, vector<8x352xf32> -> vector<8x352xf32>
    %194 = arith.addf %188, %193 : vector<8x352xf32>
    %c0_223 = arith.constant 0 : index
    %c0_224 = arith.constant 0 : index
    %195 = vector.load %arg5[%c0_223, %c0_224] : memref<8x352xf32, #tpu.memory_space<vmem>>, vector<8x352xf32>
    tpu.vector_store %arg5[%c0_223, %c0_224], %194 {strides = array<i32>} : memref<8x352xf32, #tpu.memory_space<vmem>>, vector<8x352xf32>,
    %c0_225 = arith.constant 0 : index
    %c0_226 = arith.constant 0 : index
    %196 = vector.load %arg5[%c0_225, %c0_226] : memref<8x352xf32, #tpu.memory_space<vmem>>, vector<8x352xf32>
    %c24 = arith.constant 24 : index
    %c0_227 = arith.constant 0 : index
    %c0_228 = arith.constant 0 : index
    %197 = vector.load %arg2[%c24, %c0_227, %c0_228] : memref<27x8x8xf32, #tpu.memory_space<vmem>>, vector<1x8x8xf32>
    %198 = vector.shape_cast %197 : vector<1x8x8xf32> to vector<8x8xf32>
    %c0_229 = arith.constant 0 : index
    %c0_230 = arith.constant 0 : index
    %c132 = arith.constant 132 : index
    %199 = vector.load %arg1[%c0_229, %c0_230, %c132] : memref<1x8x506xf32, #tpu.memory_space<vmem>>, vector<1x8x352xf32>
    %200 = vector.shape_cast %199 : vector<1x8x352xf32> to vector<8x352xf32>
    %cst_231 = arith.constant dense<0.000000e+00> : vector<8x352xf32>
    %201 = tpu.matmul %198, %200, %cst_231 {dimension_numbers = #tpu.dot_dimension_numbers<[1], [0], [0], [1], [0, 0, 1, 1], [], []>} : vector<8x8xf32>, vector<8x352xf32>, vector<8x352xf32> -> vector<8x352xf32>
    %202 = arith.addf %196, %201 : vector<8x352xf32>
    %c0_232 = arith.constant 0 : index
    %c0_233 = arith.constant 0 : index
    %203 = vector.load %arg5[%c0_232, %c0_233] : memref<8x352xf32, #tpu.memory_space<vmem>>, vector<8x352xf32>
    tpu.vector_store %arg5[%c0_232, %c0_233], %202 {strides = array<i32>} : memref<8x352xf32, #tpu.memory_space<vmem>>, vector<8x352xf32>,
    %c0_234 = arith.constant 0 : index
    %c0_235 = arith.constant 0 : index
    %204 = vector.load %arg5[%c0_234, %c0_235] : memref<8x352xf32, #tpu.memory_space<vmem>>, vector<8x352xf32>
    %c25_236 = arith.constant 25 : index
    %c0_237 = arith.constant 0 : index
    %c0_238 = arith.constant 0 : index
    %205 = vector.load %arg2[%c25_236, %c0_237, %c0_238] : memref<27x8x8xf32, #tpu.memory_space<vmem>>, vector<1x8x8xf32>
    %206 = vector.shape_cast %205 : vector<1x8x8xf32> to vector<8x8xf32>
    %c0_239 = arith.constant 0 : index
    %c0_240 = arith.constant 0 : index
    %c135 = arith.constant 135 : index
    %207 = vector.load %arg1[%c0_239, %c0_240, %c135] : memref<1x8x506xf32, #tpu.memory_space<vmem>>, vector<1x8x352xf32>
    %208 = vector.shape_cast %207 : vector<1x8x352xf32> to vector<8x352xf32>
    %cst_241 = arith.constant dense<0.000000e+00> : vector<8x352xf32>
    %209 = tpu.matmul %206, %208, %cst_241 {dimension_numbers = #tpu.dot_dimension_numbers<[1], [0], [0], [1], [0, 0, 1, 1], [], []>} : vector<8x8xf32>, vector<8x352xf32>, vector<8x352xf32> -> vector<8x352xf32>
    %210 = arith.addf %204, %209 : vector<8x352xf32>
    %c0_242 = arith.constant 0 : index
    %c0_243 = arith.constant 0 : index
    %211 = vector.load %arg5[%c0_242, %c0_243] : memref<8x352xf32, #tpu.memory_space<vmem>>, vector<8x352xf32>
    tpu.vector_store %arg5[%c0_242, %c0_243], %210 {strides = array<i32>} : memref<8x352xf32, #tpu.memory_space<vmem>>, vector<8x352xf32>,
    %c0_244 = arith.constant 0 : index
    %c0_245 = arith.constant 0 : index
    %212 = vector.load %arg5[%c0_244, %c0_245] : memref<8x352xf32, #tpu.memory_space<vmem>>, vector<8x352xf32>
    %c26 = arith.constant 26 : index
    %c0_246 = arith.constant 0 : index
    %c0_247 = arith.constant 0 : index
    %213 = vector.load %arg2[%c26, %c0_246, %c0_247] : memref<27x8x8xf32, #tpu.memory_space<vmem>>, vector<1x8x8xf32>
    %214 = vector.shape_cast %213 : vector<1x8x8xf32> to vector<8x8xf32>
    %c0_248 = arith.constant 0 : index
    %c0_249 = arith.constant 0 : index
    %c138 = arith.constant 138 : index
    %215 = vector.load %arg1[%c0_248, %c0_249, %c138] : memref<1x8x506xf32, #tpu.memory_space<vmem>>, vector<1x8x352xf32>
    %216 = vector.shape_cast %215 : vector<1x8x352xf32> to vector<8x352xf32>
    %cst_250 = arith.constant dense<0.000000e+00> : vector<8x352xf32>
    %217 = tpu.matmul %214, %216, %cst_250 {dimension_numbers = #tpu.dot_dimension_numbers<[1], [0], [0], [1], [0, 0, 1, 1], [], []>} : vector<8x8xf32>, vector<8x352xf32>, vector<8x352xf32> -> vector<8x352xf32>
    %218 = arith.addf %212, %217 : vector<8x352xf32>
    %c0_251 = arith.constant 0 : index
    %c0_252 = arith.constant 0 : index
    %219 = vector.load %arg5[%c0_251, %c0_252] : memref<8x352xf32, #tpu.memory_space<vmem>>, vector<8x352xf32>
    tpu.vector_store %arg5[%c0_251, %c0_252], %218 {strides = array<i32>} : memref<8x352xf32, #tpu.memory_space<vmem>>, vector<8x352xf32>,
    %c0_253 = arith.constant 0 : index
    %c0_254 = arith.constant 0 : index
    %220 = vector.load %arg5[%c0_253, %c0_254] : memref<8x352xf32, #tpu.memory_space<vmem>>, vector<8x16xf32>
    %c0_255 = arith.constant 0 : index
    %c0_256 = arith.constant 0 : index
    %c0_257 = arith.constant 0 : index
    %c0_258 = arith.constant 0 : index
    %221 = vector.load %arg4[%c0_255, %c0_256, %c0_257, %c0_258] : memref<1x8x16x16xf32, #tpu.memory_space<vmem>>, vector<1x8x1x16xf32>
    %222 = vector.shape_cast %221 : vector<1x8x1x16xf32> to vector<8x16xf32>
    %223 = vector.shape_cast %220 : vector<8x16xf32> to vector<1x8x1x16xf32>
    tpu.vector_store %arg4[%c0_255, %c0_256, %c0_257, %c0_258], %223 {strides = array<i32>} : memref<1x8x16x16xf32, #tpu.memory_space<vmem>>, vector<1x8x1x16xf32>,
    %c0_259 = arith.constant 0 : index
    %c22_260 = arith.constant 22 : index
    %224 = vector.load %arg5[%c0_259, %c22_260] : memref<8x352xf32, #tpu.memory_space<vmem>>, vector<8x16xf32>
    %c0_261 = arith.constant 0 : index
    %c0_262 = arith.constant 0 : index
    %c1_263 = arith.constant 1 : index
    %c0_264 = arith.constant 0 : index
    %225 = vector.load %arg4[%c0_261, %c0_262, %c1_263, %c0_264] : memref<1x8x16x16xf32, #tpu.memory_space<vmem>>, vector<1x8x1x16xf32>
    %226 = vector.shape_cast %225 : vector<1x8x1x16xf32> to vector<8x16xf32>
    %227 = vector.shape_cast %224 : vector<8x16xf32> to vector<1x8x1x16xf32>
    tpu.vector_store %arg4[%c0_261, %c0_262, %c1_263, %c0_264], %227 {strides = array<i32>} : memref<1x8x16x16xf32, #tpu.memory_space<vmem>>, vector<1x8x1x16xf32>,
    %c0_265 = arith.constant 0 : index
    %c44 = arith.constant 44 : index
    %228 = vector.load %arg5[%c0_265, %c44] : memref<8x352xf32, #tpu.memory_space<vmem>>, vector<8x16xf32>
    %c0_266 = arith.constant 0 : index
    %c0_267 = arith.constant 0 : index
    %c2_268 = arith.constant 2 : index
    %c0_269 = arith.constant 0 : index
    %229 = vector.load %arg4[%c0_266, %c0_267, %c2_268, %c0_269] : memref<1x8x16x16xf32, #tpu.memory_space<vmem>>, vector<1x8x1x16xf32>
    %230 = vector.shape_cast %229 : vector<1x8x1x16xf32> to vector<8x16xf32>
    %231 = vector.shape_cast %228 : vector<8x16xf32> to vector<1x8x1x16xf32>
    tpu.vector_store %arg4[%c0_266, %c0_267, %c2_268, %c0_269], %231 {strides = array<i32>} : memref<1x8x16x16xf32, #tpu.memory_space<vmem>>, vector<1x8x1x16xf32>,
    %c0_270 = arith.constant 0 : index
    %c66_271 = arith.constant 66 : index
    %232 = vector.load %arg5[%c0_270, %c66_271] : memref<8x352xf32, #tpu.memory_space<vmem>>, vector<8x16xf32>
    %c0_272 = arith.constant 0 : index
    %c0_273 = arith.constant 0 : index
    %c3_274 = arith.constant 3 : index
    %c0_275 = arith.constant 0 : index
    %233 = vector.load %arg4[%c0_272, %c0_273, %c3_274, %c0_275] : memref<1x8x16x16xf32, #tpu.memory_space<vmem>>, vector<1x8x1x16xf32>
    %234 = vector.shape_cast %233 : vector<1x8x1x16xf32> to vector<8x16xf32>
    %235 = vector.shape_cast %232 : vector<8x16xf32> to vector<1x8x1x16xf32>
    tpu.vector_store %arg4[%c0_272, %c0_273, %c3_274, %c0_275], %235 {strides = array<i32>} : memref<1x8x16x16xf32, #tpu.memory_space<vmem>>, vector<1x8x1x16xf32>,
    %c0_276 = arith.constant 0 : index
    %c88 = arith.constant 88 : index
    %236 = vector.load %arg5[%c0_276, %c88] : memref<8x352xf32, #tpu.memory_space<vmem>>, vector<8x16xf32>
    %c0_277 = arith.constant 0 : index
    %c0_278 = arith.constant 0 : index
    %c4_279 = arith.constant 4 : index
    %c0_280 = arith.constant 0 : index
    %237 = vector.load %arg4[%c0_277, %c0_278, %c4_279, %c0_280] : memref<1x8x16x16xf32, #tpu.memory_space<vmem>>, vector<1x8x1x16xf32>
    %238 = vector.shape_cast %237 : vector<1x8x1x16xf32> to vector<8x16xf32>
    %239 = vector.shape_cast %236 : vector<8x16xf32> to vector<1x8x1x16xf32>
    tpu.vector_store %arg4[%c0_277, %c0_278, %c4_279, %c0_280], %239 {strides = array<i32>} : memref<1x8x16x16xf32, #tpu.memory_space<vmem>>, vector<1x8x1x16xf32>,
    %c0_281 = arith.constant 0 : index
    %c110 = arith.constant 110 : index
    %240 = vector.load %arg5[%c0_281, %c110] : memref<8x352xf32, #tpu.memory_space<vmem>>, vector<8x16xf32>
    %c0_282 = arith.constant 0 : index
    %c0_283 = arith.constant 0 : index
    %c5_284 = arith.constant 5 : index
    %c0_285 = arith.constant 0 : index
    %241 = vector.load %arg4[%c0_282, %c0_283, %c5_284, %c0_285] : memref<1x8x16x16xf32, #tpu.memory_space<vmem>>, vector<1x8x1x16xf32>
    %242 = vector.shape_cast %241 : vector<1x8x1x16xf32> to vector<8x16xf32>
    %243 = vector.shape_cast %240 : vector<8x16xf32> to vector<1x8x1x16xf32>
    tpu.vector_store %arg4[%c0_282, %c0_283, %c5_284, %c0_285], %243 {strides = array<i32>} : memref<1x8x16x16xf32, #tpu.memory_space<vmem>>, vector<1x8x1x16xf32>,
    %c0_286 = arith.constant 0 : index
    %c132_287 = arith.constant 132 : index
    %244 = vector.load %arg5[%c0_286, %c132_287] : memref<8x352xf32, #tpu.memory_space<vmem>>, vector<8x16xf32>
    %c0_288 = arith.constant 0 : index
    %c0_289 = arith.constant 0 : index
    %c6_290 = arith.constant 6 : index
    %c0_291 = arith.constant 0 : index
    %245 = vector.load %arg4[%c0_288, %c0_289, %c6_290, %c0_291] : memref<1x8x16x16xf32, #tpu.memory_space<vmem>>, vector<1x8x1x16xf32>
    %246 = vector.shape_cast %245 : vector<1x8x1x16xf32> to vector<8x16xf32>
    %247 = vector.shape_cast %244 : vector<8x16xf32> to vector<1x8x1x16xf32>
    tpu.vector_store %arg4[%c0_288, %c0_289, %c6_290, %c0_291], %247 {strides = array<i32>} : memref<1x8x16x16xf32, #tpu.memory_space<vmem>>, vector<1x8x1x16xf32>,
    %c0_292 = arith.constant 0 : index
    %c154 = arith.constant 154 : index
    %248 = vector.load %arg5[%c0_292, %c154] : memref<8x352xf32, #tpu.memory_space<vmem>>, vector<8x16xf32>
    %c0_293 = arith.constant 0 : index
    %c0_294 = arith.constant 0 : index
    %c7_295 = arith.constant 7 : index
    %c0_296 = arith.constant 0 : index
    %249 = vector.load %arg4[%c0_293, %c0_294, %c7_295, %c0_296] : memref<1x8x16x16xf32, #tpu.memory_space<vmem>>, vector<1x8x1x16xf32>
    %250 = vector.shape_cast %249 : vector<1x8x1x16xf32> to vector<8x16xf32>
    %251 = vector.shape_cast %248 : vector<8x16xf32> to vector<1x8x1x16xf32>
    tpu.vector_store %arg4[%c0_293, %c0_294, %c7_295, %c0_296], %251 {strides = array<i32>} : memref<1x8x16x16xf32, #tpu.memory_space<vmem>>, vector<1x8x1x16xf32>,
    %c0_297 = arith.constant 0 : index
    %c176 = arith.constant 176 : index
    %252 = vector.load %arg5[%c0_297, %c176] : memref<8x352xf32, #tpu.memory_space<vmem>>, vector<8x16xf32>
    %c0_298 = arith.constant 0 : index
    %c0_299 = arith.constant 0 : index
    %c8_300 = arith.constant 8 : index
    %c0_301 = arith.constant 0 : index
    %253 = vector.load %arg4[%c0_298, %c0_299, %c8_300, %c0_301] : memref<1x8x16x16xf32, #tpu.memory_space<vmem>>, vector<1x8x1x16xf32>
    %254 = vector.shape_cast %253 : vector<1x8x1x16xf32> to vector<8x16xf32>
    %255 = vector.shape_cast %252 : vector<8x16xf32> to vector<1x8x1x16xf32>
    tpu.vector_store %arg4[%c0_298, %c0_299, %c8_300, %c0_301], %255 {strides = array<i32>} : memref<1x8x16x16xf32, #tpu.memory_space<vmem>>, vector<1x8x1x16xf32>,
    %c0_302 = arith.constant 0 : index
    %c198 = arith.constant 198 : index
    %256 = vector.load %arg5[%c0_302, %c198] : memref<8x352xf32, #tpu.memory_space<vmem>>, vector<8x16xf32>
    %c0_303 = arith.constant 0 : index
    %c0_304 = arith.constant 0 : index
    %c9_305 = arith.constant 9 : index
    %c0_306 = arith.constant 0 : index
    %257 = vector.load %arg4[%c0_303, %c0_304, %c9_305, %c0_306] : memref<1x8x16x16xf32, #tpu.memory_space<vmem>>, vector<1x8x1x16xf32>
    %258 = vector.shape_cast %257 : vector<1x8x1x16xf32> to vector<8x16xf32>
    %259 = vector.shape_cast %256 : vector<8x16xf32> to vector<1x8x1x16xf32>
    tpu.vector_store %arg4[%c0_303, %c0_304, %c9_305, %c0_306], %259 {strides = array<i32>} : memref<1x8x16x16xf32, #tpu.memory_space<vmem>>, vector<1x8x1x16xf32>,
    %c0_307 = arith.constant 0 : index
    %c220 = arith.constant 220 : index
    %260 = vector.load %arg5[%c0_307, %c220] : memref<8x352xf32, #tpu.memory_space<vmem>>, vector<8x16xf32>
    %c0_308 = arith.constant 0 : index
    %c0_309 = arith.constant 0 : index
    %c10_310 = arith.constant 10 : index
    %c0_311 = arith.constant 0 : index
    %261 = vector.load %arg4[%c0_308, %c0_309, %c10_310, %c0_311] : memref<1x8x16x16xf32, #tpu.memory_space<vmem>>, vector<1x8x1x16xf32>
    %262 = vector.shape_cast %261 : vector<1x8x1x16xf32> to vector<8x16xf32>
    %263 = vector.shape_cast %260 : vector<8x16xf32> to vector<1x8x1x16xf32>
    tpu.vector_store %arg4[%c0_308, %c0_309, %c10_310, %c0_311], %263 {strides = array<i32>} : memref<1x8x16x16xf32, #tpu.memory_space<vmem>>, vector<1x8x1x16xf32>,
    %c0_312 = arith.constant 0 : index
    %c242 = arith.constant 242 : index
    %264 = vector.load %arg5[%c0_312, %c242] : memref<8x352xf32, #tpu.memory_space<vmem>>, vector<8x16xf32>
    %c0_313 = arith.constant 0 : index
    %c0_314 = arith.constant 0 : index
    %c11_315 = arith.constant 11 : index
    %c0_316 = arith.constant 0 : index
    %265 = vector.load %arg4[%c0_313, %c0_314, %c11_315, %c0_316] : memref<1x8x16x16xf32, #tpu.memory_space<vmem>>, vector<1x8x1x16xf32>
    %266 = vector.shape_cast %265 : vector<1x8x1x16xf32> to vector<8x16xf32>
    %267 = vector.shape_cast %264 : vector<8x16xf32> to vector<1x8x1x16xf32>
    tpu.vector_store %arg4[%c0_313, %c0_314, %c11_315, %c0_316], %267 {strides = array<i32>} : memref<1x8x16x16xf32, #tpu.memory_space<vmem>>, vector<1x8x1x16xf32>,
    %c0_317 = arith.constant 0 : index
    %c264 = arith.constant 264 : index
    %268 = vector.load %arg5[%c0_317, %c264] : memref<8x352xf32, #tpu.memory_space<vmem>>, vector<8x16xf32>
    %c0_318 = arith.constant 0 : index
    %c0_319 = arith.constant 0 : index
    %c12_320 = arith.constant 12 : index
    %c0_321 = arith.constant 0 : index
    %269 = vector.load %arg4[%c0_318, %c0_319, %c12_320, %c0_321] : memref<1x8x16x16xf32, #tpu.memory_space<vmem>>, vector<1x8x1x16xf32>
    %270 = vector.shape_cast %269 : vector<1x8x1x16xf32> to vector<8x16xf32>
    %271 = vector.shape_cast %268 : vector<8x16xf32> to vector<1x8x1x16xf32>
    tpu.vector_store %arg4[%c0_318, %c0_319, %c12_320, %c0_321], %271 {strides = array<i32>} : memref<1x8x16x16xf32, #tpu.memory_space<vmem>>, vector<1x8x1x16xf32>,
    %c0_322 = arith.constant 0 : index
    %c286 = arith.constant 286 : index
    %272 = vector.load %arg5[%c0_322, %c286] : memref<8x352xf32, #tpu.memory_space<vmem>>, vector<8x16xf32>
    %c0_323 = arith.constant 0 : index
    %c0_324 = arith.constant 0 : index
    %c13_325 = arith.constant 13 : index
    %c0_326 = arith.constant 0 : index
    %273 = vector.load %arg4[%c0_323, %c0_324, %c13_325, %c0_326] : memref<1x8x16x16xf32, #tpu.memory_space<vmem>>, vector<1x8x1x16xf32>
    %274 = vector.shape_cast %273 : vector<1x8x1x16xf32> to vector<8x16xf32>
    %275 = vector.shape_cast %272 : vector<8x16xf32> to vector<1x8x1x16xf32>
    tpu.vector_store %arg4[%c0_323, %c0_324, %c13_325, %c0_326], %275 {strides = array<i32>} : memref<1x8x16x16xf32, #tpu.memory_space<vmem>>, vector<1x8x1x16xf32>,
    %c0_327 = arith.constant 0 : index
    %c308 = arith.constant 308 : index
    %276 = vector.load %arg5[%c0_327, %c308] : memref<8x352xf32, #tpu.memory_space<vmem>>, vector<8x16xf32>
    %c0_328 = arith.constant 0 : index
    %c0_329 = arith.constant 0 : index
    %c14_330 = arith.constant 14 : index
    %c0_331 = arith.constant 0 : index
    %277 = vector.load %arg4[%c0_328, %c0_329, %c14_330, %c0_331] : memref<1x8x16x16xf32, #tpu.memory_space<vmem>>, vector<1x8x1x16xf32>
    %278 = vector.shape_cast %277 : vector<1x8x1x16xf32> to vector<8x16xf32>
    %279 = vector.shape_cast %276 : vector<8x16xf32> to vector<1x8x1x16xf32>
    tpu.vector_store %arg4[%c0_328, %c0_329, %c14_330, %c0_331], %279 {strides = array<i32>} : memref<1x8x16x16xf32, #tpu.memory_space<vmem>>, vector<1x8x1x16xf32>,
    %c0_332 = arith.constant 0 : index
    %c330 = arith.constant 330 : index
    %280 = vector.load %arg5[%c0_332, %c330] : memref<8x352xf32, #tpu.memory_space<vmem>>, vector<8x16xf32>
    %c0_333 = arith.constant 0 : index
    %c0_334 = arith.constant 0 : index
    %c15_335 = arith.constant 15 : index
    %c0_336 = arith.constant 0 : index
    %281 = vector.load %arg4[%c0_333, %c0_334, %c15_335, %c0_336] : memref<1x8x16x16xf32, #tpu.memory_space<vmem>>, vector<1x8x1x16xf32>
    %282 = vector.shape_cast %281 : vector<1x8x1x16xf32> to vector<8x16xf32>
    %283 = vector.shape_cast %280 : vector<8x16xf32> to vector<1x8x1x16xf32>
    tpu.vector_store %arg4[%c0_333, %c0_334, %c15_335, %c0_336], %283 {strides = array<i32>} : memref<1x8x16x16xf32, #tpu.memory_space<vmem>>, vector<1x8x1x16xf32>,
    return
  }
  func.func @transform_0(%arg0: i32) -> (i32, i32, i32) {
    %c0_i32 = arith.constant 0 : i32
    %c0_i32_0 = arith.constant 0 : i32
    %c0_i32_1 = arith.constant 0 : i32
    return %arg0, %c0_i32, %c0_i32_0 : i32, i32, i32
  }
  func.func @transform_1(%arg0: i32) -> (i32, i32, i32) {
    %c0_i32 = arith.constant 0 : i32
    %c0_i32_0 = arith.constant 0 : i32
    %c0_i32_1 = arith.constant 0 : i32
    %c0_i32_2 = arith.constant 0 : i32
    return %c0_i32, %c0_i32_0, %c0_i32_1 : i32, i32, i32
  }
  func.func @transform_2(%arg0: i32) -> (i32, i32) {
    %c0_i32 = arith.constant 0 : i32
    %c0_i32_0 = arith.constant 0 : i32
    %c0_i32_1 = arith.constant 0 : i32
    return %c0_i32, %c0_i32_0 : i32, i32
  }
  func.func @transform_3(%arg0: i32) -> (i32, i32, i32, i32) {
    %c0_i32 = arith.constant 0 : i32
    %c0_i32_0 = arith.constant 0 : i32
    %c0_i32_1 = arith.constant 0 : i32
    %c0_i32_2 = arith.constant 0 : i32
    return %arg0, %c0_i32, %c0_i32_0, %c0_i32_1 : i32, i32, i32, i32
  }
}

</mosaic_0001>

<llo_original>
// kernel: tpu_custom_call.1
$region0: #{tpu_custom_call.1}
  #allocation0 [shape = 'u32[]', space=smem, size = 0x4, offset = 0x4, fixed_abs, tag = 'smem constant byte address 0x4 - core index']
  #allocation1 [shape = 'u32[144,128]{1,0:T(1,128)}', space=vmem, size = 0x12000, scoped, tag = 'internal scratch']
  #allocation2 [shape = 'f32[8,352]{1,0:T(8,128)}', space=vmem, size = 0x3000, scoped, tag = 'scratch operand']
  %s0 = inlined_call_operand.vmem [shape: f32[2,8,506], index: 0, kind: input, shape index: {}]
  %s1 = inlined_call_operand.vmem [shape: f32[27,8,8], index: 1, kind: input, shape index: {}]
  %s2 = inlined_call_operand.vmem [shape: f32[8,1], index: 2, kind: input, shape index: {}]
  %s3 = inlined_call_operand.hbm [shape: f32[2,8,16,16], index: 3, kind: output, shape index: {}]
  %s4 = sld [smem:[#allocation0]]
  $region45: #{tpu_custom_call.1} parent=0
    _
  %s6 = ssub.s32 1, %s4
  %s7 = scalar_select 0, %s6, %s4
  $region1: #{tpu_custom_call.1} parent=0
    #allocation3 [shape = 'u8[131072]{0}', space=vmem, size = 0x20000, scoped, tag = 'output window, operand 0']
    #allocation4 [shape = 's32[2]{0}', space=sflag, size = 0x8, scoped, tag = 'scoped memory for tpu_custom_call.1']
    %8 = vsyncpa [#allocation4], 0
    %s9 = scalar_lea.sflag [#allocation4], 1
    %10 = vsyncpa %s9, 0
    loop: start=0, step=1, limit=4
    $region2: #{tpu_custom_call.1} parent=1 // loop_pre_header
      _
    $region3: #{tpu_custom_call.1} parent=1 // loop_header
      %s12 = sphi 0, %s16
      %p13 = scmp.ge.s32.totalorder %s12, 4
      %s22 = sphi 0, %s24
      %s25 = sphi 0, %s22
      %s26 = sphi 0, %s25
      %s42 = sphi 0, %s26
      %s46 = sphi 0, %s46
      %s48 = sphi 0, %s46
      %s49 = sphi 0, %s48
      %s63 = sphi 0, %s49
      %s67 = sphi 0, %s67
      %s69 = sphi 0, %s67
      %s70 = sphi 0, %s69
      %s84 = sphi 0, %s70
      %s90 = sphi 0, %s92
      %s93 = sphi 0, %s90
      %s94 = sphi 0, %s93
      %s110 = sphi 0, %s94
    $region4: #{tpu_custom_call.1} parent=1 // loop_header_branch
      %15 = sbr.rel (%p13) target = $region8
    $region5: #{tpu_custom_call.1} parent=1 // loop_body
      %s17 = ssub.s32 %s12, 1
      %s18 = ssub.s32 %s12, 2
      %s19 = sadd.s32 %s12, 1
      %s20 = ssub.s32 %s12, %s19
      %p21 = scmp.eq.s32.totalorder %s20, 0
      %s23 = sadd.s32 %s22, 1
      %s24 = scalar_select %p21, %s22, %s23
      %p27 = pneg %p21
      %p28 = scmp.eq.s32.totalorder %s12, 1
      %p29 = por %p27, %p28
      %p30 = scmp.ne.s32.totalorder %s22, %s25
      %p31 = scmp.eq.s32.totalorder %s12, 0
      %p32 = por %p30, %p31
      %p33 = scmp.ne.s32.totalorder %s22, %s25
      %p34 = scmp.eq.s32.totalorder %s17, 1
      %p35 = por %p33, %p34
      %p36 = scmp.ne.s32.totalorder %s25, %s26
      %p37 = scmp.eq.s32.totalorder %s17, 0
      %p38 = por %p36, %p37
      %p39 = scmp.ne.s32.totalorder %s25, %s26
      %p40 = scmp.eq.s32.totalorder %s18, 1
      %p41 = por %p39, %p40
      %p43 = scmp.ne.s32.totalorder %s26, %s42
      %p44 = scmp.eq.s32.totalorder %s18, 0
      %p45 = por %p43, %p44
      %s47 = sadd.s32 %s46, 1
      %p50 = scmp.eq.s32.totalorder %s12, 1
      %p51 = scmp.ne.s32.totalorder %s46, %s48
      %p52 = scmp.eq.s32.totalorder %s12, 0
      %p53 = por %p51, %p52
      %p54 = scmp.ne.s32.totalorder %s46, %s48
      %p55 = scmp.eq.s32.totalorder %s17, 1
      %p56 = por %p54, %p55
      %p57 = scmp.ne.s32.totalorder %s48, %s49
      %p58 = scmp.eq.s32.totalorder %s17, 0
      %p59 = por %p57, %p58
      %p60 = scmp.ne.s32.totalorder %s48, %s49
      %p61 = scmp.eq.s32.totalorder %s18, 1
      %p62 = por %p60, %p61
      %p64 = scmp.ne.s32.totalorder %s49, %s63
      %p65 = scmp.eq.s32.totalorder %s18, 0
      %p66 = por %p64, %p65
      %s68 = sadd.s32 %s67, 1
      %p71 = scmp.eq.s32.totalorder %s12, 1
      %p72 = scmp.ne.s32.totalorder %s67, %s69
      %p73 = scmp.eq.s32.totalorder %s12, 0
      %p74 = por %p72, %p73
      %p75 = scmp.ne.s32.totalorder %s67, %s69
      %p76 = scmp.eq.s32.totalorder %s17, 1
      %p77 = por %p75, %p76
      %p78 = scmp.ne.s32.totalorder %s69, %s70
      %p79 = scmp.eq.s32.totalorder %s17, 0
      %p80 = por %p78, %p79
      %p81 = scmp.ne.s32.totalorder %s69, %s70
      %p82 = scmp.eq.s32.totalorder %s18, 1
      %p83 = por %p81, %p82
      %p85 = scmp.ne.s32.totalorder %s70, %s84
      %p86 = scmp.eq.s32.totalorder %s18, 0
      %p87 = por %p85, %p86
      %s88 = ssub.s32 %s12, %s19
      %p89 = scmp.eq.s32.totalorder %s88, 0
      %s91 = sadd.s32 %s90, 1
      %s92 = scalar_select %p89, %s90, %s91
      %p95 = pneg %p89
      %p96 = scmp.eq.s32.totalorder %s12, 1
      %p97 = por %p95, %p96
      %p98 = scmp.ne.s32.totalorder %s90, %s93
      %p99 = scmp.eq.s32.totalorder %s12, 0
      %p100 = por %p98, %p99
      %p101 = scmp.ne.s32.totalorder %s90, %s93
      %p102 = scmp.eq.s32.totalorder %s17, 1
      %p103 = por %p101, %p102
      %p104 = scmp.ne.s32.totalorder %s93, %s94
      %p105 = scmp.eq.s32.totalorder %s17, 0
      %p106 = por %p104, %p105
      %p107 = scmp.ne.s32.totalorder %s93, %s94
      %p108 = scmp.eq.s32.totalorder %s18, 1
      %p109 = por %p107, %p108
      %p111 = scmp.ne.s32.totalorder %s94, %s110
      %p112 = scmp.eq.s32.totalorder %s18, 0
      %p113 = por %p111, %p112
      %p114 = scmp.le.s32.totalorder 1, %s12
      %p115 = scmp.lt.s32.totalorder %s12, 3
      %p116 = pnand %p114, %p115
      %p117 = pneg %p116
      // Predicated region
      $region9: #{tpu_custom_call.1} parent=5 // pred_check
        _
      $region10: #{tpu_custom_call.1} parent=5 // pred_check_branch
        %119 = sbr.rel (%p116) target = $region12
      $region11: #{tpu_custom_call.1} parent=5 // pred_region
        %s120 = ssub.s32 %s12, 1
        // Predicated region
        $region13: #{tpu_custom_call.1} parent=11 // pred_check
          %p121 = pneg %p59
        $region14: #{tpu_custom_call.1} parent=11 // pred_check_branch
          %123 = sbr.rel (%p121) target = $region16
        $region15: #{tpu_custom_call.1} parent=11 // pred_region
          _
        $region16: #{tpu_custom_call.1} parent=11 // pred_fallthru
          _
        // Predicated region
        $region17: #{tpu_custom_call.1} parent=11 // pred_check
          %p124 = pneg %p80
        $region18: #{tpu_custom_call.1} parent=11 // pred_check_branch
          %126 = sbr.rel (%p124) target = $region20
        $region19: #{tpu_custom_call.1} parent=11 // pred_region
          _
        $region20: #{tpu_custom_call.1} parent=11 // pred_fallthru
          _
      $region12: #{tpu_custom_call.1} parent=5 // pred_fallthru
        _
      %p127 = scmp.lt.s32.totalorder %s12, 2
      // Predicated region
      $region21: #{tpu_custom_call.1} parent=5 // pred_check
        %p128 = pneg %p127
      $region22: #{tpu_custom_call.1} parent=5 // pred_check_branch
        %130 = sbr.rel (%p128) target = $region24
      $region23: #{tpu_custom_call.1} parent=5 // pred_region
        // Predicated region
        $region25: #{tpu_custom_call.1} parent=23 // pred_check
          %p131 = pneg %p32
        $region26: #{tpu_custom_call.1} parent=23 // pred_check_branch
          %133 = sbr.rel (%p131) target = $region28
        $region27: #{tpu_custom_call.1} parent=23 // pred_region
          %p134 = scmp.lt.s32.totalorder %s12, 1
          %s135 = scalar_select %p134, %s12, 1
          %s136 = smul.addr %s135, 4
          %s137 = smul.addr %s136, 8
          %s138 = scalar_lea.vmem %s0, %s137
        $region28: #{tpu_custom_call.1} parent=23 // pred_fallthru
          _
      $region24: #{tpu_custom_call.1} parent=5 // pred_fallthru
        _
      %p139 = scmp.le.s32.totalorder 1, %s12
      %p140 = scmp.lt.s32.totalorder %s12, 3
      %p141 = pnand %p139, %p140
      %p142 = pneg %p141
      // Predicated region
      $region29: #{tpu_custom_call.1} parent=5 // pred_check
        _
      $region30: #{tpu_custom_call.1} parent=5 // pred_check_branch
        %144 = sbr.rel (%p141) target = $region32
      $region31: #{tpu_custom_call.1} parent=5 // pred_region
        %s145 = ssub.s32 %s12, 1
        %p146 = scmp.lt.s32.totalorder %s17, 1
        %s147 = scalar_select %p146, %s17, 1
        %s148 = smul.addr %s147, 4
        %s149 = smul.addr %s148, 8
        %s150 = scalar_lea.vmem %s0, %s149
        %p151 = pneg %p38
        %p152 = pneg %p35
        %p153 = pneg %p59
        %p154 = pneg %p56
        %p155 = pneg %p80
        %p156 = pneg %p77
        %p157 = pneg %p106
        %p158 = pneg %p103
        %s159 = sand.u32 %s93, 1
        %s160 = scalar_lea.sflag [#allocation4], %s159
        %s161 = sand.u32 %s93, 1
        %s162 = smul.addr %s161, 128
        %s163 = scalar_lea.vmem [#allocation3], %s162
        %p164 = scmp.lt.s32.totalorder %s17, 1
        %s165 = scalar_select %p164, %s17, 1
        %s166 = smul.addr %s165, 4
        %s167 = smul.addr %s166, 8
        %s168 = scalar_lea.vmem %s0, %s167
        %v169 = vld [vmem:[%s2] sm:$0xff]
        %171 = vset.pattern.permute.xlu0 0
        %172 = vperm.xlu0 %171, %v169
        %v173 = vpop.permute.xlu0 %172
        %175 = vst [vmem:[#allocation2] sm:$0xff] %v173
        %176 = vst [vmem:[#allocation2 + $0x8] sm:$0xff] %v173
        %vm177 = vcmask 785408
        %178 = vst.msk [vmem:[#allocation2 + $0x10] sm:$0xff] %vm177, %v173
        %v179 = vld [vmem:[#allocation2] sm:$0xff]
        %v180 = vld [vmem:[#allocation2 + $0x8] sm:$0xff]
        %v181 = vld [vmem:[#allocation2 + $0x10] sm:$0xff]
        %v182 = vld [vmem:[%s1] sm:$0xff]
        %v183 = vld [vmem:[%s168] sm:$0xff]
        %v184 = vld [vmem:[%s168 + $0x8] sm:$0xff]
        %v185 = vld [vmem:[%s168 + $0x10] sm:$0xff]
        %v186 = vld [vmem:[%s168 + $0x18] sm:$0xff]
        %191 = vrot.lane.b32.xlu0 %v183, 82
        %v192 = vpop.permute.xlu0 %191
        %193 = vrot.lane.b32.xlu0 %v184, 82
        %v194 = vpop.permute.xlu0 %193
        %195 = vrot.lane.b32.xlu0 %v185, 82
        %v196 = vpop.permute.xlu0 %195
        %197 = vrot.lane.b32.xlu0 %v186, 82
        %v198 = vpop.permute.xlu0 %197
        %vm199 = vcmask 670720
        %v200 = vsel %vm199, %v192, %v194
        %v201 = vsel %vm199, %v194, %v196
        %v202 = vsel %vm199, %v196, %v198
        %vm206 = vcmask 64512
        %v208 = vsel %vm206, %v182, 0
        %210 = vmatprep.subr.mxu0 %v201
        %211 = vmatpush1.msra.mxu0 %v200
        %212 = vmatprep.subr.mxu0 0.0
        %213 = vmatpush1.msra.mxu0 0.0
        %214 = vmatprep.subr.mxu0 0.0
        %215 = vmatpush1.msra.mxu0 0.0
        %216 = vmatprep.subr.mxu0 0.0
        %217 = vmatpush1.msra.mxu0 0.0
        %218 = vmatprep.subr.mxu0 0.0
        %219 = vmatpush1.msra.mxu0 0.0
        %220 = vmatprep.subr.mxu0 0.0
        %221 = vmatpush1.msra.mxu0 0.0
        %222 = vmatprep.subr.mxu0 0.0
        %223 = vmatpush1.msra.mxu0 0.0
        %224 = vmatprep.subr.mxu0 0.0
        %225 = vmatpush1.msra.mxu0 0.0
        %226 = vmatprep.subr.mxu0 0.0
        %227 = vmatpush1.msra.mxu0 0.0
        %228 = vmatprep.subr.mxu0 0.0
        %229 = vmatpush1.msra.mxu0 0.0
        %230 = vmatprep.subr.mxu0 0.0
        %231 = vmatpush1.msra.mxu0 0.0
        %232 = vmatprep.subr.mxu0 0.0
        %233 = vmatpush1.msra.mxu0 0.0
        %234 = vmatprep.subr.mxu0 0.0
        %235 = vmatpush1.msra.mxu0 0.0
        %236 = vmatprep.subr.mxu0 0.0
        %237 = vmatpush1.msra.mxu0 0.0
        %238 = vmatprep.subr.mxu0 0.0
        %239 = vmatpush1.msra.mxu0 0.0
        %240 = vmatprep.subr.mxu0 0.0
        %241 = vmatpush1.msra.mxu0 0.0
        %242 = vmatprep.subr.mxu0 0.0
        %243 = vmatpush1.msra.mxu0 0.0
        %244 = vmatprep.subr.mxu0 0.0
        %245 = vmatpush1.msra.mxu0 0.0
        %246 = vmatprep.subr.mxu0 0.0
        %247 = vmatpush1.msra.mxu0 0.0
        %248 = vmatprep.subr.mxu0 0.0
        %249 = vmatpush1.msra.mxu0 0.0
        %250 = vmatprep.subr.mxu0 0.0
        %251 = vmatpush1.msra.mxu0 0.0
        %252 = vmatprep.subr.mxu0 0.0
        %253 = vmatpush1.msra.mxu0 0.0
        %254 = vmatprep.subr.mxu0 0.0
        %255 = vmatpush1.msra.mxu0 0.0
        %256 = vmatprep.subr.mxu0 0.0
        %257 = vmatpush1.msra.mxu0 0.0
        %258 = vmatprep.subr.mxu0 0.0
        %259 = vmatpush1.msra.mxu0 0.0
        %260 = vmatprep.subr.mxu0 0.0
        %261 = vmatpush1.msra.mxu0 0.0
        %262 = vmatprep.subr.mxu0 0.0
        %263 = vmatpush1.msra.mxu0 0.0
        %264 = vmatprep.subr.mxu0 0.0
        %265 = vmatpush1.msra.mxu0 0.0
        %266 = vmatprep.subr.mxu0 0.0
        %267 = vmatpush1.msra.mxu0 0.0
        %268 = vmatprep.subr.mxu0 0.0
        %269 = vmatpush1.msra.mxu0 0.0
        %270 = vmatprep.subr.mxu0 0.0
        %271 = vmatpush1.msra.mxu0 0.0
        %272 = vmatprep.subr.mxu0 0.0
        %273 = vmatpush1.msra.mxu0 0.0
        %274 = vmatprep.mubr.f32.mxu0 0.0
        %275 = vmatmul.mubr.f32.gmra.mrb[0].mxu0 %v208
        %v276 = vpop.f32.mrb[0].mxu0
        %v277 = vadd.f32 0.0, %v276
        %v278 = vpop.f32.mrb[0].mxu0
        %v279 = vadd.f32 0.0, %v278
        %280 = vdwg.mxu0
        %281 = vmatprep.subr.mxu0 0.0
        %282 = vmatpush1.msra.mxu0 %v202
        %283 = vmatprep.subr.mxu0 0.0
        %284 = vmatpush1.msra.mxu0 0.0
        %285 = vmatprep.subr.mxu0 0.0
        %286 = vmatpush1.msra.mxu0 0.0
        %287 = vmatprep.subr.mxu0 0.0
        %288 = vmatpush1.msra.mxu0 0.0
        %289 = vmatprep.subr.mxu0 0.0
        %290 = vmatpush1.msra.mxu0 0.0
        %291 = vmatprep.subr.mxu0 0.0
        %292 = vmatpush1.msra.mxu0 0.0
        %293 = vmatprep.subr.mxu0 0.0
        %294 = vmatpush1.msra.mxu0 0.0
        %295 = vmatprep.subr.mxu0 0.0
        %296 = vmatpush1.msra.mxu0 0.0
        %297 = vmatprep.subr.mxu0 0.0
        %298 = vmatpush1.msra.mxu0 0.0
        %299 = vmatprep.subr.mxu0 0.0
        %300 = vmatpush1.msra.mxu0 0.0
        %301 = vmatprep.subr.mxu0 0.0
        %302 = vmatpush1.msra.mxu0 0.0
        %303 = vmatprep.subr.mxu0 0.0
        %304 = vmatpush1.msra.mxu0 0.0
        %305 = vmatprep.subr.mxu0 0.0
        %306 = vmatpush1.msra.mxu0 0.0
        %307 = vmatprep.subr.mxu0 0.0
        %308 = vmatpush1.msra.mxu0 0.0
        %309 = vmatprep.subr.mxu0 0.0
        %310 = vmatpush1.msra.mxu0 0.0
        %311 = vmatprep.subr.mxu0 0.0
        %312 = vmatpush1.msra.mxu0 0.0
        %313 = vmatprep.subr.mxu0 0.0
        %314 = vmatpush1.msra.mxu0 0.0
        %315 = vmatprep.subr.mxu0 0.0
        %316 = vmatpush1.msra.mxu0 0.0
        %317 = vmatprep.subr.mxu0 0.0
        %318 = vmatpush1.msra.mxu0 0.0
        %319 = vmatprep.subr.mxu0 0.0
        %320 = vmatpush1.msra.mxu0 0.0
        %321 = vmatprep.subr.mxu0 0.0
        %322 = vmatpush1.msra.mxu0 0.0
        %323 = vmatprep.subr.mxu0 0.0
        %324 = vmatpush1.msra.mxu0 0.0
        %325 = vmatprep.subr.mxu0 0.0
        %326 = vmatpush1.msra.mxu0 0.0
        %327 = vmatprep.subr.mxu0 0.0
        %328 = vmatpush1.msra.mxu0 0.0
        %329 = vmatprep.subr.mxu0 0.0
        %330 = vmatpush1.msra.mxu0 0.0
        %331 = vmatprep.subr.mxu0 0.0
        %332 = vmatpush1.msra.mxu0 0.0
        %333 = vmatprep.subr.mxu0 0.0
        %334 = vmatpush1.msra.mxu0 0.0
        %335 = vmatprep.subr.mxu0 0.0
        %336 = vmatpush1.msra.mxu0 0.0
        %337 = vmatprep.subr.mxu0 0.0
        %338 = vmatpush1.msra.mxu0 0.0
        %339 = vmatprep.subr.mxu0 0.0
        %340 = vmatpush1.msra.mxu0 0.0
        %341 = vmatprep.subr.mxu0 0.0
        %342 = vmatpush1.msra.mxu0 0.0
        %343 = vmatprep.subr.mxu0 0.0
        %344 = vmatpush1.msra.mxu0 0.0
        %345 = vmatprep.mubr.f32.mxu0 0.0
        %346 = vmatmul.mubr.f32.gmra.mrb[0].mxu0 %v208
        %v347 = vpop.f32.mrb[0].mxu0
        %v348 = vadd.f32 0.0, %v347
        %v349 = vpop.f32.mrb[0].mxu0
        %350 = vdwg.mxu0
        %v351 = vadd.f32 %v179, %v277
        %v352 = vadd.f32 %v180, %v279
        %v353 = vadd.f32 %v181, %v348
        %354 = vst [vmem:[#allocation2] sm:$0xff] %v351
        %355 = vst [vmem:[#allocation2 + $0x8] sm:$0xff] %v352
        %356 = vst.msk [vmem:[#allocation2 + $0x10] sm:$0xff] %vm177, %v353
        %v357 = vld [vmem:[#allocation2] sm:$0xff]
        %v358 = vld [vmem:[#allocation2 + $0x8] sm:$0xff]
        %v359 = vld [vmem:[#allocation2 + $0x10] sm:$0xff]
        %s360 = scalar_lea.vmem %s1, 8
        %v361 = vld [vmem:[%s360] sm:$0xff]
        %v362 = vld [vmem:[%s168] sm:$0xff]
        %v363 = vld [vmem:[%s168 + $0x8] sm:$0xff]
        %v364 = vld [vmem:[%s168 + $0x10] sm:$0xff]
        %v365 = vld [vmem:[%s168 + $0x18] sm:$0xff]
        %370 = vrot.lane.b32.xlu0 %v362, 81
        %v371 = vpop.permute.xlu0 %370
        %372 = vrot.lane.b32.xlu0 %v363, 81
        %v373 = vpop.permute.xlu0 %372
        %374 = vrot.lane.b32.xlu0 %v364, 81
        %v375 = vpop.permute.xlu0 %374
        %376 = vrot.lane.b32.xlu0 %v365, 81
        %v377 = vpop.permute.xlu0 %376
        %vm378 = vcmask 662528
        %v379 = vsel %vm378, %v371, %v373
        %v380 = vsel %vm378, %v373, %v375
        %v381 = vsel %vm378, %v375, %v377
        %v386 = vsel %vm206, %v361, 0
        %388 = vmatprep.subr.mxu0 %v380
        %389 = vmatpush1.msra.mxu0 %v379
        %390 = vmatprep.subr.mxu0 0.0
        %391 = vmatpush1.msra.mxu0 0.0
        %392 = vmatprep.subr.mxu0 0.0
        %393 = vmatpush1.msra.mxu0 0.0
        %394 = vmatprep.subr.mxu0 0.0
        %395 = vmatpush1.msra.mxu0 0.0
        %396 = vmatprep.subr.mxu0 0.0
        %397 = vmatpush1.msra.mxu0 0.0
        %398 = vmatprep.subr.mxu0 0.0
        %399 = vmatpush1.msra.mxu0 0.0
        %400 = vmatprep.subr.mxu0 0.0
        %401 = vmatpush1.msra.mxu0 0.0
        %402 = vmatprep.subr.mxu0 0.0
        %403 = vmatpush1.msra.mxu0 0.0
        %404 = vmatprep.subr.mxu0 0.0
        %405 = vmatpush1.msra.mxu0 0.0
        %406 = vmatprep.subr.mxu0 0.0
        %407 = vmatpush1.msra.mxu0 0.0
        %408 = vmatprep.subr.mxu0 0.0
        %409 = vmatpush1.msra.mxu0 0.0
        %410 = vmatprep.subr.mxu0 0.0
        %411 = vmatpush1.msra.mxu0 0.0
        %412 = vmatprep.subr.mxu0 0.0
        %413 = vmatpush1.msra.mxu0 0.0
        %414 = vmatprep.subr.mxu0 0.0
        %415 = vmatpush1.msra.mxu0 0.0
        %416 = vmatprep.subr.mxu0 0.0
        %417 = vmatpush1.msra.mxu0 0.0
        %418 = vmatprep.subr.mxu0 0.0
        %419 = vmatpush1.msra.mxu0 0.0
        %420 = vmatprep.subr.mxu0 0.0
        %421 = vmatpush1.msra.mxu0 0.0
        %422 = vmatprep.subr.mxu0 0.0
        %423 = vmatpush1.msra.mxu0 0.0
        %424 = vmatprep.subr.mxu0 0.0
        %425 = vmatpush1.msra.mxu0 0.0
        %426 = vmatprep.subr.mxu0 0.0
        %427 = vmatpush1.msra.mxu0 0.0
        %428 = vmatprep.subr.mxu0 0.0
        %429 = vmatpush1.msra.mxu0 0.0
        %430 = vmatprep.subr.mxu0 0.0
        %431 = vmatpush1.msra.mxu0 0.0
        %432 = vmatprep.subr.mxu0 0.0
        %433 = vmatpush1.msra.mxu0 0.0
        %434 = vmatprep.subr.mxu0 0.0
        %435 = vmatpush1.msra.mxu0 0.0
        %436 = vmatprep.subr.mxu0 0.0
        %437 = vmatpush1.msra.mxu0 0.0
        %438 = vmatprep.subr.mxu0 0.0
        %439 = vmatpush1.msra.mxu0 0.0
        %440 = vmatprep.subr.mxu0 0.0
        %441 = vmatpush1.msra.mxu0 0.0
        %442 = vmatprep.subr.mxu0 0.0
        %443 = vmatpush1.msra.mxu0 0.0
        %444 = vmatprep.subr.mxu0 0.0
        %445 = vmatpush1.msra.mxu0 0.0
        %446 = vmatprep.subr.mxu0 0.0
        %447 = vmatpush1.msra.mxu0 0.0
        %448 = vmatprep.subr.mxu0 0.0
        %449 = vmatpush1.msra.mxu0 0.0
        %450 = vmatprep.subr.mxu0 0.0
        %451 = vmatpush1.msra.mxu0 0.0
        %452 = vmatprep.mubr.f32.mxu0 0.0
        %453 = vmatmul.mubr.f32.gmra.mrb[0].mxu0 %v386
        %v454 = vpop.f32.mrb[0].mxu0
        %v455 = vadd.f32 0.0, %v454
        %v456 = vpop.f32.mrb[0].mxu0
        %v457 = vadd.f32 0.0, %v456
        %458 = vdwg.mxu0
        %459 = vmatprep.subr.mxu0 0.0
        %460 = vmatpush1.msra.mxu0 %v381
        %461 = vmatprep.subr.mxu0 0.0
        %462 = vmatpush1.msra.mxu0 0.0
        %463 = vmatprep.subr.mxu0 0.0
        %464 = vmatpush1.msra.mxu0 0.0
        %465 = vmatprep.subr.mxu0 0.0
        %466 = vmatpush1.msra.mxu0 0.0
        %467 = vmatprep.subr.mxu0 0.0
        %468 = vmatpush1.msra.mxu0 0.0
        %469 = vmatprep.subr.mxu0 0.0
        %470 = vmatpush1.msra.mxu0 0.0
        %471 = vmatprep.subr.mxu0 0.0
        %472 = vmatpush1.msra.mxu0 0.0
        %473 = vmatprep.subr.mxu0 0.0
        %474 = vmatpush1.msra.mxu0 0.0
        %475 = vmatprep.subr.mxu0 0.0
        %476 = vmatpush1.msra.mxu0 0.0
        %477 = vmatprep.subr.mxu0 0.0
        %478 = vmatpush1.msra.mxu0 0.0
        %479 = vmatprep.subr.mxu0 0.0
        %480 = vmatpush1.msra.mxu0 0.0
        %481 = vmatprep.subr.mxu0 0.0
        %482 = vmatpush1.msra.mxu0 0.0
        %483 = vmatprep.subr.mxu0 0.0
        %484 = vmatpush1.msra.mxu0 0.0
        %485 = vmatprep.subr.mxu0 0.0
        %486 = vmatpush1.msra.mxu0 0.0
        %487 = vmatprep.subr.mxu0 0.0
        %488 = vmatpush1.msra.mxu0 0.0
        %489 = vmatprep.subr.mxu0 0.0
        %490 = vmatpush1.msra.mxu0 0.0
        %491 = vmatprep.subr.mxu0 0.0
        %492 = vmatpush1.msra.mxu0 0.0
        %493 = vmatprep.subr.mxu0 0.0
        %494 = vmatpush1.msra.mxu0 0.0
        %495 = vmatprep.subr.mxu0 0.0
        %496 = vmatpush1.msra.mxu0 0.0
        %497 = vmatprep.subr.mxu0 0.0
        %498 = vmatpush1.msra.mxu0 0.0
        %499 = vmatprep.subr.mxu0 0.0
        %500 = vmatpush1.msra.mxu0 0.0
        %501 = vmatprep.subr.mxu0 0.0
        %502 = vmatpush1.msra.mxu0 0.0
        %503 = vmatprep.subr.mxu0 0.0
        %504 = vmatpush1.msra.mxu0 0.0
        %505 = vmatprep.subr.mxu0 0.0
        %506 = vmatpush1.msra.mxu0 0.0
        %507 = vmatprep.subr.mxu0 0.0
        %508 = vmatpush1.msra.mxu0 0.0
        %509 = vmatprep.subr.mxu0 0.0
        %510 = vmatpush1.msra.mxu0 0.0
        %511 = vmatprep.subr.mxu0 0.0
        %512 = vmatpush1.msra.mxu0 0.0
        %513 = vmatprep.subr.mxu0 0.0
        %514 = vmatpush1.msra.mxu0 0.0
        %515 = vmatprep.subr.mxu0 0.0
        %516 = vmatpush1.msra.mxu0 0.0
        %517 = vmatprep.subr.mxu0 0.0
        %518 = vmatpush1.msra.mxu0 0.0
        %519 = vmatprep.subr.mxu0 0.0
        %520 = vmatpush1.msra.mxu0 0.0
        %521 = vmatprep.subr.mxu0 0.0
        %522 = vmatpush1.msra.mxu0 0.0
        %523 = vmatprep.mubr.f32.mxu0 0.0
        %524 = vmatmul.mubr.f32.gmra.mrb[0].mxu0 %v386
        %v525 = vpop.f32.mrb[0].mxu0
        %v526 = vadd.f32 0.0, %v525
        %v527 = vpop.f32.mrb[0].mxu0
        %528 = vdwg.mxu0
        %v529 = vadd.f32 %v357, %v455
        %v530 = vadd.f32 %v358, %v457
        %v531 = vadd.f32 %v359, %v526
        %532 = vst [vmem:[#allocation2] sm:$0xff] %v529
        %533 = vst [vmem:[#allocation2 + $0x8] sm:$0xff] %v530
        %534 = vst.msk [vmem:[#allocation2 + $0x10] sm:$0xff] %vm177, %v531
        %v535 = vld [vmem:[#allocation2] sm:$0xff]
        %v536 = vld [vmem:[#allocation2 + $0x8] sm:$0xff]
        %v537 = vld [vmem:[#allocation2 + $0x10] sm:$0xff]
        %s538 = scalar_lea.vmem %s1, 16
        %v539 = vld [vmem:[%s538] sm:$0xff]
        %v540 = vld [vmem:[%s168] sm:$0xff]
        %v541 = vld [vmem:[%s168 + $0x8] sm:$0xff]
        %v542 = vld [vmem:[%s168 + $0x10] sm:$0xff]
        %v543 = vld [vmem:[%s168 + $0x18] sm:$0xff]
        %548 = vrot.lane.b32.xlu0 %v540, 80
        %v549 = vpop.permute.xlu0 %548
        %550 = vrot.lane.b32.xlu0 %v541, 80
        %v551 = vpop.permute.xlu0 %550
        %552 = vrot.lane.b32.xlu0 %v542, 80
        %v553 = vpop.permute.xlu0 %552
        %554 = vrot.lane.b32.xlu0 %v543, 80
        %v555 = vpop.permute.xlu0 %554
        %vm556 = vcmask 654336
        %v557 = vsel %vm556, %v549, %v551
        %v558 = vsel %vm556, %v551, %v553
        %v559 = vsel %vm556, %v553, %v555
        %v564 = vsel %vm206, %v539, 0
        %566 = vmatprep.subr.mxu0 %v558
        %567 = vmatpush1.msra.mxu0 %v557
        %568 = vmatprep.subr.mxu0 0.0
        %569 = vmatpush1.msra.mxu0 0.0
        %570 = vmatprep.subr.mxu0 0.0
        %571 = vmatpush1.msra.mxu0 0.0
        %572 = vmatprep.subr.mxu0 0.0
        %573 = vmatpush1.msra.mxu0 0.0
        %574 = vmatprep.subr.mxu0 0.0
        %575 = vmatpush1.msra.mxu0 0.0
        %576 = vmatprep.subr.mxu0 0.0
        %577 = vmatpush1.msra.mxu0 0.0
        %578 = vmatprep.subr.mxu0 0.0
        %579 = vmatpush1.msra.mxu0 0.0
        %580 = vmatprep.subr.mxu0 0.0
        %581 = vmatpush1.msra.mxu0 0.0
        %582 = vmatprep.subr.mxu0 0.0
        %583 = vmatpush1.msra.mxu0 0.0
        %584 = vmatprep.subr.mxu0 0.0
        %585 = vmatpush1.msra.mxu0 0.0
        %586 = vmatprep.subr.mxu0 0.0
        %587 = vmatpush1.msra.mxu0 0.0
        %588 = vmatprep.subr.mxu0 0.0
        %589 = vmatpush1.msra.mxu0 0.0
        %590 = vmatprep.subr.mxu0 0.0
        %591 = vmatpush1.msra.mxu0 0.0
        %592 = vmatprep.subr.mxu0 0.0
        %593 = vmatpush1.msra.mxu0 0.0
        %594 = vmatprep.subr.mxu0 0.0
        %595 = vmatpush1.msra.mxu0 0.0
        %596 = vmatprep.subr.mxu0 0.0
        %597 = vmatpush1.msra.mxu0 0.0
        %598 = vmatprep.subr.mxu0 0.0
        %599 = vmatpush1.msra.mxu0 0.0
        %600 = vmatprep.subr.mxu0 0.0
        %601 = vmatpush1.msra.mxu0 0.0
        %602 = vmatprep.subr.mxu0 0.0
        %603 = vmatpush1.msra.mxu0 0.0
        %604 = vmatprep.subr.mxu0 0.0
        %605 = vmatpush1.msra.mxu0 0.0
        %606 = vmatprep.subr.mxu0 0.0
        %607 = vmatpush1.msra.mxu0 0.0
        %608 = vmatprep.subr.mxu0 0.0
        %609 = vmatpush1.msra.mxu0 0.0
        %610 = vmatprep.subr.mxu0 0.0
        %611 = vmatpush1.msra.mxu0 0.0
        %612 = vmatprep.subr.mxu0 0.0
        %613 = vmatpush1.msra.mxu0 0.0
        %614 = vmatprep.subr.mxu0 0.0
        %615 = vmatpush1.msra.mxu0 0.0
        %616 = vmatprep.subr.mxu0 0.0
        %617 = vmatpush1.msra.mxu0 0.0
        %618 = vmatprep.subr.mxu0 0.0
        %619 = vmatpush1.msra.mxu0 0.0
        %620 = vmatprep.subr.mxu0 0.0
        %621 = vmatpush1.msra.mxu0 0.0
        %622 = vmatprep.subr.mxu0 0.0
        %623 = vmatpush1.msra.mxu0 0.0
        %624 = vmatprep.subr.mxu0 0.0
        %625 = vmatpush1.msra.mxu0 0.0
        %626 = vmatprep.subr.mxu0 0.0
        %627 = vmatpush1.msra.mxu0 0.0
        %628 = vmatprep.subr.mxu0 0.0
        %629 = vmatpush1.msra.mxu0 0.0
        %630 = vmatprep.mubr.f32.mxu0 0.0
        %631 = vmatmul.mubr.f32.gmra.mrb[0].mxu0 %v564
        %v632 = vpop.f32.mrb[0].mxu0
        %v633 = vadd.f32 0.0, %v632
        %v634 = vpop.f32.mrb[0].mxu0
        %v635 = vadd.f32 0.0, %v634
        %636 = vdwg.mxu0
        %637 = vmatprep.subr.mxu0 0.0
        %638 = vmatpush1.msra.mxu0 %v559
        %639 = vmatprep.subr.mxu0 0.0
        %640 = vmatpush1.msra.mxu0 0.0
        %641 = vmatprep.subr.mxu0 0.0
        %642 = vmatpush1.msra.mxu0 0.0
        %643 = vmatprep.subr.mxu0 0.0
        %644 = vmatpush1.msra.mxu0 0.0
        %645 = vmatprep.subr.mxu0 0.0
        %646 = vmatpush1.msra.mxu0 0.0
        %647 = vmatprep.subr.mxu0 0.0
        %648 = vmatpush1.msra.mxu0 0.0
        %649 = vmatprep.subr.mxu0 0.0
        %650 = vmatpush1.msra.mxu0 0.0
        %651 = vmatprep.subr.mxu0 0.0
        %652 = vmatpush1.msra.mxu0 0.0
        %653 = vmatprep.subr.mxu0 0.0
        %654 = vmatpush1.msra.mxu0 0.0
        %655 = vmatprep.subr.mxu0 0.0
        %656 = vmatpush1.msra.mxu0 0.0
        %657 = vmatprep.subr.mxu0 0.0
        %658 = vmatpush1.msra.mxu0 0.0
        %659 = vmatprep.subr.mxu0 0.0
        %660 = vmatpush1.msra.mxu0 0.0
        %661 = vmatprep.subr.mxu0 0.0
        %662 = vmatpush1.msra.mxu0 0.0
        %663 = vmatprep.subr.mxu0 0.0
        %664 = vmatpush1.msra.mxu0 0.0
        %665 = vmatprep.subr.mxu0 0.0
        %666 = vmatpush1.msra.mxu0 0.0
        %667 = vmatprep.subr.mxu0 0.0
        %668 = vmatpush1.msra.mxu0 0.0
        %669 = vmatprep.subr.mxu0 0.0
        %670 = vmatpush1.msra.mxu0 0.0
        %671 = vmatprep.subr.mxu0 0.0
        %672 = vmatpush1.msra.mxu0 0.0
        %673 = vmatprep.subr.mxu0 0.0
        %674 = vmatpush1.msra.mxu0 0.0
        %675 = vmatprep.subr.mxu0 0.0
        %676 = vmatpush1.msra.mxu0 0.0
        %677 = vmatprep.subr.mxu0 0.0
        %678 = vmatpush1.msra.mxu0 0.0
        %679 = vmatprep.subr.mxu0 0.0
        %680 = vmatpush1.msra.mxu0 0.0
        %681 = vmatprep.subr.mxu0 0.0
        %682 = vmatpush1.msra.mxu0 0.0
        %683 = vmatprep.subr.mxu0 0.0
        %684 = vmatpush1.msra.mxu0 0.0
        %685 = vmatprep.subr.mxu0 0.0
        %686 = vmatpush1.msra.mxu0 0.0
        %687 = vmatprep.subr.mxu0 0.0
        %688 = vmatpush1.msra.mxu0 0.0
        %689 = vmatprep.subr.mxu0 0.0
        %690 = vmatpush1.msra.mxu0 0.0
        %691 = vmatprep.subr.mxu0 0.0
        %692 = vmatpush1.msra.mxu0 0.0
        %693 = vmatprep.subr.mxu0 0.0
        %694 = vmatpush1.msra.mxu0 0.0
        %695 = vmatprep.subr.mxu0 0.0
        %696 = vmatpush1.msra.mxu0 0.0
        %697 = vmatprep.subr.mxu0 0.0
        %698 = vmatpush1.msra.mxu0 0.0
        %699 = vmatprep.subr.mxu0 0.0
        %700 = vmatpush1.msra.mxu0 0.0
        %701 = vmatprep.mubr.f32.mxu0 0.0
        %702 = vmatmul.mubr.f32.gmra.mrb[0].mxu0 %v564
        %v703 = vpop.f32.mrb[0].mxu0
        %v704 = vadd.f32 0.0, %v703
        %v705 = vpop.f32.mrb[0].mxu0
        %706 = vdwg.mxu0
        %v707 = vadd.f32 %v535, %v633
        %v708 = vadd.f32 %v536, %v635
        %v709 = vadd.f32 %v537, %v704
        %710 = vst [vmem:[#allocation2] sm:$0xff] %v707
        %711 = vst [vmem:[#allocation2 + $0x8] sm:$0xff] %v708
        %712 = vst.msk [vmem:[#allocation2 + $0x10] sm:$0xff] %vm177, %v709
        %v713 = vld [vmem:[#allocation2] sm:$0xff]
        %v714 = vld [vmem:[#allocation2 + $0x8] sm:$0xff]
        %v715 = vld [vmem:[#allocation2 + $0x10] sm:$0xff]
        %s716 = scalar_lea.vmem %s1, 24
        %v717 = vld [vmem:[%s716] sm:$0xff]
        %v718 = vld [vmem:[%s168] sm:$0xff]
        %v719 = vld [vmem:[%s168 + $0x8] sm:$0xff]
        %v720 = vld [vmem:[%s168 + $0x10] sm:$0xff]
        %v721 = vld [vmem:[%s168 + $0x18] sm:$0xff]
        %726 = vrot.lane.b32.xlu0 %v718, 60
        %v727 = vpop.permute.xlu0 %726
        %728 = vrot.lane.b32.xlu0 %v719, 60
        %v729 = vpop.permute.xlu0 %728
        %730 = vrot.lane.b32.xlu0 %v720, 60
        %v731 = vpop.permute.xlu0 %730
        %732 = vrot.lane.b32.xlu0 %v721, 60
        %v733 = vpop.permute.xlu0 %732
        %vm734 = vcmask 490496
        %v735 = vsel %vm734, %v727, %v729
        %v736 = vsel %vm734, %v729, %v731
        %v737 = vsel %vm734, %v731, %v733
        %v742 = vsel %vm206, %v717, 0
        %744 = vmatprep.subr.mxu0 %v736
        %745 = vmatpush1.msra.mxu0 %v735
        %746 = vmatprep.subr.mxu0 0.0
        %747 = vmatpush1.msra.mxu0 0.0
        %748 = vmatprep.subr.mxu0 0.0
        %749 = vmatpush1.msra.mxu0 0.0
        %750 = vmatprep.subr.mxu0 0.0
        %751 = vmatpush1.msra.mxu0 0.0
        %752 = vmatprep.subr.mxu0 0.0
        %753 = vmatpush1.msra.mxu0 0.0
        %754 = vmatprep.subr.mxu0 0.0
        %755 = vmatpush1.msra.mxu0 0.0
        %756 = vmatprep.subr.mxu0 0.0
        %757 = vmatpush1.msra.mxu0 0.0
        %758 = vmatprep.subr.mxu0 0.0
        %759 = vmatpush1.msra.mxu0 0.0
        %760 = vmatprep.subr.mxu0 0.0
        %761 = vmatpush1.msra.mxu0 0.0
        %762 = vmatprep.subr.mxu0 0.0
        %763 = vmatpush1.msra.mxu0 0.0
        %764 = vmatprep.subr.mxu0 0.0
        %765 = vmatpush1.msra.mxu0 0.0
        %766 = vmatprep.subr.mxu0 0.0
        %767 = vmatpush1.msra.mxu0 0.0
        %768 = vmatprep.subr.mxu0 0.0
        %769 = vmatpush1.msra.mxu0 0.0
        %770 = vmatprep.subr.mxu0 0.0
        %771 = vmatpush1.msra.mxu0 0.0
        %772 = vmatprep.subr.mxu0 0.0
        %773 = vmatpush1.msra.mxu0 0.0
        %774 = vmatprep.subr.mxu0 0.0
        %775 = vmatpush1.msra.mxu0 0.0
        %776 = vmatprep.subr.mxu0 0.0
        %777 = vmatpush1.msra.mxu0 0.0
        %778 = vmatprep.subr.mxu0 0.0
        %779 = vmatpush1.msra.mxu0 0.0
        %780 = vmatprep.subr.mxu0 0.0
        %781 = vmatpush1.msra.mxu0 0.0
        %782 = vmatprep.subr.mxu0 0.0
        %783 = vmatpush1.msra.mxu0 0.0
        %784 = vmatprep.subr.mxu0 0.0
        %785 = vmatpush1.msra.mxu0 0.0
        %786 = vmatprep.subr.mxu0 0.0
        %787 = vmatpush1.msra.mxu0 0.0
        %788 = vmatprep.subr.mxu0 0.0
        %789 = vmatpush1.msra.mxu0 0.0
        %790 = vmatprep.subr.mxu0 0.0
        %791 = vmatpush1.msra.mxu0 0.0
        %792 = vmatprep.subr.mxu0 0.0
        %793 = vmatpush1.msra.mxu0 0.0
        %794 = vmatprep.subr.mxu0 0.0
        %795 = vmatpush1.msra.mxu0 0.0
        %796 = vmatprep.subr.mxu0 0.0
        %797 = vmatpush1.msra.mxu0 0.0
        %798 = vmatprep.subr.mxu0 0.0
        %799 = vmatpush1.msra.mxu0 0.0
        %800 = vmatprep.subr.mxu0 0.0
        %801 = vmatpush1.msra.mxu0 0.0
        %802 = vmatprep.subr.mxu0 0.0
        %803 = vmatpush1.msra.mxu0 0.0
        %804 = vmatprep.subr.mxu0 0.0
        %805 = vmatpush1.msra.mxu0 0.0
        %806 = vmatprep.subr.mxu0 0.0
        %807 = vmatpush1.msra.mxu0 0.0
        %808 = vmatprep.mubr.f32.mxu0 0.0
        %809 = vmatmul.mubr.f32.gmra.mrb[0].mxu0 %v742
        %v810 = vpop.f32.mrb[0].mxu0
        %v811 = vadd.f32 0.0, %v810
        %v812 = vpop.f32.mrb[0].mxu0
        %v813 = vadd.f32 0.0, %v812
        %814 = vdwg.mxu0
        %815 = vmatprep.subr.mxu0 0.0
        %816 = vmatpush1.msra.mxu0 %v737
        %817 = vmatprep.subr.mxu0 0.0
        %818 = vmatpush1.msra.mxu0 0.0
        %819 = vmatprep.subr.mxu0 0.0
        %820 = vmatpush1.msra.mxu0 0.0
        %821 = vmatprep.subr.mxu0 0.0
        %822 = vmatpush1.msra.mxu0 0.0
        %823 = vmatprep.subr.mxu0 0.0
        %824 = vmatpush1.msra.mxu0 0.0
        %825 = vmatprep.subr.mxu0 0.0
        %826 = vmatpush1.msra.mxu0 0.0
        %827 = vmatprep.subr.mxu0 0.0
        %828 = vmatpush1.msra.mxu0 0.0
        %829 = vmatprep.subr.mxu0 0.0
        %830 = vmatpush1.msra.mxu0 0.0
        %831 = vmatprep.subr.mxu0 0.0
        %832 = vmatpush1.msra.mxu0 0.0
        %833 = vmatprep.subr.mxu0 0.0
        %834 = vmatpush1.msra.mxu0 0.0
        %835 = vmatprep.subr.mxu0 0.0
        %836 = vmatpush1.msra.mxu0 0.0
        %837 = vmatprep.subr.mxu0 0.0
        %838 = vmatpush1.msra.mxu0 0.0
        %839 = vmatprep.subr.mxu0 0.0
        %840 = vmatpush1.msra.mxu0 0.0
        %841 = vmatprep.subr.mxu0 0.0
        %842 = vmatpush1.msra.mxu0 0.0
        %843 = vmatprep.subr.mxu0 0.0
        %844 = vmatpush1.msra.mxu0 0.0
        %845 = vmatprep.subr.mxu0 0.0
        %846 = vmatpush1.msra.mxu0 0.0
        %847 = vmatprep.subr.mxu0 0.0
        %848 = vmatpush1.msra.mxu0 0.0
        %849 = vmatprep.subr.mxu0 0.0
        %850 = vmatpush1.msra.mxu0 0.0
        %851 = vmatprep.subr.mxu0 0.0
        %852 = vmatpush1.msra.mxu0 0.0
        %853 = vmatprep.subr.mxu0 0.0
        %854 = vmatpush1.msra.mxu0 0.0
        %855 = vmatprep.subr.mxu0 0.0
        %856 = vmatpush1.msra.mxu0 0.0
        %857 = vmatprep.subr.mxu0 0.0
        %858 = vmatpush1.msra.mxu0 0.0
        %859 = vmatprep.subr.mxu0 0.0
        %860 = vmatpush1.msra.mxu0 0.0
        %861 = vmatprep.subr.mxu0 0.0
        %862 = vmatpush1.msra.mxu0 0.0
        %863 = vmatprep.subr.mxu0 0.0
        %864 = vmatpush1.msra.mxu0 0.0
        %865 = vmatprep.subr.mxu0 0.0
        %866 = vmatpush1.msra.mxu0 0.0
        %867 = vmatprep.subr.mxu0 0.0
        %868 = vmatpush1.msra.mxu0 0.0
        %869 = vmatprep.subr.mxu0 0.0
        %870 = vmatpush1.msra.mxu0 0.0
        %871 = vmatprep.subr.mxu0 0.0
        %872 = vmatpush1.msra.mxu0 0.0
        %873 = vmatprep.subr.mxu0 0.0
        %874 = vmatpush1.msra.mxu0 0.0
        %875 = vmatprep.subr.mxu0 0.0
        %876 = vmatpush1.msra.mxu0 0.0
        %877 = vmatprep.subr.mxu0 0.0
        %878 = vmatpush1.msra.mxu0 0.0
        %879 = vmatprep.mubr.f32.mxu0 0.0
        %880 = vmatmul.mubr.f32.gmra.mrb[0].mxu0 %v742
        %v881 = vpop.f32.mrb[0].mxu0
        %v882 = vadd.f32 0.0, %v881
        %v883 = vpop.f32.mrb[0].mxu0
        %884 = vdwg.mxu0
        %v885 = vadd.f32 %v713, %v811
        %v886 = vadd.f32 %v714, %v813
        %v887 = vadd.f32 %v715, %v882
        %888 = vst [vmem:[#allocation2] sm:$0xff] %v885
        %889 = vst [vmem:[#allocation2 + $0x8] sm:$0xff] %v886
        %890 = vst.msk [vmem:[#allocation2 + $0x10] sm:$0xff] %vm177, %v887
        %v891 = vld [vmem:[#allocation2] sm:$0xff]
        %v892 = vld [vmem:[#allocation2 + $0x8] sm:$0xff]
        %v893 = vld [vmem:[#allocation2 + $0x10] sm:$0xff]
        %s894 = scalar_lea.vmem %s1, 32
        %v895 = vld [vmem:[%s894] sm:$0xff]
        %v896 = vld [vmem:[%s168] sm:$0xff]
        %v897 = vld [vmem:[%s168 + $0x8] sm:$0xff]
        %v898 = vld [vmem:[%s168 + $0x10] sm:$0xff]
        %v899 = vld [vmem:[%s168 + $0x18] sm:$0xff]
        %904 = vrot.lane.b32.xlu0 %v896, 59
        %v905 = vpop.permute.xlu0 %904
        %906 = vrot.lane.b32.xlu0 %v897, 59
        %v907 = vpop.permute.xlu0 %906
        %908 = vrot.lane.b32.xlu0 %v898, 59
        %v909 = vpop.permute.xlu0 %908
        %910 = vrot.lane.b32.xlu0 %v899, 59
        %v911 = vpop.permute.xlu0 %910
        %vm912 = vcmask 482304
        %v913 = vsel %vm912, %v905, %v907
        %v914 = vsel %vm912, %v907, %v909
        %v915 = vsel %vm912, %v909, %v911
        %v920 = vsel %vm206, %v895, 0
        %922 = vmatprep.subr.mxu0 %v914
        %923 = vmatpush1.msra.mxu0 %v913
        %924 = vmatprep.subr.mxu0 0.0
        %925 = vmatpush1.msra.mxu0 0.0
        %926 = vmatprep.subr.mxu0 0.0
        %927 = vmatpush1.msra.mxu0 0.0
        %928 = vmatprep.subr.mxu0 0.0
        %929 = vmatpush1.msra.mxu0 0.0
        %930 = vmatprep.subr.mxu0 0.0
        %931 = vmatpush1.msra.mxu0 0.0
        %932 = vmatprep.subr.mxu0 0.0
        %933 = vmatpush1.msra.mxu0 0.0
        %934 = vmatprep.subr.mxu0 0.0
        %935 = vmatpush1.msra.mxu0 0.0
        %936 = vmatprep.subr.mxu0 0.0
        %937 = vmatpush1.msra.mxu0 0.0
        %938 = vmatprep.subr.mxu0 0.0
        %939 = vmatpush1.msra.mxu0 0.0
        %940 = vmatprep.subr.mxu0 0.0
        %941 = vmatpush1.msra.mxu0 0.0
        %942 = vmatprep.subr.mxu0 0.0
        %943 = vmatpush1.msra.mxu0 0.0
        %944 = vmatprep.subr.mxu0 0.0
        %945 = vmatpush1.msra.mxu0 0.0
        %946 = vmatprep.subr.mxu0 0.0
        %947 = vmatpush1.msra.mxu0 0.0
        %948 = vmatprep.subr.mxu0 0.0
        %949 = vmatpush1.msra.mxu0 0.0
        %950 = vmatprep.subr.mxu0 0.0
        %951 = vmatpush1.msra.mxu0 0.0
        %952 = vmatprep.subr.mxu0 0.0
        %953 = vmatpush1.msra.mxu0 0.0
        %954 = vmatprep.subr.mxu0 0.0
        %955 = vmatpush1.msra.mxu0 0.0
        %956 = vmatprep.subr.mxu0 0.0
        %957 = vmatpush1.msra.mxu0 0.0
        %958 = vmatprep.subr.mxu0 0.0
        %959 = vmatpush1.msra.mxu0 0.0
        %960 = vmatprep.subr.mxu0 0.0
        %961 = vmatpush1.msra.mxu0 0.0
        %962 = vmatprep.subr.mxu0 0.0
        %963 = vmatpush1.msra.mxu0 0.0
        %964 = vmatprep.subr.mxu0 0.0
        %965 = vmatpush1.msra.mxu0 0.0
        %966 = vmatprep.subr.mxu0 0.0
        %967 = vmatpush1.msra.mxu0 0.0
        %968 = vmatprep.subr.mxu0 0.0
        %969 = vmatpush1.msra.mxu0 0.0
        %970 = vmatprep.subr.mxu0 0.0
        %971 = vmatpush1.msra.mxu0 0.0
        %972 = vmatprep.subr.mxu0 0.0
        %973 = vmatpush1.msra.mxu0 0.0
        %974 = vmatprep.subr.mxu0 0.0
        %975 = vmatpush1.msra.mxu0 0.0
        %976 = vmatprep.subr.mxu0 0.0
        %977 = vmatpush1.msra.mxu0 0.0
        %978 = vmatprep.subr.mxu0 0.0
        %979 = vmatpush1.msra.mxu0 0.0
        %980 = vmatprep.subr.mxu0 0.0
        %981 = vmatpush1.msra.mxu0 0.0
        %982 = vmatprep.subr.mxu0 0.0
        %983 = vmatpush1.msra.mxu0 0.0
        %984 = vmatprep.subr.mxu0 0.0
        %985 = vmatpush1.msra.mxu0 0.0
        %986 = vmatprep.mubr.f32.mxu0 0.0
        %987 = vmatmul.mubr.f32.gmra.mrb[0].mxu0 %v920
        %v988 = vpop.f32.mrb[0].mxu0
        %v989 = vadd.f32 0.0, %v988
        %v990 = vpop.f32.mrb[0].mxu0
        %v991 = vadd.f32 0.0, %v990
        %992 = vdwg.mxu0
        %993 = vmatprep.subr.mxu0 0.0
        %994 = vmatpush1.msra.mxu0 %v915
        %995 = vmatprep.subr.mxu0 0.0
        %996 = vmatpush1.msra.mxu0 0.0
        %997 = vmatprep.subr.mxu0 0.0
        %998 = vmatpush1.msra.mxu0 0.0
        %999 = vmatprep.subr.mxu0 0.0
        %1000 = vmatpush1.msra.mxu0 0.0
        %1001 = vmatprep.subr.mxu0 0.0
        %1002 = vmatpush1.msra.mxu0 0.0
        %1003 = vmatprep.subr.mxu0 0.0
        %1004 = vmatpush1.msra.mxu0 0.0
        %1005 = vmatprep.subr.mxu0 0.0
        %1006 = vmatpush1.msra.mxu0 0.0
        %1007 = vmatprep.subr.mxu0 0.0
        %1008 = vmatpush1.msra.mxu0 0.0
        %1009 = vmatprep.subr.mxu0 0.0
        %1010 = vmatpush1.msra.mxu0 0.0
        %1011 = vmatprep.subr.mxu0 0.0
        %1012 = vmatpush1.msra.mxu0 0.0
        %1013 = vmatprep.subr.mxu0 0.0
        %1014 = vmatpush1.msra.mxu0 0.0
        %1015 = vmatprep.subr.mxu0 0.0
        %1016 = vmatpush1.msra.mxu0 0.0
        %1017 = vmatprep.subr.mxu0 0.0
        %1018 = vmatpush1.msra.mxu0 0.0
        %1019 = vmatprep.subr.mxu0 0.0
        %1020 = vmatpush1.msra.mxu0 0.0
        %1021 = vmatprep.subr.mxu0 0.0
        %1022 = vmatpush1.msra.mxu0 0.0
        %1023 = vmatprep.subr.mxu0 0.0
        %1024 = vmatpush1.msra.mxu0 0.0
        %1025 = vmatprep.subr.mxu0 0.0
        %1026 = vmatpush1.msra.mxu0 0.0
        %1027 = vmatprep.subr.mxu0 0.0
        %1028 = vmatpush1.msra.mxu0 0.0
        %1029 = vmatprep.subr.mxu0 0.0
        %1030 = vmatpush1.msra.mxu0 0.0
        %1031 = vmatprep.subr.mxu0 0.0
        %1032 = vmatpush1.msra.mxu0 0.0
        %1033 = vmatprep.subr.mxu0 0.0
        %1034 = vmatpush1.msra.mxu0 0.0
        %1035 = vmatprep.subr.mxu0 0.0
        %1036 = vmatpush1.msra.mxu0 0.0
        %1037 = vmatprep.subr.mxu0 0.0
        %1038 = vmatpush1.msra.mxu0 0.0
        %1039 = vmatprep.subr.mxu0 0.0
        %1040 = vmatpush1.msra.mxu0 0.0
        %1041 = vmatprep.subr.mxu0 0.0
        %1042 = vmatpush1.msra.mxu0 0.0
        %1043 = vmatprep.subr.mxu0 0.0
        %1044 = vmatpush1.msra.mxu0 0.0
        %1045 = vmatprep.subr.mxu0 0.0
        %1046 = vmatpush1.msra.mxu0 0.0
        %1047 = vmatprep.subr.mxu0 0.0
        %1048 = vmatpush1.msra.mxu0 0.0
        %1049 = vmatprep.subr.mxu0 0.0
        %1050 = vmatpush1.msra.mxu0 0.0
        %1051 = vmatprep.subr.mxu0 0.0
        %1052 = vmatpush1.msra.mxu0 0.0
        %1053 = vmatprep.subr.mxu0 0.0
        %1054 = vmatpush1.msra.mxu0 0.0
        %1055 = vmatprep.subr.mxu0 0.0
        %1056 = vmatpush1.msra.mxu0 0.0
        %1057 = vmatprep.mubr.f32.mxu0 0.0
        %1058 = vmatmul.mubr.f32.gmra.mrb[0].mxu0 %v920
        %v1059 = vpop.f32.mrb[0].mxu0
        %v1060 = vadd.f32 0.0, %v1059
        %v1061 = vpop.f32.mrb[0].mxu0
        %1062 = vdwg.mxu0
        %v1063 = vadd.f32 %v891, %v989
        %v1064 = vadd.f32 %v892, %v991
        %v1065 = vadd.f32 %v893, %v1060
        %1066 = vst [vmem:[#allocation2] sm:$0xff] %v1063
        %1067 = vst [vmem:[#allocation2 + $0x8] sm:$0xff] %v1064
        %1068 = vst.msk [vmem:[#allocation2 + $0x10] sm:$0xff] %vm177, %v1065
        %v1069 = vld [vmem:[#allocation2] sm:$0xff]
        %v1070 = vld [vmem:[#allocation2 + $0x8] sm:$0xff]
        %v1071 = vld [vmem:[#allocation2 + $0x10] sm:$0xff]
        %s1072 = scalar_lea.vmem %s1, 40
        %v1073 = vld [vmem:[%s1072] sm:$0xff]
        %v1074 = vld [vmem:[%s168] sm:$0xff]
        %v1075 = vld [vmem:[%s168 + $0x8] sm:$0xff]
        %v1076 = vld [vmem:[%s168 + $0x10] sm:$0xff]
        %v1077 = vld [vmem:[%s168 + $0x18] sm:$0xff]
        %1082 = vrot.lane.b32.xlu0 %v1074, 58
        %v1083 = vpop.permute.xlu0 %1082
        %1084 = vrot.lane.b32.xlu0 %v1075, 58
        %v1085 = vpop.permute.xlu0 %1084
        %1086 = vrot.lane.b32.xlu0 %v1076, 58
        %v1087 = vpop.permute.xlu0 %1086
        %1088 = vrot.lane.b32.xlu0 %v1077, 58
        %v1089 = vpop.permute.xlu0 %1088
        %vm1090 = vcmask 474112
        %v1091 = vsel %vm1090, %v1083, %v1085
        %v1092 = vsel %vm1090, %v1085, %v1087
        %v1093 = vsel %vm1090, %v1087, %v1089
        %v1098 = vsel %vm206, %v1073, 0
        %1100 = vmatprep.subr.mxu0 %v1092
        %1101 = vmatpush1.msra.mxu0 %v1091
        %1102 = vmatprep.subr.mxu0 0.0
        %1103 = vmatpush1.msra.mxu0 0.0
        %1104 = vmatprep.subr.mxu0 0.0
        %1105 = vmatpush1.msra.mxu0 0.0
        %1106 = vmatprep.subr.mxu0 0.0
        %1107 = vmatpush1.msra.mxu0 0.0
        %1108 = vmatprep.subr.mxu0 0.0
        %1109 = vmatpush1.msra.mxu0 0.0
        %1110 = vmatprep.subr.mxu0 0.0
        %1111 = vmatpush1.msra.mxu0 0.0
        %1112 = vmatprep.subr.mxu0 0.0
        %1113 = vmatpush1.msra.mxu0 0.0
        %1114 = vmatprep.subr.mxu0 0.0
        %1115 = vmatpush1.msra.mxu0 0.0
        %1116 = vmatprep.subr.mxu0 0.0
        %1117 = vmatpush1.msra.mxu0 0.0
        %1118 = vmatprep.subr.mxu0 0.0
        %1119 = vmatpush1.msra.mxu0 0.0
        %1120 = vmatprep.subr.mxu0 0.0
        %1121 = vmatpush1.msra.mxu0 0.0
        %1122 = vmatprep.subr.mxu0 0.0
        %1123 = vmatpush1.msra.mxu0 0.0
        %1124 = vmatprep.subr.mxu0 0.0
        %1125 = vmatpush1.msra.mxu0 0.0
        %1126 = vmatprep.subr.mxu0 0.0
        %1127 = vmatpush1.msra.mxu0 0.0
        %1128 = vmatprep.subr.mxu0 0.0
        %1129 = vmatpush1.msra.mxu0 0.0
        %1130 = vmatprep.subr.mxu0 0.0
        %1131 = vmatpush1.msra.mxu0 0.0
        %1132 = vmatprep.subr.mxu0 0.0
        %1133 = vmatpush1.msra.mxu0 0.0
        %1134 = vmatprep.subr.mxu0 0.0
        %1135 = vmatpush1.msra.mxu0 0.0
        %1136 = vmatprep.subr.mxu0 0.0
        %1137 = vmatpush1.msra.mxu0 0.0
        %1138 = vmatprep.subr.mxu0 0.0
        %1139 = vmatpush1.msra.mxu0 0.0
        %1140 = vmatprep.subr.mxu0 0.0
        %1141 = vmatpush1.msra.mxu0 0.0
        %1142 = vmatprep.subr.mxu0 0.0
        %1143 = vmatpush1.msra.mxu0 0.0
        %1144 = vmatprep.subr.mxu0 0.0
        %1145 = vmatpush1.msra.mxu0 0.0
        %1146 = vmatprep.subr.mxu0 0.0
        %1147 = vmatpush1.msra.mxu0 0.0
        %1148 = vmatprep.subr.mxu0 0.0
        %1149 = vmatpush1.msra.mxu0 0.0
        %1150 = vmatprep.subr.mxu0 0.0
        %1151 = vmatpush1.msra.mxu0 0.0
        %1152 = vmatprep.subr.mxu0 0.0
        %1153 = vmatpush1.msra.mxu0 0.0
        %1154 = vmatprep.subr.mxu0 0.0
        %1155 = vmatpush1.msra.mxu0 0.0
        %1156 = vmatprep.subr.mxu0 0.0
        %1157 = vmatpush1.msra.mxu0 0.0
        %1158 = vmatprep.subr.mxu0 0.0
        %1159 = vmatpush1.msra.mxu0 0.0
        %1160 = vmatprep.subr.mxu0 0.0
        %1161 = vmatpush1.msra.mxu0 0.0
        %1162 = vmatprep.subr.mxu0 0.0
        %1163 = vmatpush1.msra.mxu0 0.0
        %1164 = vmatprep.mubr.f32.mxu0 0.0
        %1165 = vmatmul.mubr.f32.gmra.mrb[0].mxu0 %v1098
        %v1166 = vpop.f32.mrb[0].mxu0
        %v1167 = vadd.f32 0.0, %v1166
        %v1168 = vpop.f32.mrb[0].mxu0
        %v1169 = vadd.f32 0.0, %v1168
        %1170 = vdwg.mxu0
        %1171 = vmatprep.subr.mxu0 0.0
        %1172 = vmatpush1.msra.mxu0 %v1093
        %1173 = vmatprep.subr.mxu0 0.0
        %1174 = vmatpush1.msra.mxu0 0.0
        %1175 = vmatprep.subr.mxu0 0.0
        %1176 = vmatpush1.msra.mxu0 0.0
        %1177 = vmatprep.subr.mxu0 0.0
        %1178 = vmatpush1.msra.mxu0 0.0
        %1179 = vmatprep.subr.mxu0 0.0
        %1180 = vmatpush1.msra.mxu0 0.0
        %1181 = vmatprep.subr.mxu0 0.0
        %1182 = vmatpush1.msra.mxu0 0.0
        %1183 = vmatprep.subr.mxu0 0.0
        %1184 = vmatpush1.msra.mxu0 0.0
        %1185 = vmatprep.subr.mxu0 0.0
        %1186 = vmatpush1.msra.mxu0 0.0
        %1187 = vmatprep.subr.mxu0 0.0
        %1188 = vmatpush1.msra.mxu0 0.0
        %1189 = vmatprep.subr.mxu0 0.0
        %1190 = vmatpush1.msra.mxu0 0.0
        %1191 = vmatprep.subr.mxu0 0.0
        %1192 = vmatpush1.msra.mxu0 0.0
        %1193 = vmatprep.subr.mxu0 0.0
        %1194 = vmatpush1.msra.mxu0 0.0
        %1195 = vmatprep.subr.mxu0 0.0
        %1196 = vmatpush1.msra.mxu0 0.0
        %1197 = vmatprep.subr.mxu0 0.0
        %1198 = vmatpush1.msra.mxu0 0.0
        %1199 = vmatprep.subr.mxu0 0.0
        %1200 = vmatpush1.msra.mxu0 0.0
        %1201 = vmatprep.subr.mxu0 0.0
        %1202 = vmatpush1.msra.mxu0 0.0
        %1203 = vmatprep.subr.mxu0 0.0
        %1204 = vmatpush1.msra.mxu0 0.0
        %1205 = vmatprep.subr.mxu0 0.0
        %1206 = vmatpush1.msra.mxu0 0.0
        %1207 = vmatprep.subr.mxu0 0.0
        %1208 = vmatpush1.msra.mxu0 0.0
        %1209 = vmatprep.subr.mxu0 0.0
        %1210 = vmatpush1.msra.mxu0 0.0
        %1211 = vmatprep.subr.mxu0 0.0
        %1212 = vmatpush1.msra.mxu0 0.0
        %1213 = vmatprep.subr.mxu0 0.0
        %1214 = vmatpush1.msra.mxu0 0.0
        %1215 = vmatprep.subr.mxu0 0.0
        %1216 = vmatpush1.msra.mxu0 0.0
        %1217 = vmatprep.subr.mxu0 0.0
        %1218 = vmatpush1.msra.mxu0 0.0
        %1219 = vmatprep.subr.mxu0 0.0
        %1220 = vmatpush1.msra.mxu0 0.0
        %1221 = vmatprep.subr.mxu0 0.0
        %1222 = vmatpush1.msra.mxu0 0.0
        %1223 = vmatprep.subr.mxu0 0.0
        %1224 = vmatpush1.msra.mxu0 0.0
        %1225 = vmatprep.subr.mxu0 0.0
        %1226 = vmatpush1.msra.mxu0 0.0
        %1227 = vmatprep.subr.mxu0 0.0
        %1228 = vmatpush1.msra.mxu0 0.0
        %1229 = vmatprep.subr.mxu0 0.0
        %1230 = vmatpush1.msra.mxu0 0.0
        %1231 = vmatprep.subr.mxu0 0.0
        %1232 = vmatpush1.msra.mxu0 0.0
        %1233 = vmatprep.subr.mxu0 0.0
        %1234 = vmatpush1.msra.mxu0 0.0
        %1235 = vmatprep.mubr.f32.mxu0 0.0
        %1236 = vmatmul.mubr.f32.gmra.mrb[0].mxu0 %v1098
        %v1237 = vpop.f32.mrb[0].mxu0
        %v1238 = vadd.f32 0.0, %v1237
        %v1239 = vpop.f32.mrb[0].mxu0
        %1240 = vdwg.mxu0
        %v1241 = vadd.f32 %v1069, %v1167
        %v1242 = vadd.f32 %v1070, %v1169
        %v1243 = vadd.f32 %v1071, %v1238
        %1244 = vst [vmem:[#allocation2] sm:$0xff] %v1241
        %1245 = vst [vmem:[#allocation2 + $0x8] sm:$0xff] %v1242
        %1246 = vst.msk [vmem:[#allocation2 + $0x10] sm:$0xff] %vm177, %v1243
        %v1247 = vld [vmem:[#allocation2] sm:$0xff]
        %v1248 = vld [vmem:[#allocation2 + $0x8] sm:$0xff]
        %v1249 = vld [vmem:[#allocation2 + $0x10] sm:$0xff]
        %s1250 = scalar_lea.vmem %s1, 48
        %v1251 = vld [vmem:[%s1250] sm:$0xff]
        %v1252 = vld [vmem:[%s168] sm:$0xff]
        %v1253 = vld [vmem:[%s168 + $0x8] sm:$0xff]
        %v1254 = vld [vmem:[%s168 + $0x10] sm:$0xff]
        %v1255 = vld [vmem:[%s168 + $0x18] sm:$0xff]
        %1260 = vrot.lane.b32.xlu0 %v1252, 38
        %v1261 = vpop.permute.xlu0 %1260
        %1262 = vrot.lane.b32.xlu0 %v1253, 38
        %v1263 = vpop.permute.xlu0 %1262
        %1264 = vrot.lane.b32.xlu0 %v1254, 38
        %v1265 = vpop.permute.xlu0 %1264
        %1266 = vrot.lane.b32.xlu0 %v1255, 38
        %v1267 = vpop.permute.xlu0 %1266
        %vm1268 = vcmask 310272
        %v1269 = vsel %vm1268, %v1261, %v1263
        %v1270 = vsel %vm1268, %v1263, %v1265
        %v1271 = vsel %vm1268, %v1265, %v1267
        %v1276 = vsel %vm206, %v1251, 0
        %1278 = vmatprep.subr.mxu0 %v1270
        %1279 = vmatpush1.msra.mxu0 %v1269
        %1280 = vmatprep.subr.mxu0 0.0
        %1281 = vmatpush1.msra.mxu0 0.0
        %1282 = vmatprep.subr.mxu0 0.0
        %1283 = vmatpush1.msra.mxu0 0.0
        %1284 = vmatprep.subr.mxu0 0.0
        %1285 = vmatpush1.msra.mxu0 0.0
        %1286 = vmatprep.subr.mxu0 0.0
        %1287 = vmatpush1.msra.mxu0 0.0
        %1288 = vmatprep.subr.mxu0 0.0
        %1289 = vmatpush1.msra.mxu0 0.0
        %1290 = vmatprep.subr.mxu0 0.0
        %1291 = vmatpush1.msra.mxu0 0.0
        %1292 = vmatprep.subr.mxu0 0.0
        %1293 = vmatpush1.msra.mxu0 0.0
        %1294 = vmatprep.subr.mxu0 0.0
        %1295 = vmatpush1.msra.mxu0 0.0
        %1296 = vmatprep.subr.mxu0 0.0
        %1297 = vmatpush1.msra.mxu0 0.0
        %1298 = vmatprep.subr.mxu0 0.0
        %1299 = vmatpush1.msra.mxu0 0.0
        %1300 = vmatprep.subr.mxu0 0.0
        %1301 = vmatpush1.msra.mxu0 0.0
        %1302 = vmatprep.subr.mxu0 0.0
        %1303 = vmatpush1.msra.mxu0 0.0
        %1304 = vmatprep.subr.mxu0 0.0
        %1305 = vmatpush1.msra.mxu0 0.0
        %1306 = vmatprep.subr.mxu0 0.0
        %1307 = vmatpush1.msra.mxu0 0.0
        %1308 = vmatprep.subr.mxu0 0.0
        %1309 = vmatpush1.msra.mxu0 0.0
        %1310 = vmatprep.subr.mxu0 0.0
        %1311 = vmatpush1.msra.mxu0 0.0
        %1312 = vmatprep.subr.mxu0 0.0
        %1313 = vmatpush1.msra.mxu0 0.0
        %1314 = vmatprep.subr.mxu0 0.0
        %1315 = vmatpush1.msra.mxu0 0.0
        %1316 = vmatprep.subr.mxu0 0.0
        %1317 = vmatpush1.msra.mxu0 0.0
        %1318 = vmatprep.subr.mxu0 0.0
        %1319 = vmatpush1.msra.mxu0 0.0
        %1320 = vmatprep.subr.mxu0 0.0
        %1321 = vmatpush1.msra.mxu0 0.0
        %1322 = vmatprep.subr.mxu0 0.0
        %1323 = vmatpush1.msra.mxu0 0.0
        %1324 = vmatprep.subr.mxu0 0.0
        %1325 = vmatpush1.msra.mxu0 0.0
        %1326 = vmatprep.subr.mxu0 0.0
        %1327 = vmatpush1.msra.mxu0 0.0
        %1328 = vmatprep.subr.mxu0 0.0
        %1329 = vmatpush1.msra.mxu0 0.0
        %1330 = vmatprep.subr.mxu0 0.0
        %1331 = vmatpush1.msra.mxu0 0.0
        %1332 = vmatprep.subr.mxu0 0.0
        %1333 = vmatpush1.msra.mxu0 0.0
        %1334 = vmatprep.subr.mxu0 0.0
        %1335 = vmatpush1.msra.mxu0 0.0
        %1336 = vmatprep.subr.mxu0 0.0
        %1337 = vmatpush1.msra.mxu0 0.0
        %1338 = vmatprep.subr.mxu0 0.0
        %1339 = vmatpush1.msra.mxu0 0.0
        %1340 = vmatprep.subr.mxu0 0.0
        %1341 = vmatpush1.msra.mxu0 0.0
        %1342 = vmatprep.mubr.f32.mxu0 0.0
        %1343 = vmatmul.mubr.f32.gmra.mrb[0].mxu0 %v1276
        %v1344 = vpop.f32.mrb[0].mxu0
        %v1345 = vadd.f32 0.0, %v1344
        %v1346 = vpop.f32.mrb[0].mxu0
        %v1347 = vadd.f32 0.0, %v1346
        %1348 = vdwg.mxu0
        %1349 = vmatprep.subr.mxu0 0.0
        %1350 = vmatpush1.msra.mxu0 %v1271
        %1351 = vmatprep.subr.mxu0 0.0
        %1352 = vmatpush1.msra.mxu0 0.0
        %1353 = vmatprep.subr.mxu0 0.0
        %1354 = vmatpush1.msra.mxu0 0.0
        %1355 = vmatprep.subr.mxu0 0.0
        %1356 = vmatpush1.msra.mxu0 0.0
        %1357 = vmatprep.subr.mxu0 0.0
        %1358 = vmatpush1.msra.mxu0 0.0
        %1359 = vmatprep.subr.mxu0 0.0
        %1360 = vmatpush1.msra.mxu0 0.0
        %1361 = vmatprep.subr.mxu0 0.0
        %1362 = vmatpush1.msra.mxu0 0.0
        %1363 = vmatprep.subr.mxu0 0.0
        %1364 = vmatpush1.msra.mxu0 0.0
        %1365 = vmatprep.subr.mxu0 0.0
        %1366 = vmatpush1.msra.mxu0 0.0
        %1367 = vmatprep.subr.mxu0 0.0
        %1368 = vmatpush1.msra.mxu0 0.0
        %1369 = vmatprep.subr.mxu0 0.0
        %1370 = vmatpush1.msra.mxu0 0.0
        %1371 = vmatprep.subr.mxu0 0.0
        %1372 = vmatpush1.msra.mxu0 0.0
        %1373 = vmatprep.subr.mxu0 0.0
        %1374 = vmatpush1.msra.mxu0 0.0
        %1375 = vmatprep.subr.mxu0 0.0
        %1376 = vmatpush1.msra.mxu0 0.0
        %1377 = vmatprep.subr.mxu0 0.0
        %1378 = vmatpush1.msra.mxu0 0.0
        %1379 = vmatprep.subr.mxu0 0.0
        %1380 = vmatpush1.msra.mxu0 0.0
        %1381 = vmatprep.subr.mxu0 0.0
        %1382 = vmatpush1.msra.mxu0 0.0
        %1383 = vmatprep.subr.mxu0 0.0
        %1384 = vmatpush1.msra.mxu0 0.0
        %1385 = vmatprep.subr.mxu0 0.0
        %1386 = vmatpush1.msra.mxu0 0.0
        %1387 = vmatprep.subr.mxu0 0.0
        %1388 = vmatpush1.msra.mxu0 0.0
        %1389 = vmatprep.subr.mxu0 0.0
        %1390 = vmatpush1.msra.mxu0 0.0
        %1391 = vmatprep.subr.mxu0 0.0
        %1392 = vmatpush1.msra.mxu0 0.0
        %1393 = vmatprep.subr.mxu0 0.0
        %1394 = vmatpush1.msra.mxu0 0.0
        %1395 = vmatprep.subr.mxu0 0.0
        %1396 = vmatpush1.msra.mxu0 0.0
        %1397 = vmatprep.subr.mxu0 0.0
        %1398 = vmatpush1.msra.mxu0 0.0
        %1399 = vmatprep.subr.mxu0 0.0
        %1400 = vmatpush1.msra.mxu0 0.0
        %1401 = vmatprep.subr.mxu0 0.0
        %1402 = vmatpush1.msra.mxu0 0.0
        %1403 = vmatprep.subr.mxu0 0.0
        %1404 = vmatpush1.msra.mxu0 0.0
        %1405 = vmatprep.subr.mxu0 0.0
        %1406 = vmatpush1.msra.mxu0 0.0
        %1407 = vmatprep.subr.mxu0 0.0
        %1408 = vmatpush1.msra.mxu0 0.0
        %1409 = vmatprep.subr.mxu0 0.0
        %1410 = vmatpush1.msra.mxu0 0.0
        %1411 = vmatprep.subr.mxu0 0.0
        %1412 = vmatpush1.msra.mxu0 0.0
        %1413 = vmatprep.mubr.f32.mxu0 0.0
        %1414 = vmatmul.mubr.f32.gmra.mrb[0].mxu0 %v1276
        %v1415 = vpop.f32.mrb[0].mxu0
        %v1416 = vadd.f32 0.0, %v1415
        %v1417 = vpop.f32.mrb[0].mxu0
        %1418 = vdwg.mxu0
        %v1419 = vadd.f32 %v1247, %v1345
        %v1420 = vadd.f32 %v1248, %v1347
        %v1421 = vadd.f32 %v1249, %v1416
        %1422 = vst [vmem:[#allocation2] sm:$0xff] %v1419
        %1423 = vst [vmem:[#allocation2 + $0x8] sm:$0xff] %v1420
        %1424 = vst.msk [vmem:[#allocation2 + $0x10] sm:$0xff] %vm177, %v1421
        %v1425 = vld [vmem:[#allocation2] sm:$0xff]
        %v1426 = vld [vmem:[#allocation2 + $0x8] sm:$0xff]
        %v1427 = vld [vmem:[#allocation2 + $0x10] sm:$0xff]
        %s1428 = scalar_lea.vmem %s1, 56
        %v1429 = vld [vmem:[%s1428] sm:$0xff]
        %v1430 = vld [vmem:[%s168] sm:$0xff]
        %v1431 = vld [vmem:[%s168 + $0x8] sm:$0xff]
        %v1432 = vld [vmem:[%s168 + $0x10] sm:$0xff]
        %v1433 = vld [vmem:[%s168 + $0x18] sm:$0xff]
        %1438 = vrot.lane.b32.xlu0 %v1430, 37
        %v1439 = vpop.permute.xlu0 %1438
        %1440 = vrot.lane.b32.xlu0 %v1431, 37
        %v1441 = vpop.permute.xlu0 %1440
        %1442 = vrot.lane.b32.xlu0 %v1432, 37
        %v1443 = vpop.permute.xlu0 %1442
        %1444 = vrot.lane.b32.xlu0 %v1433, 37
        %v1445 = vpop.permute.xlu0 %1444
        %vm1446 = vcmask 302080
        %v1447 = vsel %vm1446, %v1439, %v1441
        %v1448 = vsel %vm1446, %v1441, %v1443
        %v1449 = vsel %vm1446, %v1443, %v1445
        %v1454 = vsel %vm206, %v1429, 0
        %1456 = vmatprep.subr.mxu0 %v1448
        %1457 = vmatpush1.msra.mxu0 %v1447
        %1458 = vmatprep.subr.mxu0 0.0
        %1459 = vmatpush1.msra.mxu0 0.0
        %1460 = vmatprep.subr.mxu0 0.0
        %1461 = vmatpush1.msra.mxu0 0.0
        %1462 = vmatprep.subr.mxu0 0.0
        %1463 = vmatpush1.msra.mxu0 0.0
        %1464 = vmatprep.subr.mxu0 0.0
        %1465 = vmatpush1.msra.mxu0 0.0
        %1466 = vmatprep.subr.mxu0 0.0
        %1467 = vmatpush1.msra.mxu0 0.0
        %1468 = vmatprep.subr.mxu0 0.0
        %1469 = vmatpush1.msra.mxu0 0.0
        %1470 = vmatprep.subr.mxu0 0.0
        %1471 = vmatpush1.msra.mxu0 0.0
        %1472 = vmatprep.subr.mxu0 0.0
        %1473 = vmatpush1.msra.mxu0 0.0
        %1474 = vmatprep.subr.mxu0 0.0
        %1475 = vmatpush1.msra.mxu0 0.0
        %1476 = vmatprep.subr.mxu0 0.0
        %1477 = vmatpush1.msra.mxu0 0.0
        %1478 = vmatprep.subr.mxu0 0.0
        %1479 = vmatpush1.msra.mxu0 0.0
        %1480 = vmatprep.subr.mxu0 0.0
        %1481 = vmatpush1.msra.mxu0 0.0
        %1482 = vmatprep.subr.mxu0 0.0
        %1483 = vmatpush1.msra.mxu0 0.0
        %1484 = vmatprep.subr.mxu0 0.0
        %1485 = vmatpush1.msra.mxu0 0.0
        %1486 = vmatprep.subr.mxu0 0.0
        %1487 = vmatpush1.msra.mxu0 0.0
        %1488 = vmatprep.subr.mxu0 0.0
        %1489 = vmatpush1.msra.mxu0 0.0
        %1490 = vmatprep.subr.mxu0 0.0
        %1491 = vmatpush1.msra.mxu0 0.0
        %1492 = vmatprep.subr.mxu0 0.0
        %1493 = vmatpush1.msra.mxu0 0.0
        %1494 = vmatprep.subr.mxu0 0.0
        %1495 = vmatpush1.msra.mxu0 0.0
        %1496 = vmatprep.subr.mxu0 0.0
        %1497 = vmatpush1.msra.mxu0 0.0
        %1498 = vmatprep.subr.mxu0 0.0
        %1499 = vmatpush1.msra.mxu0 0.0
        %1500 = vmatprep.subr.mxu0 0.0
        %1501 = vmatpush1.msra.mxu0 0.0
        %1502 = vmatprep.subr.mxu0 0.0
        %1503 = vmatpush1.msra.mxu0 0.0
        %1504 = vmatprep.subr.mxu0 0.0
        %1505 = vmatpush1.msra.mxu0 0.0
        %1506 = vmatprep.subr.mxu0 0.0
        %1507 = vmatpush1.msra.mxu0 0.0
        %1508 = vmatprep.subr.mxu0 0.0
        %1509 = vmatpush1.msra.mxu0 0.0
        %1510 = vmatprep.subr.mxu0 0.0
        %1511 = vmatpush1.msra.mxu0 0.0
        %1512 = vmatprep.subr.mxu0 0.0
        %1513 = vmatpush1.msra.mxu0 0.0
        %1514 = vmatprep.subr.mxu0 0.0
        %1515 = vmatpush1.msra.mxu0 0.0
        %1516 = vmatprep.subr.mxu0 0.0
        %1517 = vmatpush1.msra.mxu0 0.0
        %1518 = vmatprep.subr.mxu0 0.0
        %1519 = vmatpush1.msra.mxu0 0.0
        %1520 = vmatprep.mubr.f32.mxu0 0.0
        %1521 = vmatmul.mubr.f32.gmra.mrb[0].mxu0 %v1454
        %v1522 = vpop.f32.mrb[0].mxu0
        %v1523 = vadd.f32 0.0, %v1522
        %v1524 = vpop.f32.mrb[0].mxu0
        %v1525 = vadd.f32 0.0, %v1524
        %1526 = vdwg.mxu0
        %1527 = vmatprep.subr.mxu0 0.0
        %1528 = vmatpush1.msra.mxu0 %v1449
        %1529 = vmatprep.subr.mxu0 0.0
        %1530 = vmatpush1.msra.mxu0 0.0
        %1531 = vmatprep.subr.mxu0 0.0
        %1532 = vmatpush1.msra.mxu0 0.0
        %1533 = vmatprep.subr.mxu0 0.0
        %1534 = vmatpush1.msra.mxu0 0.0
        %1535 = vmatprep.subr.mxu0 0.0
        %1536 = vmatpush1.msra.mxu0 0.0
        %1537 = vmatprep.subr.mxu0 0.0
        %1538 = vmatpush1.msra.mxu0 0.0
        %1539 = vmatprep.subr.mxu0 0.0
        %1540 = vmatpush1.msra.mxu0 0.0
        %1541 = vmatprep.subr.mxu0 0.0
        %1542 = vmatpush1.msra.mxu0 0.0
        %1543 = vmatprep.subr.mxu0 0.0
        %1544 = vmatpush1.msra.mxu0 0.0
        %1545 = vmatprep.subr.mxu0 0.0
        %1546 = vmatpush1.msra.mxu0 0.0
        %1547 = vmatprep.subr.mxu0 0.0
        %1548 = vmatpush1.msra.mxu0 0.0
        %1549 = vmatprep.subr.mxu0 0.0
        %1550 = vmatpush1.msra.mxu0 0.0
        %1551 = vmatprep.subr.mxu0 0.0
        %1552 = vmatpush1.msra.mxu0 0.0
        %1553 = vmatprep.subr.mxu0 0.0
        %1554 = vmatpush1.msra.mxu0 0.0
        %1555 = vmatprep.subr.mxu0 0.0
        %1556 = vmatpush1.msra.mxu0 0.0
        %1557 = vmatprep.subr.mxu0 0.0
        %1558 = vmatpush1.msra.mxu0 0.0
        %1559 = vmatprep.subr.mxu0 0.0
        %1560 = vmatpush1.msra.mxu0 0.0
        %1561 = vmatprep.subr.mxu0 0.0
        %1562 = vmatpush1.msra.mxu0 0.0
        %1563 = vmatprep.subr.mxu0 0.0
        %1564 = vmatpush1.msra.mxu0 0.0
        %1565 = vmatprep.subr.mxu0 0.0
        %1566 = vmatpush1.msra.mxu0 0.0
        %1567 = vmatprep.subr.mxu0 0.0
        %1568 = vmatpush1.msra.mxu0 0.0
        %1569 = vmatprep.subr.mxu0 0.0
        %1570 = vmatpush1.msra.mxu0 0.0
        %1571 = vmatprep.subr.mxu0 0.0
        %1572 = vmatpush1.msra.mxu0 0.0
        %1573 = vmatprep.subr.mxu0 0.0
        %1574 = vmatpush1.msra.mxu0 0.0
        %1575 = vmatprep.subr.mxu0 0.0
        %1576 = vmatpush1.msra.mxu0 0.0
        %1577 = vmatprep.subr.mxu0 0.0
        %1578 = vmatpush1.msra.mxu0 0.0
        %1579 = vmatprep.subr.mxu0 0.0
        %1580 = vmatpush1.msra.mxu0 0.0
        %1581 = vmatprep.subr.mxu0 0.0
        %1582 = vmatpush1.msra.mxu0 0.0
        %1583 = vmatprep.subr.mxu0 0.0
        %1584 = vmatpush1.msra.mxu0 0.0
        %1585 = vmatprep.subr.mxu0 0.0
        %1586 = vmatpush1.msra.mxu0 0.0
        %1587 = vmatprep.subr.mxu0 0.0
        %1588 = vmatpush1.msra.mxu0 0.0
        %1589 = vmatprep.subr.mxu0 0.0
        %1590 = vmatpush1.msra.mxu0 0.0
        %1591 = vmatprep.mubr.f32.mxu0 0.0
        %1592 = vmatmul.mubr.f32.gmra.mrb[0].mxu0 %v1454
        %v1593 = vpop.f32.mrb[0].mxu0
        %v1594 = vadd.f32 0.0, %v1593
        %v1595 = vpop.f32.mrb[0].mxu0
        %1596 = vdwg.mxu0
        %v1597 = vadd.f32 %v1425, %v1523
        %v1598 = vadd.f32 %v1426, %v1525
        %v1599 = vadd.f32 %v1427, %v1594
        %1600 = vst [vmem:[#allocation2] sm:$0xff] %v1597
        %1601 = vst [vmem:[#allocation2 + $0x8] sm:$0xff] %v1598
        %1602 = vst.msk [vmem:[#allocation2 + $0x10] sm:$0xff] %vm177, %v1599
        %v1603 = vld [vmem:[#allocation2] sm:$0xff]
        %v1604 = vld [vmem:[#allocation2 + $0x8] sm:$0xff]
        %v1605 = vld [vmem:[#allocation2 + $0x10] sm:$0xff]
        %s1606 = scalar_lea.vmem %s1, 64
        %v1607 = vld [vmem:[%s1606] sm:$0xff]
        %v1608 = vld [vmem:[%s168] sm:$0xff]
        %v1609 = vld [vmem:[%s168 + $0x8] sm:$0xff]
        %v1610 = vld [vmem:[%s168 + $0x10] sm:$0xff]
        %v1611 = vld [vmem:[%s168 + $0x18] sm:$0xff]
        %1616 = vrot.lane.b32.xlu0 %v1608, 36
        %v1617 = vpop.permute.xlu0 %1616
        %1618 = vrot.lane.b32.xlu0 %v1609, 36
        %v1619 = vpop.permute.xlu0 %1618
        %1620 = vrot.lane.b32.xlu0 %v1610, 36
        %v1621 = vpop.permute.xlu0 %1620
        %1622 = vrot.lane.b32.xlu0 %v1611, 36
        %v1623 = vpop.permute.xlu0 %1622
        %vm1624 = vcmask 293888
        %v1625 = vsel %vm1624, %v1617, %v1619
        %v1626 = vsel %vm1624, %v1619, %v1621
        %v1627 = vsel %vm1624, %v1621, %v1623
        %v1632 = vsel %vm206, %v1607, 0
        %1634 = vmatprep.subr.mxu0 %v1626
        %1635 = vmatpush1.msra.mxu0 %v1625
        %1636 = vmatprep.subr.mxu0 0.0
        %1637 = vmatpush1.msra.mxu0 0.0
        %1638 = vmatprep.subr.mxu0 0.0
        %1639 = vmatpush1.msra.mxu0 0.0
        %1640 = vmatprep.subr.mxu0 0.0
        %1641 = vmatpush1.msra.mxu0 0.0
        %1642 = vmatprep.subr.mxu0 0.0
        %1643 = vmatpush1.msra.mxu0 0.0
        %1644 = vmatprep.subr.mxu0 0.0
        %1645 = vmatpush1.msra.mxu0 0.0
        %1646 = vmatprep.subr.mxu0 0.0
        %1647 = vmatpush1.msra.mxu0 0.0
        %1648 = vmatprep.subr.mxu0 0.0
        %1649 = vmatpush1.msra.mxu0 0.0
        %1650 = vmatprep.subr.mxu0 0.0
        %1651 = vmatpush1.msra.mxu0 0.0
        %1652 = vmatprep.subr.mxu0 0.0
        %1653 = vmatpush1.msra.mxu0 0.0
        %1654 = vmatprep.subr.mxu0 0.0
        %1655 = vmatpush1.msra.mxu0 0.0
        %1656 = vmatprep.subr.mxu0 0.0
        %1657 = vmatpush1.msra.mxu0 0.0
        %1658 = vmatprep.subr.mxu0 0.0
        %1659 = vmatpush1.msra.mxu0 0.0
        %1660 = vmatprep.subr.mxu0 0.0
        %1661 = vmatpush1.msra.mxu0 0.0
        %1662 = vmatprep.subr.mxu0 0.0
        %1663 = vmatpush1.msra.mxu0 0.0
        %1664 = vmatprep.subr.mxu0 0.0
        %1665 = vmatpush1.msra.mxu0 0.0
        %1666 = vmatprep.subr.mxu0 0.0
        %1667 = vmatpush1.msra.mxu0 0.0
        %1668 = vmatprep.subr.mxu0 0.0
        %1669 = vmatpush1.msra.mxu0 0.0
        %1670 = vmatprep.subr.mxu0 0.0
        %1671 = vmatpush1.msra.mxu0 0.0
        %1672 = vmatprep.subr.mxu0 0.0
        %1673 = vmatpush1.msra.mxu0 0.0
        %1674 = vmatprep.subr.mxu0 0.0
        %1675 = vmatpush1.msra.mxu0 0.0
        %1676 = vmatprep.subr.mxu0 0.0
        %1677 = vmatpush1.msra.mxu0 0.0
        %1678 = vmatprep.subr.mxu0 0.0
        %1679 = vmatpush1.msra.mxu0 0.0
        %1680 = vmatprep.subr.mxu0 0.0
        %1681 = vmatpush1.msra.mxu0 0.0
        %1682 = vmatprep.subr.mxu0 0.0
        %1683 = vmatpush1.msra.mxu0 0.0
        %1684 = vmatprep.subr.mxu0 0.0
        %1685 = vmatpush1.msra.mxu0 0.0
        %1686 = vmatprep.subr.mxu0 0.0
        %1687 = vmatpush1.msra.mxu0 0.0
        %1688 = vmatprep.subr.mxu0 0.0
        %1689 = vmatpush1.msra.mxu0 0.0
        %1690 = vmatprep.subr.mxu0 0.0
        %1691 = vmatpush1.msra.mxu0 0.0
        %1692 = vmatprep.subr.mxu0 0.0
        %1693 = vmatpush1.msra.mxu0 0.0
        %1694 = vmatprep.subr.mxu0 0.0
        %1695 = vmatpush1.msra.mxu0 0.0
        %1696 = vmatprep.subr.mxu0 0.0
        %1697 = vmatpush1.msra.mxu0 0.0
        %1698 = vmatprep.mubr.f32.mxu0 0.0
        %1699 = vmatmul.mubr.f32.gmra.mrb[0].mxu0 %v1632
        %v1700 = vpop.f32.mrb[0].mxu0
        %v1701 = vadd.f32 0.0, %v1700
        %v1702 = vpop.f32.mrb[0].mxu0
        %v1703 = vadd.f32 0.0, %v1702
        %1704 = vdwg.mxu0
        %1705 = vmatprep.subr.mxu0 0.0
        %1706 = vmatpush1.msra.mxu0 %v1627
        %1707 = vmatprep.subr.mxu0 0.0
        %1708 = vmatpush1.msra.mxu0 0.0
        %1709 = vmatprep.subr.mxu0 0.0
        %1710 = vmatpush1.msra.mxu0 0.0
        %1711 = vmatprep.subr.mxu0 0.0
        %1712 = vmatpush1.msra.mxu0 0.0
        %1713 = vmatprep.subr.mxu0 0.0
        %1714 = vmatpush1.msra.mxu0 0.0
        %1715 = vmatprep.subr.mxu0 0.0
        %1716 = vmatpush1.msra.mxu0 0.0
        %1717 = vmatprep.subr.mxu0 0.0
        %1718 = vmatpush1.msra.mxu0 0.0
        %1719 = vmatprep.subr.mxu0 0.0
        %1720 = vmatpush1.msra.mxu0 0.0
        %1721 = vmatprep.subr.mxu0 0.0
        %1722 = vmatpush1.msra.mxu0 0.0
        %1723 = vmatprep.subr.mxu0 0.0
        %1724 = vmatpush1.msra.mxu0 0.0
        %1725 = vmatprep.subr.mxu0 0.0
        %1726 = vmatpush1.msra.mxu0 0.0
        %1727 = vmatprep.subr.mxu0 0.0
        %1728 = vmatpush1.msra.mxu0 0.0
        %1729 = vmatprep.subr.mxu0 0.0
        %1730 = vmatpush1.msra.mxu0 0.0
        %1731 = vmatprep.subr.mxu0 0.0
        %1732 = vmatpush1.msra.mxu0 0.0
        %1733 = vmatprep.subr.mxu0 0.0
        %1734 = vmatpush1.msra.mxu0 0.0
        %1735 = vmatprep.subr.mxu0 0.0
        %1736 = vmatpush1.msra.mxu0 0.0
        %1737 = vmatprep.subr.mxu0 0.0
        %1738 = vmatpush1.msra.mxu0 0.0
        %1739 = vmatprep.subr.mxu0 0.0
        %1740 = vmatpush1.msra.mxu0 0.0
        %1741 = vmatprep.subr.mxu0 0.0
        %1742 = vmatpush1.msra.mxu0 0.0
        %1743 = vmatprep.subr.mxu0 0.0
        %1744 = vmatpush1.msra.mxu0 0.0
        %1745 = vmatprep.subr.mxu0 0.0
        %1746 = vmatpush1.msra.mxu0 0.0
        %1747 = vmatprep.subr.mxu0 0.0
        %1748 = vmatpush1.msra.mxu0 0.0
        %1749 = vmatprep.subr.mxu0 0.0
        %1750 = vmatpush1.msra.mxu0 0.0
        %1751 = vmatprep.subr.mxu0 0.0
        %1752 = vmatpush1.msra.mxu0 0.0
        %1753 = vmatprep.subr.mxu0 0.0
        %1754 = vmatpush1.msra.mxu0 0.0
        %1755 = vmatprep.subr.mxu0 0.0
        %1756 = vmatpush1.msra.mxu0 0.0
        %1757 = vmatprep.subr.mxu0 0.0
        %1758 = vmatpush1.msra.mxu0 0.0
        %1759 = vmatprep.subr.mxu0 0.0
        %1760 = vmatpush1.msra.mxu0 0.0
        %1761 = vmatprep.subr.mxu0 0.0
        %1762 = vmatpush1.msra.mxu0 0.0
        %1763 = vmatprep.subr.mxu0 0.0
        %1764 = vmatpush1.msra.mxu0 0.0
        %1765 = vmatprep.subr.mxu0 0.0
        %1766 = vmatpush1.msra.mxu0 0.0
        %1767 = vmatprep.subr.mxu0 0.0
        %1768 = vmatpush1.msra.mxu0 0.0
        %1769 = vmatprep.mubr.f32.mxu0 0.0
        %1770 = vmatmul.mubr.f32.gmra.mrb[0].mxu0 %v1632
        %v1771 = vpop.f32.mrb[0].mxu0
        %v1772 = vadd.f32 0.0, %v1771
        %v1773 = vpop.f32.mrb[0].mxu0
        %1774 = vdwg.mxu0
        %v1775 = vadd.f32 %v1603, %v1701
        %v1776 = vadd.f32 %v1604, %v1703
        %v1777 = vadd.f32 %v1605, %v1772
        %1778 = vst [vmem:[#allocation2] sm:$0xff] %v1775
        %1779 = vst [vmem:[#allocation2 + $0x8] sm:$0xff] %v1776
        %1780 = vst.msk [vmem:[#allocation2 + $0x10] sm:$0xff] %vm177, %v1777
        %v1781 = vld [vmem:[#allocation2] sm:$0xff]
        %v1782 = vld [vmem:[#allocation2 + $0x8] sm:$0xff]
        %v1783 = vld [vmem:[#allocation2 + $0x10] sm:$0xff]
        %s1784 = scalar_lea.vmem %s1, 72
        %v1785 = vld [vmem:[%s1784] sm:$0xff]
        %v1786 = vld [vmem:[%s168] sm:$0xff]
        %v1787 = vld [vmem:[%s168 + $0x8] sm:$0xff]
        %v1788 = vld [vmem:[%s168 + $0x10] sm:$0xff]
        %1792 = vrot.lane.b32.xlu0 %v1786, 105
        %v1793 = vpop.permute.xlu0 %1792
        %1794 = vrot.lane.b32.xlu0 %v1787, 105
        %v1795 = vpop.permute.xlu0 %1794
        %1796 = vrot.lane.b32.xlu0 %v1788, 105
        %v1797 = vpop.permute.xlu0 %1796
        %vm1798 = vcmask 859136
        %v1799 = vsel %vm1798, %v1793, %v1795
        %v1800 = vsel %vm1798, %v1795, %v1797
        %v1805 = vsel %vm206, %v1785, 0
        %1807 = vmatprep.subr.mxu0 %v1800
        %1808 = vmatpush1.msra.mxu0 %v1799
        %1809 = vmatprep.subr.mxu0 0.0
        %1810 = vmatpush1.msra.mxu0 0.0
        %1811 = vmatprep.subr.mxu0 0.0
        %1812 = vmatpush1.msra.mxu0 0.0
        %1813 = vmatprep.subr.mxu0 0.0
        %1814 = vmatpush1.msra.mxu0 0.0
        %1815 = vmatprep.subr.mxu0 0.0
        %1816 = vmatpush1.msra.mxu0 0.0
        %1817 = vmatprep.subr.mxu0 0.0
        %1818 = vmatpush1.msra.mxu0 0.0
        %1819 = vmatprep.subr.mxu0 0.0
        %1820 = vmatpush1.msra.mxu0 0.0
        %1821 = vmatprep.subr.mxu0 0.0
        %1822 = vmatpush1.msra.mxu0 0.0
        %1823 = vmatprep.subr.mxu0 0.0
        %1824 = vmatpush1.msra.mxu0 0.0
        %1825 = vmatprep.subr.mxu0 0.0
        %1826 = vmatpush1.msra.mxu0 0.0
        %1827 = vmatprep.subr.mxu0 0.0
        %1828 = vmatpush1.msra.mxu0 0.0
        %1829 = vmatprep.subr.mxu0 0.0
        %1830 = vmatpush1.msra.mxu0 0.0
        %1831 = vmatprep.subr.mxu0 0.0
        %1832 = vmatpush1.msra.mxu0 0.0
        %1833 = vmatprep.subr.mxu0 0.0
        %1834 = vmatpush1.msra.mxu0 0.0
        %1835 = vmatprep.subr.mxu0 0.0
        %1836 = vmatpush1.msra.mxu0 0.0
        %1837 = vmatprep.subr.mxu0 0.0
        %1838 = vmatpush1.msra.mxu0 0.0
        %1839 = vmatprep.subr.mxu0 0.0
        %1840 = vmatpush1.msra.mxu0 0.0
        %1841 = vmatprep.subr.mxu0 0.0
        %1842 = vmatpush1.msra.mxu0 0.0
        %1843 = vmatprep.subr.mxu0 0.0
        %1844 = vmatpush1.msra.mxu0 0.0
        %1845 = vmatprep.subr.mxu0 0.0
        %1846 = vmatpush1.msra.mxu0 0.0
        %1847 = vmatprep.subr.mxu0 0.0
        %1848 = vmatpush1.msra.mxu0 0.0
        %1849 = vmatprep.subr.mxu0 0.0
        %1850 = vmatpush1.msra.mxu0 0.0
        %1851 = vmatprep.subr.mxu0 0.0
        %1852 = vmatpush1.msra.mxu0 0.0
        %1853 = vmatprep.subr.mxu0 0.0
        %1854 = vmatpush1.msra.mxu0 0.0
        %1855 = vmatprep.subr.mxu0 0.0
        %1856 = vmatpush1.msra.mxu0 0.0
        %1857 = vmatprep.subr.mxu0 0.0
        %1858 = vmatpush1.msra.mxu0 0.0
        %1859 = vmatprep.subr.mxu0 0.0
        %1860 = vmatpush1.msra.mxu0 0.0
        %1861 = vmatprep.subr.mxu0 0.0
        %1862 = vmatpush1.msra.mxu0 0.0
        %1863 = vmatprep.subr.mxu0 0.0
        %1864 = vmatpush1.msra.mxu0 0.0
        %1865 = vmatprep.subr.mxu0 0.0
        %1866 = vmatpush1.msra.mxu0 0.0
        %1867 = vmatprep.subr.mxu0 0.0
        %1868 = vmatpush1.msra.mxu0 0.0
        %1869 = vmatprep.subr.mxu0 0.0
        %1870 = vmatpush1.msra.mxu0 0.0
        %1871 = vmatprep.mubr.f32.mxu0 0.0
        %1872 = vmatmul.mubr.f32.gmra.mrb[0].mxu0 %v1805
        %v1873 = vpop.f32.mrb[0].mxu0
        %v1874 = vadd.f32 0.0, %v1873
        %v1875 = vpop.f32.mrb[0].mxu0
        %v1876 = vadd.f32 0.0, %v1875
        %1877 = vdwg.mxu0
        %1878 = vmatprep.subr.mxu0 0.0
        %1879 = vmatpush1.msra.mxu0 %v1797
        %1880 = vmatprep.subr.mxu0 0.0
        %1881 = vmatpush1.msra.mxu0 0.0
        %1882 = vmatprep.subr.mxu0 0.0
        %1883 = vmatpush1.msra.mxu0 0.0
        %1884 = vmatprep.subr.mxu0 0.0
        %1885 = vmatpush1.msra.mxu0 0.0
        %1886 = vmatprep.subr.mxu0 0.0
        %1887 = vmatpush1.msra.mxu0 0.0
        %1888 = vmatprep.subr.mxu0 0.0
        %1889 = vmatpush1.msra.mxu0 0.0
        %1890 = vmatprep.subr.mxu0 0.0
        %1891 = vmatpush1.msra.mxu0 0.0
        %1892 = vmatprep.subr.mxu0 0.0
        %1893 = vmatpush1.msra.mxu0 0.0
        %1894 = vmatprep.subr.mxu0 0.0
        %1895 = vmatpush1.msra.mxu0 0.0
        %1896 = vmatprep.subr.mxu0 0.0
        %1897 = vmatpush1.msra.mxu0 0.0
        %1898 = vmatprep.subr.mxu0 0.0
        %1899 = vmatpush1.msra.mxu0 0.0
        %1900 = vmatprep.subr.mxu0 0.0
        %1901 = vmatpush1.msra.mxu0 0.0
        %1902 = vmatprep.subr.mxu0 0.0
        %1903 = vmatpush1.msra.mxu0 0.0
        %1904 = vmatprep.subr.mxu0 0.0
        %1905 = vmatpush1.msra.mxu0 0.0
        %1906 = vmatprep.subr.mxu0 0.0
        %1907 = vmatpush1.msra.mxu0 0.0
        %1908 = vmatprep.subr.mxu0 0.0
        %1909 = vmatpush1.msra.mxu0 0.0
        %1910 = vmatprep.subr.mxu0 0.0
        %1911 = vmatpush1.msra.mxu0 0.0
        %1912 = vmatprep.subr.mxu0 0.0
        %1913 = vmatpush1.msra.mxu0 0.0
        %1914 = vmatprep.subr.mxu0 0.0
        %1915 = vmatpush1.msra.mxu0 0.0
        %1916 = vmatprep.subr.mxu0 0.0
        %1917 = vmatpush1.msra.mxu0 0.0
        %1918 = vmatprep.subr.mxu0 0.0
        %1919 = vmatpush1.msra.mxu0 0.0
        %1920 = vmatprep.subr.mxu0 0.0
        %1921 = vmatpush1.msra.mxu0 0.0
        %1922 = vmatprep.subr.mxu0 0.0
        %1923 = vmatpush1.msra.mxu0 0.0
        %1924 = vmatprep.subr.mxu0 0.0
        %1925 = vmatpush1.msra.mxu0 0.0
        %1926 = vmatprep.subr.mxu0 0.0
        %1927 = vmatpush1.msra.mxu0 0.0
        %1928 = vmatprep.subr.mxu0 0.0
        %1929 = vmatpush1.msra.mxu0 0.0
        %1930 = vmatprep.subr.mxu0 0.0
        %1931 = vmatpush1.msra.mxu0 0.0
        %1932 = vmatprep.subr.mxu0 0.0
        %1933 = vmatpush1.msra.mxu0 0.0
        %1934 = vmatprep.subr.mxu0 0.0
        %1935 = vmatpush1.msra.mxu0 0.0
        %1936 = vmatprep.subr.mxu0 0.0
        %1937 = vmatpush1.msra.mxu0 0.0
        %1938 = vmatprep.subr.mxu0 0.0
        %1939 = vmatpush1.msra.mxu0 0.0
        %1940 = vmatprep.subr.mxu0 0.0
        %1941 = vmatpush1.msra.mxu0 0.0
        %1942 = vmatprep.mubr.f32.mxu0 0.0
        %1943 = vmatmul.mubr.f32.gmra.mrb[0].mxu0 %v1805
        %v1944 = vpop.f32.mrb[0].mxu0
        %v1945 = vadd.f32 0.0, %v1944
        %v1946 = vpop.f32.mrb[0].mxu0
        %1947 = vdwg.mxu0
        %v1948 = vadd.f32 %v1781, %v1874
        %v1949 = vadd.f32 %v1782, %v1876
        %v1950 = vadd.f32 %v1783, %v1945
        %1951 = vst [vmem:[#allocation2] sm:$0xff] %v1948
        %1952 = vst [vmem:[#allocation2 + $0x8] sm:$0xff] %v1949
        %1953 = vst.msk [vmem:[#allocation2 + $0x10] sm:$0xff] %vm177, %v1950
        %v1954 = vld [vmem:[#allocation2] sm:$0xff]
        %v1955 = vld [vmem:[#allocation2 + $0x8] sm:$0xff]
        %v1956 = vld [vmem:[#allocation2 + $0x10] sm:$0xff]
        %s1957 = scalar_lea.vmem %s1, 80
        %v1958 = vld [vmem:[%s1957] sm:$0xff]
        %v1959 = vld [vmem:[%s168] sm:$0xff]
        %v1960 = vld [vmem:[%s168 + $0x8] sm:$0xff]
        %v1961 = vld [vmem:[%s168 + $0x10] sm:$0xff]
        %1965 = vrot.lane.b32.xlu0 %v1959, 103
        %v1966 = vpop.permute.xlu0 %1965
        %1967 = vrot.lane.b32.xlu0 %v1960, 103
        %v1968 = vpop.permute.xlu0 %1967
        %1969 = vrot.lane.b32.xlu0 %v1961, 103
        %v1970 = vpop.permute.xlu0 %1969
        %vm1971 = vcmask 842752
        %v1972 = vsel %vm1971, %v1966, %v1968
        %v1973 = vsel %vm1971, %v1968, %v1970
        %v1978 = vsel %vm206, %v1958, 0
        %1980 = vmatprep.subr.mxu0 %v1973
        %1981 = vmatpush1.msra.mxu0 %v1972
        %1982 = vmatprep.subr.mxu0 0.0
        %1983 = vmatpush1.msra.mxu0 0.0
        %1984 = vmatprep.subr.mxu0 0.0
        %1985 = vmatpush1.msra.mxu0 0.0
        %1986 = vmatprep.subr.mxu0 0.0
        %1987 = vmatpush1.msra.mxu0 0.0
        %1988 = vmatprep.subr.mxu0 0.0
        %1989 = vmatpush1.msra.mxu0 0.0
        %1990 = vmatprep.subr.mxu0 0.0
        %1991 = vmatpush1.msra.mxu0 0.0
        %1992 = vmatprep.subr.mxu0 0.0
        %1993 = vmatpush1.msra.mxu0 0.0
        %1994 = vmatprep.subr.mxu0 0.0
        %1995 = vmatpush1.msra.mxu0 0.0
        %1996 = vmatprep.subr.mxu0 0.0
        %1997 = vmatpush1.msra.mxu0 0.0
        %1998 = vmatprep.subr.mxu0 0.0
        %1999 = vmatpush1.msra.mxu0 0.0
        %2000 = vmatprep.subr.mxu0 0.0
        %2001 = vmatpush1.msra.mxu0 0.0
        %2002 = vmatprep.subr.mxu0 0.0
        %2003 = vmatpush1.msra.mxu0 0.0
        %2004 = vmatprep.subr.mxu0 0.0
        %2005 = vmatpush1.msra.mxu0 0.0
        %2006 = vmatprep.subr.mxu0 0.0
        %2007 = vmatpush1.msra.mxu0 0.0
        %2008 = vmatprep.subr.mxu0 0.0
        %2009 = vmatpush1.msra.mxu0 0.0
        %2010 = vmatprep.subr.mxu0 0.0
        %2011 = vmatpush1.msra.mxu0 0.0
        %2012 = vmatprep.subr.mxu0 0.0
        %2013 = vmatpush1.msra.mxu0 0.0
        %2014 = vmatprep.subr.mxu0 0.0
        %2015 = vmatpush1.msra.mxu0 0.0
        %2016 = vmatprep.subr.mxu0 0.0
        %2017 = vmatpush1.msra.mxu0 0.0
        %2018 = vmatprep.subr.mxu0 0.0
        %2019 = vmatpush1.msra.mxu0 0.0
        %2020 = vmatprep.subr.mxu0 0.0
        %2021 = vmatpush1.msra.mxu0 0.0
        %2022 = vmatprep.subr.mxu0 0.0
        %2023 = vmatpush1.msra.mxu0 0.0
        %2024 = vmatprep.subr.mxu0 0.0
        %2025 = vmatpush1.msra.mxu0 0.0
        %2026 = vmatprep.subr.mxu0 0.0
        %2027 = vmatpush1.msra.mxu0 0.0
        %2028 = vmatprep.subr.mxu0 0.0
        %2029 = vmatpush1.msra.mxu0 0.0
        %2030 = vmatprep.subr.mxu0 0.0
        %2031 = vmatpush1.msra.mxu0 0.0
        %2032 = vmatprep.subr.mxu0 0.0
        %2033 = vmatpush1.msra.mxu0 0.0
        %2034 = vmatprep.subr.mxu0 0.0
        %2035 = vmatpush1.msra.mxu0 0.0
        %2036 = vmatprep.subr.mxu0 0.0
        %2037 = vmatpush1.msra.mxu0 0.0
        %2038 = vmatprep.subr.mxu0 0.0
        %2039 = vmatpush1.msra.mxu0 0.0
        %2040 = vmatprep.subr.mxu0 0.0
        %2041 = vmatpush1.msra.mxu0 0.0
        %2042 = vmatprep.subr.mxu0 0.0
        %2043 = vmatpush1.msra.mxu0 0.0
        %2044 = vmatprep.mubr.f32.mxu0 0.0
        %2045 = vmatmul.mubr.f32.gmra.mrb[0].mxu0 %v1978
        %v2046 = vpop.f32.mrb[0].mxu0
        %v2047 = vadd.f32 0.0, %v2046
        %v2048 = vpop.f32.mrb[0].mxu0
        %v2049 = vadd.f32 0.0, %v2048
        %2050 = vdwg.mxu0
        %2051 = vmatprep.subr.mxu0 0.0
        %2052 = vmatpush1.msra.mxu0 %v1970
        %2053 = vmatprep.subr.mxu0 0.0
        %2054 = vmatpush1.msra.mxu0 0.0
        %2055 = vmatprep.subr.mxu0 0.0
        %2056 = vmatpush1.msra.mxu0 0.0
        %2057 = vmatprep.subr.mxu0 0.0
        %2058 = vmatpush1.msra.mxu0 0.0
        %2059 = vmatprep.subr.mxu0 0.0
        %2060 = vmatpush1.msra.mxu0 0.0
        %2061 = vmatprep.subr.mxu0 0.0
        %2062 = vmatpush1.msra.mxu0 0.0
        %2063 = vmatprep.subr.mxu0 0.0
        %2064 = vmatpush1.msra.mxu0 0.0
        %2065 = vmatprep.subr.mxu0 0.0
        %2066 = vmatpush1.msra.mxu0 0.0
        %2067 = vmatprep.subr.mxu0 0.0
        %2068 = vmatpush1.msra.mxu0 0.0
        %2069 = vmatprep.subr.mxu0 0.0
        %2070 = vmatpush1.msra.mxu0 0.0
        %2071 = vmatprep.subr.mxu0 0.0
        %2072 = vmatpush1.msra.mxu0 0.0
        %2073 = vmatprep.subr.mxu0 0.0
        %2074 = vmatpush1.msra.mxu0 0.0
        %2075 = vmatprep.subr.mxu0 0.0
        %2076 = vmatpush1.msra.mxu0 0.0
        %2077 = vmatprep.subr.mxu0 0.0
        %2078 = vmatpush1.msra.mxu0 0.0
        %2079 = vmatprep.subr.mxu0 0.0
        %2080 = vmatpush1.msra.mxu0 0.0
        %2081 = vmatprep.subr.mxu0 0.0
        %2082 = vmatpush1.msra.mxu0 0.0
        %2083 = vmatprep.subr.mxu0 0.0
        %2084 = vmatpush1.msra.mxu0 0.0
        %2085 = vmatprep.subr.mxu0 0.0
        %2086 = vmatpush1.msra.mxu0 0.0
        %2087 = vmatprep.subr.mxu0 0.0
        %2088 = vmatpush1.msra.mxu0 0.0
        %2089 = vmatprep.subr.mxu0 0.0
        %2090 = vmatpush1.msra.mxu0 0.0
        %2091 = vmatprep.subr.mxu0 0.0
        %2092 = vmatpush1.msra.mxu0 0.0
        %2093 = vmatprep.subr.mxu0 0.0
        %2094 = vmatpush1.msra.mxu0 0.0
        %2095 = vmatprep.subr.mxu0 0.0
        %2096 = vmatpush1.msra.mxu0 0.0
        %2097 = vmatprep.subr.mxu0 0.0
        %2098 = vmatpush1.msra.mxu0 0.0
        %2099 = vmatprep.subr.mxu0 0.0
        %2100 = vmatpush1.msra.mxu0 0.0
        %2101 = vmatprep.subr.mxu0 0.0
        %2102 = vmatpush1.msra.mxu0 0.0
        %2103 = vmatprep.subr.mxu0 0.0
        %2104 = vmatpush1.msra.mxu0 0.0
        %2105 = vmatprep.subr.mxu0 0.0
        %2106 = vmatpush1.msra.mxu0 0.0
        %2107 = vmatprep.subr.mxu0 0.0
        %2108 = vmatpush1.msra.mxu0 0.0
        %2109 = vmatprep.subr.mxu0 0.0
        %2110 = vmatpush1.msra.mxu0 0.0
        %2111 = vmatprep.subr.mxu0 0.0
        %2112 = vmatpush1.msra.mxu0 0.0
        %2113 = vmatprep.subr.mxu0 0.0
        %2114 = vmatpush1.msra.mxu0 0.0
        %2115 = vmatprep.mubr.f32.mxu0 0.0
        %2116 = vmatmul.mubr.f32.gmra.mrb[0].mxu0 %v1978
        %v2117 = vpop.f32.mrb[0].mxu0
        %v2118 = vadd.f32 0.0, %v2117
        %v2119 = vpop.f32.mrb[0].mxu0
        %2120 = vdwg.mxu0
        %v2121 = vadd.f32 %v1954, %v2047
        %v2122 = vadd.f32 %v1955, %v2049
        %v2123 = vadd.f32 %v1956, %v2118
        %2124 = vst [vmem:[#allocation2] sm:$0xff] %v2121
        %2125 = vst [vmem:[#allocation2 + $0x8] sm:$0xff] %v2122
        %2126 = vst.msk [vmem:[#allocation2 + $0x10] sm:$0xff] %vm177, %v2123
        %v2127 = vld [vmem:[#allocation2] sm:$0xff]
        %v2128 = vld [vmem:[#allocation2 + $0x8] sm:$0xff]
        %v2129 = vld [vmem:[#allocation2 + $0x10] sm:$0xff]
        %s2130 = scalar_lea.vmem %s1, 88
        %v2131 = vld [vmem:[%s2130] sm:$0xff]
        %v2132 = vld [vmem:[%s168] sm:$0xff]
        %v2133 = vld [vmem:[%s168 + $0x8] sm:$0xff]
        %v2134 = vld [vmem:[%s168 + $0x10] sm:$0xff]
        %2138 = vrot.lane.b32.xlu0 %v2132, 101
        %v2139 = vpop.permute.xlu0 %2138
        %2140 = vrot.lane.b32.xlu0 %v2133, 101
        %v2141 = vpop.permute.xlu0 %2140
        %2142 = vrot.lane.b32.xlu0 %v2134, 101
        %v2143 = vpop.permute.xlu0 %2142
        %vm2144 = vcmask 826368
        %v2145 = vsel %vm2144, %v2139, %v2141
        %v2146 = vsel %vm2144, %v2141, %v2143
        %v2151 = vsel %vm206, %v2131, 0
        %2153 = vmatprep.subr.mxu0 %v2146
        %2154 = vmatpush1.msra.mxu0 %v2145
        %2155 = vmatprep.subr.mxu0 0.0
        %2156 = vmatpush1.msra.mxu0 0.0
        %2157 = vmatprep.subr.mxu0 0.0
        %2158 = vmatpush1.msra.mxu0 0.0
        %2159 = vmatprep.subr.mxu0 0.0
        %2160 = vmatpush1.msra.mxu0 0.0
        %2161 = vmatprep.subr.mxu0 0.0
        %2162 = vmatpush1.msra.mxu0 0.0
        %2163 = vmatprep.subr.mxu0 0.0
        %2164 = vmatpush1.msra.mxu0 0.0
        %2165 = vmatprep.subr.mxu0 0.0
        %2166 = vmatpush1.msra.mxu0 0.0
        %2167 = vmatprep.subr.mxu0 0.0
        %2168 = vmatpush1.msra.mxu0 0.0
        %2169 = vmatprep.subr.mxu0 0.0
        %2170 = vmatpush1.msra.mxu0 0.0
        %2171 = vmatprep.subr.mxu0 0.0
        %2172 = vmatpush1.msra.mxu0 0.0
        %2173 = vmatprep.subr.mxu0 0.0
        %2174 = vmatpush1.msra.mxu0 0.0
        %2175 = vmatprep.subr.mxu0 0.0
        %2176 = vmatpush1.msra.mxu0 0.0
        %2177 = vmatprep.subr.mxu0 0.0
        %2178 = vmatpush1.msra.mxu0 0.0
        %2179 = vmatprep.subr.mxu0 0.0
        %2180 = vmatpush1.msra.mxu0 0.0
        %2181 = vmatprep.subr.mxu0 0.0
        %2182 = vmatpush1.msra.mxu0 0.0
        %2183 = vmatprep.subr.mxu0 0.0
        %2184 = vmatpush1.msra.mxu0 0.0
        %2185 = vmatprep.subr.mxu0 0.0
        %2186 = vmatpush1.msra.mxu0 0.0
        %2187 = vmatprep.subr.mxu0 0.0
        %2188 = vmatpush1.msra.mxu0 0.0
        %2189 = vmatprep.subr.mxu0 0.0
        %2190 = vmatpush1.msra.mxu0 0.0
        %2191 = vmatprep.subr.mxu0 0.0
        %2192 = vmatpush1.msra.mxu0 0.0
        %2193 = vmatprep.subr.mxu0 0.0
        %2194 = vmatpush1.msra.mxu0 0.0
        %2195 = vmatprep.subr.mxu0 0.0
        %2196 = vmatpush1.msra.mxu0 0.0
        %2197 = vmatprep.subr.mxu0 0.0
        %2198 = vmatpush1.msra.mxu0 0.0
        %2199 = vmatprep.subr.mxu0 0.0
        %2200 = vmatpush1.msra.mxu0 0.0
        %2201 = vmatprep.subr.mxu0 0.0
        %2202 = vmatpush1.msra.mxu0 0.0
        %2203 = vmatprep.subr.mxu0 0.0
        %2204 = vmatpush1.msra.mxu0 0.0
        %2205 = vmatprep.subr.mxu0 0.0
        %2206 = vmatpush1.msra.mxu0 0.0
        %2207 = vmatprep.subr.mxu0 0.0
        %2208 = vmatpush1.msra.mxu0 0.0
        %2209 = vmatprep.subr.mxu0 0.0
        %2210 = vmatpush1.msra.mxu0 0.0
        %2211 = vmatprep.subr.mxu0 0.0
        %2212 = vmatpush1.msra.mxu0 0.0
        %2213 = vmatprep.subr.mxu0 0.0
        %2214 = vmatpush1.msra.mxu0 0.0
        %2215 = vmatprep.subr.mxu0 0.0
        %2216 = vmatpush1.msra.mxu0 0.0
        %2217 = vmatprep.mubr.f32.mxu0 0.0
        %2218 = vmatmul.mubr.f32.gmra.mrb[0].mxu0 %v2151
        %v2219 = vpop.f32.mrb[0].mxu0
        %v2220 = vadd.f32 0.0, %v2219
        %v2221 = vpop.f32.mrb[0].mxu0
        %v2222 = vadd.f32 0.0, %v2221
        %2223 = vdwg.mxu0
        %2224 = vmatprep.subr.mxu0 0.0
        %2225 = vmatpush1.msra.mxu0 %v2143
        %2226 = vmatprep.subr.mxu0 0.0
        %2227 = vmatpush1.msra.mxu0 0.0
        %2228 = vmatprep.subr.mxu0 0.0
        %2229 = vmatpush1.msra.mxu0 0.0
        %2230 = vmatprep.subr.mxu0 0.0
        %2231 = vmatpush1.msra.mxu0 0.0
        %2232 = vmatprep.subr.mxu0 0.0
        %2233 = vmatpush1.msra.mxu0 0.0
        %2234 = vmatprep.subr.mxu0 0.0
        %2235 = vmatpush1.msra.mxu0 0.0
        %2236 = vmatprep.subr.mxu0 0.0
        %2237 = vmatpush1.msra.mxu0 0.0
        %2238 = vmatprep.subr.mxu0 0.0
        %2239 = vmatpush1.msra.mxu0 0.0
        %2240 = vmatprep.subr.mxu0 0.0
        %2241 = vmatpush1.msra.mxu0 0.0
        %2242 = vmatprep.subr.mxu0 0.0
        %2243 = vmatpush1.msra.mxu0 0.0
        %2244 = vmatprep.subr.mxu0 0.0
        %2245 = vmatpush1.msra.mxu0 0.0
        %2246 = vmatprep.subr.mxu0 0.0
        %2247 = vmatpush1.msra.mxu0 0.0
        %2248 = vmatprep.subr.mxu0 0.0
        %2249 = vmatpush1.msra.mxu0 0.0
        %2250 = vmatprep.subr.mxu0 0.0
        %2251 = vmatpush1.msra.mxu0 0.0
        %2252 = vmatprep.subr.mxu0 0.0
        %2253 = vmatpush1.msra.mxu0 0.0
        %2254 = vmatprep.subr.mxu0 0.0
        %2255 = vmatpush1.msra.mxu0 0.0
        %2256 = vmatprep.subr.mxu0 0.0
        %2257 = vmatpush1.msra.mxu0 0.0
        %2258 = vmatprep.subr.mxu0 0.0
        %2259 = vmatpush1.msra.mxu0 0.0
        %2260 = vmatprep.subr.mxu0 0.0
        %2261 = vmatpush1.msra.mxu0 0.0
        %2262 = vmatprep.subr.mxu0 0.0
        %2263 = vmatpush1.msra.mxu0 0.0
        %2264 = vmatprep.subr.mxu0 0.0
        %2265 = vmatpush1.msra.mxu0 0.0
        %2266 = vmatprep.subr.mxu0 0.0
        %2267 = vmatpush1.msra.mxu0 0.0
        %2268 = vmatprep.subr.mxu0 0.0
        %2269 = vmatpush1.msra.mxu0 0.0
        %2270 = vmatprep.subr.mxu0 0.0
        %2271 = vmatpush1.msra.mxu0 0.0
        %2272 = vmatprep.subr.mxu0 0.0
        %2273 = vmatpush1.msra.mxu0 0.0
        %2274 = vmatprep.subr.mxu0 0.0
        %2275 = vmatpush1.msra.mxu0 0.0
        %2276 = vmatprep.subr.mxu0 0.0
        %2277 = vmatpush1.msra.mxu0 0.0
        %2278 = vmatprep.subr.mxu0 0.0
        %2279 = vmatpush1.msra.mxu0 0.0
        %2280 = vmatprep.subr.mxu0 0.0
        %2281 = vmatpush1.msra.mxu0 0.0
        %2282 = vmatprep.subr.mxu0 0.0
        %2283 = vmatpush1.msra.mxu0 0.0
        %2284 = vmatprep.subr.mxu0 0.0
        %2285 = vmatpush1.msra.mxu0 0.0
        %2286 = vmatprep.subr.mxu0 0.0
        %2287 = vmatpush1.msra.mxu0 0.0
        %2288 = vmatprep.mubr.f32.mxu0 0.0
        %2289 = vmatmul.mubr.f32.gmra.mrb[0].mxu0 %v2151
        %v2290 = vpop.f32.mrb[0].mxu0
        %v2291 = vadd.f32 0.0, %v2290
        %v2292 = vpop.f32.mrb[0].mxu0
        %2293 = vdwg.mxu0
        %v2294 = vadd.f32 %v2127, %v2220
        %v2295 = vadd.f32 %v2128, %v2222
        %v2296 = vadd.f32 %v2129, %v2291
        %2297 = vst [vmem:[#allocation2] sm:$0xff] %v2294
        %2298 = vst [vmem:[#allocation2 + $0x8] sm:$0xff] %v2295
        %2299 = vst.msk [vmem:[#allocation2 + $0x10] sm:$0xff] %vm177, %v2296
        %v2300 = vld [vmem:[#allocation2] sm:$0xff]
        %v2301 = vld [vmem:[#allocation2 + $0x8] sm:$0xff]
        %v2302 = vld [vmem:[#allocation2 + $0x10] sm:$0xff]
        %s2303 = scalar_lea.vmem %s1, 96
        %v2304 = vld [vmem:[%s2303] sm:$0xff]
        %v2305 = vld [vmem:[%s168] sm:$0xff]
        %v2306 = vld [vmem:[%s168 + $0x8] sm:$0xff]
        %v2307 = vld [vmem:[%s168 + $0x10] sm:$0xff]
        %v2308 = vld [vmem:[%s168 + $0x18] sm:$0xff]
        %2313 = vrot.lane.b32.xlu0 %v2305, 61
        %v2314 = vpop.permute.xlu0 %2313
        %2315 = vrot.lane.b32.xlu0 %v2306, 61
        %v2316 = vpop.permute.xlu0 %2315
        %2317 = vrot.lane.b32.xlu0 %v2307, 61
        %v2318 = vpop.permute.xlu0 %2317
        %2319 = vrot.lane.b32.xlu0 %v2308, 61
        %v2320 = vpop.permute.xlu0 %2319
        %vm2321 = vcmask 498688
        %v2322 = vsel %vm2321, %v2314, %v2316
        %v2323 = vsel %vm2321, %v2316, %v2318
        %v2324 = vsel %vm2321, %v2318, %v2320
        %v2329 = vsel %vm206, %v2304, 0
        %2331 = vmatprep.subr.mxu0 %v2323
        %2332 = vmatpush1.msra.mxu0 %v2322
        %2333 = vmatprep.subr.mxu0 0.0
        %2334 = vmatpush1.msra.mxu0 0.0
        %2335 = vmatprep.subr.mxu0 0.0
        %2336 = vmatpush1.msra.mxu0 0.0
        %2337 = vmatprep.subr.mxu0 0.0
        %2338 = vmatpush1.msra.mxu0 0.0
        %2339 = vmatprep.subr.mxu0 0.0
        %2340 = vmatpush1.msra.mxu0 0.0
        %2341 = vmatprep.subr.mxu0 0.0
        %2342 = vmatpush1.msra.mxu0 0.0
        %2343 = vmatprep.subr.mxu0 0.0
        %2344 = vmatpush1.msra.mxu0 0.0
        %2345 = vmatprep.subr.mxu0 0.0
        %2346 = vmatpush1.msra.mxu0 0.0
        %2347 = vmatprep.subr.mxu0 0.0
        %2348 = vmatpush1.msra.mxu0 0.0
        %2349 = vmatprep.subr.mxu0 0.0
        %2350 = vmatpush1.msra.mxu0 0.0
        %2351 = vmatprep.subr.mxu0 0.0
        %2352 = vmatpush1.msra.mxu0 0.0
        %2353 = vmatprep.subr.mxu0 0.0
        %2354 = vmatpush1.msra.mxu0 0.0
        %2355 = vmatprep.subr.mxu0 0.0
        %2356 = vmatpush1.msra.mxu0 0.0
        %2357 = vmatprep.subr.mxu0 0.0
        %2358 = vmatpush1.msra.mxu0 0.0
        %2359 = vmatprep.subr.mxu0 0.0
        %2360 = vmatpush1.msra.mxu0 0.0
        %2361 = vmatprep.subr.mxu0 0.0
        %2362 = vmatpush1.msra.mxu0 0.0
        %2363 = vmatprep.subr.mxu0 0.0
        %2364 = vmatpush1.msra.mxu0 0.0
        %2365 = vmatprep.subr.mxu0 0.0
        %2366 = vmatpush1.msra.mxu0 0.0
        %2367 = vmatprep.subr.mxu0 0.0
        %2368 = vmatpush1.msra.mxu0 0.0
        %2369 = vmatprep.subr.mxu0 0.0
        %2370 = vmatpush1.msra.mxu0 0.0
        %2371 = vmatprep.subr.mxu0 0.0
        %2372 = vmatpush1.msra.mxu0 0.0
        %2373 = vmatprep.subr.mxu0 0.0
        %2374 = vmatpush1.msra.mxu0 0.0
        %2375 = vmatprep.subr.mxu0 0.0
        %2376 = vmatpush1.msra.mxu0 0.0
        %2377 = vmatprep.subr.mxu0 0.0
        %2378 = vmatpush1.msra.mxu0 0.0
        %2379 = vmatprep.subr.mxu0 0.0
        %2380 = vmatpush1.msra.mxu0 0.0
        %2381 = vmatprep.subr.mxu0 0.0
        %2382 = vmatpush1.msra.mxu0 0.0
        %2383 = vmatprep.subr.mxu0 0.0
        %2384 = vmatpush1.msra.mxu0 0.0
        %2385 = vmatprep.subr.mxu0 0.0
        %2386 = vmatpush1.msra.mxu0 0.0
        %2387 = vmatprep.subr.mxu0 0.0
        %2388 = vmatpush1.msra.mxu0 0.0
        %2389 = vmatprep.subr.mxu0 0.0
        %2390 = vmatpush1.msra.mxu0 0.0
        %2391 = vmatprep.subr.mxu0 0.0
        %2392 = vmatpush1.msra.mxu0 0.0
        %2393 = vmatprep.subr.mxu0 0.0
        %2394 = vmatpush1.msra.mxu0 0.0
        %2395 = vmatprep.mubr.f32.mxu0 0.0
        %2396 = vmatmul.mubr.f32.gmra.mrb[0].mxu0 %v2329
        %v2397 = vpop.f32.mrb[0].mxu0
        %v2398 = vadd.f32 0.0, %v2397
        %v2399 = vpop.f32.mrb[0].mxu0
        %v2400 = vadd.f32 0.0, %v2399
        %2401 = vdwg.mxu0
        %2402 = vmatprep.subr.mxu0 0.0
        %2403 = vmatpush1.msra.mxu0 %v2324
        %2404 = vmatprep.subr.mxu0 0.0
        %2405 = vmatpush1.msra.mxu0 0.0
        %2406 = vmatprep.subr.mxu0 0.0
        %2407 = vmatpush1.msra.mxu0 0.0
        %2408 = vmatprep.subr.mxu0 0.0
        %2409 = vmatpush1.msra.mxu0 0.0
        %2410 = vmatprep.subr.mxu0 0.0
        %2411 = vmatpush1.msra.mxu0 0.0
        %2412 = vmatprep.subr.mxu0 0.0
        %2413 = vmatpush1.msra.mxu0 0.0
        %2414 = vmatprep.subr.mxu0 0.0
        %2415 = vmatpush1.msra.mxu0 0.0
        %2416 = vmatprep.subr.mxu0 0.0
        %2417 = vmatpush1.msra.mxu0 0.0
        %2418 = vmatprep.subr.mxu0 0.0
        %2419 = vmatpush1.msra.mxu0 0.0
        %2420 = vmatprep.subr.mxu0 0.0
        %2421 = vmatpush1.msra.mxu0 0.0
        %2422 = vmatprep.subr.mxu0 0.0
        %2423 = vmatpush1.msra.mxu0 0.0
        %2424 = vmatprep.subr.mxu0 0.0
        %2425 = vmatpush1.msra.mxu0 0.0
        %2426 = vmatprep.subr.mxu0 0.0
        %2427 = vmatpush1.msra.mxu0 0.0
        %2428 = vmatprep.subr.mxu0 0.0
        %2429 = vmatpush1.msra.mxu0 0.0
        %2430 = vmatprep.subr.mxu0 0.0
        %2431 = vmatpush1.msra.mxu0 0.0
        %2432 = vmatprep.subr.mxu0 0.0
        %2433 = vmatpush1.msra.mxu0 0.0
        %2434 = vmatprep.subr.mxu0 0.0
        %2435 = vmatpush1.msra.mxu0 0.0
        %2436 = vmatprep.subr.mxu0 0.0
        %2437 = vmatpush1.msra.mxu0 0.0
        %2438 = vmatprep.subr.mxu0 0.0
        %2439 = vmatpush1.msra.mxu0 0.0
        %2440 = vmatprep.subr.mxu0 0.0
        %2441 = vmatpush1.msra.mxu0 0.0
        %2442 = vmatprep.subr.mxu0 0.0
        %2443 = vmatpush1.msra.mxu0 0.0
        %2444 = vmatprep.subr.mxu0 0.0
        %2445 = vmatpush1.msra.mxu0 0.0
        %2446 = vmatprep.subr.mxu0 0.0
        %2447 = vmatpush1.msra.mxu0 0.0
        %2448 = vmatprep.subr.mxu0 0.0
        %2449 = vmatpush1.msra.mxu0 0.0
        %2450 = vmatprep.subr.mxu0 0.0
        %2451 = vmatpush1.msra.mxu0 0.0
        %2452 = vmatprep.subr.mxu0 0.0
        %2453 = vmatpush1.msra.mxu0 0.0
        %2454 = vmatprep.subr.mxu0 0.0
        %2455 = vmatpush1.msra.mxu0 0.0
        %2456 = vmatprep.subr.mxu0 0.0
        %2457 = vmatpush1.msra.mxu0 0.0
        %2458 = vmatprep.subr.mxu0 0.0
        %2459 = vmatpush1.msra.mxu0 0.0
        %2460 = vmatprep.subr.mxu0 0.0
        %2461 = vmatpush1.msra.mxu0 0.0
        %2462 = vmatprep.subr.mxu0 0.0
        %2463 = vmatpush1.msra.mxu0 0.0
        %2464 = vmatprep.subr.mxu0 0.0
        %2465 = vmatpush1.msra.mxu0 0.0
        %2466 = vmatprep.mubr.f32.mxu0 0.0
        %2467 = vmatmul.mubr.f32.gmra.mrb[0].mxu0 %v2329
        %v2468 = vpop.f32.mrb[0].mxu0
        %v2469 = vadd.f32 0.0, %v2468
        %v2470 = vpop.f32.mrb[0].mxu0
        %2471 = vdwg.mxu0
        %v2472 = vadd.f32 %v2300, %v2398
        %v2473 = vadd.f32 %v2301, %v2400
        %v2474 = vadd.f32 %v2302, %v2469
        %2475 = vst [vmem:[#allocation2] sm:$0xff] %v2472
        %2476 = vst [vmem:[#allocation2 + $0x8] sm:$0xff] %v2473
        %2477 = vst.msk [vmem:[#allocation2 + $0x10] sm:$0xff] %vm177, %v2474
        %v2478 = vld [vmem:[#allocation2] sm:$0xff]
        %v2479 = vld [vmem:[#allocation2 + $0x8] sm:$0xff]
        %v2480 = vld [vmem:[#allocation2 + $0x10] sm:$0xff]
        %s2481 = scalar_lea.vmem %s1, 104
        %v2482 = vld [vmem:[%s2481] sm:$0xff]
        %v2483 = vld [vmem:[%s168] sm:$0xff]
        %v2484 = vld [vmem:[%s168 + $0x8] sm:$0xff]
        %v2485 = vld [vmem:[%s168 + $0x10] sm:$0xff]
        %v2486 = vld [vmem:[%s168 + $0x18] sm:$0xff]
        %2491 = vrot.lane.b32.xlu0 %v2483, 59
        %v2492 = vpop.permute.xlu0 %2491
        %2493 = vrot.lane.b32.xlu0 %v2484, 59
        %v2494 = vpop.permute.xlu0 %2493
        %2495 = vrot.lane.b32.xlu0 %v2485, 59
        %v2496 = vpop.permute.xlu0 %2495
        %2497 = vrot.lane.b32.xlu0 %v2486, 59
        %v2498 = vpop.permute.xlu0 %2497
        %v2499 = vsel %vm912, %v2492, %v2494
        %v2500 = vsel %vm912, %v2494, %v2496
        %v2501 = vsel %vm912, %v2496, %v2498
        %v2506 = vsel %vm206, %v2482, 0
        %2508 = vmatprep.subr.mxu0 %v2500
        %2509 = vmatpush1.msra.mxu0 %v2499
        %2510 = vmatprep.subr.mxu0 0.0
        %2511 = vmatpush1.msra.mxu0 0.0
        %2512 = vmatprep.subr.mxu0 0.0
        %2513 = vmatpush1.msra.mxu0 0.0
        %2514 = vmatprep.subr.mxu0 0.0
        %2515 = vmatpush1.msra.mxu0 0.0
        %2516 = vmatprep.subr.mxu0 0.0
        %2517 = vmatpush1.msra.mxu0 0.0
        %2518 = vmatprep.subr.mxu0 0.0
        %2519 = vmatpush1.msra.mxu0 0.0
        %2520 = vmatprep.subr.mxu0 0.0
        %2521 = vmatpush1.msra.mxu0 0.0
        %2522 = vmatprep.subr.mxu0 0.0
        %2523 = vmatpush1.msra.mxu0 0.0
        %2524 = vmatprep.subr.mxu0 0.0
        %2525 = vmatpush1.msra.mxu0 0.0
        %2526 = vmatprep.subr.mxu0 0.0
        %2527 = vmatpush1.msra.mxu0 0.0
        %2528 = vmatprep.subr.mxu0 0.0
        %2529 = vmatpush1.msra.mxu0 0.0
        %2530 = vmatprep.subr.mxu0 0.0
        %2531 = vmatpush1.msra.mxu0 0.0
        %2532 = vmatprep.subr.mxu0 0.0
        %2533 = vmatpush1.msra.mxu0 0.0
        %2534 = vmatprep.subr.mxu0 0.0
        %2535 = vmatpush1.msra.mxu0 0.0
        %2536 = vmatprep.subr.mxu0 0.0
        %2537 = vmatpush1.msra.mxu0 0.0
        %2538 = vmatprep.subr.mxu0 0.0
        %2539 = vmatpush1.msra.mxu0 0.0
        %2540 = vmatprep.subr.mxu0 0.0
        %2541 = vmatpush1.msra.mxu0 0.0
        %2542 = vmatprep.subr.mxu0 0.0
        %2543 = vmatpush1.msra.mxu0 0.0
        %2544 = vmatprep.subr.mxu0 0.0
        %2545 = vmatpush1.msra.mxu0 0.0
        %2546 = vmatprep.subr.mxu0 0.0
        %2547 = vmatpush1.msra.mxu0 0.0
        %2548 = vmatprep.subr.mxu0 0.0
        %2549 = vmatpush1.msra.mxu0 0.0
        %2550 = vmatprep.subr.mxu0 0.0
        %2551 = vmatpush1.msra.mxu0 0.0
        %2552 = vmatprep.subr.mxu0 0.0
        %2553 = vmatpush1.msra.mxu0 0.0
        %2554 = vmatprep.subr.mxu0 0.0
        %2555 = vmatpush1.msra.mxu0 0.0
        %2556 = vmatprep.subr.mxu0 0.0
        %2557 = vmatpush1.msra.mxu0 0.0
        %2558 = vmatprep.subr.mxu0 0.0
        %2559 = vmatpush1.msra.mxu0 0.0
        %2560 = vmatprep.subr.mxu0 0.0
        %2561 = vmatpush1.msra.mxu0 0.0
        %2562 = vmatprep.subr.mxu0 0.0
        %2563 = vmatpush1.msra.mxu0 0.0
        %2564 = vmatprep.subr.mxu0 0.0
        %2565 = vmatpush1.msra.mxu0 0.0
        %2566 = vmatprep.subr.mxu0 0.0
        %2567 = vmatpush1.msra.mxu0 0.0
        %2568 = vmatprep.subr.mxu0 0.0
        %2569 = vmatpush1.msra.mxu0 0.0
        %2570 = vmatprep.subr.mxu0 0.0
        %2571 = vmatpush1.msra.mxu0 0.0
        %2572 = vmatprep.mubr.f32.mxu0 0.0
        %2573 = vmatmul.mubr.f32.gmra.mrb[0].mxu0 %v2506
        %v2574 = vpop.f32.mrb[0].mxu0
        %v2575 = vadd.f32 0.0, %v2574
        %v2576 = vpop.f32.mrb[0].mxu0
        %v2577 = vadd.f32 0.0, %v2576
        %2578 = vdwg.mxu0
        %2579 = vmatprep.subr.mxu0 0.0
        %2580 = vmatpush1.msra.mxu0 %v2501
        %2581 = vmatprep.subr.mxu0 0.0
        %2582 = vmatpush1.msra.mxu0 0.0
        %2583 = vmatprep.subr.mxu0 0.0
        %2584 = vmatpush1.msra.mxu0 0.0
        %2585 = vmatprep.subr.mxu0 0.0
        %2586 = vmatpush1.msra.mxu0 0.0
        %2587 = vmatprep.subr.mxu0 0.0
        %2588 = vmatpush1.msra.mxu0 0.0
        %2589 = vmatprep.subr.mxu0 0.0
        %2590 = vmatpush1.msra.mxu0 0.0
        %2591 = vmatprep.subr.mxu0 0.0
        %2592 = vmatpush1.msra.mxu0 0.0
        %2593 = vmatprep.subr.mxu0 0.0
        %2594 = vmatpush1.msra.mxu0 0.0
        %2595 = vmatprep.subr.mxu0 0.0
        %2596 = vmatpush1.msra.mxu0 0.0
        %2597 = vmatprep.subr.mxu0 0.0
        %2598 = vmatpush1.msra.mxu0 0.0
        %2599 = vmatprep.subr.mxu0 0.0
        %2600 = vmatpush1.msra.mxu0 0.0
        %2601 = vmatprep.subr.mxu0 0.0
        %2602 = vmatpush1.msra.mxu0 0.0
        %2603 = vmatprep.subr.mxu0 0.0
        %2604 = vmatpush1.msra.mxu0 0.0
        %2605 = vmatprep.subr.mxu0 0.0
        %2606 = vmatpush1.msra.mxu0 0.0
        %2607 = vmatprep.subr.mxu0 0.0
        %2608 = vmatpush1.msra.mxu0 0.0
        %2609 = vmatprep.subr.mxu0 0.0
        %2610 = vmatpush1.msra.mxu0 0.0
        %2611 = vmatprep.subr.mxu0 0.0
        %2612 = vmatpush1.msra.mxu0 0.0
        %2613 = vmatprep.subr.mxu0 0.0
        %2614 = vmatpush1.msra.mxu0 0.0
        %2615 = vmatprep.subr.mxu0 0.0
        %2616 = vmatpush1.msra.mxu0 0.0
        %2617 = vmatprep.subr.mxu0 0.0
        %2618 = vmatpush1.msra.mxu0 0.0
        %2619 = vmatprep.subr.mxu0 0.0
        %2620 = vmatpush1.msra.mxu0 0.0
        %2621 = vmatprep.subr.mxu0 0.0
        %2622 = vmatpush1.msra.mxu0 0.0
        %2623 = vmatprep.subr.mxu0 0.0
        %2624 = vmatpush1.msra.mxu0 0.0
        %2625 = vmatprep.subr.mxu0 0.0
        %2626 = vmatpush1.msra.mxu0 0.0
        %2627 = vmatprep.subr.mxu0 0.0
        %2628 = vmatpush1.msra.mxu0 0.0
        %2629 = vmatprep.subr.mxu0 0.0
        %2630 = vmatpush1.msra.mxu0 0.0
        %2631 = vmatprep.subr.mxu0 0.0
        %2632 = vmatpush1.msra.mxu0 0.0
        %2633 = vmatprep.subr.mxu0 0.0
        %2634 = vmatpush1.msra.mxu0 0.0
        %2635 = vmatprep.subr.mxu0 0.0
        %2636 = vmatpush1.msra.mxu0 0.0
        %2637 = vmatprep.subr.mxu0 0.0
        %2638 = vmatpush1.msra.mxu0 0.0
        %2639 = vmatprep.subr.mxu0 0.0
        %2640 = vmatpush1.msra.mxu0 0.0
        %2641 = vmatprep.subr.mxu0 0.0
        %2642 = vmatpush1.msra.mxu0 0.0
        %2643 = vmatprep.mubr.f32.mxu0 0.0
        %2644 = vmatmul.mubr.f32.gmra.mrb[0].mxu0 %v2506
        %v2645 = vpop.f32.mrb[0].mxu0
        %v2646 = vadd.f32 0.0, %v2645
        %v2647 = vpop.f32.mrb[0].mxu0
        %2648 = vdwg.mxu0
        %v2649 = vadd.f32 %v2478, %v2575
        %v2650 = vadd.f32 %v2479, %v2577
        %v2651 = vadd.f32 %v2480, %v2646
        %2652 = vst [vmem:[#allocation2] sm:$0xff] %v2649
        %2653 = vst [vmem:[#allocation2 + $0x8] sm:$0xff] %v2650
        %2654 = vst.msk [vmem:[#allocation2 + $0x10] sm:$0xff] %vm177, %v2651
        %v2655 = vld [vmem:[#allocation2] sm:$0xff]
        %v2656 = vld [vmem:[#allocation2 + $0x8] sm:$0xff]
        %v2657 = vld [vmem:[#allocation2 + $0x10] sm:$0xff]
        %s2658 = scalar_lea.vmem %s1, 112
        %v2659 = vld [vmem:[%s2658] sm:$0xff]
        %v2660 = vld [vmem:[%s168] sm:$0xff]
        %v2661 = vld [vmem:[%s168 + $0x8] sm:$0xff]
        %v2662 = vld [vmem:[%s168 + $0x10] sm:$0xff]
        %v2663 = vld [vmem:[%s168 + $0x18] sm:$0xff]
        %2668 = vrot.lane.b32.xlu0 %v2660, 57
        %v2669 = vpop.permute.xlu0 %2668
        %2670 = vrot.lane.b32.xlu0 %v2661, 57
        %v2671 = vpop.permute.xlu0 %2670
        %2672 = vrot.lane.b32.xlu0 %v2662, 57
        %v2673 = vpop.permute.xlu0 %2672
        %2674 = vrot.lane.b32.xlu0 %v2663, 57
        %v2675 = vpop.permute.xlu0 %2674
        %vm2676 = vcmask 465920
        %v2677 = vsel %vm2676, %v2669, %v2671
        %v2678 = vsel %vm2676, %v2671, %v2673
        %v2679 = vsel %vm2676, %v2673, %v2675
        %v2684 = vsel %vm206, %v2659, 0
        %2686 = vmatprep.subr.mxu0 %v2678
        %2687 = vmatpush1.msra.mxu0 %v2677
        %2688 = vmatprep.subr.mxu0 0.0
        %2689 = vmatpush1.msra.mxu0 0.0
        %2690 = vmatprep.subr.mxu0 0.0
        %2691 = vmatpush1.msra.mxu0 0.0
        %2692 = vmatprep.subr.mxu0 0.0
        %2693 = vmatpush1.msra.mxu0 0.0
        %2694 = vmatprep.subr.mxu0 0.0
        %2695 = vmatpush1.msra.mxu0 0.0
        %2696 = vmatprep.subr.mxu0 0.0
        %2697 = vmatpush1.msra.mxu0 0.0
        %2698 = vmatprep.subr.mxu0 0.0
        %2699 = vmatpush1.msra.mxu0 0.0
        %2700 = vmatprep.subr.mxu0 0.0
        %2701 = vmatpush1.msra.mxu0 0.0
        %2702 = vmatprep.subr.mxu0 0.0
        %2703 = vmatpush1.msra.mxu0 0.0
        %2704 = vmatprep.subr.mxu0 0.0
        %2705 = vmatpush1.msra.mxu0 0.0
        %2706 = vmatprep.subr.mxu0 0.0
        %2707 = vmatpush1.msra.mxu0 0.0
        %2708 = vmatprep.subr.mxu0 0.0
        %2709 = vmatpush1.msra.mxu0 0.0
        %2710 = vmatprep.subr.mxu0 0.0
        %2711 = vmatpush1.msra.mxu0 0.0
        %2712 = vmatprep.subr.mxu0 0.0
        %2713 = vmatpush1.msra.mxu0 0.0
        %2714 = vmatprep.subr.mxu0 0.0
        %2715 = vmatpush1.msra.mxu0 0.0
        %2716 = vmatprep.subr.mxu0 0.0
        %2717 = vmatpush1.msra.mxu0 0.0
        %2718 = vmatprep.subr.mxu0 0.0
        %2719 = vmatpush1.msra.mxu0 0.0
        %2720 = vmatprep.subr.mxu0 0.0
        %2721 = vmatpush1.msra.mxu0 0.0
        %2722 = vmatprep.subr.mxu0 0.0
        %2723 = vmatpush1.msra.mxu0 0.0
        %2724 = vmatprep.subr.mxu0 0.0
        %2725 = vmatpush1.msra.mxu0 0.0
        %2726 = vmatprep.subr.mxu0 0.0
        %2727 = vmatpush1.msra.mxu0 0.0
        %2728 = vmatprep.subr.mxu0 0.0
        %2729 = vmatpush1.msra.mxu0 0.0
        %2730 = vmatprep.subr.mxu0 0.0
        %2731 = vmatpush1.msra.mxu0 0.0
        %2732 = vmatprep.subr.mxu0 0.0
        %2733 = vmatpush1.msra.mxu0 0.0
        %2734 = vmatprep.subr.mxu0 0.0
        %2735 = vmatpush1.msra.mxu0 0.0
        %2736 = vmatprep.subr.mxu0 0.0
        %2737 = vmatpush1.msra.mxu0 0.0
        %2738 = vmatprep.subr.mxu0 0.0
        %2739 = vmatpush1.msra.mxu0 0.0
        %2740 = vmatprep.subr.mxu0 0.0
        %2741 = vmatpush1.msra.mxu0 0.0
        %2742 = vmatprep.subr.mxu0 0.0
        %2743 = vmatpush1.msra.mxu0 0.0
        %2744 = vmatprep.subr.mxu0 0.0
        %2745 = vmatpush1.msra.mxu0 0.0
        %2746 = vmatprep.subr.mxu0 0.0
        %2747 = vmatpush1.msra.mxu0 0.0
        %2748 = vmatprep.subr.mxu0 0.0
        %2749 = vmatpush1.msra.mxu0 0.0
        %2750 = vmatprep.mubr.f32.mxu0 0.0
        %2751 = vmatmul.mubr.f32.gmra.mrb[0].mxu0 %v2684
        %v2752 = vpop.f32.mrb[0].mxu0
        %v2753 = vadd.f32 0.0, %v2752
        %v2754 = vpop.f32.mrb[0].mxu0
        %v2755 = vadd.f32 0.0, %v2754
        %2756 = vdwg.mxu0
        %2757 = vmatprep.subr.mxu0 0.0
        %2758 = vmatpush1.msra.mxu0 %v2679
        %2759 = vmatprep.subr.mxu0 0.0
        %2760 = vmatpush1.msra.mxu0 0.0
        %2761 = vmatprep.subr.mxu0 0.0
        %2762 = vmatpush1.msra.mxu0 0.0
        %2763 = vmatprep.subr.mxu0 0.0
        %2764 = vmatpush1.msra.mxu0 0.0
        %2765 = vmatprep.subr.mxu0 0.0
        %2766 = vmatpush1.msra.mxu0 0.0
        %2767 = vmatprep.subr.mxu0 0.0
        %2768 = vmatpush1.msra.mxu0 0.0
        %2769 = vmatprep.subr.mxu0 0.0
        %2770 = vmatpush1.msra.mxu0 0.0
        %2771 = vmatprep.subr.mxu0 0.0
        %2772 = vmatpush1.msra.mxu0 0.0
        %2773 = vmatprep.subr.mxu0 0.0
        %2774 = vmatpush1.msra.mxu0 0.0
        %2775 = vmatprep.subr.mxu0 0.0
        %2776 = vmatpush1.msra.mxu0 0.0
        %2777 = vmatprep.subr.mxu0 0.0
        %2778 = vmatpush1.msra.mxu0 0.0
        %2779 = vmatprep.subr.mxu0 0.0
        %2780 = vmatpush1.msra.mxu0 0.0
        %2781 = vmatprep.subr.mxu0 0.0
        %2782 = vmatpush1.msra.mxu0 0.0
        %2783 = vmatprep.subr.mxu0 0.0
        %2784 = vmatpush1.msra.mxu0 0.0
        %2785 = vmatprep.subr.mxu0 0.0
        %2786 = vmatpush1.msra.mxu0 0.0
        %2787 = vmatprep.subr.mxu0 0.0
        %2788 = vmatpush1.msra.mxu0 0.0
        %2789 = vmatprep.subr.mxu0 0.0
        %2790 = vmatpush1.msra.mxu0 0.0
        %2791 = vmatprep.subr.mxu0 0.0
        %2792 = vmatpush1.msra.mxu0 0.0
        %2793 = vmatprep.subr.mxu0 0.0
        %2794 = vmatpush1.msra.mxu0 0.0
        %2795 = vmatprep.subr.mxu0 0.0
        %2796 = vmatpush1.msra.mxu0 0.0
        %2797 = vmatprep.subr.mxu0 0.0
        %2798 = vmatpush1.msra.mxu0 0.0
        %2799 = vmatprep.subr.mxu0 0.0
        %2800 = vmatpush1.msra.mxu0 0.0
        %2801 = vmatprep.subr.mxu0 0.0
        %2802 = vmatpush1.msra.mxu0 0.0
        %2803 = vmatprep.subr.mxu0 0.0
        %2804 = vmatpush1.msra.mxu0 0.0
        %2805 = vmatprep.subr.mxu0 0.0
        %2806 = vmatpush1.msra.mxu0 0.0
        %2807 = vmatprep.subr.mxu0 0.0
        %2808 = vmatpush1.msra.mxu0 0.0
        %2809 = vmatprep.subr.mxu0 0.0
        %2810 = vmatpush1.msra.mxu0 0.0
        %2811 = vmatprep.subr.mxu0 0.0
        %2812 = vmatpush1.msra.mxu0 0.0
        %2813 = vmatprep.subr.mxu0 0.0
        %2814 = vmatpush1.msra.mxu0 0.0
        %2815 = vmatprep.subr.mxu0 0.0
        %2816 = vmatpush1.msra.mxu0 0.0
        %2817 = vmatprep.subr.mxu0 0.0
        %2818 = vmatpush1.msra.mxu0 0.0
        %2819 = vmatprep.subr.mxu0 0.0
        %2820 = vmatpush1.msra.mxu0 0.0
        %2821 = vmatprep.mubr.f32.mxu0 0.0
        %2822 = vmatmul.mubr.f32.gmra.mrb[0].mxu0 %v2684
        %v2823 = vpop.f32.mrb[0].mxu0
        %v2824 = vadd.f32 0.0, %v2823
        %v2825 = vpop.f32.mrb[0].mxu0
        %2826 = vdwg.mxu0
        %v2827 = vadd.f32 %v2655, %v2753
        %v2828 = vadd.f32 %v2656, %v2755
        %v2829 = vadd.f32 %v2657, %v2824
        %2830 = vst [vmem:[#allocation2] sm:$0xff] %v2827
        %2831 = vst [vmem:[#allocation2 + $0x8] sm:$0xff] %v2828
        %2832 = vst.msk [vmem:[#allocation2 + $0x10] sm:$0xff] %vm177, %v2829
        %v2833 = vld [vmem:[#allocation2] sm:$0xff]
        %v2834 = vld [vmem:[#allocation2 + $0x8] sm:$0xff]
        %v2835 = vld [vmem:[#allocation2 + $0x10] sm:$0xff]
        %s2836 = scalar_lea.vmem %s1, 120
        %v2837 = vld [vmem:[%s2836] sm:$0xff]
        %v2838 = vld [vmem:[%s168] sm:$0xff]
        %v2839 = vld [vmem:[%s168 + $0x8] sm:$0xff]
        %v2840 = vld [vmem:[%s168 + $0x10] sm:$0xff]
        %v2841 = vld [vmem:[%s168 + $0x18] sm:$0xff]
        %2846 = vrot.lane.b32.xlu0 %v2838, 17
        %v2847 = vpop.permute.xlu0 %2846
        %2848 = vrot.lane.b32.xlu0 %v2839, 17
        %v2849 = vpop.permute.xlu0 %2848
        %2850 = vrot.lane.b32.xlu0 %v2840, 17
        %v2851 = vpop.permute.xlu0 %2850
        %2852 = vrot.lane.b32.xlu0 %v2841, 17
        %v2853 = vpop.permute.xlu0 %2852
        %vm2854 = vcmask 138240
        %v2855 = vsel %vm2854, %v2847, %v2849
        %v2856 = vsel %vm2854, %v2849, %v2851
        %v2857 = vsel %vm2854, %v2851, %v2853
        %v2862 = vsel %vm206, %v2837, 0
        %2864 = vmatprep.subr.mxu0 %v2856
        %2865 = vmatpush1.msra.mxu0 %v2855
        %2866 = vmatprep.subr.mxu0 0.0
        %2867 = vmatpush1.msra.mxu0 0.0
        %2868 = vmatprep.subr.mxu0 0.0
        %2869 = vmatpush1.msra.mxu0 0.0
        %2870 = vmatprep.subr.mxu0 0.0
        %2871 = vmatpush1.msra.mxu0 0.0
        %2872 = vmatprep.subr.mxu0 0.0
        %2873 = vmatpush1.msra.mxu0 0.0
        %2874 = vmatprep.subr.mxu0 0.0
        %2875 = vmatpush1.msra.mxu0 0.0
        %2876 = vmatprep.subr.mxu0 0.0
        %2877 = vmatpush1.msra.mxu0 0.0
        %2878 = vmatprep.subr.mxu0 0.0
        %2879 = vmatpush1.msra.mxu0 0.0
        %2880 = vmatprep.subr.mxu0 0.0
        %2881 = vmatpush1.msra.mxu0 0.0
        %2882 = vmatprep.subr.mxu0 0.0
        %2883 = vmatpush1.msra.mxu0 0.0
        %2884 = vmatprep.subr.mxu0 0.0
        %2885 = vmatpush1.msra.mxu0 0.0
        %2886 = vmatprep.subr.mxu0 0.0
        %2887 = vmatpush1.msra.mxu0 0.0
        %2888 = vmatprep.subr.mxu0 0.0
        %2889 = vmatpush1.msra.mxu0 0.0
        %2890 = vmatprep.subr.mxu0 0.0
        %2891 = vmatpush1.msra.mxu0 0.0
        %2892 = vmatprep.subr.mxu0 0.0
        %2893 = vmatpush1.msra.mxu0 0.0
        %2894 = vmatprep.subr.mxu0 0.0
        %2895 = vmatpush1.msra.mxu0 0.0
        %2896 = vmatprep.subr.mxu0 0.0
        %2897 = vmatpush1.msra.mxu0 0.0
        %2898 = vmatprep.subr.mxu0 0.0
        %2899 = vmatpush1.msra.mxu0 0.0
        %2900 = vmatprep.subr.mxu0 0.0
        %2901 = vmatpush1.msra.mxu0 0.0
        %2902 = vmatprep.subr.mxu0 0.0
        %2903 = vmatpush1.msra.mxu0 0.0
        %2904 = vmatprep.subr.mxu0 0.0
        %2905 = vmatpush1.msra.mxu0 0.0
        %2906 = vmatprep.subr.mxu0 0.0
        %2907 = vmatpush1.msra.mxu0 0.0
        %2908 = vmatprep.subr.mxu0 0.0
        %2909 = vmatpush1.msra.mxu0 0.0
        %2910 = vmatprep.subr.mxu0 0.0
        %2911 = vmatpush1.msra.mxu0 0.0
        %2912 = vmatprep.subr.mxu0 0.0
        %2913 = vmatpush1.msra.mxu0 0.0
        %2914 = vmatprep.subr.mxu0 0.0
        %2915 = vmatpush1.msra.mxu0 0.0
        %2916 = vmatprep.subr.mxu0 0.0
        %2917 = vmatpush1.msra.mxu0 0.0
        %2918 = vmatprep.subr.mxu0 0.0
        %2919 = vmatpush1.msra.mxu0 0.0
        %2920 = vmatprep.subr.mxu0 0.0
        %2921 = vmatpush1.msra.mxu0 0.0
        %2922 = vmatprep.subr.mxu0 0.0
        %2923 = vmatpush1.msra.mxu0 0.0
        %2924 = vmatprep.subr.mxu0 0.0
        %2925 = vmatpush1.msra.mxu0 0.0
        %2926 = vmatprep.subr.mxu0 0.0
        %2927 = vmatpush1.msra.mxu0 0.0
        %2928 = vmatprep.mubr.f32.mxu0 0.0
        %2929 = vmatmul.mubr.f32.gmra.mrb[0].mxu0 %v2862
        %v2930 = vpop.f32.mrb[0].mxu0
        %v2931 = vadd.f32 0.0, %v2930
        %v2932 = vpop.f32.mrb[0].mxu0
        %v2933 = vadd.f32 0.0, %v2932
        %2934 = vdwg.mxu0
        %2935 = vmatprep.subr.mxu0 0.0
        %2936 = vmatpush1.msra.mxu0 %v2857
        %2937 = vmatprep.subr.mxu0 0.0
        %2938 = vmatpush1.msra.mxu0 0.0
        %2939 = vmatprep.subr.mxu0 0.0
        %2940 = vmatpush1.msra.mxu0 0.0
        %2941 = vmatprep.subr.mxu0 0.0
        %2942 = vmatpush1.msra.mxu0 0.0
        %2943 = vmatprep.subr.mxu0 0.0
        %2944 = vmatpush1.msra.mxu0 0.0
        %2945 = vmatprep.subr.mxu0 0.0
        %2946 = vmatpush1.msra.mxu0 0.0
        %2947 = vmatprep.subr.mxu0 0.0
        %2948 = vmatpush1.msra.mxu0 0.0
        %2949 = vmatprep.subr.mxu0 0.0
        %2950 = vmatpush1.msra.mxu0 0.0
        %2951 = vmatprep.subr.mxu0 0.0
        %2952 = vmatpush1.msra.mxu0 0.0
        %2953 = vmatprep.subr.mxu0 0.0
        %2954 = vmatpush1.msra.mxu0 0.0
        %2955 = vmatprep.subr.mxu0 0.0
        %2956 = vmatpush1.msra.mxu0 0.0
        %2957 = vmatprep.subr.mxu0 0.0
        %2958 = vmatpush1.msra.mxu0 0.0
        %2959 = vmatprep.subr.mxu0 0.0
        %2960 = vmatpush1.msra.mxu0 0.0
        %2961 = vmatprep.subr.mxu0 0.0
        %2962 = vmatpush1.msra.mxu0 0.0
        %2963 = vmatprep.subr.mxu0 0.0
        %2964 = vmatpush1.msra.mxu0 0.0
        %2965 = vmatprep.subr.mxu0 0.0
        %2966 = vmatpush1.msra.mxu0 0.0
        %2967 = vmatprep.subr.mxu0 0.0
        %2968 = vmatpush1.msra.mxu0 0.0
        %2969 = vmatprep.subr.mxu0 0.0
        %2970 = vmatpush1.msra.mxu0 0.0
        %2971 = vmatprep.subr.mxu0 0.0
        %2972 = vmatpush1.msra.mxu0 0.0
        %2973 = vmatprep.subr.mxu0 0.0
        %2974 = vmatpush1.msra.mxu0 0.0
        %2975 = vmatprep.subr.mxu0 0.0
        %2976 = vmatpush1.msra.mxu0 0.0
        %2977 = vmatprep.subr.mxu0 0.0
        %2978 = vmatpush1.msra.mxu0 0.0
        %2979 = vmatprep.subr.mxu0 0.0
        %2980 = vmatpush1.msra.mxu0 0.0
        %2981 = vmatprep.subr.mxu0 0.0
        %2982 = vmatpush1.msra.mxu0 0.0
        %2983 = vmatprep.subr.mxu0 0.0
        %2984 = vmatpush1.msra.mxu0 0.0
        %2985 = vmatprep.subr.mxu0 0.0
        %2986 = vmatpush1.msra.mxu0 0.0
        %2987 = vmatprep.subr.mxu0 0.0
        %2988 = vmatpush1.msra.mxu0 0.0
        %2989 = vmatprep.subr.mxu0 0.0
        %2990 = vmatpush1.msra.mxu0 0.0
        %2991 = vmatprep.subr.mxu0 0.0
        %2992 = vmatpush1.msra.mxu0 0.0
        %2993 = vmatprep.subr.mxu0 0.0
        %2994 = vmatpush1.msra.mxu0 0.0
        %2995 = vmatprep.subr.mxu0 0.0
        %2996 = vmatpush1.msra.mxu0 0.0
        %2997 = vmatprep.subr.mxu0 0.0
        %2998 = vmatpush1.msra.mxu0 0.0
        %2999 = vmatprep.mubr.f32.mxu0 0.0
        %3000 = vmatmul.mubr.f32.gmra.mrb[0].mxu0 %v2862
        %v3001 = vpop.f32.mrb[0].mxu0
        %v3002 = vadd.f32 0.0, %v3001
        %v3003 = vpop.f32.mrb[0].mxu0
        %3004 = vdwg.mxu0
        %v3005 = vadd.f32 %v2833, %v2931
        %v3006 = vadd.f32 %v2834, %v2933
        %v3007 = vadd.f32 %v2835, %v3002
        %3008 = vst [vmem:[#allocation2] sm:$0xff] %v3005
        %3009 = vst [vmem:[#allocation2 + $0x8] sm:$0xff] %v3006
        %3010 = vst.msk [vmem:[#allocation2 + $0x10] sm:$0xff] %vm177, %v3007
        %v3011 = vld [vmem:[#allocation2] sm:$0xff]
        %v3012 = vld [vmem:[#allocation2 + $0x8] sm:$0xff]
        %v3013 = vld [vmem:[#allocation2 + $0x10] sm:$0xff]
        %s3014 = scalar_lea.vmem %s1, 128
        %v3015 = vld [vmem:[%s3014] sm:$0xff]
        %v3016 = vld [vmem:[%s168] sm:$0xff]
        %v3017 = vld [vmem:[%s168 + $0x8] sm:$0xff]
        %v3018 = vld [vmem:[%s168 + $0x10] sm:$0xff]
        %v3019 = vld [vmem:[%s168 + $0x18] sm:$0xff]
        %3024 = vrot.lane.b32.xlu0 %v3016, 15
        %v3025 = vpop.permute.xlu0 %3024
        %3026 = vrot.lane.b32.xlu0 %v3017, 15
        %v3027 = vpop.permute.xlu0 %3026
        %3028 = vrot.lane.b32.xlu0 %v3018, 15
        %v3029 = vpop.permute.xlu0 %3028
        %3030 = vrot.lane.b32.xlu0 %v3019, 15
        %v3031 = vpop.permute.xlu0 %3030
        %vm3032 = vcmask 121856
        %v3033 = vsel %vm3032, %v3025, %v3027
        %v3034 = vsel %vm3032, %v3027, %v3029
        %v3035 = vsel %vm3032, %v3029, %v3031
        %v3040 = vsel %vm206, %v3015, 0
        %3042 = vmatprep.subr.mxu0 %v3034
        %3043 = vmatpush1.msra.mxu0 %v3033
        %3044 = vmatprep.subr.mxu0 0.0
        %3045 = vmatpush1.msra.mxu0 0.0
        %3046 = vmatprep.subr.mxu0 0.0
        %3047 = vmatpush1.msra.mxu0 0.0
        %3048 = vmatprep.subr.mxu0 0.0
        %3049 = vmatpush1.msra.mxu0 0.0
        %3050 = vmatprep.subr.mxu0 0.0
        %3051 = vmatpush1.msra.mxu0 0.0
        %3052 = vmatprep.subr.mxu0 0.0
        %3053 = vmatpush1.msra.mxu0 0.0
        %3054 = vmatprep.subr.mxu0 0.0
        %3055 = vmatpush1.msra.mxu0 0.0
        %3056 = vmatprep.subr.mxu0 0.0
        %3057 = vmatpush1.msra.mxu0 0.0
        %3058 = vmatprep.subr.mxu0 0.0
        %3059 = vmatpush1.msra.mxu0 0.0
        %3060 = vmatprep.subr.mxu0 0.0
        %3061 = vmatpush1.msra.mxu0 0.0
        %3062 = vmatprep.subr.mxu0 0.0
        %3063 = vmatpush1.msra.mxu0 0.0
        %3064 = vmatprep.subr.mxu0 0.0
        %3065 = vmatpush1.msra.mxu0 0.0
        %3066 = vmatprep.subr.mxu0 0.0
        %3067 = vmatpush1.msra.mxu0 0.0
        %3068 = vmatprep.subr.mxu0 0.0
        %3069 = vmatpush1.msra.mxu0 0.0
        %3070 = vmatprep.subr.mxu0 0.0
        %3071 = vmatpush1.msra.mxu0 0.0
        %3072 = vmatprep.subr.mxu0 0.0
        %3073 = vmatpush1.msra.mxu0 0.0
        %3074 = vmatprep.subr.mxu0 0.0
        %3075 = vmatpush1.msra.mxu0 0.0
        %3076 = vmatprep.subr.mxu0 0.0
        %3077 = vmatpush1.msra.mxu0 0.0
        %3078 = vmatprep.subr.mxu0 0.0
        %3079 = vmatpush1.msra.mxu0 0.0
        %3080 = vmatprep.subr.mxu0 0.0
        %3081 = vmatpush1.msra.mxu0 0.0
        %3082 = vmatprep.subr.mxu0 0.0
        %3083 = vmatpush1.msra.mxu0 0.0
        %3084 = vmatprep.subr.mxu0 0.0
        %3085 = vmatpush1.msra.mxu0 0.0
        %3086 = vmatprep.subr.mxu0 0.0
        %3087 = vmatpush1.msra.mxu0 0.0
        %3088 = vmatprep.subr.mxu0 0.0
        %3089 = vmatpush1.msra.mxu0 0.0
        %3090 = vmatprep.subr.mxu0 0.0
        %3091 = vmatpush1.msra.mxu0 0.0
        %3092 = vmatprep.subr.mxu0 0.0
        %3093 = vmatpush1.msra.mxu0 0.0
        %3094 = vmatprep.subr.mxu0 0.0
        %3095 = vmatpush1.msra.mxu0 0.0
        %3096 = vmatprep.subr.mxu0 0.0
        %3097 = vmatpush1.msra.mxu0 0.0
        %3098 = vmatprep.subr.mxu0 0.0
        %3099 = vmatpush1.msra.mxu0 0.0
        %3100 = vmatprep.subr.mxu0 0.0
        %3101 = vmatpush1.msra.mxu0 0.0
        %3102 = vmatprep.subr.mxu0 0.0
        %3103 = vmatpush1.msra.mxu0 0.0
        %3104 = vmatprep.subr.mxu0 0.0
        %3105 = vmatpush1.msra.mxu0 0.0
        %3106 = vmatprep.mubr.f32.mxu0 0.0
        %3107 = vmatmul.mubr.f32.gmra.mrb[0].mxu0 %v3040
        %v3108 = vpop.f32.mrb[0].mxu0
        %v3109 = vadd.f32 0.0, %v3108
        %v3110 = vpop.f32.mrb[0].mxu0
        %v3111 = vadd.f32 0.0, %v3110
        %3112 = vdwg.mxu0
        %3113 = vmatprep.subr.mxu0 0.0
        %3114 = vmatpush1.msra.mxu0 %v3035
        %3115 = vmatprep.subr.mxu0 0.0
        %3116 = vmatpush1.msra.mxu0 0.0
        %3117 = vmatprep.subr.mxu0 0.0
        %3118 = vmatpush1.msra.mxu0 0.0
        %3119 = vmatprep.subr.mxu0 0.0
        %3120 = vmatpush1.msra.mxu0 0.0
        %3121 = vmatprep.subr.mxu0 0.0
        %3122 = vmatpush1.msra.mxu0 0.0
        %3123 = vmatprep.subr.mxu0 0.0
        %3124 = vmatpush1.msra.mxu0 0.0
        %3125 = vmatprep.subr.mxu0 0.0
        %3126 = vmatpush1.msra.mxu0 0.0
        %3127 = vmatprep.subr.mxu0 0.0
        %3128 = vmatpush1.msra.mxu0 0.0
        %3129 = vmatprep.subr.mxu0 0.0
        %3130 = vmatpush1.msra.mxu0 0.0
        %3131 = vmatprep.subr.mxu0 0.0
        %3132 = vmatpush1.msra.mxu0 0.0
        %3133 = vmatprep.subr.mxu0 0.0
        %3134 = vmatpush1.msra.mxu0 0.0
        %3135 = vmatprep.subr.mxu0 0.0
        %3136 = vmatpush1.msra.mxu0 0.0
        %3137 = vmatprep.subr.mxu0 0.0
        %3138 = vmatpush1.msra.mxu0 0.0
        %3139 = vmatprep.subr.mxu0 0.0
        %3140 = vmatpush1.msra.mxu0 0.0
        %3141 = vmatprep.subr.mxu0 0.0
        %3142 = vmatpush1.msra.mxu0 0.0
        %3143 = vmatprep.subr.mxu0 0.0
        %3144 = vmatpush1.msra.mxu0 0.0
        %3145 = vmatprep.subr.mxu0 0.0
        %3146 = vmatpush1.msra.mxu0 0.0
        %3147 = vmatprep.subr.mxu0 0.0
        %3148 = vmatpush1.msra.mxu0 0.0
        %3149 = vmatprep.subr.mxu0 0.0
        %3150 = vmatpush1.msra.mxu0 0.0
        %3151 = vmatprep.subr.mxu0 0.0
        %3152 = vmatpush1.msra.mxu0 0.0
        %3153 = vmatprep.subr.mxu0 0.0
        %3154 = vmatpush1.msra.mxu0 0.0
        %3155 = vmatprep.subr.mxu0 0.0
        %3156 = vmatpush1.msra.mxu0 0.0
        %3157 = vmatprep.subr.mxu0 0.0
        %3158 = vmatpush1.msra.mxu0 0.0
        %3159 = vmatprep.subr.mxu0 0.0
        %3160 = vmatpush1.msra.mxu0 0.0
        %3161 = vmatprep.subr.mxu0 0.0
        %3162 = vmatpush1.msra.mxu0 0.0
        %3163 = vmatprep.subr.mxu0 0.0
        %3164 = vmatpush1.msra.mxu0 0.0
        %3165 = vmatprep.subr.mxu0 0.0
        %3166 = vmatpush1.msra.mxu0 0.0
        %3167 = vmatprep.subr.mxu0 0.0
        %3168 = vmatpush1.msra.mxu0 0.0
        %3169 = vmatprep.subr.mxu0 0.0
        %3170 = vmatpush1.msra.mxu0 0.0
        %3171 = vmatprep.subr.mxu0 0.0
        %3172 = vmatpush1.msra.mxu0 0.0
        %3173 = vmatprep.subr.mxu0 0.0
        %3174 = vmatpush1.msra.mxu0 0.0
        %3175 = vmatprep.subr.mxu0 0.0
        %3176 = vmatpush1.msra.mxu0 0.0
        %3177 = vmatprep.mubr.f32.mxu0 0.0
        %3178 = vmatmul.mubr.f32.gmra.mrb[0].mxu0 %v3040
        %v3179 = vpop.f32.mrb[0].mxu0
        %v3180 = vadd.f32 0.0, %v3179
        %v3181 = vpop.f32.mrb[0].mxu0
        %3182 = vdwg.mxu0
        %v3183 = vadd.f32 %v3011, %v3109
        %v3184 = vadd.f32 %v3012, %v3111
        %v3185 = vadd.f32 %v3013, %v3180
        %3186 = vst [vmem:[#allocation2] sm:$0xff] %v3183
        %3187 = vst [vmem:[#allocation2 + $0x8] sm:$0xff] %v3184
        %3188 = vst.msk [vmem:[#allocation2 + $0x10] sm:$0xff] %vm177, %v3185
        %v3189 = vld [vmem:[#allocation2] sm:$0xff]
        %v3190 = vld [vmem:[#allocation2 + $0x8] sm:$0xff]
        %v3191 = vld [vmem:[#allocation2 + $0x10] sm:$0xff]
        %s3192 = scalar_lea.vmem %s1, 136
        %v3193 = vld [vmem:[%s3192] sm:$0xff]
        %v3194 = vld [vmem:[%s168] sm:$0xff]
        %v3195 = vld [vmem:[%s168 + $0x8] sm:$0xff]
        %v3196 = vld [vmem:[%s168 + $0x10] sm:$0xff]
        %v3197 = vld [vmem:[%s168 + $0x18] sm:$0xff]
        %3202 = vrot.lane.b32.xlu0 %v3194, 13
        %v3203 = vpop.permute.xlu0 %3202
        %3204 = vrot.lane.b32.xlu0 %v3195, 13
        %v3205 = vpop.permute.xlu0 %3204
        %3206 = vrot.lane.b32.xlu0 %v3196, 13
        %v3207 = vpop.permute.xlu0 %3206
        %3208 = vrot.lane.b32.xlu0 %v3197, 13
        %v3209 = vpop.permute.xlu0 %3208
        %vm3210 = vcmask 105472
        %v3211 = vsel %vm3210, %v3203, %v3205
        %v3212 = vsel %vm3210, %v3205, %v3207
        %v3213 = vsel %vm3210, %v3207, %v3209
        %v3218 = vsel %vm206, %v3193, 0
        %3220 = vmatprep.subr.mxu0 %v3212
        %3221 = vmatpush1.msra.mxu0 %v3211
        %3222 = vmatprep.subr.mxu0 0.0
        %3223 = vmatpush1.msra.mxu0 0.0
        %3224 = vmatprep.subr.mxu0 0.0
        %3225 = vmatpush1.msra.mxu0 0.0
        %3226 = vmatprep.subr.mxu0 0.0
        %3227 = vmatpush1.msra.mxu0 0.0
        %3228 = vmatprep.subr.mxu0 0.0
        %3229 = vmatpush1.msra.mxu0 0.0
        %3230 = vmatprep.subr.mxu0 0.0
        %3231 = vmatpush1.msra.mxu0 0.0
        %3232 = vmatprep.subr.mxu0 0.0
        %3233 = vmatpush1.msra.mxu0 0.0
        %3234 = vmatprep.subr.mxu0 0.0
        %3235 = vmatpush1.msra.mxu0 0.0
        %3236 = vmatprep.subr.mxu0 0.0
        %3237 = vmatpush1.msra.mxu0 0.0
        %3238 = vmatprep.subr.mxu0 0.0
        %3239 = vmatpush1.msra.mxu0 0.0
        %3240 = vmatprep.subr.mxu0 0.0
        %3241 = vmatpush1.msra.mxu0 0.0
        %3242 = vmatprep.subr.mxu0 0.0
        %3243 = vmatpush1.msra.mxu0 0.0
        %3244 = vmatprep.subr.mxu0 0.0
        %3245 = vmatpush1.msra.mxu0 0.0
        %3246 = vmatprep.subr.mxu0 0.0
        %3247 = vmatpush1.msra.mxu0 0.0
        %3248 = vmatprep.subr.mxu0 0.0
        %3249 = vmatpush1.msra.mxu0 0.0
        %3250 = vmatprep.subr.mxu0 0.0
        %3251 = vmatpush1.msra.mxu0 0.0
        %3252 = vmatprep.subr.mxu0 0.0
        %3253 = vmatpush1.msra.mxu0 0.0
        %3254 = vmatprep.subr.mxu0 0.0
        %3255 = vmatpush1.msra.mxu0 0.0
        %3256 = vmatprep.subr.mxu0 0.0
        %3257 = vmatpush1.msra.mxu0 0.0
        %3258 = vmatprep.subr.mxu0 0.0
        %3259 = vmatpush1.msra.mxu0 0.0
        %3260 = vmatprep.subr.mxu0 0.0
        %3261 = vmatpush1.msra.mxu0 0.0
        %3262 = vmatprep.subr.mxu0 0.0
        %3263 = vmatpush1.msra.mxu0 0.0
        %3264 = vmatprep.subr.mxu0 0.0
        %3265 = vmatpush1.msra.mxu0 0.0
        %3266 = vmatprep.subr.mxu0 0.0
        %3267 = vmatpush1.msra.mxu0 0.0
        %3268 = vmatprep.subr.mxu0 0.0
        %3269 = vmatpush1.msra.mxu0 0.0
        %3270 = vmatprep.subr.mxu0 0.0
        %3271 = vmatpush1.msra.mxu0 0.0
        %3272 = vmatprep.subr.mxu0 0.0
        %3273 = vmatpush1.msra.mxu0 0.0
        %3274 = vmatprep.subr.mxu0 0.0
        %3275 = vmatpush1.msra.mxu0 0.0
        %3276 = vmatprep.subr.mxu0 0.0
        %3277 = vmatpush1.msra.mxu0 0.0
        %3278 = vmatprep.subr.mxu0 0.0
        %3279 = vmatpush1.msra.mxu0 0.0
        %3280 = vmatprep.subr.mxu0 0.0
        %3281 = vmatpush1.msra.mxu0 0.0
        %3282 = vmatprep.subr.mxu0 0.0
        %3283 = vmatpush1.msra.mxu0 0.0
        %3284 = vmatprep.mubr.f32.mxu0 0.0
        %3285 = vmatmul.mubr.f32.gmra.mrb[0].mxu0 %v3218
        %v3286 = vpop.f32.mrb[0].mxu0
        %v3287 = vadd.f32 0.0, %v3286
        %v3288 = vpop.f32.mrb[0].mxu0
        %v3289 = vadd.f32 0.0, %v3288
        %3290 = vdwg.mxu0
        %3291 = vmatprep.subr.mxu0 0.0
        %3292 = vmatpush1.msra.mxu0 %v3213
        %3293 = vmatprep.subr.mxu0 0.0
        %3294 = vmatpush1.msra.mxu0 0.0
        %3295 = vmatprep.subr.mxu0 0.0
        %3296 = vmatpush1.msra.mxu0 0.0
        %3297 = vmatprep.subr.mxu0 0.0
        %3298 = vmatpush1.msra.mxu0 0.0
        %3299 = vmatprep.subr.mxu0 0.0
        %3300 = vmatpush1.msra.mxu0 0.0
        %3301 = vmatprep.subr.mxu0 0.0
        %3302 = vmatpush1.msra.mxu0 0.0
        %3303 = vmatprep.subr.mxu0 0.0
        %3304 = vmatpush1.msra.mxu0 0.0
        %3305 = vmatprep.subr.mxu0 0.0
        %3306 = vmatpush1.msra.mxu0 0.0
        %3307 = vmatprep.subr.mxu0 0.0
        %3308 = vmatpush1.msra.mxu0 0.0
        %3309 = vmatprep.subr.mxu0 0.0
        %3310 = vmatpush1.msra.mxu0 0.0
        %3311 = vmatprep.subr.mxu0 0.0
        %3312 = vmatpush1.msra.mxu0 0.0
        %3313 = vmatprep.subr.mxu0 0.0
        %3314 = vmatpush1.msra.mxu0 0.0
        %3315 = vmatprep.subr.mxu0 0.0
        %3316 = vmatpush1.msra.mxu0 0.0
        %3317 = vmatprep.subr.mxu0 0.0
        %3318 = vmatpush1.msra.mxu0 0.0
        %3319 = vmatprep.subr.mxu0 0.0
        %3320 = vmatpush1.msra.mxu0 0.0
        %3321 = vmatprep.subr.mxu0 0.0
        %3322 = vmatpush1.msra.mxu0 0.0
        %3323 = vmatprep.subr.mxu0 0.0
        %3324 = vmatpush1.msra.mxu0 0.0
        %3325 = vmatprep.subr.mxu0 0.0
        %3326 = vmatpush1.msra.mxu0 0.0
        %3327 = vmatprep.subr.mxu0 0.0
        %3328 = vmatpush1.msra.mxu0 0.0
        %3329 = vmatprep.subr.mxu0 0.0
        %3330 = vmatpush1.msra.mxu0 0.0
        %3331 = vmatprep.subr.mxu0 0.0
        %3332 = vmatpush1.msra.mxu0 0.0
        %3333 = vmatprep.subr.mxu0 0.0
        %3334 = vmatpush1.msra.mxu0 0.0
        %3335 = vmatprep.subr.mxu0 0.0
        %3336 = vmatpush1.msra.mxu0 0.0
        %3337 = vmatprep.subr.mxu0 0.0
        %3338 = vmatpush1.msra.mxu0 0.0
        %3339 = vmatprep.subr.mxu0 0.0
        %3340 = vmatpush1.msra.mxu0 0.0
        %3341 = vmatprep.subr.mxu0 0.0
        %3342 = vmatpush1.msra.mxu0 0.0
        %3343 = vmatprep.subr.mxu0 0.0
        %3344 = vmatpush1.msra.mxu0 0.0
        %3345 = vmatprep.subr.mxu0 0.0
        %3346 = vmatpush1.msra.mxu0 0.0
        %3347 = vmatprep.subr.mxu0 0.0
        %3348 = vmatpush1.msra.mxu0 0.0
        %3349 = vmatprep.subr.mxu0 0.0
        %3350 = vmatpush1.msra.mxu0 0.0
        %3351 = vmatprep.subr.mxu0 0.0
        %3352 = vmatpush1.msra.mxu0 0.0
        %3353 = vmatprep.subr.mxu0 0.0
        %3354 = vmatpush1.msra.mxu0 0.0
        %3355 = vmatprep.mubr.f32.mxu0 0.0
        %3356 = vmatmul.mubr.f32.gmra.mrb[0].mxu0 %v3218
        %v3357 = vpop.f32.mrb[0].mxu0
        %v3358 = vadd.f32 0.0, %v3357
        %v3359 = vpop.f32.mrb[0].mxu0
        %3360 = vdwg.mxu0
        %v3361 = vadd.f32 %v3189, %v3287
        %v3362 = vadd.f32 %v3190, %v3289
        %v3363 = vadd.f32 %v3191, %v3358
        %3364 = vst [vmem:[#allocation2] sm:$0xff] %v3361
        %3365 = vst [vmem:[#allocation2 + $0x8] sm:$0xff] %v3362
        %3366 = vst.msk [vmem:[#allocation2 + $0x10] sm:$0xff] %vm177, %v3363
        %v3367 = vld [vmem:[#allocation2] sm:$0xff]
        %v3368 = vld [vmem:[#allocation2 + $0x8] sm:$0xff]
        %v3369 = vld [vmem:[#allocation2 + $0x10] sm:$0xff]
        %s3370 = scalar_lea.vmem %s1, 144
        %v3371 = vld [vmem:[%s3370] sm:$0xff]
        %v3372 = vld [vmem:[%s168] sm:$0xff]
        %v3373 = vld [vmem:[%s168 + $0x8] sm:$0xff]
        %v3374 = vld [vmem:[%s168 + $0x10] sm:$0xff]
        %v3376 = vsel %vm206, %v3371, 0
        %3378 = vmatprep.subr.mxu0 %v3373
        %3379 = vmatpush1.msra.mxu0 %v3372
        %3380 = vmatprep.subr.mxu0 0.0
        %3381 = vmatpush1.msra.mxu0 0.0
        %3382 = vmatprep.subr.mxu0 0.0
        %3383 = vmatpush1.msra.mxu0 0.0
        %3384 = vmatprep.subr.mxu0 0.0
        %3385 = vmatpush1.msra.mxu0 0.0
        %3386 = vmatprep.subr.mxu0 0.0
        %3387 = vmatpush1.msra.mxu0 0.0
        %3388 = vmatprep.subr.mxu0 0.0
        %3389 = vmatpush1.msra.mxu0 0.0
        %3390 = vmatprep.subr.mxu0 0.0
        %3391 = vmatpush1.msra.mxu0 0.0
        %3392 = vmatprep.subr.mxu0 0.0
        %3393 = vmatpush1.msra.mxu0 0.0
        %3394 = vmatprep.subr.mxu0 0.0
        %3395 = vmatpush1.msra.mxu0 0.0
        %3396 = vmatprep.subr.mxu0 0.0
        %3397 = vmatpush1.msra.mxu0 0.0
        %3398 = vmatprep.subr.mxu0 0.0
        %3399 = vmatpush1.msra.mxu0 0.0
        %3400 = vmatprep.subr.mxu0 0.0
        %3401 = vmatpush1.msra.mxu0 0.0
        %3402 = vmatprep.subr.mxu0 0.0
        %3403 = vmatpush1.msra.mxu0 0.0
        %3404 = vmatprep.subr.mxu0 0.0
        %3405 = vmatpush1.msra.mxu0 0.0
        %3406 = vmatprep.subr.mxu0 0.0
        %3407 = vmatpush1.msra.mxu0 0.0
        %3408 = vmatprep.subr.mxu0 0.0
        %3409 = vmatpush1.msra.mxu0 0.0
        %3410 = vmatprep.subr.mxu0 0.0
        %3411 = vmatpush1.msra.mxu0 0.0
        %3412 = vmatprep.subr.mxu0 0.0
        %3413 = vmatpush1.msra.mxu0 0.0
        %3414 = vmatprep.subr.mxu0 0.0
        %3415 = vmatpush1.msra.mxu0 0.0
        %3416 = vmatprep.subr.mxu0 0.0
        %3417 = vmatpush1.msra.mxu0 0.0
        %3418 = vmatprep.subr.mxu0 0.0
        %3419 = vmatpush1.msra.mxu0 0.0
        %3420 = vmatprep.subr.mxu0 0.0
        %3421 = vmatpush1.msra.mxu0 0.0
        %3422 = vmatprep.subr.mxu0 0.0
        %3423 = vmatpush1.msra.mxu0 0.0
        %3424 = vmatprep.subr.mxu0 0.0
        %3425 = vmatpush1.msra.mxu0 0.0
        %3426 = vmatprep.subr.mxu0 0.0
        %3427 = vmatpush1.msra.mxu0 0.0
        %3428 = vmatprep.subr.mxu0 0.0
        %3429 = vmatpush1.msra.mxu0 0.0
        %3430 = vmatprep.subr.mxu0 0.0
        %3431 = vmatpush1.msra.mxu0 0.0
        %3432 = vmatprep.subr.mxu0 0.0
        %3433 = vmatpush1.msra.mxu0 0.0
        %3434 = vmatprep.subr.mxu0 0.0
        %3435 = vmatpush1.msra.mxu0 0.0
        %3436 = vmatprep.subr.mxu0 0.0
        %3437 = vmatpush1.msra.mxu0 0.0
        %3438 = vmatprep.subr.mxu0 0.0
        %3439 = vmatpush1.msra.mxu0 0.0
        %3440 = vmatprep.subr.mxu0 0.0
        %3441 = vmatpush1.msra.mxu0 0.0
        %3442 = vmatprep.mubr.f32.mxu0 0.0
        %3443 = vmatmul.mubr.f32.gmra.mrb[0].mxu0 %v3376
        %v3444 = vpop.f32.mrb[0].mxu0
        %v3445 = vadd.f32 0.0, %v3444
        %v3446 = vpop.f32.mrb[0].mxu0
        %v3447 = vadd.f32 0.0, %v3446
        %3448 = vdwg.mxu0
        %3449 = vmatprep.subr.mxu0 0.0
        %3450 = vmatpush1.msra.mxu0 %v3374
        %3451 = vmatprep.subr.mxu0 0.0
        %3452 = vmatpush1.msra.mxu0 0.0
        %3453 = vmatprep.subr.mxu0 0.0
        %3454 = vmatpush1.msra.mxu0 0.0
        %3455 = vmatprep.subr.mxu0 0.0
        %3456 = vmatpush1.msra.mxu0 0.0
        %3457 = vmatprep.subr.mxu0 0.0
        %3458 = vmatpush1.msra.mxu0 0.0
        %3459 = vmatprep.subr.mxu0 0.0
        %3460 = vmatpush1.msra.mxu0 0.0
        %3461 = vmatprep.subr.mxu0 0.0
        %3462 = vmatpush1.msra.mxu0 0.0
        %3463 = vmatprep.subr.mxu0 0.0
        %3464 = vmatpush1.msra.mxu0 0.0
        %3465 = vmatprep.subr.mxu0 0.0
        %3466 = vmatpush1.msra.mxu0 0.0
        %3467 = vmatprep.subr.mxu0 0.0
        %3468 = vmatpush1.msra.mxu0 0.0
        %3469 = vmatprep.subr.mxu0 0.0
        %3470 = vmatpush1.msra.mxu0 0.0
        %3471 = vmatprep.subr.mxu0 0.0
        %3472 = vmatpush1.msra.mxu0 0.0
        %3473 = vmatprep.subr.mxu0 0.0
        %3474 = vmatpush1.msra.mxu0 0.0
        %3475 = vmatprep.subr.mxu0 0.0
        %3476 = vmatpush1.msra.mxu0 0.0
        %3477 = vmatprep.subr.mxu0 0.0
        %3478 = vmatpush1.msra.mxu0 0.0
        %3479 = vmatprep.subr.mxu0 0.0
        %3480 = vmatpush1.msra.mxu0 0.0
        %3481 = vmatprep.subr.mxu0 0.0
        %3482 = vmatpush1.msra.mxu0 0.0
        %3483 = vmatprep.subr.mxu0 0.0
        %3484 = vmatpush1.msra.mxu0 0.0
        %3485 = vmatprep.subr.mxu0 0.0
        %3486 = vmatpush1.msra.mxu0 0.0
        %3487 = vmatprep.subr.mxu0 0.0
        %3488 = vmatpush1.msra.mxu0 0.0
        %3489 = vmatprep.subr.mxu0 0.0
        %3490 = vmatpush1.msra.mxu0 0.0
        %3491 = vmatprep.subr.mxu0 0.0
        %3492 = vmatpush1.msra.mxu0 0.0
        %3493 = vmatprep.subr.mxu0 0.0
        %3494 = vmatpush1.msra.mxu0 0.0
        %3495 = vmatprep.subr.mxu0 0.0
        %3496 = vmatpush1.msra.mxu0 0.0
        %3497 = vmatprep.subr.mxu0 0.0
        %3498 = vmatpush1.msra.mxu0 0.0
        %3499 = vmatprep.subr.mxu0 0.0
        %3500 = vmatpush1.msra.mxu0 0.0
        %3501 = vmatprep.subr.mxu0 0.0
        %3502 = vmatpush1.msra.mxu0 0.0
        %3503 = vmatprep.subr.mxu0 0.0
        %3504 = vmatpush1.msra.mxu0 0.0
        %3505 = vmatprep.subr.mxu0 0.0
        %3506 = vmatpush1.msra.mxu0 0.0
        %3507 = vmatprep.subr.mxu0 0.0
        %3508 = vmatpush1.msra.mxu0 0.0
        %3509 = vmatprep.subr.mxu0 0.0
        %3510 = vmatpush1.msra.mxu0 0.0
        %3511 = vmatprep.subr.mxu0 0.0
        %3512 = vmatpush1.msra.mxu0 0.0
        %3513 = vmatprep.mubr.f32.mxu0 0.0
        %3514 = vmatmul.mubr.f32.gmra.mrb[0].mxu0 %v3376
        %v3515 = vpop.f32.mrb[0].mxu0
        %v3516 = vadd.f32 0.0, %v3515
        %v3517 = vpop.f32.mrb[0].mxu0
        %3518 = vdwg.mxu0
        %v3519 = vadd.f32 %v3367, %v3445
        %v3520 = vadd.f32 %v3368, %v3447
        %v3521 = vadd.f32 %v3369, %v3516
        %3522 = vst [vmem:[#allocation2] sm:$0xff] %v3519
        %3523 = vst [vmem:[#allocation2 + $0x8] sm:$0xff] %v3520
        %3524 = vst.msk [vmem:[#allocation2 + $0x10] sm:$0xff] %vm177, %v3521
        %v3525 = vld [vmem:[#allocation2] sm:$0xff]
        %v3526 = vld [vmem:[#allocation2 + $0x8] sm:$0xff]
        %v3527 = vld [vmem:[#allocation2 + $0x10] sm:$0xff]
        %s3528 = scalar_lea.vmem %s1, 152
        %v3529 = vld [vmem:[%s3528] sm:$0xff]
        %v3530 = vld [vmem:[%s168] sm:$0xff]
        %v3531 = vld [vmem:[%s168 + $0x8] sm:$0xff]
        %v3532 = vld [vmem:[%s168 + $0x10] sm:$0xff]
        %3536 = vrot.lane.b32.xlu0 %v3530, 125
        %v3537 = vpop.permute.xlu0 %3536
        %3538 = vrot.lane.b32.xlu0 %v3531, 125
        %v3539 = vpop.permute.xlu0 %3538
        %3540 = vrot.lane.b32.xlu0 %v3532, 125
        %v3541 = vpop.permute.xlu0 %3540
        %vm3542 = vcmask 1022976
        %v3543 = vsel %vm3542, %v3537, %v3539
        %v3544 = vsel %vm3542, %v3539, %v3541
        %v3549 = vsel %vm206, %v3529, 0
        %3551 = vmatprep.subr.mxu0 %v3544
        %3552 = vmatpush1.msra.mxu0 %v3543
        %3553 = vmatprep.subr.mxu0 0.0
        %3554 = vmatpush1.msra.mxu0 0.0
        %3555 = vmatprep.subr.mxu0 0.0
        %3556 = vmatpush1.msra.mxu0 0.0
        %3557 = vmatprep.subr.mxu0 0.0
        %3558 = vmatpush1.msra.mxu0 0.0
        %3559 = vmatprep.subr.mxu0 0.0
        %3560 = vmatpush1.msra.mxu0 0.0
        %3561 = vmatprep.subr.mxu0 0.0
        %3562 = vmatpush1.msra.mxu0 0.0
        %3563 = vmatprep.subr.mxu0 0.0
        %3564 = vmatpush1.msra.mxu0 0.0
        %3565 = vmatprep.subr.mxu0 0.0
        %3566 = vmatpush1.msra.mxu0 0.0
        %3567 = vmatprep.subr.mxu0 0.0
        %3568 = vmatpush1.msra.mxu0 0.0
        %3569 = vmatprep.subr.mxu0 0.0
        %3570 = vmatpush1.msra.mxu0 0.0
        %3571 = vmatprep.subr.mxu0 0.0
        %3572 = vmatpush1.msra.mxu0 0.0
        %3573 = vmatprep.subr.mxu0 0.0
        %3574 = vmatpush1.msra.mxu0 0.0
        %3575 = vmatprep.subr.mxu0 0.0
        %3576 = vmatpush1.msra.mxu0 0.0
        %3577 = vmatprep.subr.mxu0 0.0
        %3578 = vmatpush1.msra.mxu0 0.0
        %3579 = vmatprep.subr.mxu0 0.0
        %3580 = vmatpush1.msra.mxu0 0.0
        %3581 = vmatprep.subr.mxu0 0.0
        %3582 = vmatpush1.msra.mxu0 0.0
        %3583 = vmatprep.subr.mxu0 0.0
        %3584 = vmatpush1.msra.mxu0 0.0
        %3585 = vmatprep.subr.mxu0 0.0
        %3586 = vmatpush1.msra.mxu0 0.0
        %3587 = vmatprep.subr.mxu0 0.0
        %3588 = vmatpush1.msra.mxu0 0.0
        %3589 = vmatprep.subr.mxu0 0.0
        %3590 = vmatpush1.msra.mxu0 0.0
        %3591 = vmatprep.subr.mxu0 0.0
        %3592 = vmatpush1.msra.mxu0 0.0
        %3593 = vmatprep.subr.mxu0 0.0
        %3594 = vmatpush1.msra.mxu0 0.0
        %3595 = vmatprep.subr.mxu0 0.0
        %3596 = vmatpush1.msra.mxu0 0.0
        %3597 = vmatprep.subr.mxu0 0.0
        %3598 = vmatpush1.msra.mxu0 0.0
        %3599 = vmatprep.subr.mxu0 0.0
        %3600 = vmatpush1.msra.mxu0 0.0
        %3601 = vmatprep.subr.mxu0 0.0
        %3602 = vmatpush1.msra.mxu0 0.0
        %3603 = vmatprep.subr.mxu0 0.0
        %3604 = vmatpush1.msra.mxu0 0.0
        %3605 = vmatprep.subr.mxu0 0.0
        %3606 = vmatpush1.msra.mxu0 0.0
        %3607 = vmatprep.subr.mxu0 0.0
        %3608 = vmatpush1.msra.mxu0 0.0
        %3609 = vmatprep.subr.mxu0 0.0
        %3610 = vmatpush1.msra.mxu0 0.0
        %3611 = vmatprep.subr.mxu0 0.0
        %3612 = vmatpush1.msra.mxu0 0.0
        %3613 = vmatprep.subr.mxu0 0.0
        %3614 = vmatpush1.msra.mxu0 0.0
        %3615 = vmatprep.mubr.f32.mxu0 0.0
        %3616 = vmatmul.mubr.f32.gmra.mrb[0].mxu0 %v3549
        %v3617 = vpop.f32.mrb[0].mxu0
        %v3618 = vadd.f32 0.0, %v3617
        %v3619 = vpop.f32.mrb[0].mxu0
        %v3620 = vadd.f32 0.0, %v3619
        %3621 = vdwg.mxu0
        %3622 = vmatprep.subr.mxu0 0.0
        %3623 = vmatpush1.msra.mxu0 %v3541
        %3624 = vmatprep.subr.mxu0 0.0
        %3625 = vmatpush1.msra.mxu0 0.0
        %3626 = vmatprep.subr.mxu0 0.0
        %3627 = vmatpush1.msra.mxu0 0.0
        %3628 = vmatprep.subr.mxu0 0.0
        %3629 = vmatpush1.msra.mxu0 0.0
        %3630 = vmatprep.subr.mxu0 0.0
        %3631 = vmatpush1.msra.mxu0 0.0
        %3632 = vmatprep.subr.mxu0 0.0
        %3633 = vmatpush1.msra.mxu0 0.0
        %3634 = vmatprep.subr.mxu0 0.0
        %3635 = vmatpush1.msra.mxu0 0.0
        %3636 = vmatprep.subr.mxu0 0.0
        %3637 = vmatpush1.msra.mxu0 0.0
        %3638 = vmatprep.subr.mxu0 0.0
        %3639 = vmatpush1.msra.mxu0 0.0
        %3640 = vmatprep.subr.mxu0 0.0
        %3641 = vmatpush1.msra.mxu0 0.0
        %3642 = vmatprep.subr.mxu0 0.0
        %3643 = vmatpush1.msra.mxu0 0.0
        %3644 = vmatprep.subr.mxu0 0.0
        %3645 = vmatpush1.msra.mxu0 0.0
        %3646 = vmatprep.subr.mxu0 0.0
        %3647 = vmatpush1.msra.mxu0 0.0
        %3648 = vmatprep.subr.mxu0 0.0
        %3649 = vmatpush1.msra.mxu0 0.0
        %3650 = vmatprep.subr.mxu0 0.0
        %3651 = vmatpush1.msra.mxu0 0.0
        %3652 = vmatprep.subr.mxu0 0.0
        %3653 = vmatpush1.msra.mxu0 0.0
        %3654 = vmatprep.subr.mxu0 0.0
        %3655 = vmatpush1.msra.mxu0 0.0
        %3656 = vmatprep.subr.mxu0 0.0
        %3657 = vmatpush1.msra.mxu0 0.0
        %3658 = vmatprep.subr.mxu0 0.0
        %3659 = vmatpush1.msra.mxu0 0.0
        %3660 = vmatprep.subr.mxu0 0.0
        %3661 = vmatpush1.msra.mxu0 0.0
        %3662 = vmatprep.subr.mxu0 0.0
        %3663 = vmatpush1.msra.mxu0 0.0
        %3664 = vmatprep.subr.mxu0 0.0
        %3665 = vmatpush1.msra.mxu0 0.0
        %3666 = vmatprep.subr.mxu0 0.0
        %3667 = vmatpush1.msra.mxu0 0.0
        %3668 = vmatprep.subr.mxu0 0.0
        %3669 = vmatpush1.msra.mxu0 0.0
        %3670 = vmatprep.subr.mxu0 0.0
        %3671 = vmatpush1.msra.mxu0 0.0
        %3672 = vmatprep.subr.mxu0 0.0
        %3673 = vmatpush1.msra.mxu0 0.0
        %3674 = vmatprep.subr.mxu0 0.0
        %3675 = vmatpush1.msra.mxu0 0.0
        %3676 = vmatprep.subr.mxu0 0.0
        %3677 = vmatpush1.msra.mxu0 0.0
        %3678 = vmatprep.subr.mxu0 0.0
        %3679 = vmatpush1.msra.mxu0 0.0
        %3680 = vmatprep.subr.mxu0 0.0
        %3681 = vmatpush1.msra.mxu0 0.0
        %3682 = vmatprep.subr.mxu0 0.0
        %3683 = vmatpush1.msra.mxu0 0.0
        %3684 = vmatprep.subr.mxu0 0.0
        %3685 = vmatpush1.msra.mxu0 0.0
        %3686 = vmatprep.mubr.f32.mxu0 0.0
        %3687 = vmatmul.mubr.f32.gmra.mrb[0].mxu0 %v3549
        %v3688 = vpop.f32.mrb[0].mxu0
        %v3689 = vadd.f32 0.0, %v3688
        %v3690 = vpop.f32.mrb[0].mxu0
        %3691 = vdwg.mxu0
        %v3692 = vadd.f32 %v3525, %v3618
        %v3693 = vadd.f32 %v3526, %v3620
        %v3694 = vadd.f32 %v3527, %v3689
        %3695 = vst [vmem:[#allocation2] sm:$0xff] %v3692
        %3696 = vst [vmem:[#allocation2 + $0x8] sm:$0xff] %v3693
        %3697 = vst.msk [vmem:[#allocation2 + $0x10] sm:$0xff] %vm177, %v3694
        %v3698 = vld [vmem:[#allocation2] sm:$0xff]
        %v3699 = vld [vmem:[#allocation2 + $0x8] sm:$0xff]
        %v3700 = vld [vmem:[#allocation2 + $0x10] sm:$0xff]
        %s3701 = scalar_lea.vmem %s1, 160
        %v3702 = vld [vmem:[%s3701] sm:$0xff]
        %v3703 = vld [vmem:[%s168] sm:$0xff]
        %v3704 = vld [vmem:[%s168 + $0x8] sm:$0xff]
        %v3705 = vld [vmem:[%s168 + $0x10] sm:$0xff]
        %3709 = vrot.lane.b32.xlu0 %v3703, 122
        %v3710 = vpop.permute.xlu0 %3709
        %3711 = vrot.lane.b32.xlu0 %v3704, 122
        %v3712 = vpop.permute.xlu0 %3711
        %3713 = vrot.lane.b32.xlu0 %v3705, 122
        %v3714 = vpop.permute.xlu0 %3713
        %vm3715 = vcmask 998400
        %v3716 = vsel %vm3715, %v3710, %v3712
        %v3717 = vsel %vm3715, %v3712, %v3714
        %v3722 = vsel %vm206, %v3702, 0
        %3724 = vmatprep.subr.mxu0 %v3717
        %3725 = vmatpush1.msra.mxu0 %v3716
        %3726 = vmatprep.subr.mxu0 0.0
        %3727 = vmatpush1.msra.mxu0 0.0
        %3728 = vmatprep.subr.mxu0 0.0
        %3729 = vmatpush1.msra.mxu0 0.0
        %3730 = vmatprep.subr.mxu0 0.0
        %3731 = vmatpush1.msra.mxu0 0.0
        %3732 = vmatprep.subr.mxu0 0.0
        %3733 = vmatpush1.msra.mxu0 0.0
        %3734 = vmatprep.subr.mxu0 0.0
        %3735 = vmatpush1.msra.mxu0 0.0
        %3736 = vmatprep.subr.mxu0 0.0
        %3737 = vmatpush1.msra.mxu0 0.0
        %3738 = vmatprep.subr.mxu0 0.0
        %3739 = vmatpush1.msra.mxu0 0.0
        %3740 = vmatprep.subr.mxu0 0.0
        %3741 = vmatpush1.msra.mxu0 0.0
        %3742 = vmatprep.subr.mxu0 0.0
        %3743 = vmatpush1.msra.mxu0 0.0
        %3744 = vmatprep.subr.mxu0 0.0
        %3745 = vmatpush1.msra.mxu0 0.0
        %3746 = vmatprep.subr.mxu0 0.0
        %3747 = vmatpush1.msra.mxu0 0.0
        %3748 = vmatprep.subr.mxu0 0.0
        %3749 = vmatpush1.msra.mxu0 0.0
        %3750 = vmatprep.subr.mxu0 0.0
        %3751 = vmatpush1.msra.mxu0 0.0
        %3752 = vmatprep.subr.mxu0 0.0
        %3753 = vmatpush1.msra.mxu0 0.0
        %3754 = vmatprep.subr.mxu0 0.0
        %3755 = vmatpush1.msra.mxu0 0.0
        %3756 = vmatprep.subr.mxu0 0.0
        %3757 = vmatpush1.msra.mxu0 0.0
        %3758 = vmatprep.subr.mxu0 0.0
        %3759 = vmatpush1.msra.mxu0 0.0
        %3760 = vmatprep.subr.mxu0 0.0
        %3761 = vmatpush1.msra.mxu0 0.0
        %3762 = vmatprep.subr.mxu0 0.0
        %3763 = vmatpush1.msra.mxu0 0.0
        %3764 = vmatprep.subr.mxu0 0.0
        %3765 = vmatpush1.msra.mxu0 0.0
        %3766 = vmatprep.subr.mxu0 0.0
        %3767 = vmatpush1.msra.mxu0 0.0
        %3768 = vmatprep.subr.mxu0 0.0
        %3769 = vmatpush1.msra.mxu0 0.0
        %3770 = vmatprep.subr.mxu0 0.0
        %3771 = vmatpush1.msra.mxu0 0.0
        %3772 = vmatprep.subr.mxu0 0.0
        %3773 = vmatpush1.msra.mxu0 0.0
        %3774 = vmatprep.subr.mxu0 0.0
        %3775 = vmatpush1.msra.mxu0 0.0
        %3776 = vmatprep.subr.mxu0 0.0
        %3777 = vmatpush1.msra.mxu0 0.0
        %3778 = vmatprep.subr.mxu0 0.0
        %3779 = vmatpush1.msra.mxu0 0.0
        %3780 = vmatprep.subr.mxu0 0.0
        %3781 = vmatpush1.msra.mxu0 0.0
        %3782 = vmatprep.subr.mxu0 0.0
        %3783 = vmatpush1.msra.mxu0 0.0
        %3784 = vmatprep.subr.mxu0 0.0
        %3785 = vmatpush1.msra.mxu0 0.0
        %3786 = vmatprep.subr.mxu0 0.0
        %3787 = vmatpush1.msra.mxu0 0.0
        %3788 = vmatprep.mubr.f32.mxu0 0.0
        %3789 = vmatmul.mubr.f32.gmra.mrb[0].mxu0 %v3722
        %v3790 = vpop.f32.mrb[0].mxu0
        %v3791 = vadd.f32 0.0, %v3790
        %v3792 = vpop.f32.mrb[0].mxu0
        %v3793 = vadd.f32 0.0, %v3792
        %3794 = vdwg.mxu0
        %3795 = vmatprep.subr.mxu0 0.0
        %3796 = vmatpush1.msra.mxu0 %v3714
        %3797 = vmatprep.subr.mxu0 0.0
        %3798 = vmatpush1.msra.mxu0 0.0
        %3799 = vmatprep.subr.mxu0 0.0
        %3800 = vmatpush1.msra.mxu0 0.0
        %3801 = vmatprep.subr.mxu0 0.0
        %3802 = vmatpush1.msra.mxu0 0.0
        %3803 = vmatprep.subr.mxu0 0.0
        %3804 = vmatpush1.msra.mxu0 0.0
        %3805 = vmatprep.subr.mxu0 0.0
        %3806 = vmatpush1.msra.mxu0 0.0
        %3807 = vmatprep.subr.mxu0 0.0
        %3808 = vmatpush1.msra.mxu0 0.0
        %3809 = vmatprep.subr.mxu0 0.0
        %3810 = vmatpush1.msra.mxu0 0.0
        %3811 = vmatprep.subr.mxu0 0.0
        %3812 = vmatpush1.msra.mxu0 0.0
        %3813 = vmatprep.subr.mxu0 0.0
        %3814 = vmatpush1.msra.mxu0 0.0
        %3815 = vmatprep.subr.mxu0 0.0
        %3816 = vmatpush1.msra.mxu0 0.0
        %3817 = vmatprep.subr.mxu0 0.0
        %3818 = vmatpush1.msra.mxu0 0.0
        %3819 = vmatprep.subr.mxu0 0.0
        %3820 = vmatpush1.msra.mxu0 0.0
        %3821 = vmatprep.subr.mxu0 0.0
        %3822 = vmatpush1.msra.mxu0 0.0
        %3823 = vmatprep.subr.mxu0 0.0
        %3824 = vmatpush1.msra.mxu0 0.0
        %3825 = vmatprep.subr.mxu0 0.0
        %3826 = vmatpush1.msra.mxu0 0.0
        %3827 = vmatprep.subr.mxu0 0.0
        %3828 = vmatpush1.msra.mxu0 0.0
        %3829 = vmatprep.subr.mxu0 0.0
        %3830 = vmatpush1.msra.mxu0 0.0
        %3831 = vmatprep.subr.mxu0 0.0
        %3832 = vmatpush1.msra.mxu0 0.0
        %3833 = vmatprep.subr.mxu0 0.0
        %3834 = vmatpush1.msra.mxu0 0.0
        %3835 = vmatprep.subr.mxu0 0.0
        %3836 = vmatpush1.msra.mxu0 0.0
        %3837 = vmatprep.subr.mxu0 0.0
        %3838 = vmatpush1.msra.mxu0 0.0
        %3839 = vmatprep.subr.mxu0 0.0
        %3840 = vmatpush1.msra.mxu0 0.0
        %3841 = vmatprep.subr.mxu0 0.0
        %3842 = vmatpush1.msra.mxu0 0.0
        %3843 = vmatprep.subr.mxu0 0.0
        %3844 = vmatpush1.msra.mxu0 0.0
        %3845 = vmatprep.subr.mxu0 0.0
        %3846 = vmatpush1.msra.mxu0 0.0
        %3847 = vmatprep.subr.mxu0 0.0
        %3848 = vmatpush1.msra.mxu0 0.0
        %3849 = vmatprep.subr.mxu0 0.0
        %3850 = vmatpush1.msra.mxu0 0.0
        %3851 = vmatprep.subr.mxu0 0.0
        %3852 = vmatpush1.msra.mxu0 0.0
        %3853 = vmatprep.subr.mxu0 0.0
        %3854 = vmatpush1.msra.mxu0 0.0
        %3855 = vmatprep.subr.mxu0 0.0
        %3856 = vmatpush1.msra.mxu0 0.0
        %3857 = vmatprep.subr.mxu0 0.0
        %3858 = vmatpush1.msra.mxu0 0.0
        %3859 = vmatprep.mubr.f32.mxu0 0.0
        %3860 = vmatmul.mubr.f32.gmra.mrb[0].mxu0 %v3722
        %v3861 = vpop.f32.mrb[0].mxu0
        %v3862 = vadd.f32 0.0, %v3861
        %v3863 = vpop.f32.mrb[0].mxu0
        %3864 = vdwg.mxu0
        %v3865 = vadd.f32 %v3698, %v3791
        %v3866 = vadd.f32 %v3699, %v3793
        %v3867 = vadd.f32 %v3700, %v3862
        %3868 = vst [vmem:[#allocation2] sm:$0xff] %v3865
        %3869 = vst [vmem:[#allocation2 + $0x8] sm:$0xff] %v3866
        %3870 = vst.msk [vmem:[#allocation2 + $0x10] sm:$0xff] %vm177, %v3867
        %v3871 = vld [vmem:[#allocation2] sm:$0xff]
        %v3872 = vld [vmem:[#allocation2 + $0x8] sm:$0xff]
        %v3873 = vld [vmem:[#allocation2 + $0x10] sm:$0xff]
        %s3874 = scalar_lea.vmem %s1, 168
        %v3875 = vld [vmem:[%s3874] sm:$0xff]
        %v3876 = vld [vmem:[%s168] sm:$0xff]
        %v3877 = vld [vmem:[%s168 + $0x8] sm:$0xff]
        %v3878 = vld [vmem:[%s168 + $0x10] sm:$0xff]
        %v3879 = vld [vmem:[%s168 + $0x18] sm:$0xff]
        %3884 = vrot.lane.b32.xlu0 %v3876, 62
        %v3885 = vpop.permute.xlu0 %3884
        %3886 = vrot.lane.b32.xlu0 %v3877, 62
        %v3887 = vpop.permute.xlu0 %3886
        %3888 = vrot.lane.b32.xlu0 %v3878, 62
        %v3889 = vpop.permute.xlu0 %3888
        %3890 = vrot.lane.b32.xlu0 %v3879, 62
        %v3891 = vpop.permute.xlu0 %3890
        %vm3892 = vcmask 506880
        %v3893 = vsel %vm3892, %v3885, %v3887
        %v3894 = vsel %vm3892, %v3887, %v3889
        %v3895 = vsel %vm3892, %v3889, %v3891
        %v3900 = vsel %vm206, %v3875, 0
        %3902 = vmatprep.subr.mxu0 %v3894
        %3903 = vmatpush1.msra.mxu0 %v3893
        %3904 = vmatprep.subr.mxu0 0.0
        %3905 = vmatpush1.msra.mxu0 0.0
        %3906 = vmatprep.subr.mxu0 0.0
        %3907 = vmatpush1.msra.mxu0 0.0
        %3908 = vmatprep.subr.mxu0 0.0
        %3909 = vmatpush1.msra.mxu0 0.0
        %3910 = vmatprep.subr.mxu0 0.0
        %3911 = vmatpush1.msra.mxu0 0.0
        %3912 = vmatprep.subr.mxu0 0.0
        %3913 = vmatpush1.msra.mxu0 0.0
        %3914 = vmatprep.subr.mxu0 0.0
        %3915 = vmatpush1.msra.mxu0 0.0
        %3916 = vmatprep.subr.mxu0 0.0
        %3917 = vmatpush1.msra.mxu0 0.0
        %3918 = vmatprep.subr.mxu0 0.0
        %3919 = vmatpush1.msra.mxu0 0.0
        %3920 = vmatprep.subr.mxu0 0.0
        %3921 = vmatpush1.msra.mxu0 0.0
        %3922 = vmatprep.subr.mxu0 0.0
        %3923 = vmatpush1.msra.mxu0 0.0
        %3924 = vmatprep.subr.mxu0 0.0
        %3925 = vmatpush1.msra.mxu0 0.0
        %3926 = vmatprep.subr.mxu0 0.0
        %3927 = vmatpush1.msra.mxu0 0.0
        %3928 = vmatprep.subr.mxu0 0.0
        %3929 = vmatpush1.msra.mxu0 0.0
        %3930 = vmatprep.subr.mxu0 0.0
        %3931 = vmatpush1.msra.mxu0 0.0
        %3932 = vmatprep.subr.mxu0 0.0
        %3933 = vmatpush1.msra.mxu0 0.0
        %3934 = vmatprep.subr.mxu0 0.0
        %3935 = vmatpush1.msra.mxu0 0.0
        %3936 = vmatprep.subr.mxu0 0.0
        %3937 = vmatpush1.msra.mxu0 0.0
        %3938 = vmatprep.subr.mxu0 0.0
        %3939 = vmatpush1.msra.mxu0 0.0
        %3940 = vmatprep.subr.mxu0 0.0
        %3941 = vmatpush1.msra.mxu0 0.0
        %3942 = vmatprep.subr.mxu0 0.0
        %3943 = vmatpush1.msra.mxu0 0.0
        %3944 = vmatprep.subr.mxu0 0.0
        %3945 = vmatpush1.msra.mxu0 0.0
        %3946 = vmatprep.subr.mxu0 0.0
        %3947 = vmatpush1.msra.mxu0 0.0
        %3948 = vmatprep.subr.mxu0 0.0
        %3949 = vmatpush1.msra.mxu0 0.0
        %3950 = vmatprep.subr.mxu0 0.0
        %3951 = vmatpush1.msra.mxu0 0.0
        %3952 = vmatprep.subr.mxu0 0.0
        %3953 = vmatpush1.msra.mxu0 0.0
        %3954 = vmatprep.subr.mxu0 0.0
        %3955 = vmatpush1.msra.mxu0 0.0
        %3956 = vmatprep.subr.mxu0 0.0
        %3957 = vmatpush1.msra.mxu0 0.0
        %3958 = vmatprep.subr.mxu0 0.0
        %3959 = vmatpush1.msra.mxu0 0.0
        %3960 = vmatprep.subr.mxu0 0.0
        %3961 = vmatpush1.msra.mxu0 0.0
        %3962 = vmatprep.subr.mxu0 0.0
        %3963 = vmatpush1.msra.mxu0 0.0
        %3964 = vmatprep.subr.mxu0 0.0
        %3965 = vmatpush1.msra.mxu0 0.0
        %3966 = vmatprep.mubr.f32.mxu0 0.0
        %3967 = vmatmul.mubr.f32.gmra.mrb[0].mxu0 %v3900
        %v3968 = vpop.f32.mrb[0].mxu0
        %v3969 = vadd.f32 0.0, %v3968
        %v3970 = vpop.f32.mrb[0].mxu0
        %v3971 = vadd.f32 0.0, %v3970
        %3972 = vdwg.mxu0
        %3973 = vmatprep.subr.mxu0 0.0
        %3974 = vmatpush1.msra.mxu0 %v3895
        %3975 = vmatprep.subr.mxu0 0.0
        %3976 = vmatpush1.msra.mxu0 0.0
        %3977 = vmatprep.subr.mxu0 0.0
        %3978 = vmatpush1.msra.mxu0 0.0
        %3979 = vmatprep.subr.mxu0 0.0
        %3980 = vmatpush1.msra.mxu0 0.0
        %3981 = vmatprep.subr.mxu0 0.0
        %3982 = vmatpush1.msra.mxu0 0.0
        %3983 = vmatprep.subr.mxu0 0.0
        %3984 = vmatpush1.msra.mxu0 0.0
        %3985 = vmatprep.subr.mxu0 0.0
        %3986 = vmatpush1.msra.mxu0 0.0
        %3987 = vmatprep.subr.mxu0 0.0
        %3988 = vmatpush1.msra.mxu0 0.0
        %3989 = vmatprep.subr.mxu0 0.0
        %3990 = vmatpush1.msra.mxu0 0.0
        %3991 = vmatprep.subr.mxu0 0.0
        %3992 = vmatpush1.msra.mxu0 0.0
        %3993 = vmatprep.subr.mxu0 0.0
        %3994 = vmatpush1.msra.mxu0 0.0
        %3995 = vmatprep.subr.mxu0 0.0
        %3996 = vmatpush1.msra.mxu0 0.0
        %3997 = vmatprep.subr.mxu0 0.0
        %3998 = vmatpush1.msra.mxu0 0.0
        %3999 = vmatprep.subr.mxu0 0.0
        %4000 = vmatpush1.msra.mxu0 0.0
        %4001 = vmatprep.subr.mxu0 0.0
        %4002 = vmatpush1.msra.mxu0 0.0
        %4003 = vmatprep.subr.mxu0 0.0
        %4004 = vmatpush1.msra.mxu0 0.0
        %4005 = vmatprep.subr.mxu0 0.0
        %4006 = vmatpush1.msra.mxu0 0.0
        %4007 = vmatprep.subr.mxu0 0.0
        %4008 = vmatpush1.msra.mxu0 0.0
        %4009 = vmatprep.subr.mxu0 0.0
        %4010 = vmatpush1.msra.mxu0 0.0
        %4011 = vmatprep.subr.mxu0 0.0
        %4012 = vmatpush1.msra.mxu0 0.0
        %4013 = vmatprep.subr.mxu0 0.0
        %4014 = vmatpush1.msra.mxu0 0.0
        %4015 = vmatprep.subr.mxu0 0.0
        %4016 = vmatpush1.msra.mxu0 0.0
        %4017 = vmatprep.subr.mxu0 0.0
        %4018 = vmatpush1.msra.mxu0 0.0
        %4019 = vmatprep.subr.mxu0 0.0
        %4020 = vmatpush1.msra.mxu0 0.0
        %4021 = vmatprep.subr.mxu0 0.0
        %4022 = vmatpush1.msra.mxu0 0.0
        %4023 = vmatprep.subr.mxu0 0.0
        %4024 = vmatpush1.msra.mxu0 0.0
        %4025 = vmatprep.subr.mxu0 0.0
        %4026 = vmatpush1.msra.mxu0 0.0
        %4027 = vmatprep.subr.mxu0 0.0
        %4028 = vmatpush1.msra.mxu0 0.0
        %4029 = vmatprep.subr.mxu0 0.0
        %4030 = vmatpush1.msra.mxu0 0.0
        %4031 = vmatprep.subr.mxu0 0.0
        %4032 = vmatpush1.msra.mxu0 0.0
        %4033 = vmatprep.subr.mxu0 0.0
        %4034 = vmatpush1.msra.mxu0 0.0
        %4035 = vmatprep.subr.mxu0 0.0
        %4036 = vmatpush1.msra.mxu0 0.0
        %4037 = vmatprep.mubr.f32.mxu0 0.0
        %4038 = vmatmul.mubr.f32.gmra.mrb[0].mxu0 %v3900
        %v4039 = vpop.f32.mrb[0].mxu0
        %v4040 = vadd.f32 0.0, %v4039
        %v4041 = vpop.f32.mrb[0].mxu0
        %4042 = vdwg.mxu0
        %v4043 = vadd.f32 %v3871, %v3969
        %v4044 = vadd.f32 %v3872, %v3971
        %v4045 = vadd.f32 %v3873, %v4040
        %4046 = vst [vmem:[#allocation2] sm:$0xff] %v4043
        %4047 = vst [vmem:[#allocation2 + $0x8] sm:$0xff] %v4044
        %4048 = vst.msk [vmem:[#allocation2 + $0x10] sm:$0xff] %vm177, %v4045
        %v4049 = vld [vmem:[#allocation2] sm:$0xff]
        %v4050 = vld [vmem:[#allocation2 + $0x8] sm:$0xff]
        %v4051 = vld [vmem:[#allocation2 + $0x10] sm:$0xff]
        %s4052 = scalar_lea.vmem %s1, 176
        %v4053 = vld [vmem:[%s4052] sm:$0xff]
        %v4054 = vld [vmem:[%s168] sm:$0xff]
        %v4055 = vld [vmem:[%s168 + $0x8] sm:$0xff]
        %v4056 = vld [vmem:[%s168 + $0x10] sm:$0xff]
        %v4057 = vld [vmem:[%s168 + $0x18] sm:$0xff]
        %4062 = vrot.lane.b32.xlu0 %v4054, 59
        %v4063 = vpop.permute.xlu0 %4062
        %4064 = vrot.lane.b32.xlu0 %v4055, 59
        %v4065 = vpop.permute.xlu0 %4064
        %4066 = vrot.lane.b32.xlu0 %v4056, 59
        %v4067 = vpop.permute.xlu0 %4066
        %4068 = vrot.lane.b32.xlu0 %v4057, 59
        %v4069 = vpop.permute.xlu0 %4068
        %v4070 = vsel %vm912, %v4063, %v4065
        %v4071 = vsel %vm912, %v4065, %v4067
        %v4072 = vsel %vm912, %v4067, %v4069
        %v4077 = vsel %vm206, %v4053, 0
        %4079 = vmatprep.subr.mxu0 %v4071
        %4080 = vmatpush1.msra.mxu0 %v4070
        %4081 = vmatprep.subr.mxu0 0.0
        %4082 = vmatpush1.msra.mxu0 0.0
        %4083 = vmatprep.subr.mxu0 0.0
        %4084 = vmatpush1.msra.mxu0 0.0
        %4085 = vmatprep.subr.mxu0 0.0
        %4086 = vmatpush1.msra.mxu0 0.0
        %4087 = vmatprep.subr.mxu0 0.0
        %4088 = vmatpush1.msra.mxu0 0.0
        %4089 = vmatprep.subr.mxu0 0.0
        %4090 = vmatpush1.msra.mxu0 0.0
        %4091 = vmatprep.subr.mxu0 0.0
        %4092 = vmatpush1.msra.mxu0 0.0
        %4093 = vmatprep.subr.mxu0 0.0
        %4094 = vmatpush1.msra.mxu0 0.0
        %4095 = vmatprep.subr.mxu0 0.0
        %4096 = vmatpush1.msra.mxu0 0.0
        %4097 = vmatprep.subr.mxu0 0.0
        %4098 = vmatpush1.msra.mxu0 0.0
        %4099 = vmatprep.subr.mxu0 0.0
        %4100 = vmatpush1.msra.mxu0 0.0
        %4101 = vmatprep.subr.mxu0 0.0
        %4102 = vmatpush1.msra.mxu0 0.0
        %4103 = vmatprep.subr.mxu0 0.0
        %4104 = vmatpush1.msra.mxu0 0.0
        %4105 = vmatprep.subr.mxu0 0.0
        %4106 = vmatpush1.msra.mxu0 0.0
        %4107 = vmatprep.subr.mxu0 0.0
        %4108 = vmatpush1.msra.mxu0 0.0
        %4109 = vmatprep.subr.mxu0 0.0
        %4110 = vmatpush1.msra.mxu0 0.0
        %4111 = vmatprep.subr.mxu0 0.0
        %4112 = vmatpush1.msra.mxu0 0.0
        %4113 = vmatprep.subr.mxu0 0.0
        %4114 = vmatpush1.msra.mxu0 0.0
        %4115 = vmatprep.subr.mxu0 0.0
        %4116 = vmatpush1.msra.mxu0 0.0
        %4117 = vmatprep.subr.mxu0 0.0
        %4118 = vmatpush1.msra.mxu0 0.0
        %4119 = vmatprep.subr.mxu0 0.0
        %4120 = vmatpush1.msra.mxu0 0.0
        %4121 = vmatprep.subr.mxu0 0.0
        %4122 = vmatpush1.msra.mxu0 0.0
        %4123 = vmatprep.subr.mxu0 0.0
        %4124 = vmatpush1.msra.mxu0 0.0
        %4125 = vmatprep.subr.mxu0 0.0
        %4126 = vmatpush1.msra.mxu0 0.0
        %4127 = vmatprep.subr.mxu0 0.0
        %4128 = vmatpush1.msra.mxu0 0.0
        %4129 = vmatprep.subr.mxu0 0.0
        %4130 = vmatpush1.msra.mxu0 0.0
        %4131 = vmatprep.subr.mxu0 0.0
        %4132 = vmatpush1.msra.mxu0 0.0
        %4133 = vmatprep.subr.mxu0 0.0
        %4134 = vmatpush1.msra.mxu0 0.0
        %4135 = vmatprep.subr.mxu0 0.0
        %4136 = vmatpush1.msra.mxu0 0.0
        %4137 = vmatprep.subr.mxu0 0.0
        %4138 = vmatpush1.msra.mxu0 0.0
        %4139 = vmatprep.subr.mxu0 0.0
        %4140 = vmatpush1.msra.mxu0 0.0
        %4141 = vmatprep.subr.mxu0 0.0
        %4142 = vmatpush1.msra.mxu0 0.0
        %4143 = vmatprep.mubr.f32.mxu0 0.0
        %4144 = vmatmul.mubr.f32.gmra.mrb[0].mxu0 %v4077
        %v4145 = vpop.f32.mrb[0].mxu0
        %v4146 = vadd.f32 0.0, %v4145
        %v4147 = vpop.f32.mrb[0].mxu0
        %v4148 = vadd.f32 0.0, %v4147
        %4149 = vdwg.mxu0
        %4150 = vmatprep.subr.mxu0 0.0
        %4151 = vmatpush1.msra.mxu0 %v4072
        %4152 = vmatprep.subr.mxu0 0.0
        %4153 = vmatpush1.msra.mxu0 0.0
        %4154 = vmatprep.subr.mxu0 0.0
        %4155 = vmatpush1.msra.mxu0 0.0
        %4156 = vmatprep.subr.mxu0 0.0
        %4157 = vmatpush1.msra.mxu0 0.0
        %4158 = vmatprep.subr.mxu0 0.0
        %4159 = vmatpush1.msra.mxu0 0.0
        %4160 = vmatprep.subr.mxu0 0.0
        %4161 = vmatpush1.msra.mxu0 0.0
        %4162 = vmatprep.subr.mxu0 0.0
        %4163 = vmatpush1.msra.mxu0 0.0
        %4164 = vmatprep.subr.mxu0 0.0
        %4165 = vmatpush1.msra.mxu0 0.0
        %4166 = vmatprep.subr.mxu0 0.0
        %4167 = vmatpush1.msra.mxu0 0.0
        %4168 = vmatprep.subr.mxu0 0.0
        %4169 = vmatpush1.msra.mxu0 0.0
        %4170 = vmatprep.subr.mxu0 0.0
        %4171 = vmatpush1.msra.mxu0 0.0
        %4172 = vmatprep.subr.mxu0 0.0
        %4173 = vmatpush1.msra.mxu0 0.0
        %4174 = vmatprep.subr.mxu0 0.0
        %4175 = vmatpush1.msra.mxu0 0.0
        %4176 = vmatprep.subr.mxu0 0.0
        %4177 = vmatpush1.msra.mxu0 0.0
        %4178 = vmatprep.subr.mxu0 0.0
        %4179 = vmatpush1.msra.mxu0 0.0
        %4180 = vmatprep.subr.mxu0 0.0
        %4181 = vmatpush1.msra.mxu0 0.0
        %4182 = vmatprep.subr.mxu0 0.0
        %4183 = vmatpush1.msra.mxu0 0.0
        %4184 = vmatprep.subr.mxu0 0.0
        %4185 = vmatpush1.msra.mxu0 0.0
        %4186 = vmatprep.subr.mxu0 0.0
        %4187 = vmatpush1.msra.mxu0 0.0
        %4188 = vmatprep.subr.mxu0 0.0
        %4189 = vmatpush1.msra.mxu0 0.0
        %4190 = vmatprep.subr.mxu0 0.0
        %4191 = vmatpush1.msra.mxu0 0.0
        %4192 = vmatprep.subr.mxu0 0.0
        %4193 = vmatpush1.msra.mxu0 0.0
        %4194 = vmatprep.subr.mxu0 0.0
        %4195 = vmatpush1.msra.mxu0 0.0
        %4196 = vmatprep.subr.mxu0 0.0
        %4197 = vmatpush1.msra.mxu0 0.0
        %4198 = vmatprep.subr.mxu0 0.0
        %4199 = vmatpush1.msra.mxu0 0.0
        %4200 = vmatprep.subr.mxu0 0.0
        %4201 = vmatpush1.msra.mxu0 0.0
        %4202 = vmatprep.subr.mxu0 0.0
        %4203 = vmatpush1.msra.mxu0 0.0
        %4204 = vmatprep.subr.mxu0 0.0
        %4205 = vmatpush1.msra.mxu0 0.0
        %4206 = vmatprep.subr.mxu0 0.0
        %4207 = vmatpush1.msra.mxu0 0.0
        %4208 = vmatprep.subr.mxu0 0.0
        %4209 = vmatpush1.msra.mxu0 0.0
        %4210 = vmatprep.subr.mxu0 0.0
        %4211 = vmatpush1.msra.mxu0 0.0
        %4212 = vmatprep.subr.mxu0 0.0
        %4213 = vmatpush1.msra.mxu0 0.0
        %4214 = vmatprep.mubr.f32.mxu0 0.0
        %4215 = vmatmul.mubr.f32.gmra.mrb[0].mxu0 %v4077
        %v4216 = vpop.f32.mrb[0].mxu0
        %v4217 = vadd.f32 0.0, %v4216
        %v4218 = vpop.f32.mrb[0].mxu0
        %4219 = vdwg.mxu0
        %v4220 = vadd.f32 %v4049, %v4146
        %v4221 = vadd.f32 %v4050, %v4148
        %v4222 = vadd.f32 %v4051, %v4217
        %4223 = vst [vmem:[#allocation2] sm:$0xff] %v4220
        %4224 = vst [vmem:[#allocation2 + $0x8] sm:$0xff] %v4221
        %4225 = vst.msk [vmem:[#allocation2 + $0x10] sm:$0xff] %vm177, %v4222
        %v4226 = vld [vmem:[#allocation2] sm:$0xff]
        %v4227 = vld [vmem:[#allocation2 + $0x8] sm:$0xff]
        %v4228 = vld [vmem:[#allocation2 + $0x10] sm:$0xff]
        %s4229 = scalar_lea.vmem %s1, 184
        %v4230 = vld [vmem:[%s4229] sm:$0xff]
        %v4231 = vld [vmem:[%s168] sm:$0xff]
        %v4232 = vld [vmem:[%s168 + $0x8] sm:$0xff]
        %v4233 = vld [vmem:[%s168 + $0x10] sm:$0xff]
        %v4234 = vld [vmem:[%s168 + $0x18] sm:$0xff]
        %4239 = vrot.lane.b32.xlu0 %v4231, 56
        %v4240 = vpop.permute.xlu0 %4239
        %4241 = vrot.lane.b32.xlu0 %v4232, 56
        %v4242 = vpop.permute.xlu0 %4241
        %4243 = vrot.lane.b32.xlu0 %v4233, 56
        %v4244 = vpop.permute.xlu0 %4243
        %4245 = vrot.lane.b32.xlu0 %v4234, 56
        %v4246 = vpop.permute.xlu0 %4245
        %vm4247 = vcmask 457728
        %v4248 = vsel %vm4247, %v4240, %v4242
        %v4249 = vsel %vm4247, %v4242, %v4244
        %v4250 = vsel %vm4247, %v4244, %v4246
        %v4255 = vsel %vm206, %v4230, 0
        %4257 = vmatprep.subr.mxu0 %v4249
        %4258 = vmatpush1.msra.mxu0 %v4248
        %4259 = vmatprep.subr.mxu0 0.0
        %4260 = vmatpush1.msra.mxu0 0.0
        %4261 = vmatprep.subr.mxu0 0.0
        %4262 = vmatpush1.msra.mxu0 0.0
        %4263 = vmatprep.subr.mxu0 0.0
        %4264 = vmatpush1.msra.mxu0 0.0
        %4265 = vmatprep.subr.mxu0 0.0
        %4266 = vmatpush1.msra.mxu0 0.0
        %4267 = vmatprep.subr.mxu0 0.0
        %4268 = vmatpush1.msra.mxu0 0.0
        %4269 = vmatprep.subr.mxu0 0.0
        %4270 = vmatpush1.msra.mxu0 0.0
        %4271 = vmatprep.subr.mxu0 0.0
        %4272 = vmatpush1.msra.mxu0 0.0
        %4273 = vmatprep.subr.mxu0 0.0
        %4274 = vmatpush1.msra.mxu0 0.0
        %4275 = vmatprep.subr.mxu0 0.0
        %4276 = vmatpush1.msra.mxu0 0.0
        %4277 = vmatprep.subr.mxu0 0.0
        %4278 = vmatpush1.msra.mxu0 0.0
        %4279 = vmatprep.subr.mxu0 0.0
        %4280 = vmatpush1.msra.mxu0 0.0
        %4281 = vmatprep.subr.mxu0 0.0
        %4282 = vmatpush1.msra.mxu0 0.0
        %4283 = vmatprep.subr.mxu0 0.0
        %4284 = vmatpush1.msra.mxu0 0.0
        %4285 = vmatprep.subr.mxu0 0.0
        %4286 = vmatpush1.msra.mxu0 0.0
        %4287 = vmatprep.subr.mxu0 0.0
        %4288 = vmatpush1.msra.mxu0 0.0
        %4289 = vmatprep.subr.mxu0 0.0
        %4290 = vmatpush1.msra.mxu0 0.0
        %4291 = vmatprep.subr.mxu0 0.0
        %4292 = vmatpush1.msra.mxu0 0.0
        %4293 = vmatprep.subr.mxu0 0.0
        %4294 = vmatpush1.msra.mxu0 0.0
        %4295 = vmatprep.subr.mxu0 0.0
        %4296 = vmatpush1.msra.mxu0 0.0
        %4297 = vmatprep.subr.mxu0 0.0
        %4298 = vmatpush1.msra.mxu0 0.0
        %4299 = vmatprep.subr.mxu0 0.0
        %4300 = vmatpush1.msra.mxu0 0.0
        %4301 = vmatprep.subr.mxu0 0.0
        %4302 = vmatpush1.msra.mxu0 0.0
        %4303 = vmatprep.subr.mxu0 0.0
        %4304 = vmatpush1.msra.mxu0 0.0
        %4305 = vmatprep.subr.mxu0 0.0
        %4306 = vmatpush1.msra.mxu0 0.0
        %4307 = vmatprep.subr.mxu0 0.0
        %4308 = vmatpush1.msra.mxu0 0.0
        %4309 = vmatprep.subr.mxu0 0.0
        %4310 = vmatpush1.msra.mxu0 0.0
        %4311 = vmatprep.subr.mxu0 0.0
        %4312 = vmatpush1.msra.mxu0 0.0
        %4313 = vmatprep.subr.mxu0 0.0
        %4314 = vmatpush1.msra.mxu0 0.0
        %4315 = vmatprep.subr.mxu0 0.0
        %4316 = vmatpush1.msra.mxu0 0.0
        %4317 = vmatprep.subr.mxu0 0.0
        %4318 = vmatpush1.msra.mxu0 0.0
        %4319 = vmatprep.subr.mxu0 0.0
        %4320 = vmatpush1.msra.mxu0 0.0
        %4321 = vmatprep.mubr.f32.mxu0 0.0
        %4322 = vmatmul.mubr.f32.gmra.mrb[0].mxu0 %v4255
        %v4323 = vpop.f32.mrb[0].mxu0
        %v4324 = vadd.f32 0.0, %v4323
        %v4325 = vpop.f32.mrb[0].mxu0
        %v4326 = vadd.f32 0.0, %v4325
        %4327 = vdwg.mxu0
        %4328 = vmatprep.subr.mxu0 0.0
        %4329 = vmatpush1.msra.mxu0 %v4250
        %4330 = vmatprep.subr.mxu0 0.0
        %4331 = vmatpush1.msra.mxu0 0.0
        %4332 = vmatprep.subr.mxu0 0.0
        %4333 = vmatpush1.msra.mxu0 0.0
        %4334 = vmatprep.subr.mxu0 0.0
        %4335 = vmatpush1.msra.mxu0 0.0
        %4336 = vmatprep.subr.mxu0 0.0
        %4337 = vmatpush1.msra.mxu0 0.0
        %4338 = vmatprep.subr.mxu0 0.0
        %4339 = vmatpush1.msra.mxu0 0.0
        %4340 = vmatprep.subr.mxu0 0.0
        %4341 = vmatpush1.msra.mxu0 0.0
        %4342 = vmatprep.subr.mxu0 0.0
        %4343 = vmatpush1.msra.mxu0 0.0
        %4344 = vmatprep.subr.mxu0 0.0
        %4345 = vmatpush1.msra.mxu0 0.0
        %4346 = vmatprep.subr.mxu0 0.0
        %4347 = vmatpush1.msra.mxu0 0.0
        %4348 = vmatprep.subr.mxu0 0.0
        %4349 = vmatpush1.msra.mxu0 0.0
        %4350 = vmatprep.subr.mxu0 0.0
        %4351 = vmatpush1.msra.mxu0 0.0
        %4352 = vmatprep.subr.mxu0 0.0
        %4353 = vmatpush1.msra.mxu0 0.0
        %4354 = vmatprep.subr.mxu0 0.0
        %4355 = vmatpush1.msra.mxu0 0.0
        %4356 = vmatprep.subr.mxu0 0.0
        %4357 = vmatpush1.msra.mxu0 0.0
        %4358 = vmatprep.subr.mxu0 0.0
        %4359 = vmatpush1.msra.mxu0 0.0
        %4360 = vmatprep.subr.mxu0 0.0
        %4361 = vmatpush1.msra.mxu0 0.0
        %4362 = vmatprep.subr.mxu0 0.0
        %4363 = vmatpush1.msra.mxu0 0.0
        %4364 = vmatprep.subr.mxu0 0.0
        %4365 = vmatpush1.msra.mxu0 0.0
        %4366 = vmatprep.subr.mxu0 0.0
        %4367 = vmatpush1.msra.mxu0 0.0
        %4368 = vmatprep.subr.mxu0 0.0
        %4369 = vmatpush1.msra.mxu0 0.0
        %4370 = vmatprep.subr.mxu0 0.0
        %4371 = vmatpush1.msra.mxu0 0.0
        %4372 = vmatprep.subr.mxu0 0.0
        %4373 = vmatpush1.msra.mxu0 0.0
        %4374 = vmatprep.subr.mxu0 0.0
        %4375 = vmatpush1.msra.mxu0 0.0
        %4376 = vmatprep.subr.mxu0 0.0
        %4377 = vmatpush1.msra.mxu0 0.0
        %4378 = vmatprep.subr.mxu0 0.0
        %4379 = vmatpush1.msra.mxu0 0.0
        %4380 = vmatprep.subr.mxu0 0.0
        %4381 = vmatpush1.msra.mxu0 0.0
        %4382 = vmatprep.subr.mxu0 0.0
        %4383 = vmatpush1.msra.mxu0 0.0
        %4384 = vmatprep.subr.mxu0 0.0
        %4385 = vmatpush1.msra.mxu0 0.0
        %4386 = vmatprep.subr.mxu0 0.0
        %4387 = vmatpush1.msra.mxu0 0.0
        %4388 = vmatprep.subr.mxu0 0.0
        %4389 = vmatpush1.msra.mxu0 0.0
        %4390 = vmatprep.subr.mxu0 0.0
        %4391 = vmatpush1.msra.mxu0 0.0
        %4392 = vmatprep.mubr.f32.mxu0 0.0
        %4393 = vmatmul.mubr.f32.gmra.mrb[0].mxu0 %v4255
        %v4394 = vpop.f32.mrb[0].mxu0
        %v4395 = vadd.f32 0.0, %v4394
        %v4396 = vpop.f32.mrb[0].mxu0
        %4397 = vdwg.mxu0
        %v4398 = vadd.f32 %v4226, %v4324
        %v4399 = vadd.f32 %v4227, %v4326
        %v4400 = vadd.f32 %v4228, %v4395
        %4401 = vst [vmem:[#allocation2] sm:$0xff] %v4398
        %4402 = vst [vmem:[#allocation2 + $0x8] sm:$0xff] %v4399
        %4403 = vst.msk [vmem:[#allocation2 + $0x10] sm:$0xff] %vm177, %v4400
        %v4404 = vld [vmem:[#allocation2] sm:$0xff]
        %v4405 = vld [vmem:[#allocation2 + $0x8] sm:$0xff]
        %v4406 = vld [vmem:[#allocation2 + $0x10] sm:$0xff]
        %s4407 = scalar_lea.vmem %s1, 192
        %v4408 = vld [vmem:[%s4407] sm:$0xff]
        %v4409 = vld [vmem:[%s168 + $0x8] sm:$0xff]
        %v4410 = vld [vmem:[%s168 + $0x10] sm:$0xff]
        %v4411 = vld [vmem:[%s168 + $0x18] sm:$0xff]
        %4415 = vrot.lane.b32.xlu0 %v4409, 124
        %v4416 = vpop.permute.xlu0 %4415
        %4417 = vrot.lane.b32.xlu0 %v4410, 124
        %v4418 = vpop.permute.xlu0 %4417
        %4419 = vrot.lane.b32.xlu0 %v4411, 124
        %v4420 = vpop.permute.xlu0 %4419
        %vm4421 = vcmask 1014784
        %v4422 = vsel %vm4421, %v4416, %v4418
        %v4423 = vsel %vm4421, %v4418, %v4420
        %v4428 = vsel %vm206, %v4408, 0
        %4430 = vmatprep.subr.mxu0 %v4423
        %4431 = vmatpush1.msra.mxu0 %v4422
        %4432 = vmatprep.subr.mxu0 0.0
        %4433 = vmatpush1.msra.mxu0 0.0
        %4434 = vmatprep.subr.mxu0 0.0
        %4435 = vmatpush1.msra.mxu0 0.0
        %4436 = vmatprep.subr.mxu0 0.0
        %4437 = vmatpush1.msra.mxu0 0.0
        %4438 = vmatprep.subr.mxu0 0.0
        %4439 = vmatpush1.msra.mxu0 0.0
        %4440 = vmatprep.subr.mxu0 0.0
        %4441 = vmatpush1.msra.mxu0 0.0
        %4442 = vmatprep.subr.mxu0 0.0
        %4443 = vmatpush1.msra.mxu0 0.0
        %4444 = vmatprep.subr.mxu0 0.0
        %4445 = vmatpush1.msra.mxu0 0.0
        %4446 = vmatprep.subr.mxu0 0.0
        %4447 = vmatpush1.msra.mxu0 0.0
        %4448 = vmatprep.subr.mxu0 0.0
        %4449 = vmatpush1.msra.mxu0 0.0
        %4450 = vmatprep.subr.mxu0 0.0
        %4451 = vmatpush1.msra.mxu0 0.0
        %4452 = vmatprep.subr.mxu0 0.0
        %4453 = vmatpush1.msra.mxu0 0.0
        %4454 = vmatprep.subr.mxu0 0.0
        %4455 = vmatpush1.msra.mxu0 0.0
        %4456 = vmatprep.subr.mxu0 0.0
        %4457 = vmatpush1.msra.mxu0 0.0
        %4458 = vmatprep.subr.mxu0 0.0
        %4459 = vmatpush1.msra.mxu0 0.0
        %4460 = vmatprep.subr.mxu0 0.0
        %4461 = vmatpush1.msra.mxu0 0.0
        %4462 = vmatprep.subr.mxu0 0.0
        %4463 = vmatpush1.msra.mxu0 0.0
        %4464 = vmatprep.subr.mxu0 0.0
        %4465 = vmatpush1.msra.mxu0 0.0
        %4466 = vmatprep.subr.mxu0 0.0
        %4467 = vmatpush1.msra.mxu0 0.0
        %4468 = vmatprep.subr.mxu0 0.0
        %4469 = vmatpush1.msra.mxu0 0.0
        %4470 = vmatprep.subr.mxu0 0.0
        %4471 = vmatpush1.msra.mxu0 0.0
        %4472 = vmatprep.subr.mxu0 0.0
        %4473 = vmatpush1.msra.mxu0 0.0
        %4474 = vmatprep.subr.mxu0 0.0
        %4475 = vmatpush1.msra.mxu0 0.0
        %4476 = vmatprep.subr.mxu0 0.0
        %4477 = vmatpush1.msra.mxu0 0.0
        %4478 = vmatprep.subr.mxu0 0.0
        %4479 = vmatpush1.msra.mxu0 0.0
        %4480 = vmatprep.subr.mxu0 0.0
        %4481 = vmatpush1.msra.mxu0 0.0
        %4482 = vmatprep.subr.mxu0 0.0
        %4483 = vmatpush1.msra.mxu0 0.0
        %4484 = vmatprep.subr.mxu0 0.0
        %4485 = vmatpush1.msra.mxu0 0.0
        %4486 = vmatprep.subr.mxu0 0.0
        %4487 = vmatpush1.msra.mxu0 0.0
        %4488 = vmatprep.subr.mxu0 0.0
        %4489 = vmatpush1.msra.mxu0 0.0
        %4490 = vmatprep.subr.mxu0 0.0
        %4491 = vmatpush1.msra.mxu0 0.0
        %4492 = vmatprep.subr.mxu0 0.0
        %4493 = vmatpush1.msra.mxu0 0.0
        %4494 = vmatprep.mubr.f32.mxu0 0.0
        %4495 = vmatmul.mubr.f32.gmra.mrb[0].mxu0 %v4428
        %v4496 = vpop.f32.mrb[0].mxu0
        %v4497 = vadd.f32 0.0, %v4496
        %v4498 = vpop.f32.mrb[0].mxu0
        %v4499 = vadd.f32 0.0, %v4498
        %4500 = vdwg.mxu0
        %4501 = vmatprep.subr.mxu0 0.0
        %4502 = vmatpush1.msra.mxu0 %v4420
        %4503 = vmatprep.subr.mxu0 0.0
        %4504 = vmatpush1.msra.mxu0 0.0
        %4505 = vmatprep.subr.mxu0 0.0
        %4506 = vmatpush1.msra.mxu0 0.0
        %4507 = vmatprep.subr.mxu0 0.0
        %4508 = vmatpush1.msra.mxu0 0.0
        %4509 = vmatprep.subr.mxu0 0.0
        %4510 = vmatpush1.msra.mxu0 0.0
        %4511 = vmatprep.subr.mxu0 0.0
        %4512 = vmatpush1.msra.mxu0 0.0
        %4513 = vmatprep.subr.mxu0 0.0
        %4514 = vmatpush1.msra.mxu0 0.0
        %4515 = vmatprep.subr.mxu0 0.0
        %4516 = vmatpush1.msra.mxu0 0.0
        %4517 = vmatprep.subr.mxu0 0.0
        %4518 = vmatpush1.msra.mxu0 0.0
        %4519 = vmatprep.subr.mxu0 0.0
        %4520 = vmatpush1.msra.mxu0 0.0
        %4521 = vmatprep.subr.mxu0 0.0
        %4522 = vmatpush1.msra.mxu0 0.0
        %4523 = vmatprep.subr.mxu0 0.0
        %4524 = vmatpush1.msra.mxu0 0.0
        %4525 = vmatprep.subr.mxu0 0.0
        %4526 = vmatpush1.msra.mxu0 0.0
        %4527 = vmatprep.subr.mxu0 0.0
        %4528 = vmatpush1.msra.mxu0 0.0
        %4529 = vmatprep.subr.mxu0 0.0
        %4530 = vmatpush1.msra.mxu0 0.0
        %4531 = vmatprep.subr.mxu0 0.0
        %4532 = vmatpush1.msra.mxu0 0.0
        %4533 = vmatprep.subr.mxu0 0.0
        %4534 = vmatpush1.msra.mxu0 0.0
        %4535 = vmatprep.subr.mxu0 0.0
        %4536 = vmatpush1.msra.mxu0 0.0
        %4537 = vmatprep.subr.mxu0 0.0
        %4538 = vmatpush1.msra.mxu0 0.0
        %4539 = vmatprep.subr.mxu0 0.0
        %4540 = vmatpush1.msra.mxu0 0.0
        %4541 = vmatprep.subr.mxu0 0.0
        %4542 = vmatpush1.msra.mxu0 0.0
        %4543 = vmatprep.subr.mxu0 0.0
        %4544 = vmatpush1.msra.mxu0 0.0
        %4545 = vmatprep.subr.mxu0 0.0
        %4546 = vmatpush1.msra.mxu0 0.0
        %4547 = vmatprep.subr.mxu0 0.0
        %4548 = vmatpush1.msra.mxu0 0.0
        %4549 = vmatprep.subr.mxu0 0.0
        %4550 = vmatpush1.msra.mxu0 0.0
        %4551 = vmatprep.subr.mxu0 0.0
        %4552 = vmatpush1.msra.mxu0 0.0
        %4553 = vmatprep.subr.mxu0 0.0
        %4554 = vmatpush1.msra.mxu0 0.0
        %4555 = vmatprep.subr.mxu0 0.0
        %4556 = vmatpush1.msra.mxu0 0.0
        %4557 = vmatprep.subr.mxu0 0.0
        %4558 = vmatpush1.msra.mxu0 0.0
        %4559 = vmatprep.subr.mxu0 0.0
        %4560 = vmatpush1.msra.mxu0 0.0
        %4561 = vmatprep.subr.mxu0 0.0
        %4562 = vmatpush1.msra.mxu0 0.0
        %4563 = vmatprep.subr.mxu0 0.0
        %4564 = vmatpush1.msra.mxu0 0.0
        %4565 = vmatprep.mubr.f32.mxu0 0.0
        %4566 = vmatmul.mubr.f32.gmra.mrb[0].mxu0 %v4428
        %v4567 = vpop.f32.mrb[0].mxu0
        %v4568 = vadd.f32 0.0, %v4567
        %v4569 = vpop.f32.mrb[0].mxu0
        %4570 = vdwg.mxu0
        %v4571 = vadd.f32 %v4404, %v4497
        %v4572 = vadd.f32 %v4405, %v4499
        %v4573 = vadd.f32 %v4406, %v4568
        %4574 = vst [vmem:[#allocation2] sm:$0xff] %v4571
        %4575 = vst [vmem:[#allocation2 + $0x8] sm:$0xff] %v4572
        %4576 = vst.msk [vmem:[#allocation2 + $0x10] sm:$0xff] %vm177, %v4573
        %v4577 = vld [vmem:[#allocation2] sm:$0xff]
        %v4578 = vld [vmem:[#allocation2 + $0x8] sm:$0xff]
        %v4579 = vld [vmem:[#allocation2 + $0x10] sm:$0xff]
        %s4580 = scalar_lea.vmem %s1, 200
        %v4581 = vld [vmem:[%s4580] sm:$0xff]
        %v4582 = vld [vmem:[%s168 + $0x8] sm:$0xff]
        %v4583 = vld [vmem:[%s168 + $0x10] sm:$0xff]
        %v4584 = vld [vmem:[%s168 + $0x18] sm:$0xff]
        %4588 = vrot.lane.b32.xlu0 %v4582, 121
        %v4589 = vpop.permute.xlu0 %4588
        %4590 = vrot.lane.b32.xlu0 %v4583, 121
        %v4591 = vpop.permute.xlu0 %4590
        %4592 = vrot.lane.b32.xlu0 %v4584, 121
        %v4593 = vpop.permute.xlu0 %4592
        %vm4594 = vcmask 990208
        %v4595 = vsel %vm4594, %v4589, %v4591
        %v4596 = vsel %vm4594, %v4591, %v4593
        %v4601 = vsel %vm206, %v4581, 0
        %4603 = vmatprep.subr.mxu0 %v4596
        %4604 = vmatpush1.msra.mxu0 %v4595
        %4605 = vmatprep.subr.mxu0 0.0
        %4606 = vmatpush1.msra.mxu0 0.0
        %4607 = vmatprep.subr.mxu0 0.0
        %4608 = vmatpush1.msra.mxu0 0.0
        %4609 = vmatprep.subr.mxu0 0.0
        %4610 = vmatpush1.msra.mxu0 0.0
        %4611 = vmatprep.subr.mxu0 0.0
        %4612 = vmatpush1.msra.mxu0 0.0
        %4613 = vmatprep.subr.mxu0 0.0
        %4614 = vmatpush1.msra.mxu0 0.0
        %4615 = vmatprep.subr.mxu0 0.0
        %4616 = vmatpush1.msra.mxu0 0.0
        %4617 = vmatprep.subr.mxu0 0.0
        %4618 = vmatpush1.msra.mxu0 0.0
        %4619 = vmatprep.subr.mxu0 0.0
        %4620 = vmatpush1.msra.mxu0 0.0
        %4621 = vmatprep.subr.mxu0 0.0
        %4622 = vmatpush1.msra.mxu0 0.0
        %4623 = vmatprep.subr.mxu0 0.0
        %4624 = vmatpush1.msra.mxu0 0.0
        %4625 = vmatprep.subr.mxu0 0.0
        %4626 = vmatpush1.msra.mxu0 0.0
        %4627 = vmatprep.subr.mxu0 0.0
        %4628 = vmatpush1.msra.mxu0 0.0
        %4629 = vmatprep.subr.mxu0 0.0
        %4630 = vmatpush1.msra.mxu0 0.0
        %4631 = vmatprep.subr.mxu0 0.0
        %4632 = vmatpush1.msra.mxu0 0.0
        %4633 = vmatprep.subr.mxu0 0.0
        %4634 = vmatpush1.msra.mxu0 0.0
        %4635 = vmatprep.subr.mxu0 0.0
        %4636 = vmatpush1.msra.mxu0 0.0
        %4637 = vmatprep.subr.mxu0 0.0
        %4638 = vmatpush1.msra.mxu0 0.0
        %4639 = vmatprep.subr.mxu0 0.0
        %4640 = vmatpush1.msra.mxu0 0.0
        %4641 = vmatprep.subr.mxu0 0.0
        %4642 = vmatpush1.msra.mxu0 0.0
        %4643 = vmatprep.subr.mxu0 0.0
        %4644 = vmatpush1.msra.mxu0 0.0
        %4645 = vmatprep.subr.mxu0 0.0
        %4646 = vmatpush1.msra.mxu0 0.0
        %4647 = vmatprep.subr.mxu0 0.0
        %4648 = vmatpush1.msra.mxu0 0.0
        %4649 = vmatprep.subr.mxu0 0.0
        %4650 = vmatpush1.msra.mxu0 0.0
        %4651 = vmatprep.subr.mxu0 0.0
        %4652 = vmatpush1.msra.mxu0 0.0
        %4653 = vmatprep.subr.mxu0 0.0
        %4654 = vmatpush1.msra.mxu0 0.0
        %4655 = vmatprep.subr.mxu0 0.0
        %4656 = vmatpush1.msra.mxu0 0.0
        %4657 = vmatprep.subr.mxu0 0.0
        %4658 = vmatpush1.msra.mxu0 0.0
        %4659 = vmatprep.subr.mxu0 0.0
        %4660 = vmatpush1.msra.mxu0 0.0
        %4661 = vmatprep.subr.mxu0 0.0
        %4662 = vmatpush1.msra.mxu0 0.0
        %4663 = vmatprep.subr.mxu0 0.0
        %4664 = vmatpush1.msra.mxu0 0.0
        %4665 = vmatprep.subr.mxu0 0.0
        %4666 = vmatpush1.msra.mxu0 0.0
        %4667 = vmatprep.mubr.f32.mxu0 0.0
        %4668 = vmatmul.mubr.f32.gmra.mrb[0].mxu0 %v4601
        %v4669 = vpop.f32.mrb[0].mxu0
        %v4670 = vadd.f32 0.0, %v4669
        %v4671 = vpop.f32.mrb[0].mxu0
        %v4672 = vadd.f32 0.0, %v4671
        %4673 = vdwg.mxu0
        %4674 = vmatprep.subr.mxu0 0.0
        %4675 = vmatpush1.msra.mxu0 %v4593
        %4676 = vmatprep.subr.mxu0 0.0
        %4677 = vmatpush1.msra.mxu0 0.0
        %4678 = vmatprep.subr.mxu0 0.0
        %4679 = vmatpush1.msra.mxu0 0.0
        %4680 = vmatprep.subr.mxu0 0.0
        %4681 = vmatpush1.msra.mxu0 0.0
        %4682 = vmatprep.subr.mxu0 0.0
        %4683 = vmatpush1.msra.mxu0 0.0
        %4684 = vmatprep.subr.mxu0 0.0
        %4685 = vmatpush1.msra.mxu0 0.0
        %4686 = vmatprep.subr.mxu0 0.0
        %4687 = vmatpush1.msra.mxu0 0.0
        %4688 = vmatprep.subr.mxu0 0.0
        %4689 = vmatpush1.msra.mxu0 0.0
        %4690 = vmatprep.subr.mxu0 0.0
        %4691 = vmatpush1.msra.mxu0 0.0
        %4692 = vmatprep.subr.mxu0 0.0
        %4693 = vmatpush1.msra.mxu0 0.0
        %4694 = vmatprep.subr.mxu0 0.0
        %4695 = vmatpush1.msra.mxu0 0.0
        %4696 = vmatprep.subr.mxu0 0.0
        %4697 = vmatpush1.msra.mxu0 0.0
        %4698 = vmatprep.subr.mxu0 0.0
        %4699 = vmatpush1.msra.mxu0 0.0
        %4700 = vmatprep.subr.mxu0 0.0
        %4701 = vmatpush1.msra.mxu0 0.0
        %4702 = vmatprep.subr.mxu0 0.0
        %4703 = vmatpush1.msra.mxu0 0.0
        %4704 = vmatprep.subr.mxu0 0.0
        %4705 = vmatpush1.msra.mxu0 0.0
        %4706 = vmatprep.subr.mxu0 0.0
        %4707 = vmatpush1.msra.mxu0 0.0
        %4708 = vmatprep.subr.mxu0 0.0
        %4709 = vmatpush1.msra.mxu0 0.0
        %4710 = vmatprep.subr.mxu0 0.0
        %4711 = vmatpush1.msra.mxu0 0.0
        %4712 = vmatprep.subr.mxu0 0.0
        %4713 = vmatpush1.msra.mxu0 0.0
        %4714 = vmatprep.subr.mxu0 0.0
        %4715 = vmatpush1.msra.mxu0 0.0
        %4716 = vmatprep.subr.mxu0 0.0
        %4717 = vmatpush1.msra.mxu0 0.0
        %4718 = vmatprep.subr.mxu0 0.0
        %4719 = vmatpush1.msra.mxu0 0.0
        %4720 = vmatprep.subr.mxu0 0.0
        %4721 = vmatpush1.msra.mxu0 0.0
        %4722 = vmatprep.subr.mxu0 0.0
        %4723 = vmatpush1.msra.mxu0 0.0
        %4724 = vmatprep.subr.mxu0 0.0
        %4725 = vmatpush1.msra.mxu0 0.0
        %4726 = vmatprep.subr.mxu0 0.0
        %4727 = vmatpush1.msra.mxu0 0.0
        %4728 = vmatprep.subr.mxu0 0.0
        %4729 = vmatpush1.msra.mxu0 0.0
        %4730 = vmatprep.subr.mxu0 0.0
        %4731 = vmatpush1.msra.mxu0 0.0
        %4732 = vmatprep.subr.mxu0 0.0
        %4733 = vmatpush1.msra.mxu0 0.0
        %4734 = vmatprep.subr.mxu0 0.0
        %4735 = vmatpush1.msra.mxu0 0.0
        %4736 = vmatprep.subr.mxu0 0.0
        %4737 = vmatpush1.msra.mxu0 0.0
        %4738 = vmatprep.mubr.f32.mxu0 0.0
        %4739 = vmatmul.mubr.f32.gmra.mrb[0].mxu0 %v4601
        %v4740 = vpop.f32.mrb[0].mxu0
        %v4741 = vadd.f32 0.0, %v4740
        %v4742 = vpop.f32.mrb[0].mxu0
        %4743 = vdwg.mxu0
        %v4744 = vadd.f32 %v4577, %v4670
        %v4745 = vadd.f32 %v4578, %v4672
        %v4746 = vadd.f32 %v4579, %v4741
        %4747 = vst [vmem:[#allocation2] sm:$0xff] %v4744
        %4748 = vst [vmem:[#allocation2 + $0x8] sm:$0xff] %v4745
        %4749 = vst.msk [vmem:[#allocation2 + $0x10] sm:$0xff] %vm177, %v4746
        %v4750 = vld [vmem:[#allocation2] sm:$0xff]
        %v4751 = vld [vmem:[#allocation2 + $0x8] sm:$0xff]
        %v4752 = vld [vmem:[#allocation2 + $0x10] sm:$0xff]
        %s4753 = scalar_lea.vmem %s1, 208
        %v4754 = vld [vmem:[%s4753] sm:$0xff]
        %v4755 = vld [vmem:[%s168 + $0x8] sm:$0xff]
        %v4756 = vld [vmem:[%s168 + $0x10] sm:$0xff]
        %v4757 = vld [vmem:[%s168 + $0x18] sm:$0xff]
        %4761 = vrot.lane.b32.xlu0 %v4755, 118
        %v4762 = vpop.permute.xlu0 %4761
        %4763 = vrot.lane.b32.xlu0 %v4756, 118
        %v4764 = vpop.permute.xlu0 %4763
        %4765 = vrot.lane.b32.xlu0 %v4757, 118
        %v4766 = vpop.permute.xlu0 %4765
        %vm4767 = vcmask 965632
        %v4768 = vsel %vm4767, %v4762, %v4764
        %v4769 = vsel %vm4767, %v4764, %v4766
        %v4774 = vsel %vm206, %v4754, 0
        %4776 = vmatprep.subr.mxu0 %v4769
        %4777 = vmatpush1.msra.mxu0 %v4768
        %4778 = vmatprep.subr.mxu0 0.0
        %4779 = vmatpush1.msra.mxu0 0.0
        %4780 = vmatprep.subr.mxu0 0.0
        %4781 = vmatpush1.msra.mxu0 0.0
        %4782 = vmatprep.subr.mxu0 0.0
        %4783 = vmatpush1.msra.mxu0 0.0
        %4784 = vmatprep.subr.mxu0 0.0
        %4785 = vmatpush1.msra.mxu0 0.0
        %4786 = vmatprep.subr.mxu0 0.0
        %4787 = vmatpush1.msra.mxu0 0.0
        %4788 = vmatprep.subr.mxu0 0.0
        %4789 = vmatpush1.msra.mxu0 0.0
        %4790 = vmatprep.subr.mxu0 0.0
        %4791 = vmatpush1.msra.mxu0 0.0
        %4792 = vmatprep.subr.mxu0 0.0
        %4793 = vmatpush1.msra.mxu0 0.0
        %4794 = vmatprep.subr.mxu0 0.0
        %4795 = vmatpush1.msra.mxu0 0.0
        %4796 = vmatprep.subr.mxu0 0.0
        %4797 = vmatpush1.msra.mxu0 0.0
        %4798 = vmatprep.subr.mxu0 0.0
        %4799 = vmatpush1.msra.mxu0 0.0
        %4800 = vmatprep.subr.mxu0 0.0
        %4801 = vmatpush1.msra.mxu0 0.0
        %4802 = vmatprep.subr.mxu0 0.0
        %4803 = vmatpush1.msra.mxu0 0.0
        %4804 = vmatprep.subr.mxu0 0.0
        %4805 = vmatpush1.msra.mxu0 0.0
        %4806 = vmatprep.subr.mxu0 0.0
        %4807 = vmatpush1.msra.mxu0 0.0
        %4808 = vmatprep.subr.mxu0 0.0
        %4809 = vmatpush1.msra.mxu0 0.0
        %4810 = vmatprep.subr.mxu0 0.0
        %4811 = vmatpush1.msra.mxu0 0.0
        %4812 = vmatprep.subr.mxu0 0.0
        %4813 = vmatpush1.msra.mxu0 0.0
        %4814 = vmatprep.subr.mxu0 0.0
        %4815 = vmatpush1.msra.mxu0 0.0
        %4816 = vmatprep.subr.mxu0 0.0
        %4817 = vmatpush1.msra.mxu0 0.0
        %4818 = vmatprep.subr.mxu0 0.0
        %4819 = vmatpush1.msra.mxu0 0.0
        %4820 = vmatprep.subr.mxu0 0.0
        %4821 = vmatpush1.msra.mxu0 0.0
        %4822 = vmatprep.subr.mxu0 0.0
        %4823 = vmatpush1.msra.mxu0 0.0
        %4824 = vmatprep.subr.mxu0 0.0
        %4825 = vmatpush1.msra.mxu0 0.0
        %4826 = vmatprep.subr.mxu0 0.0
        %4827 = vmatpush1.msra.mxu0 0.0
        %4828 = vmatprep.subr.mxu0 0.0
        %4829 = vmatpush1.msra.mxu0 0.0
        %4830 = vmatprep.subr.mxu0 0.0
        %4831 = vmatpush1.msra.mxu0 0.0
        %4832 = vmatprep.subr.mxu0 0.0
        %4833 = vmatpush1.msra.mxu0 0.0
        %4834 = vmatprep.subr.mxu0 0.0
        %4835 = vmatpush1.msra.mxu0 0.0
        %4836 = vmatprep.subr.mxu0 0.0
        %4837 = vmatpush1.msra.mxu0 0.0
        %4838 = vmatprep.subr.mxu0 0.0
        %4839 = vmatpush1.msra.mxu0 0.0
        %4840 = vmatprep.mubr.f32.mxu0 0.0
        %4841 = vmatmul.mubr.f32.gmra.mrb[0].mxu0 %v4774
        %v4842 = vpop.f32.mrb[0].mxu0
        %v4843 = vadd.f32 0.0, %v4842
        %v4844 = vpop.f32.mrb[0].mxu0
        %v4845 = vadd.f32 0.0, %v4844
        %4846 = vdwg.mxu0
        %4847 = vmatprep.subr.mxu0 0.0
        %4848 = vmatpush1.msra.mxu0 %v4766
        %4849 = vmatprep.subr.mxu0 0.0
        %4850 = vmatpush1.msra.mxu0 0.0
        %4851 = vmatprep.subr.mxu0 0.0
        %4852 = vmatpush1.msra.mxu0 0.0
        %4853 = vmatprep.subr.mxu0 0.0
        %4854 = vmatpush1.msra.mxu0 0.0
        %4855 = vmatprep.subr.mxu0 0.0
        %4856 = vmatpush1.msra.mxu0 0.0
        %4857 = vmatprep.subr.mxu0 0.0
        %4858 = vmatpush1.msra.mxu0 0.0
        %4859 = vmatprep.subr.mxu0 0.0
        %4860 = vmatpush1.msra.mxu0 0.0
        %4861 = vmatprep.subr.mxu0 0.0
        %4862 = vmatpush1.msra.mxu0 0.0
        %4863 = vmatprep.subr.mxu0 0.0
        %4864 = vmatpush1.msra.mxu0 0.0
        %4865 = vmatprep.subr.mxu0 0.0
        %4866 = vmatpush1.msra.mxu0 0.0
        %4867 = vmatprep.subr.mxu0 0.0
        %4868 = vmatpush1.msra.mxu0 0.0
        %4869 = vmatprep.subr.mxu0 0.0
        %4870 = vmatpush1.msra.mxu0 0.0
        %4871 = vmatprep.subr.mxu0 0.0
        %4872 = vmatpush1.msra.mxu0 0.0
        %4873 = vmatprep.subr.mxu0 0.0
        %4874 = vmatpush1.msra.mxu0 0.0
        %4875 = vmatprep.subr.mxu0 0.0
        %4876 = vmatpush1.msra.mxu0 0.0
        %4877 = vmatprep.subr.mxu0 0.0
        %4878 = vmatpush1.msra.mxu0 0.0
        %4879 = vmatprep.subr.mxu0 0.0
        %4880 = vmatpush1.msra.mxu0 0.0
        %4881 = vmatprep.subr.mxu0 0.0
        %4882 = vmatpush1.msra.mxu0 0.0
        %4883 = vmatprep.subr.mxu0 0.0
        %4884 = vmatpush1.msra.mxu0 0.0
        %4885 = vmatprep.subr.mxu0 0.0
        %4886 = vmatpush1.msra.mxu0 0.0
        %4887 = vmatprep.subr.mxu0 0.0
        %4888 = vmatpush1.msra.mxu0 0.0
        %4889 = vmatprep.subr.mxu0 0.0
        %4890 = vmatpush1.msra.mxu0 0.0
        %4891 = vmatprep.subr.mxu0 0.0
        %4892 = vmatpush1.msra.mxu0 0.0
        %4893 = vmatprep.subr.mxu0 0.0
        %4894 = vmatpush1.msra.mxu0 0.0
        %4895 = vmatprep.subr.mxu0 0.0
        %4896 = vmatpush1.msra.mxu0 0.0
        %4897 = vmatprep.subr.mxu0 0.0
        %4898 = vmatpush1.msra.mxu0 0.0
        %4899 = vmatprep.subr.mxu0 0.0
        %4900 = vmatpush1.msra.mxu0 0.0
        %4901 = vmatprep.subr.mxu0 0.0
        %4902 = vmatpush1.msra.mxu0 0.0
        %4903 = vmatprep.subr.mxu0 0.0
        %4904 = vmatpush1.msra.mxu0 0.0
        %4905 = vmatprep.subr.mxu0 0.0
        %4906 = vmatpush1.msra.mxu0 0.0
        %4907 = vmatprep.subr.mxu0 0.0
        %4908 = vmatpush1.msra.mxu0 0.0
        %4909 = vmatprep.subr.mxu0 0.0
        %4910 = vmatpush1.msra.mxu0 0.0
        %4911 = vmatprep.mubr.f32.mxu0 0.0
        %4912 = vmatmul.mubr.f32.gmra.mrb[0].mxu0 %v4774
        %v4913 = vpop.f32.mrb[0].mxu0
        %v4914 = vadd.f32 0.0, %v4913
        %v4915 = vpop.f32.mrb[0].mxu0
        %4916 = vdwg.mxu0
        %v4917 = vadd.f32 %v4750, %v4843
        %v4918 = vadd.f32 %v4751, %v4845
        %v4919 = vadd.f32 %v4752, %v4914
        %4920 = vst [vmem:[#allocation2] sm:$0xff] %v4917
        %4921 = vst [vmem:[#allocation2 + $0x8] sm:$0xff] %v4918
        %4922 = vst.msk [vmem:[#allocation2 + $0x10] sm:$0xff] %vm177, %v4919
        %v4923 = vld [vmem:[#allocation2] sm:$0xff]
        %v4925 = vcombine.high %v4923, %v4923
        %v4927 = vunpack.c.l.s4 1966171168
        %v4928 = vunpack.c.0.s8 %v4927
        %v4929 = vlaneseq
        %v4930 = vshrl.u32 %v4929, 7
        %v4931 = vsub.s32 %v4928, %v4930
        %v4932 = vrot.slane %v4923, %v4931
        %v4934 = vunpack.c.l.s4 1966171168
        %v4935 = vunpack.c.0.s8 %v4934
        %v4936 = vlaneseq
        %v4937 = vshrl.u32 %v4936, 7
        %v4938 = vsub.s32 %v4935, %v4937
        %v4939 = vrot.slane %v4925, %v4938
        %v4940 = vcombine.high %v4932, %v4932
        %v4941 = vcombine.high %v4939, %v4939
        %v4943 = vunpack.c.l.s4 1966171168
        %v4944 = vunpack.c.0.s8 %v4943
        %v4945 = vlaneseq
        %v4946 = vshrl.u32 %v4945, 7
        %v4947 = vsub.s32 %v4944, %v4946
        %v4948 = vrot.slane %v4932, %v4947
        %v4950 = vunpack.c.l.s4 1966171168
        %v4951 = vunpack.c.0.s8 %v4950
        %v4952 = vlaneseq
        %v4953 = vshrl.u32 %v4952, 7
        %v4954 = vsub.s32 %v4951, %v4953
        %v4955 = vrot.slane %v4939, %v4954
        %v4957 = vunpack.c.l.s4 1966171168
        %v4958 = vunpack.c.0.s8 %v4957
        %v4959 = vlaneseq
        %v4960 = vshrl.u32 %v4959, 7
        %v4961 = vsub.s32 %v4958, %v4960
        %v4962 = vrot.slane %v4940, %v4961
        %v4964 = vunpack.c.l.s4 1966171168
        %v4965 = vunpack.c.0.s8 %v4964
        %v4966 = vlaneseq
        %v4967 = vshrl.u32 %v4966, 7
        %v4968 = vsub.s32 %v4965, %v4967
        %v4969 = vrot.slane %v4941, %v4968
        %v4970 = vcombine.high %v4948, %v4948
        %v4971 = vcombine.high %v4955, %v4955
        %v4972 = vcombine.high %v4962, %v4962
        %v4973 = vcombine.high %v4969, %v4969
        %vm4982 = vcmask 122880
        %4983 = vst.msk [vmem:[%s163] sm:$0x1] %vm4982, %v4948
        %4984 = vst.msk [vmem:[%s163 + $0x10] sm:$0x1] %vm4982, %v4962
        %4985 = vst.msk [vmem:[%s163 + $0x20] sm:$0x1] %vm4982, %v4970
        %4986 = vst.msk [vmem:[%s163 + $0x30] sm:$0x1] %vm4982, %v4972
        %4987 = vst.msk [vmem:[%s163 + $0x40] sm:$0x1] %vm4982, %v4955
        %4988 = vst.msk [vmem:[%s163 + $0x50] sm:$0x1] %vm4982, %v4969
        %4989 = vst.msk [vmem:[%s163 + $0x60] sm:$0x1] %vm4982, %v4971
        %4990 = vst.msk [vmem:[%s163 + $0x70] sm:$0x1] %vm4982, %v4973
        %v4991 = vld [vmem:[#allocation2] sm:$0xff]
        %v4993 = vcombine.high %v4991, %v4991
        %v4995 = vunpack.c.l.s4 1966171168
        %v4996 = vunpack.c.0.s8 %v4995
        %v4997 = vlaneseq
        %v4998 = vshrl.u32 %v4997, 7
        %v4999 = vsub.s32 %v4996, %v4998
        %v5000 = vrot.slane %v4991, %v4999
        %v5002 = vunpack.c.l.s4 1966171168
        %v5003 = vunpack.c.0.s8 %v5002
        %v5004 = vlaneseq
        %v5005 = vshrl.u32 %v5004, 7
        %v5006 = vsub.s32 %v5003, %v5005
        %v5007 = vrot.slane %v4993, %v5006
        %v5008 = vcombine.high %v5000, %v5000
        %v5009 = vcombine.high %v5007, %v5007
        %v5011 = vunpack.c.l.s4 1966171168
        %v5012 = vunpack.c.0.s8 %v5011
        %v5013 = vlaneseq
        %v5014 = vshrl.u32 %v5013, 7
        %v5015 = vsub.s32 %v5012, %v5014
        %v5016 = vrot.slane %v5000, %v5015
        %v5018 = vunpack.c.l.s4 1966171168
        %v5019 = vunpack.c.0.s8 %v5018
        %v5020 = vlaneseq
        %v5021 = vshrl.u32 %v5020, 7
        %v5022 = vsub.s32 %v5019, %v5021
        %v5023 = vrot.slane %v5007, %v5022
        %v5025 = vunpack.c.l.s4 1966171168
        %v5026 = vunpack.c.0.s8 %v5025
        %v5027 = vlaneseq
        %v5028 = vshrl.u32 %v5027, 7
        %v5029 = vsub.s32 %v5026, %v5028
        %v5030 = vrot.slane %v5008, %v5029
        %v5032 = vunpack.c.l.s4 1966171168
        %v5033 = vunpack.c.0.s8 %v5032
        %v5034 = vlaneseq
        %v5035 = vshrl.u32 %v5034, 7
        %v5036 = vsub.s32 %v5033, %v5035
        %v5037 = vrot.slane %v5009, %v5036
        %v5038 = vcombine.high %v5016, %v5016
        %v5039 = vcombine.high %v5023, %v5023
        %v5040 = vcombine.high %v5030, %v5030
        %v5041 = vcombine.high %v5037, %v5037
        %v5042 = vlaneseq
        %v5043 = vshrl.u32 %v5042, 7
        %v5044 = vsub.s32 0, %v5043
        %v5045 = vrot.slane %v5016, %v5044
        %v5046 = vlaneseq
        %v5047 = vshrl.u32 %v5046, 7
        %v5048 = vsub.s32 0, %v5047
        %v5049 = vrot.slane %v5030, %v5048
        %v5050 = vlaneseq
        %v5051 = vshrl.u32 %v5050, 7
        %v5052 = vsub.s32 0, %v5051
        %v5053 = vrot.slane %v5038, %v5052
        %v5054 = vlaneseq
        %v5055 = vshrl.u32 %v5054, 7
        %v5056 = vsub.s32 0, %v5055
        %v5057 = vrot.slane %v5040, %v5056
        %v5058 = vlaneseq
        %v5059 = vshrl.u32 %v5058, 7
        %v5060 = vsub.s32 0, %v5059
        %v5061 = vrot.slane %v5023, %v5060
        %v5062 = vlaneseq
        %v5063 = vshrl.u32 %v5062, 7
        %v5064 = vsub.s32 0, %v5063
        %v5065 = vrot.slane %v5037, %v5064
        %v5066 = vlaneseq
        %v5067 = vshrl.u32 %v5066, 7
        %v5068 = vsub.s32 0, %v5067
        %v5069 = vrot.slane %v5039, %v5068
        %v5070 = vlaneseq
        %v5071 = vshrl.u32 %v5070, 7
        %v5072 = vsub.s32 0, %v5071
        %v5073 = vrot.slane %v5041, %v5072
        %5074 = vrot.lane.b32.xlu0 %v5045, 106
        %v5075 = vpop.permute.xlu0 %5074
        %5076 = vrot.lane.b32.xlu0 %v5049, 106
        %v5077 = vpop.permute.xlu0 %5076
        %5078 = vrot.lane.b32.xlu0 %v5053, 106
        %v5079 = vpop.permute.xlu0 %5078
        %5080 = vrot.lane.b32.xlu0 %v5057, 106
        %v5081 = vpop.permute.xlu0 %5080
        %5082 = vrot.lane.b32.xlu0 %v5061, 106
        %v5083 = vpop.permute.xlu0 %5082
        %5084 = vrot.lane.b32.xlu0 %v5065, 106
        %v5085 = vpop.permute.xlu0 %5084
        %5086 = vrot.lane.b32.xlu0 %v5069, 106
        %v5087 = vpop.permute.xlu0 %5086
        %5088 = vrot.lane.b32.xlu0 %v5073, 106
        %v5089 = vpop.permute.xlu0 %5088
        %5098 = vst.msk [vmem:[%s163 + $0x1] sm:$0x1] %vm4982, %v5075
        %5099 = vst.msk [vmem:[%s163 + $0x11] sm:$0x1] %vm4982, %v5077
        %5100 = vst.msk [vmem:[%s163 + $0x21] sm:$0x1] %vm4982, %v5079
        %5101 = vst.msk [vmem:[%s163 + $0x31] sm:$0x1] %vm4982, %v5081
        %5102 = vst.msk [vmem:[%s163 + $0x41] sm:$0x1] %vm4982, %v5083
        %5103 = vst.msk [vmem:[%s163 + $0x51] sm:$0x1] %vm4982, %v5085
        %5104 = vst.msk [vmem:[%s163 + $0x61] sm:$0x1] %vm4982, %v5087
        %5105 = vst.msk [vmem:[%s163 + $0x71] sm:$0x1] %vm4982, %v5089
        %v5106 = vld [vmem:[#allocation2] sm:$0xff]
        %v5108 = vcombine.high %v5106, %v5106
        %v5110 = vunpack.c.l.s4 1966171168
        %v5111 = vunpack.c.0.s8 %v5110
        %v5112 = vlaneseq
        %v5113 = vshrl.u32 %v5112, 7
        %v5114 = vsub.s32 %v5111, %v5113
        %v5115 = vrot.slane %v5106, %v5114
        %v5117 = vunpack.c.l.s4 1966171168
        %v5118 = vunpack.c.0.s8 %v5117
        %v5119 = vlaneseq
        %v5120 = vshrl.u32 %v5119, 7
        %v5121 = vsub.s32 %v5118, %v5120
        %v5122 = vrot.slane %v5108, %v5121
        %v5123 = vcombine.high %v5115, %v5115
        %v5124 = vcombine.high %v5122, %v5122
        %v5126 = vunpack.c.l.s4 1966171168
        %v5127 = vunpack.c.0.s8 %v5126
        %v5128 = vlaneseq
        %v5129 = vshrl.u32 %v5128, 7
        %v5130 = vsub.s32 %v5127, %v5129
        %v5131 = vrot.slane %v5115, %v5130
        %v5133 = vunpack.c.l.s4 1966171168
        %v5134 = vunpack.c.0.s8 %v5133
        %v5135 = vlaneseq
        %v5136 = vshrl.u32 %v5135, 7
        %v5137 = vsub.s32 %v5134, %v5136
        %v5138 = vrot.slane %v5122, %v5137
        %v5140 = vunpack.c.l.s4 1966171168
        %v5141 = vunpack.c.0.s8 %v5140
        %v5142 = vlaneseq
        %v5143 = vshrl.u32 %v5142, 7
        %v5144 = vsub.s32 %v5141, %v5143
        %v5145 = vrot.slane %v5123, %v5144
        %v5147 = vunpack.c.l.s4 1966171168
        %v5148 = vunpack.c.0.s8 %v5147
        %v5149 = vlaneseq
        %v5150 = vshrl.u32 %v5149, 7
        %v5151 = vsub.s32 %v5148, %v5150
        %v5152 = vrot.slane %v5124, %v5151
        %v5153 = vcombine.high %v5131, %v5131
        %v5154 = vcombine.high %v5138, %v5138
        %v5155 = vcombine.high %v5145, %v5145
        %v5156 = vcombine.high %v5152, %v5152
        %v5157 = vlaneseq
        %v5158 = vshrl.u32 %v5157, 7
        %v5159 = vsub.s32 0, %v5158
        %v5160 = vrot.slane %v5131, %v5159
        %v5161 = vlaneseq
        %v5162 = vshrl.u32 %v5161, 7
        %v5163 = vsub.s32 0, %v5162
        %v5164 = vrot.slane %v5145, %v5163
        %v5165 = vlaneseq
        %v5166 = vshrl.u32 %v5165, 7
        %v5167 = vsub.s32 0, %v5166
        %v5168 = vrot.slane %v5153, %v5167
        %v5169 = vlaneseq
        %v5170 = vshrl.u32 %v5169, 7
        %v5171 = vsub.s32 0, %v5170
        %v5172 = vrot.slane %v5155, %v5171
        %v5173 = vlaneseq
        %v5174 = vshrl.u32 %v5173, 7
        %v5175 = vsub.s32 0, %v5174
        %v5176 = vrot.slane %v5138, %v5175
        %v5177 = vlaneseq
        %v5178 = vshrl.u32 %v5177, 7
        %v5179 = vsub.s32 0, %v5178
        %v5180 = vrot.slane %v5152, %v5179
        %v5181 = vlaneseq
        %v5182 = vshrl.u32 %v5181, 7
        %v5183 = vsub.s32 0, %v5182
        %v5184 = vrot.slane %v5154, %v5183
        %v5185 = vlaneseq
        %v5186 = vshrl.u32 %v5185, 7
        %v5187 = vsub.s32 0, %v5186
        %v5188 = vrot.slane %v5156, %v5187
        %5189 = vrot.lane.b32.xlu0 %v5160, 84
        %v5190 = vpop.permute.xlu0 %5189
        %5191 = vrot.lane.b32.xlu0 %v5164, 84
        %v5192 = vpop.permute.xlu0 %5191
        %5193 = vrot.lane.b32.xlu0 %v5168, 84
        %v5194 = vpop.permute.xlu0 %5193
        %5195 = vrot.lane.b32.xlu0 %v5172, 84
        %v5196 = vpop.permute.xlu0 %5195
        %5197 = vrot.lane.b32.xlu0 %v5176, 84
        %v5198 = vpop.permute.xlu0 %5197
        %5199 = vrot.lane.b32.xlu0 %v5180, 84
        %v5200 = vpop.permute.xlu0 %5199
        %5201 = vrot.lane.b32.xlu0 %v5184, 84
        %v5202 = vpop.permute.xlu0 %5201
        %5203 = vrot.lane.b32.xlu0 %v5188, 84
        %v5204 = vpop.permute.xlu0 %5203
        %5213 = vst.msk [vmem:[%s163 + $0x2] sm:$0x1] %vm4982, %v5190
        %5214 = vst.msk [vmem:[%s163 + $0x12] sm:$0x1] %vm4982, %v5192
        %5215 = vst.msk [vmem:[%s163 + $0x22] sm:$0x1] %vm4982, %v5194
        %5216 = vst.msk [vmem:[%s163 + $0x32] sm:$0x1] %vm4982, %v5196
        %5217 = vst.msk [vmem:[%s163 + $0x42] sm:$0x1] %vm4982, %v5198
        %5218 = vst.msk [vmem:[%s163 + $0x52] sm:$0x1] %vm4982, %v5200
        %5219 = vst.msk [vmem:[%s163 + $0x62] sm:$0x1] %vm4982, %v5202
        %5220 = vst.msk [vmem:[%s163 + $0x72] sm:$0x1] %vm4982, %v5204
        %v5221 = vld [vmem:[#allocation2] sm:$0xff]
        %v5223 = vcombine.high %v5221, %v5221
        %v5225 = vunpack.c.l.s4 1966171168
        %v5226 = vunpack.c.0.s8 %v5225
        %v5227 = vlaneseq
        %v5228 = vshrl.u32 %v5227, 7
        %v5229 = vsub.s32 %v5226, %v5228
        %v5230 = vrot.slane %v5221, %v5229
        %v5232 = vunpack.c.l.s4 1966171168
        %v5233 = vunpack.c.0.s8 %v5232
        %v5234 = vlaneseq
        %v5235 = vshrl.u32 %v5234, 7
        %v5236 = vsub.s32 %v5233, %v5235
        %v5237 = vrot.slane %v5223, %v5236
        %v5238 = vcombine.high %v5230, %v5230
        %v5239 = vcombine.high %v5237, %v5237
        %v5241 = vunpack.c.l.s4 1966171168
        %v5242 = vunpack.c.0.s8 %v5241
        %v5243 = vlaneseq
        %v5244 = vshrl.u32 %v5243, 7
        %v5245 = vsub.s32 %v5242, %v5244
        %v5246 = vrot.slane %v5230, %v5245
        %v5248 = vunpack.c.l.s4 1966171168
        %v5249 = vunpack.c.0.s8 %v5248
        %v5250 = vlaneseq
        %v5251 = vshrl.u32 %v5250, 7
        %v5252 = vsub.s32 %v5249, %v5251
        %v5253 = vrot.slane %v5237, %v5252
        %v5255 = vunpack.c.l.s4 1966171168
        %v5256 = vunpack.c.0.s8 %v5255
        %v5257 = vlaneseq
        %v5258 = vshrl.u32 %v5257, 7
        %v5259 = vsub.s32 %v5256, %v5258
        %v5260 = vrot.slane %v5238, %v5259
        %v5262 = vunpack.c.l.s4 1966171168
        %v5263 = vunpack.c.0.s8 %v5262
        %v5264 = vlaneseq
        %v5265 = vshrl.u32 %v5264, 7
        %v5266 = vsub.s32 %v5263, %v5265
        %v5267 = vrot.slane %v5239, %v5266
        %v5268 = vcombine.high %v5246, %v5246
        %v5269 = vcombine.high %v5253, %v5253
        %v5270 = vcombine.high %v5260, %v5260
        %v5271 = vcombine.high %v5267, %v5267
        %v5272 = vlaneseq
        %v5273 = vshrl.u32 %v5272, 7
        %v5274 = vsub.s32 0, %v5273
        %v5275 = vrot.slane %v5246, %v5274
        %v5276 = vlaneseq
        %v5277 = vshrl.u32 %v5276, 7
        %v5278 = vsub.s32 0, %v5277
        %v5279 = vrot.slane %v5260, %v5278
        %v5280 = vlaneseq
        %v5281 = vshrl.u32 %v5280, 7
        %v5282 = vsub.s32 0, %v5281
        %v5283 = vrot.slane %v5268, %v5282
        %v5284 = vlaneseq
        %v5285 = vshrl.u32 %v5284, 7
        %v5286 = vsub.s32 0, %v5285
        %v5287 = vrot.slane %v5270, %v5286
        %v5288 = vlaneseq
        %v5289 = vshrl.u32 %v5288, 7
        %v5290 = vsub.s32 0, %v5289
        %v5291 = vrot.slane %v5253, %v5290
        %v5292 = vlaneseq
        %v5293 = vshrl.u32 %v5292, 7
        %v5294 = vsub.s32 0, %v5293
        %v5295 = vrot.slane %v5267, %v5294
        %v5296 = vlaneseq
        %v5297 = vshrl.u32 %v5296, 7
        %v5298 = vsub.s32 0, %v5297
        %v5299 = vrot.slane %v5269, %v5298
        %v5300 = vlaneseq
        %v5301 = vshrl.u32 %v5300, 7
        %v5302 = vsub.s32 0, %v5301
        %v5303 = vrot.slane %v5271, %v5302
        %5304 = vrot.lane.b32.xlu0 %v5275, 62
        %v5305 = vpop.permute.xlu0 %5304
        %5306 = vrot.lane.b32.xlu0 %v5279, 62
        %v5307 = vpop.permute.xlu0 %5306
        %5308 = vrot.lane.b32.xlu0 %v5283, 62
        %v5309 = vpop.permute.xlu0 %5308
        %5310 = vrot.lane.b32.xlu0 %v5287, 62
        %v5311 = vpop.permute.xlu0 %5310
        %5312 = vrot.lane.b32.xlu0 %v5291, 62
        %v5313 = vpop.permute.xlu0 %5312
        %5314 = vrot.lane.b32.xlu0 %v5295, 62
        %v5315 = vpop.permute.xlu0 %5314
        %5316 = vrot.lane.b32.xlu0 %v5299, 62
        %v5317 = vpop.permute.xlu0 %5316
        %5318 = vrot.lane.b32.xlu0 %v5303, 62
        %v5319 = vpop.permute.xlu0 %5318
        %5328 = vst.msk [vmem:[%s163 + $0x3] sm:$0x1] %vm4982, %v5305
        %5329 = vst.msk [vmem:[%s163 + $0x13] sm:$0x1] %vm4982, %v5307
        %5330 = vst.msk [vmem:[%s163 + $0x23] sm:$0x1] %vm4982, %v5309
        %5331 = vst.msk [vmem:[%s163 + $0x33] sm:$0x1] %vm4982, %v5311
        %5332 = vst.msk [vmem:[%s163 + $0x43] sm:$0x1] %vm4982, %v5313
        %5333 = vst.msk [vmem:[%s163 + $0x53] sm:$0x1] %vm4982, %v5315
        %5334 = vst.msk [vmem:[%s163 + $0x63] sm:$0x1] %vm4982, %v5317
        %5335 = vst.msk [vmem:[%s163 + $0x73] sm:$0x1] %vm4982, %v5319
        %v5336 = vld [vmem:[#allocation2] sm:$0xff]
        %v5338 = vcombine.high %v5336, %v5336
        %v5340 = vunpack.c.l.s4 1966171168
        %v5341 = vunpack.c.0.s8 %v5340
        %v5342 = vlaneseq
        %v5343 = vshrl.u32 %v5342, 7
        %v5344 = vsub.s32 %v5341, %v5343
        %v5345 = vrot.slane %v5336, %v5344
        %v5347 = vunpack.c.l.s4 1966171168
        %v5348 = vunpack.c.0.s8 %v5347
        %v5349 = vlaneseq
        %v5350 = vshrl.u32 %v5349, 7
        %v5351 = vsub.s32 %v5348, %v5350
        %v5352 = vrot.slane %v5338, %v5351
        %v5353 = vcombine.high %v5345, %v5345
        %v5354 = vcombine.high %v5352, %v5352
        %v5356 = vunpack.c.l.s4 1966171168
        %v5357 = vunpack.c.0.s8 %v5356
        %v5358 = vlaneseq
        %v5359 = vshrl.u32 %v5358, 7
        %v5360 = vsub.s32 %v5357, %v5359
        %v5361 = vrot.slane %v5345, %v5360
        %v5363 = vunpack.c.l.s4 1966171168
        %v5364 = vunpack.c.0.s8 %v5363
        %v5365 = vlaneseq
        %v5366 = vshrl.u32 %v5365, 7
        %v5367 = vsub.s32 %v5364, %v5366
        %v5368 = vrot.slane %v5352, %v5367
        %v5370 = vunpack.c.l.s4 1966171168
        %v5371 = vunpack.c.0.s8 %v5370
        %v5372 = vlaneseq
        %v5373 = vshrl.u32 %v5372, 7
        %v5374 = vsub.s32 %v5371, %v5373
        %v5375 = vrot.slane %v5353, %v5374
        %v5377 = vunpack.c.l.s4 1966171168
        %v5378 = vunpack.c.0.s8 %v5377
        %v5379 = vlaneseq
        %v5380 = vshrl.u32 %v5379, 7
        %v5381 = vsub.s32 %v5378, %v5380
        %v5382 = vrot.slane %v5354, %v5381
        %v5383 = vcombine.high %v5361, %v5361
        %v5384 = vcombine.high %v5368, %v5368
        %v5385 = vcombine.high %v5375, %v5375
        %v5386 = vcombine.high %v5382, %v5382
        %v5387 = vlaneseq
        %v5388 = vshrl.u32 %v5387, 7
        %v5389 = vsub.s32 0, %v5388
        %v5390 = vrot.slane %v5361, %v5389
        %v5391 = vlaneseq
        %v5392 = vshrl.u32 %v5391, 7
        %v5393 = vsub.s32 0, %v5392
        %v5394 = vrot.slane %v5375, %v5393
        %v5395 = vlaneseq
        %v5396 = vshrl.u32 %v5395, 7
        %v5397 = vsub.s32 0, %v5396
        %v5398 = vrot.slane %v5383, %v5397
        %v5399 = vlaneseq
        %v5400 = vshrl.u32 %v5399, 7
        %v5401 = vsub.s32 0, %v5400
        %v5402 = vrot.slane %v5385, %v5401
        %v5403 = vlaneseq
        %v5404 = vshrl.u32 %v5403, 7
        %v5405 = vsub.s32 0, %v5404
        %v5406 = vrot.slane %v5368, %v5405
        %v5407 = vlaneseq
        %v5408 = vshrl.u32 %v5407, 7
        %v5409 = vsub.s32 0, %v5408
        %v5410 = vrot.slane %v5382, %v5409
        %v5411 = vlaneseq
        %v5412 = vshrl.u32 %v5411, 7
        %v5413 = vsub.s32 0, %v5412
        %v5414 = vrot.slane %v5384, %v5413
        %v5415 = vlaneseq
        %v5416 = vshrl.u32 %v5415, 7
        %v5417 = vsub.s32 0, %v5416
        %v5418 = vrot.slane %v5386, %v5417
        %5419 = vrot.lane.b32.xlu0 %v5390, 40
        %v5420 = vpop.permute.xlu0 %5419
        %5421 = vrot.lane.b32.xlu0 %v5394, 40
        %v5422 = vpop.permute.xlu0 %5421
        %5423 = vrot.lane.b32.xlu0 %v5398, 40
        %v5424 = vpop.permute.xlu0 %5423
        %5425 = vrot.lane.b32.xlu0 %v5402, 40
        %v5426 = vpop.permute.xlu0 %5425
        %5427 = vrot.lane.b32.xlu0 %v5406, 40
        %v5428 = vpop.permute.xlu0 %5427
        %5429 = vrot.lane.b32.xlu0 %v5410, 40
        %v5430 = vpop.permute.xlu0 %5429
        %5431 = vrot.lane.b32.xlu0 %v5414, 40
        %v5432 = vpop.permute.xlu0 %5431
        %5433 = vrot.lane.b32.xlu0 %v5418, 40
        %v5434 = vpop.permute.xlu0 %5433
        %5443 = vst.msk [vmem:[%s163 + $0x4] sm:$0x1] %vm4982, %v5420
        %5444 = vst.msk [vmem:[%s163 + $0x14] sm:$0x1] %vm4982, %v5422
        %5445 = vst.msk [vmem:[%s163 + $0x24] sm:$0x1] %vm4982, %v5424
        %5446 = vst.msk [vmem:[%s163 + $0x34] sm:$0x1] %vm4982, %v5426
        %5447 = vst.msk [vmem:[%s163 + $0x44] sm:$0x1] %vm4982, %v5428
        %5448 = vst.msk [vmem:[%s163 + $0x54] sm:$0x1] %vm4982, %v5430
        %5449 = vst.msk [vmem:[%s163 + $0x64] sm:$0x1] %vm4982, %v5432
        %5450 = vst.msk [vmem:[%s163 + $0x74] sm:$0x1] %vm4982, %v5434
        %v5451 = vld [vmem:[#allocation2] sm:$0xff]
        %v5453 = vcombine.high %v5451, %v5451
        %v5455 = vunpack.c.l.s4 1966171168
        %v5456 = vunpack.c.0.s8 %v5455
        %v5457 = vlaneseq
        %v5458 = vshrl.u32 %v5457, 7
        %v5459 = vsub.s32 %v5456, %v5458
        %v5460 = vrot.slane %v5451, %v5459
        %v5462 = vunpack.c.l.s4 1966171168
        %v5463 = vunpack.c.0.s8 %v5462
        %v5464 = vlaneseq
        %v5465 = vshrl.u32 %v5464, 7
        %v5466 = vsub.s32 %v5463, %v5465
        %v5467 = vrot.slane %v5453, %v5466
        %v5468 = vcombine.high %v5460, %v5460
        %v5469 = vcombine.high %v5467, %v5467
        %v5471 = vunpack.c.l.s4 1966171168
        %v5472 = vunpack.c.0.s8 %v5471
        %v5473 = vlaneseq
        %v5474 = vshrl.u32 %v5473, 7
        %v5475 = vsub.s32 %v5472, %v5474
        %v5476 = vrot.slane %v5460, %v5475
        %v5478 = vunpack.c.l.s4 1966171168
        %v5479 = vunpack.c.0.s8 %v5478
        %v5480 = vlaneseq
        %v5481 = vshrl.u32 %v5480, 7
        %v5482 = vsub.s32 %v5479, %v5481
        %v5483 = vrot.slane %v5467, %v5482
        %v5485 = vunpack.c.l.s4 1966171168
        %v5486 = vunpack.c.0.s8 %v5485
        %v5487 = vlaneseq
        %v5488 = vshrl.u32 %v5487, 7
        %v5489 = vsub.s32 %v5486, %v5488
        %v5490 = vrot.slane %v5468, %v5489
        %v5492 = vunpack.c.l.s4 1966171168
        %v5493 = vunpack.c.0.s8 %v5492
        %v5494 = vlaneseq
        %v5495 = vshrl.u32 %v5494, 7
        %v5496 = vsub.s32 %v5493, %v5495
        %v5497 = vrot.slane %v5469, %v5496
        %v5498 = vcombine.high %v5476, %v5476
        %v5499 = vcombine.high %v5483, %v5483
        %v5500 = vcombine.high %v5490, %v5490
        %v5501 = vcombine.high %v5497, %v5497
        %v5502 = vlaneseq
        %v5503 = vshrl.u32 %v5502, 7
        %v5504 = vsub.s32 0, %v5503
        %v5505 = vrot.slane %v5476, %v5504
        %v5506 = vlaneseq
        %v5507 = vshrl.u32 %v5506, 7
        %v5508 = vsub.s32 0, %v5507
        %v5509 = vrot.slane %v5490, %v5508
        %v5510 = vlaneseq
        %v5511 = vshrl.u32 %v5510, 7
        %v5512 = vsub.s32 0, %v5511
        %v5513 = vrot.slane %v5498, %v5512
        %v5514 = vlaneseq
        %v5515 = vshrl.u32 %v5514, 7
        %v5516 = vsub.s32 0, %v5515
        %v5517 = vrot.slane %v5500, %v5516
        %v5518 = vlaneseq
        %v5519 = vshrl.u32 %v5518, 7
        %v5520 = vsub.s32 0, %v5519
        %v5521 = vrot.slane %v5483, %v5520
        %v5522 = vlaneseq
        %v5523 = vshrl.u32 %v5522, 7
        %v5524 = vsub.s32 0, %v5523
        %v5525 = vrot.slane %v5497, %v5524
        %v5526 = vlaneseq
        %v5527 = vshrl.u32 %v5526, 7
        %v5528 = vsub.s32 0, %v5527
        %v5529 = vrot.slane %v5499, %v5528
        %v5530 = vlaneseq
        %v5531 = vshrl.u32 %v5530, 7
        %v5532 = vsub.s32 0, %v5531
        %v5533 = vrot.slane %v5501, %v5532
        %5534 = vrot.lane.b32.xlu0 %v5505, 18
        %v5535 = vpop.permute.xlu0 %5534
        %5536 = vrot.lane.b32.xlu0 %v5509, 18
        %v5537 = vpop.permute.xlu0 %5536
        %5538 = vrot.lane.b32.xlu0 %v5513, 18
        %v5539 = vpop.permute.xlu0 %5538
        %5540 = vrot.lane.b32.xlu0 %v5517, 18
        %v5541 = vpop.permute.xlu0 %5540
        %5542 = vrot.lane.b32.xlu0 %v5521, 18
        %v5543 = vpop.permute.xlu0 %5542
        %5544 = vrot.lane.b32.xlu0 %v5525, 18
        %v5545 = vpop.permute.xlu0 %5544
        %5546 = vrot.lane.b32.xlu0 %v5529, 18
        %v5547 = vpop.permute.xlu0 %5546
        %5548 = vrot.lane.b32.xlu0 %v5533, 18
        %v5549 = vpop.permute.xlu0 %5548
        %5558 = vst.msk [vmem:[%s163 + $0x5] sm:$0x1] %vm4982, %v5535
        %5559 = vst.msk [vmem:[%s163 + $0x15] sm:$0x1] %vm4982, %v5537
        %5560 = vst.msk [vmem:[%s163 + $0x25] sm:$0x1] %vm4982, %v5539
        %5561 = vst.msk [vmem:[%s163 + $0x35] sm:$0x1] %vm4982, %v5541
        %5562 = vst.msk [vmem:[%s163 + $0x45] sm:$0x1] %vm4982, %v5543
        %5563 = vst.msk [vmem:[%s163 + $0x55] sm:$0x1] %vm4982, %v5545
        %5564 = vst.msk [vmem:[%s163 + $0x65] sm:$0x1] %vm4982, %v5547
        %5565 = vst.msk [vmem:[%s163 + $0x75] sm:$0x1] %vm4982, %v5549
        %v5566 = vld [vmem:[#allocation2 + $0x8] sm:$0xff]
        %v5568 = vcombine.high %v5566, %v5566
        %v5570 = vunpack.c.l.s4 1966171168
        %v5571 = vunpack.c.0.s8 %v5570
        %v5572 = vlaneseq
        %v5573 = vshrl.u32 %v5572, 7
        %v5574 = vsub.s32 %v5571, %v5573
        %v5575 = vrot.slane %v5566, %v5574
        %v5577 = vunpack.c.l.s4 1966171168
        %v5578 = vunpack.c.0.s8 %v5577
        %v5579 = vlaneseq
        %v5580 = vshrl.u32 %v5579, 7
        %v5581 = vsub.s32 %v5578, %v5580
        %v5582 = vrot.slane %v5568, %v5581
        %v5583 = vcombine.high %v5575, %v5575
        %v5584 = vcombine.high %v5582, %v5582
        %v5586 = vunpack.c.l.s4 1966171168
        %v5587 = vunpack.c.0.s8 %v5586
        %v5588 = vlaneseq
        %v5589 = vshrl.u32 %v5588, 7
        %v5590 = vsub.s32 %v5587, %v5589
        %v5591 = vrot.slane %v5575, %v5590
        %v5593 = vunpack.c.l.s4 1966171168
        %v5594 = vunpack.c.0.s8 %v5593
        %v5595 = vlaneseq
        %v5596 = vshrl.u32 %v5595, 7
        %v5597 = vsub.s32 %v5594, %v5596
        %v5598 = vrot.slane %v5582, %v5597
        %v5600 = vunpack.c.l.s4 1966171168
        %v5601 = vunpack.c.0.s8 %v5600
        %v5602 = vlaneseq
        %v5603 = vshrl.u32 %v5602, 7
        %v5604 = vsub.s32 %v5601, %v5603
        %v5605 = vrot.slane %v5583, %v5604
        %v5607 = vunpack.c.l.s4 1966171168
        %v5608 = vunpack.c.0.s8 %v5607
        %v5609 = vlaneseq
        %v5610 = vshrl.u32 %v5609, 7
        %v5611 = vsub.s32 %v5608, %v5610
        %v5612 = vrot.slane %v5584, %v5611
        %v5613 = vcombine.high %v5591, %v5591
        %v5614 = vcombine.high %v5598, %v5598
        %v5615 = vcombine.high %v5605, %v5605
        %v5616 = vcombine.high %v5612, %v5612
        %v5617 = vlaneseq
        %v5618 = vshrl.u32 %v5617, 7
        %v5619 = vsub.s32 0, %v5618
        %v5620 = vrot.slane %v5591, %v5619
        %v5621 = vlaneseq
        %v5622 = vshrl.u32 %v5621, 7
        %v5623 = vsub.s32 0, %v5622
        %v5624 = vrot.slane %v5605, %v5623
        %v5625 = vlaneseq
        %v5626 = vshrl.u32 %v5625, 7
        %v5627 = vsub.s32 0, %v5626
        %v5628 = vrot.slane %v5613, %v5627
        %v5629 = vlaneseq
        %v5630 = vshrl.u32 %v5629, 7
        %v5631 = vsub.s32 0, %v5630
        %v5632 = vrot.slane %v5615, %v5631
        %v5633 = vlaneseq
        %v5634 = vshrl.u32 %v5633, 7
        %v5635 = vsub.s32 0, %v5634
        %v5636 = vrot.slane %v5598, %v5635
        %v5637 = vlaneseq
        %v5638 = vshrl.u32 %v5637, 7
        %v5639 = vsub.s32 0, %v5638
        %v5640 = vrot.slane %v5612, %v5639
        %v5641 = vlaneseq
        %v5642 = vshrl.u32 %v5641, 7
        %v5643 = vsub.s32 0, %v5642
        %v5644 = vrot.slane %v5614, %v5643
        %v5645 = vlaneseq
        %v5646 = vshrl.u32 %v5645, 7
        %v5647 = vsub.s32 0, %v5646
        %v5648 = vrot.slane %v5616, %v5647
        %5649 = vrot.lane.b32.xlu0 %v5620, 124
        %v5650 = vpop.permute.xlu0 %5649
        %5651 = vrot.lane.b32.xlu0 %v5624, 124
        %v5652 = vpop.permute.xlu0 %5651
        %5653 = vrot.lane.b32.xlu0 %v5628, 124
        %v5654 = vpop.permute.xlu0 %5653
        %5655 = vrot.lane.b32.xlu0 %v5632, 124
        %v5656 = vpop.permute.xlu0 %5655
        %5657 = vrot.lane.b32.xlu0 %v5636, 124
        %v5658 = vpop.permute.xlu0 %5657
        %5659 = vrot.lane.b32.xlu0 %v5640, 124
        %v5660 = vpop.permute.xlu0 %5659
        %5661 = vrot.lane.b32.xlu0 %v5644, 124
        %v5662 = vpop.permute.xlu0 %5661
        %5663 = vrot.lane.b32.xlu0 %v5648, 124
        %v5664 = vpop.permute.xlu0 %5663
        %5673 = vst.msk [vmem:[%s163 + $0x6] sm:$0x1] %vm4982, %v5650
        %5674 = vst.msk [vmem:[%s163 + $0x16] sm:$0x1] %vm4982, %v5652
        %5675 = vst.msk [vmem:[%s163 + $0x26] sm:$0x1] %vm4982, %v5654
        %5676 = vst.msk [vmem:[%s163 + $0x36] sm:$0x1] %vm4982, %v5656
        %5677 = vst.msk [vmem:[%s163 + $0x46] sm:$0x1] %vm4982, %v5658
        %5678 = vst.msk [vmem:[%s163 + $0x56] sm:$0x1] %vm4982, %v5660
        %5679 = vst.msk [vmem:[%s163 + $0x66] sm:$0x1] %vm4982, %v5662
        %5680 = vst.msk [vmem:[%s163 + $0x76] sm:$0x1] %vm4982, %v5664
        %v5681 = vld [vmem:[#allocation2 + $0x8] sm:$0xff]
        %v5683 = vcombine.high %v5681, %v5681
        %v5685 = vunpack.c.l.s4 1966171168
        %v5686 = vunpack.c.0.s8 %v5685
        %v5687 = vlaneseq
        %v5688 = vshrl.u32 %v5687, 7
        %v5689 = vsub.s32 %v5686, %v5688
        %v5690 = vrot.slane %v5681, %v5689
        %v5692 = vunpack.c.l.s4 1966171168
        %v5693 = vunpack.c.0.s8 %v5692
        %v5694 = vlaneseq
        %v5695 = vshrl.u32 %v5694, 7
        %v5696 = vsub.s32 %v5693, %v5695
        %v5697 = vrot.slane %v5683, %v5696
        %v5698 = vcombine.high %v5690, %v5690
        %v5699 = vcombine.high %v5697, %v5697
        %v5701 = vunpack.c.l.s4 1966171168
        %v5702 = vunpack.c.0.s8 %v5701
        %v5703 = vlaneseq
        %v5704 = vshrl.u32 %v5703, 7
        %v5705 = vsub.s32 %v5702, %v5704
        %v5706 = vrot.slane %v5690, %v5705
        %v5708 = vunpack.c.l.s4 1966171168
        %v5709 = vunpack.c.0.s8 %v5708
        %v5710 = vlaneseq
        %v5711 = vshrl.u32 %v5710, 7
        %v5712 = vsub.s32 %v5709, %v5711
        %v5713 = vrot.slane %v5697, %v5712
        %v5715 = vunpack.c.l.s4 1966171168
        %v5716 = vunpack.c.0.s8 %v5715
        %v5717 = vlaneseq
        %v5718 = vshrl.u32 %v5717, 7
        %v5719 = vsub.s32 %v5716, %v5718
        %v5720 = vrot.slane %v5698, %v5719
        %v5722 = vunpack.c.l.s4 1966171168
        %v5723 = vunpack.c.0.s8 %v5722
        %v5724 = vlaneseq
        %v5725 = vshrl.u32 %v5724, 7
        %v5726 = vsub.s32 %v5723, %v5725
        %v5727 = vrot.slane %v5699, %v5726
        %v5728 = vcombine.high %v5706, %v5706
        %v5729 = vcombine.high %v5713, %v5713
        %v5730 = vcombine.high %v5720, %v5720
        %v5731 = vcombine.high %v5727, %v5727
        %v5732 = vlaneseq
        %v5733 = vshrl.u32 %v5732, 7
        %v5734 = vsub.s32 0, %v5733
        %v5735 = vrot.slane %v5706, %v5734
        %v5736 = vlaneseq
        %v5737 = vshrl.u32 %v5736, 7
        %v5738 = vsub.s32 0, %v5737
        %v5739 = vrot.slane %v5720, %v5738
        %v5740 = vlaneseq
        %v5741 = vshrl.u32 %v5740, 7
        %v5742 = vsub.s32 0, %v5741
        %v5743 = vrot.slane %v5728, %v5742
        %v5744 = vlaneseq
        %v5745 = vshrl.u32 %v5744, 7
        %v5746 = vsub.s32 0, %v5745
        %v5747 = vrot.slane %v5730, %v5746
        %v5748 = vlaneseq
        %v5749 = vshrl.u32 %v5748, 7
        %v5750 = vsub.s32 0, %v5749
        %v5751 = vrot.slane %v5713, %v5750
        %v5752 = vlaneseq
        %v5753 = vshrl.u32 %v5752, 7
        %v5754 = vsub.s32 0, %v5753
        %v5755 = vrot.slane %v5727, %v5754
        %v5756 = vlaneseq
        %v5757 = vshrl.u32 %v5756, 7
        %v5758 = vsub.s32 0, %v5757
        %v5759 = vrot.slane %v5729, %v5758
        %v5760 = vlaneseq
        %v5761 = vshrl.u32 %v5760, 7
        %v5762 = vsub.s32 0, %v5761
        %v5763 = vrot.slane %v5731, %v5762
        %5764 = vrot.lane.b32.xlu0 %v5735, 102
        %v5765 = vpop.permute.xlu0 %5764
        %5766 = vrot.lane.b32.xlu0 %v5739, 102
        %v5767 = vpop.permute.xlu0 %5766
        %5768 = vrot.lane.b32.xlu0 %v5743, 102
        %v5769 = vpop.permute.xlu0 %5768
        %5770 = vrot.lane.b32.xlu0 %v5747, 102
        %v5771 = vpop.permute.xlu0 %5770
        %5772 = vrot.lane.b32.xlu0 %v5751, 102
        %v5773 = vpop.permute.xlu0 %5772
        %5774 = vrot.lane.b32.xlu0 %v5755, 102
        %v5775 = vpop.permute.xlu0 %5774
        %5776 = vrot.lane.b32.xlu0 %v5759, 102
        %v5777 = vpop.permute.xlu0 %5776
        %5778 = vrot.lane.b32.xlu0 %v5763, 102
        %v5779 = vpop.permute.xlu0 %5778
        %5788 = vst.msk [vmem:[%s163 + $0x7] sm:$0x1] %vm4982, %v5765
        %5789 = vst.msk [vmem:[%s163 + $0x17] sm:$0x1] %vm4982, %v5767
        %5790 = vst.msk [vmem:[%s163 + $0x27] sm:$0x1] %vm4982, %v5769
        %5791 = vst.msk [vmem:[%s163 + $0x37] sm:$0x1] %vm4982, %v5771
        %5792 = vst.msk [vmem:[%s163 + $0x47] sm:$0x1] %vm4982, %v5773
        %5793 = vst.msk [vmem:[%s163 + $0x57] sm:$0x1] %vm4982, %v5775
        %5794 = vst.msk [vmem:[%s163 + $0x67] sm:$0x1] %vm4982, %v5777
        %5795 = vst.msk [vmem:[%s163 + $0x77] sm:$0x1] %vm4982, %v5779
        %v5796 = vld [vmem:[#allocation2 + $0x8] sm:$0xff]
        %v5798 = vcombine.high %v5796, %v5796
        %v5800 = vunpack.c.l.s4 1966171168
        %v5801 = vunpack.c.0.s8 %v5800
        %v5802 = vlaneseq
        %v5803 = vshrl.u32 %v5802, 7
        %v5804 = vsub.s32 %v5801, %v5803
        %v5805 = vrot.slane %v5796, %v5804
        %v5807 = vunpack.c.l.s4 1966171168
        %v5808 = vunpack.c.0.s8 %v5807
        %v5809 = vlaneseq
        %v5810 = vshrl.u32 %v5809, 7
        %v5811 = vsub.s32 %v5808, %v5810
        %v5812 = vrot.slane %v5798, %v5811
        %v5813 = vcombine.high %v5805, %v5805
        %v5814 = vcombine.high %v5812, %v5812
        %v5816 = vunpack.c.l.s4 1966171168
        %v5817 = vunpack.c.0.s8 %v5816
        %v5818 = vlaneseq
        %v5819 = vshrl.u32 %v5818, 7
        %v5820 = vsub.s32 %v5817, %v5819
        %v5821 = vrot.slane %v5805, %v5820
        %v5823 = vunpack.c.l.s4 1966171168
        %v5824 = vunpack.c.0.s8 %v5823
        %v5825 = vlaneseq
        %v5826 = vshrl.u32 %v5825, 7
        %v5827 = vsub.s32 %v5824, %v5826
        %v5828 = vrot.slane %v5812, %v5827
        %v5830 = vunpack.c.l.s4 1966171168
        %v5831 = vunpack.c.0.s8 %v5830
        %v5832 = vlaneseq
        %v5833 = vshrl.u32 %v5832, 7
        %v5834 = vsub.s32 %v5831, %v5833
        %v5835 = vrot.slane %v5813, %v5834
        %v5837 = vunpack.c.l.s4 1966171168
        %v5838 = vunpack.c.0.s8 %v5837
        %v5839 = vlaneseq
        %v5840 = vshrl.u32 %v5839, 7
        %v5841 = vsub.s32 %v5838, %v5840
        %v5842 = vrot.slane %v5814, %v5841
        %v5843 = vcombine.high %v5821, %v5821
        %v5844 = vcombine.high %v5828, %v5828
        %v5845 = vcombine.high %v5835, %v5835
        %v5846 = vcombine.high %v5842, %v5842
        %v5847 = vlaneseq
        %v5848 = vshrl.u32 %v5847, 7
        %v5849 = vsub.s32 0, %v5848
        %v5850 = vrot.slane %v5821, %v5849
        %v5851 = vlaneseq
        %v5852 = vshrl.u32 %v5851, 7
        %v5853 = vsub.s32 0, %v5852
        %v5854 = vrot.slane %v5835, %v5853
        %v5855 = vlaneseq
        %v5856 = vshrl.u32 %v5855, 7
        %v5857 = vsub.s32 0, %v5856
        %v5858 = vrot.slane %v5843, %v5857
        %v5859 = vlaneseq
        %v5860 = vshrl.u32 %v5859, 7
        %v5861 = vsub.s32 0, %v5860
        %v5862 = vrot.slane %v5845, %v5861
        %v5863 = vlaneseq
        %v5864 = vshrl.u32 %v5863, 7
        %v5865 = vsub.s32 0, %v5864
        %v5866 = vrot.slane %v5828, %v5865
        %v5867 = vlaneseq
        %v5868 = vshrl.u32 %v5867, 7
        %v5869 = vsub.s32 0, %v5868
        %v5870 = vrot.slane %v5842, %v5869
        %v5871 = vlaneseq
        %v5872 = vshrl.u32 %v5871, 7
        %v5873 = vsub.s32 0, %v5872
        %v5874 = vrot.slane %v5844, %v5873
        %v5875 = vlaneseq
        %v5876 = vshrl.u32 %v5875, 7
        %v5877 = vsub.s32 0, %v5876
        %v5878 = vrot.slane %v5846, %v5877
        %5879 = vrot.lane.b32.xlu0 %v5850, 80
        %v5880 = vpop.permute.xlu0 %5879
        %5881 = vrot.lane.b32.xlu0 %v5854, 80
        %v5882 = vpop.permute.xlu0 %5881
        %5883 = vrot.lane.b32.xlu0 %v5858, 80
        %v5884 = vpop.permute.xlu0 %5883
        %5885 = vrot.lane.b32.xlu0 %v5862, 80
        %v5886 = vpop.permute.xlu0 %5885
        %5887 = vrot.lane.b32.xlu0 %v5866, 80
        %v5888 = vpop.permute.xlu0 %5887
        %5889 = vrot.lane.b32.xlu0 %v5870, 80
        %v5890 = vpop.permute.xlu0 %5889
        %5891 = vrot.lane.b32.xlu0 %v5874, 80
        %v5892 = vpop.permute.xlu0 %5891
        %5893 = vrot.lane.b32.xlu0 %v5878, 80
        %v5894 = vpop.permute.xlu0 %5893
        %5903 = vst.msk [vmem:[%s163 + $0x8] sm:$0x1] %vm4982, %v5880
        %5904 = vst.msk [vmem:[%s163 + $0x18] sm:$0x1] %vm4982, %v5882
        %5905 = vst.msk [vmem:[%s163 + $0x28] sm:$0x1] %vm4982, %v5884
        %5906 = vst.msk [vmem:[%s163 + $0x38] sm:$0x1] %vm4982, %v5886
        %5907 = vst.msk [vmem:[%s163 + $0x48] sm:$0x1] %vm4982, %v5888
        %5908 = vst.msk [vmem:[%s163 + $0x58] sm:$0x1] %vm4982, %v5890
        %5909 = vst.msk [vmem:[%s163 + $0x68] sm:$0x1] %vm4982, %v5892
        %5910 = vst.msk [vmem:[%s163 + $0x78] sm:$0x1] %vm4982, %v5894
        %v5911 = vld [vmem:[#allocation2 + $0x8] sm:$0xff]
        %v5913 = vcombine.high %v5911, %v5911
        %v5915 = vunpack.c.l.s4 1966171168
        %v5916 = vunpack.c.0.s8 %v5915
        %v5917 = vlaneseq
        %v5918 = vshrl.u32 %v5917, 7
        %v5919 = vsub.s32 %v5916, %v5918
        %v5920 = vrot.slane %v5911, %v5919
        %v5922 = vunpack.c.l.s4 1966171168
        %v5923 = vunpack.c.0.s8 %v5922
        %v5924 = vlaneseq
        %v5925 = vshrl.u32 %v5924, 7
        %v5926 = vsub.s32 %v5923, %v5925
        %v5927 = vrot.slane %v5913, %v5926
        %v5928 = vcombine.high %v5920, %v5920
        %v5929 = vcombine.high %v5927, %v5927
        %v5931 = vunpack.c.l.s4 1966171168
        %v5932 = vunpack.c.0.s8 %v5931
        %v5933 = vlaneseq
        %v5934 = vshrl.u32 %v5933, 7
        %v5935 = vsub.s32 %v5932, %v5934
        %v5936 = vrot.slane %v5920, %v5935
        %v5938 = vunpack.c.l.s4 1966171168
        %v5939 = vunpack.c.0.s8 %v5938
        %v5940 = vlaneseq
        %v5941 = vshrl.u32 %v5940, 7
        %v5942 = vsub.s32 %v5939, %v5941
        %v5943 = vrot.slane %v5927, %v5942
        %v5945 = vunpack.c.l.s4 1966171168
        %v5946 = vunpack.c.0.s8 %v5945
        %v5947 = vlaneseq
        %v5948 = vshrl.u32 %v5947, 7
        %v5949 = vsub.s32 %v5946, %v5948
        %v5950 = vrot.slane %v5928, %v5949
        %v5952 = vunpack.c.l.s4 1966171168
        %v5953 = vunpack.c.0.s8 %v5952
        %v5954 = vlaneseq
        %v5955 = vshrl.u32 %v5954, 7
        %v5956 = vsub.s32 %v5953, %v5955
        %v5957 = vrot.slane %v5929, %v5956
        %v5958 = vcombine.high %v5936, %v5936
        %v5959 = vcombine.high %v5943, %v5943
        %v5960 = vcombine.high %v5950, %v5950
        %v5961 = vcombine.high %v5957, %v5957
        %v5962 = vlaneseq
        %v5963 = vshrl.u32 %v5962, 7
        %v5964 = vsub.s32 0, %v5963
        %v5965 = vrot.slane %v5936, %v5964
        %v5966 = vlaneseq
        %v5967 = vshrl.u32 %v5966, 7
        %v5968 = vsub.s32 0, %v5967
        %v5969 = vrot.slane %v5950, %v5968
        %v5970 = vlaneseq
        %v5971 = vshrl.u32 %v5970, 7
        %v5972 = vsub.s32 0, %v5971
        %v5973 = vrot.slane %v5958, %v5972
        %v5974 = vlaneseq
        %v5975 = vshrl.u32 %v5974, 7
        %v5976 = vsub.s32 0, %v5975
        %v5977 = vrot.slane %v5960, %v5976
        %v5978 = vlaneseq
        %v5979 = vshrl.u32 %v5978, 7
        %v5980 = vsub.s32 0, %v5979
        %v5981 = vrot.slane %v5943, %v5980
        %v5982 = vlaneseq
        %v5983 = vshrl.u32 %v5982, 7
        %v5984 = vsub.s32 0, %v5983
        %v5985 = vrot.slane %v5957, %v5984
        %v5986 = vlaneseq
        %v5987 = vshrl.u32 %v5986, 7
        %v5988 = vsub.s32 0, %v5987
        %v5989 = vrot.slane %v5959, %v5988
        %v5990 = vlaneseq
        %v5991 = vshrl.u32 %v5990, 7
        %v5992 = vsub.s32 0, %v5991
        %v5993 = vrot.slane %v5961, %v5992
        %5994 = vrot.lane.b32.xlu0 %v5965, 58
        %v5995 = vpop.permute.xlu0 %5994
        %5996 = vrot.lane.b32.xlu0 %v5969, 58
        %v5997 = vpop.permute.xlu0 %5996
        %5998 = vrot.lane.b32.xlu0 %v5973, 58
        %v5999 = vpop.permute.xlu0 %5998
        %6000 = vrot.lane.b32.xlu0 %v5977, 58
        %v6001 = vpop.permute.xlu0 %6000
        %6002 = vrot.lane.b32.xlu0 %v5981, 58
        %v6003 = vpop.permute.xlu0 %6002
        %6004 = vrot.lane.b32.xlu0 %v5985, 58
        %v6005 = vpop.permute.xlu0 %6004
        %6006 = vrot.lane.b32.xlu0 %v5989, 58
        %v6007 = vpop.permute.xlu0 %6006
        %6008 = vrot.lane.b32.xlu0 %v5993, 58
        %v6009 = vpop.permute.xlu0 %6008
        %6018 = vst.msk [vmem:[%s163 + $0x9] sm:$0x1] %vm4982, %v5995
        %6019 = vst.msk [vmem:[%s163 + $0x19] sm:$0x1] %vm4982, %v5997
        %6020 = vst.msk [vmem:[%s163 + $0x29] sm:$0x1] %vm4982, %v5999
        %6021 = vst.msk [vmem:[%s163 + $0x39] sm:$0x1] %vm4982, %v6001
        %6022 = vst.msk [vmem:[%s163 + $0x49] sm:$0x1] %vm4982, %v6003
        %6023 = vst.msk [vmem:[%s163 + $0x59] sm:$0x1] %vm4982, %v6005
        %6024 = vst.msk [vmem:[%s163 + $0x69] sm:$0x1] %vm4982, %v6007
        %6025 = vst.msk [vmem:[%s163 + $0x79] sm:$0x1] %vm4982, %v6009
        %v6026 = vld [vmem:[#allocation2 + $0x8] sm:$0xff]
        %v6028 = vcombine.high %v6026, %v6026
        %v6030 = vunpack.c.l.s4 1966171168
        %v6031 = vunpack.c.0.s8 %v6030
        %v6032 = vlaneseq
        %v6033 = vshrl.u32 %v6032, 7
        %v6034 = vsub.s32 %v6031, %v6033
        %v6035 = vrot.slane %v6026, %v6034
        %v6037 = vunpack.c.l.s4 1966171168
        %v6038 = vunpack.c.0.s8 %v6037
        %v6039 = vlaneseq
        %v6040 = vshrl.u32 %v6039, 7
        %v6041 = vsub.s32 %v6038, %v6040
        %v6042 = vrot.slane %v6028, %v6041
        %v6043 = vcombine.high %v6035, %v6035
        %v6044 = vcombine.high %v6042, %v6042
        %v6046 = vunpack.c.l.s4 1966171168
        %v6047 = vunpack.c.0.s8 %v6046
        %v6048 = vlaneseq
        %v6049 = vshrl.u32 %v6048, 7
        %v6050 = vsub.s32 %v6047, %v6049
        %v6051 = vrot.slane %v6035, %v6050
        %v6053 = vunpack.c.l.s4 1966171168
        %v6054 = vunpack.c.0.s8 %v6053
        %v6055 = vlaneseq
        %v6056 = vshrl.u32 %v6055, 7
        %v6057 = vsub.s32 %v6054, %v6056
        %v6058 = vrot.slane %v6042, %v6057
        %v6060 = vunpack.c.l.s4 1966171168
        %v6061 = vunpack.c.0.s8 %v6060
        %v6062 = vlaneseq
        %v6063 = vshrl.u32 %v6062, 7
        %v6064 = vsub.s32 %v6061, %v6063
        %v6065 = vrot.slane %v6043, %v6064
        %v6067 = vunpack.c.l.s4 1966171168
        %v6068 = vunpack.c.0.s8 %v6067
        %v6069 = vlaneseq
        %v6070 = vshrl.u32 %v6069, 7
        %v6071 = vsub.s32 %v6068, %v6070
        %v6072 = vrot.slane %v6044, %v6071
        %v6073 = vcombine.high %v6051, %v6051
        %v6074 = vcombine.high %v6058, %v6058
        %v6075 = vcombine.high %v6065, %v6065
        %v6076 = vcombine.high %v6072, %v6072
        %v6077 = vlaneseq
        %v6078 = vshrl.u32 %v6077, 7
        %v6079 = vsub.s32 0, %v6078
        %v6080 = vrot.slane %v6051, %v6079
        %v6081 = vlaneseq
        %v6082 = vshrl.u32 %v6081, 7
        %v6083 = vsub.s32 0, %v6082
        %v6084 = vrot.slane %v6065, %v6083
        %v6085 = vlaneseq
        %v6086 = vshrl.u32 %v6085, 7
        %v6087 = vsub.s32 0, %v6086
        %v6088 = vrot.slane %v6073, %v6087
        %v6089 = vlaneseq
        %v6090 = vshrl.u32 %v6089, 7
        %v6091 = vsub.s32 0, %v6090
        %v6092 = vrot.slane %v6075, %v6091
        %v6093 = vlaneseq
        %v6094 = vshrl.u32 %v6093, 7
        %v6095 = vsub.s32 0, %v6094
        %v6096 = vrot.slane %v6058, %v6095
        %v6097 = vlaneseq
        %v6098 = vshrl.u32 %v6097, 7
        %v6099 = vsub.s32 0, %v6098
        %v6100 = vrot.slane %v6072, %v6099
        %v6101 = vlaneseq
        %v6102 = vshrl.u32 %v6101, 7
        %v6103 = vsub.s32 0, %v6102
        %v6104 = vrot.slane %v6074, %v6103
        %v6105 = vlaneseq
        %v6106 = vshrl.u32 %v6105, 7
        %v6107 = vsub.s32 0, %v6106
        %v6108 = vrot.slane %v6076, %v6107
        %6109 = vrot.lane.b32.xlu0 %v6080, 36
        %v6110 = vpop.permute.xlu0 %6109
        %6111 = vrot.lane.b32.xlu0 %v6084, 36
        %v6112 = vpop.permute.xlu0 %6111
        %6113 = vrot.lane.b32.xlu0 %v6088, 36
        %v6114 = vpop.permute.xlu0 %6113
        %6115 = vrot.lane.b32.xlu0 %v6092, 36
        %v6116 = vpop.permute.xlu0 %6115
        %6117 = vrot.lane.b32.xlu0 %v6096, 36
        %v6118 = vpop.permute.xlu0 %6117
        %6119 = vrot.lane.b32.xlu0 %v6100, 36
        %v6120 = vpop.permute.xlu0 %6119
        %6121 = vrot.lane.b32.xlu0 %v6104, 36
        %v6122 = vpop.permute.xlu0 %6121
        %6123 = vrot.lane.b32.xlu0 %v6108, 36
        %v6124 = vpop.permute.xlu0 %6123
        %6133 = vst.msk [vmem:[%s163 + $0xa] sm:$0x1] %vm4982, %v6110
        %6134 = vst.msk [vmem:[%s163 + $0x1a] sm:$0x1] %vm4982, %v6112
        %6135 = vst.msk [vmem:[%s163 + $0x2a] sm:$0x1] %vm4982, %v6114
        %6136 = vst.msk [vmem:[%s163 + $0x3a] sm:$0x1] %vm4982, %v6116
        %6137 = vst.msk [vmem:[%s163 + $0x4a] sm:$0x1] %vm4982, %v6118
        %6138 = vst.msk [vmem:[%s163 + $0x5a] sm:$0x1] %vm4982, %v6120
        %6139 = vst.msk [vmem:[%s163 + $0x6a] sm:$0x1] %vm4982, %v6122
        %6140 = vst.msk [vmem:[%s163 + $0x7a] sm:$0x1] %vm4982, %v6124
        %v6141 = vld [vmem:[#allocation2 + $0x8] sm:$0xff]
        %v6142 = vld [vmem:[#allocation2 + $0x10] sm:$0xff]
        %v6145 = vcombine.low %v6141, %v6142
        %v6146 = vcombine.high %v6141, %v6142
        %v6148 = vunpack.c.l.s4 1966171168
        %v6149 = vunpack.c.0.s8 %v6148
        %v6150 = vlaneseq
        %v6151 = vshrl.u32 %v6150, 7
        %v6152 = vsub.s32 %v6149, %v6151
        %v6153 = vrot.slane %v6145, %v6152
        %v6155 = vunpack.c.l.s4 1966171168
        %v6156 = vunpack.c.0.s8 %v6155
        %v6157 = vlaneseq
        %v6158 = vshrl.u32 %v6157, 7
        %v6159 = vsub.s32 %v6156, %v6158
        %v6160 = vrot.slane %v6146, %v6159
        %v6161 = vcombine.high %v6153, %v6153
        %v6162 = vcombine.high %v6160, %v6160
        %v6164 = vunpack.c.l.s4 1966171168
        %v6165 = vunpack.c.0.s8 %v6164
        %v6166 = vlaneseq
        %v6167 = vshrl.u32 %v6166, 7
        %v6168 = vsub.s32 %v6165, %v6167
        %v6169 = vrot.slane %v6153, %v6168
        %v6171 = vunpack.c.l.s4 1966171168
        %v6172 = vunpack.c.0.s8 %v6171
        %v6173 = vlaneseq
        %v6174 = vshrl.u32 %v6173, 7
        %v6175 = vsub.s32 %v6172, %v6174
        %v6176 = vrot.slane %v6160, %v6175
        %v6178 = vunpack.c.l.s4 1966171168
        %v6179 = vunpack.c.0.s8 %v6178
        %v6180 = vlaneseq
        %v6181 = vshrl.u32 %v6180, 7
        %v6182 = vsub.s32 %v6179, %v6181
        %v6183 = vrot.slane %v6161, %v6182
        %v6185 = vunpack.c.l.s4 1966171168
        %v6186 = vunpack.c.0.s8 %v6185
        %v6187 = vlaneseq
        %v6188 = vshrl.u32 %v6187, 7
        %v6189 = vsub.s32 %v6186, %v6188
        %v6190 = vrot.slane %v6162, %v6189
        %v6191 = vcombine.high %v6169, %v6169
        %v6192 = vcombine.high %v6176, %v6176
        %v6193 = vcombine.high %v6183, %v6183
        %v6194 = vcombine.high %v6190, %v6190
        %v6195 = vlaneseq
        %v6196 = vshrl.u32 %v6195, 7
        %v6197 = vsub.s32 0, %v6196
        %v6198 = vrot.slane %v6169, %v6197
        %v6199 = vlaneseq
        %v6200 = vshrl.u32 %v6199, 7
        %v6201 = vsub.s32 1, %v6200
        %v6202 = vrot.slane %v6169, %v6201
        %v6203 = vlaneseq
        %v6204 = vshrl.u32 %v6203, 7
        %v6205 = vsub.s32 0, %v6204
        %v6206 = vrot.slane %v6183, %v6205
        %v6207 = vlaneseq
        %v6208 = vshrl.u32 %v6207, 7
        %v6209 = vsub.s32 1, %v6208
        %v6210 = vrot.slane %v6183, %v6209
        %v6211 = vlaneseq
        %v6212 = vshrl.u32 %v6211, 7
        %v6213 = vsub.s32 0, %v6212
        %v6214 = vrot.slane %v6191, %v6213
        %v6215 = vlaneseq
        %v6216 = vshrl.u32 %v6215, 7
        %v6217 = vsub.s32 1, %v6216
        %v6218 = vrot.slane %v6191, %v6217
        %v6219 = vlaneseq
        %v6220 = vshrl.u32 %v6219, 7
        %v6221 = vsub.s32 0, %v6220
        %v6222 = vrot.slane %v6193, %v6221
        %v6223 = vlaneseq
        %v6224 = vshrl.u32 %v6223, 7
        %v6225 = vsub.s32 1, %v6224
        %v6226 = vrot.slane %v6193, %v6225
        %v6227 = vlaneseq
        %v6228 = vshrl.u32 %v6227, 7
        %v6229 = vsub.s32 0, %v6228
        %v6230 = vrot.slane %v6176, %v6229
        %v6231 = vlaneseq
        %v6232 = vshrl.u32 %v6231, 7
        %v6233 = vsub.s32 1, %v6232
        %v6234 = vrot.slane %v6176, %v6233
        %v6235 = vlaneseq
        %v6236 = vshrl.u32 %v6235, 7
        %v6237 = vsub.s32 0, %v6236
        %v6238 = vrot.slane %v6190, %v6237
        %v6239 = vlaneseq
        %v6240 = vshrl.u32 %v6239, 7
        %v6241 = vsub.s32 1, %v6240
        %v6242 = vrot.slane %v6190, %v6241
        %v6243 = vlaneseq
        %v6244 = vshrl.u32 %v6243, 7
        %v6245 = vsub.s32 0, %v6244
        %v6246 = vrot.slane %v6192, %v6245
        %v6247 = vlaneseq
        %v6248 = vshrl.u32 %v6247, 7
        %v6249 = vsub.s32 1, %v6248
        %v6250 = vrot.slane %v6192, %v6249
        %v6251 = vlaneseq
        %v6252 = vshrl.u32 %v6251, 7
        %v6253 = vsub.s32 0, %v6252
        %v6254 = vrot.slane %v6194, %v6253
        %v6255 = vlaneseq
        %v6256 = vshrl.u32 %v6255, 7
        %v6257 = vsub.s32 1, %v6256
        %v6258 = vrot.slane %v6194, %v6257
        %6259 = vrot.lane.b32.xlu0 %v6198, 14
        %v6260 = vpop.permute.xlu0 %6259
        %6261 = vrot.lane.b32.xlu0 %v6202, 14
        %v6262 = vpop.permute.xlu0 %6261
        %6263 = vrot.lane.b32.xlu0 %v6206, 14
        %v6264 = vpop.permute.xlu0 %6263
        %6265 = vrot.lane.b32.xlu0 %v6210, 14
        %v6266 = vpop.permute.xlu0 %6265
        %6267 = vrot.lane.b32.xlu0 %v6214, 14
        %v6268 = vpop.permute.xlu0 %6267
        %6269 = vrot.lane.b32.xlu0 %v6218, 14
        %v6270 = vpop.permute.xlu0 %6269
        %6271 = vrot.lane.b32.xlu0 %v6222, 14
        %v6272 = vpop.permute.xlu0 %6271
        %6273 = vrot.lane.b32.xlu0 %v6226, 14
        %v6274 = vpop.permute.xlu0 %6273
        %6275 = vrot.lane.b32.xlu0 %v6230, 14
        %v6276 = vpop.permute.xlu0 %6275
        %6277 = vrot.lane.b32.xlu0 %v6234, 14
        %v6278 = vpop.permute.xlu0 %6277
        %6279 = vrot.lane.b32.xlu0 %v6238, 14
        %v6280 = vpop.permute.xlu0 %6279
        %6281 = vrot.lane.b32.xlu0 %v6242, 14
        %v6282 = vpop.permute.xlu0 %6281
        %6283 = vrot.lane.b32.xlu0 %v6246, 14
        %v6284 = vpop.permute.xlu0 %6283
        %6285 = vrot.lane.b32.xlu0 %v6250, 14
        %v6286 = vpop.permute.xlu0 %6285
        %6287 = vrot.lane.b32.xlu0 %v6254, 14
        %v6288 = vpop.permute.xlu0 %6287
        %6289 = vrot.lane.b32.xlu0 %v6258, 14
        %v6290 = vpop.permute.xlu0 %6289
        %vm6291 = vcmask 113664
        %v6292 = vsel %vm6291, %v6260, %v6262
        %v6293 = vsel %vm6291, %v6264, %v6266
        %v6294 = vsel %vm6291, %v6268, %v6270
        %v6295 = vsel %vm6291, %v6272, %v6274
        %v6296 = vsel %vm6291, %v6276, %v6278
        %v6297 = vsel %vm6291, %v6280, %v6282
        %v6298 = vsel %vm6291, %v6284, %v6286
        %v6299 = vsel %vm6291, %v6288, %v6290
        %6308 = vst.msk [vmem:[%s163 + $0xb] sm:$0x1] %vm4982, %v6292
        %6309 = vst.msk [vmem:[%s163 + $0x1b] sm:$0x1] %vm4982, %v6293
        %6310 = vst.msk [vmem:[%s163 + $0x2b] sm:$0x1] %vm4982, %v6294
        %6311 = vst.msk [vmem:[%s163 + $0x3b] sm:$0x1] %vm4982, %v6295
        %6312 = vst.msk [vmem:[%s163 + $0x4b] sm:$0x1] %vm4982, %v6296
        %6313 = vst.msk [vmem:[%s163 + $0x5b] sm:$0x1] %vm4982, %v6297
        %6314 = vst.msk [vmem:[%s163 + $0x6b] sm:$0x1] %vm4982, %v6298
        %6315 = vst.msk [vmem:[%s163 + $0x7b] sm:$0x1] %vm4982, %v6299
        %v6316 = vld [vmem:[#allocation2 + $0x10] sm:$0xff]
        %v6318 = vcombine.high %v6316, %v6316
        %v6320 = vunpack.c.l.s4 1966171168
        %v6321 = vunpack.c.0.s8 %v6320
        %v6322 = vlaneseq
        %v6323 = vshrl.u32 %v6322, 7
        %v6324 = vsub.s32 %v6321, %v6323
        %v6325 = vrot.slane %v6316, %v6324
        %v6327 = vunpack.c.l.s4 1966171168
        %v6328 = vunpack.c.0.s8 %v6327
        %v6329 = vlaneseq
        %v6330 = vshrl.u32 %v6329, 7
        %v6331 = vsub.s32 %v6328, %v6330
        %v6332 = vrot.slane %v6318, %v6331
        %v6333 = vcombine.high %v6325, %v6325
        %v6334 = vcombine.high %v6332, %v6332
        %v6336 = vunpack.c.l.s4 1966171168
        %v6337 = vunpack.c.0.s8 %v6336
        %v6338 = vlaneseq
        %v6339 = vshrl.u32 %v6338, 7
        %v6340 = vsub.s32 %v6337, %v6339
        %v6341 = vrot.slane %v6325, %v6340
        %v6343 = vunpack.c.l.s4 1966171168
        %v6344 = vunpack.c.0.s8 %v6343
        %v6345 = vlaneseq
        %v6346 = vshrl.u32 %v6345, 7
        %v6347 = vsub.s32 %v6344, %v6346
        %v6348 = vrot.slane %v6332, %v6347
        %v6350 = vunpack.c.l.s4 1966171168
        %v6351 = vunpack.c.0.s8 %v6350
        %v6352 = vlaneseq
        %v6353 = vshrl.u32 %v6352, 7
        %v6354 = vsub.s32 %v6351, %v6353
        %v6355 = vrot.slane %v6333, %v6354
        %v6357 = vunpack.c.l.s4 1966171168
        %v6358 = vunpack.c.0.s8 %v6357
        %v6359 = vlaneseq
        %v6360 = vshrl.u32 %v6359, 7
        %v6361 = vsub.s32 %v6358, %v6360
        %v6362 = vrot.slane %v6334, %v6361
        %v6363 = vcombine.high %v6341, %v6341
        %v6364 = vcombine.high %v6348, %v6348
        %v6365 = vcombine.high %v6355, %v6355
        %v6366 = vcombine.high %v6362, %v6362
        %v6367 = vlaneseq
        %v6368 = vshrl.u32 %v6367, 7
        %v6369 = vsub.s32 0, %v6368
        %v6370 = vrot.slane %v6341, %v6369
        %v6371 = vlaneseq
        %v6372 = vshrl.u32 %v6371, 7
        %v6373 = vsub.s32 0, %v6372
        %v6374 = vrot.slane %v6355, %v6373
        %v6375 = vlaneseq
        %v6376 = vshrl.u32 %v6375, 7
        %v6377 = vsub.s32 0, %v6376
        %v6378 = vrot.slane %v6363, %v6377
        %v6379 = vlaneseq
        %v6380 = vshrl.u32 %v6379, 7
        %v6381 = vsub.s32 0, %v6380
        %v6382 = vrot.slane %v6365, %v6381
        %v6383 = vlaneseq
        %v6384 = vshrl.u32 %v6383, 7
        %v6385 = vsub.s32 0, %v6384
        %v6386 = vrot.slane %v6348, %v6385
        %v6387 = vlaneseq
        %v6388 = vshrl.u32 %v6387, 7
        %v6389 = vsub.s32 0, %v6388
        %v6390 = vrot.slane %v6362, %v6389
        %v6391 = vlaneseq
        %v6392 = vshrl.u32 %v6391, 7
        %v6393 = vsub.s32 0, %v6392
        %v6394 = vrot.slane %v6364, %v6393
        %v6395 = vlaneseq
        %v6396 = vshrl.u32 %v6395, 7
        %v6397 = vsub.s32 0, %v6396
        %v6398 = vrot.slane %v6366, %v6397
        %6399 = vrot.lane.b32.xlu0 %v6370, 120
        %v6400 = vpop.permute.xlu0 %6399
        %6401 = vrot.lane.b32.xlu0 %v6374, 120
        %v6402 = vpop.permute.xlu0 %6401
        %6403 = vrot.lane.b32.xlu0 %v6378, 120
        %v6404 = vpop.permute.xlu0 %6403
        %6405 = vrot.lane.b32.xlu0 %v6382, 120
        %v6406 = vpop.permute.xlu0 %6405
        %6407 = vrot.lane.b32.xlu0 %v6386, 120
        %v6408 = vpop.permute.xlu0 %6407
        %6409 = vrot.lane.b32.xlu0 %v6390, 120
        %v6410 = vpop.permute.xlu0 %6409
        %6411 = vrot.lane.b32.xlu0 %v6394, 120
        %v6412 = vpop.permute.xlu0 %6411
        %6413 = vrot.lane.b32.xlu0 %v6398, 120
        %v6414 = vpop.permute.xlu0 %6413
        %6423 = vst.msk [vmem:[%s163 + $0xc] sm:$0x1] %vm4982, %v6400
        %6424 = vst.msk [vmem:[%s163 + $0x1c] sm:$0x1] %vm4982, %v6402
        %6425 = vst.msk [vmem:[%s163 + $0x2c] sm:$0x1] %vm4982, %v6404
        %6426 = vst.msk [vmem:[%s163 + $0x3c] sm:$0x1] %vm4982, %v6406
        %6427 = vst.msk [vmem:[%s163 + $0x4c] sm:$0x1] %vm4982, %v6408
        %6428 = vst.msk [vmem:[%s163 + $0x5c] sm:$0x1] %vm4982, %v6410
        %6429 = vst.msk [vmem:[%s163 + $0x6c] sm:$0x1] %vm4982, %v6412
        %6430 = vst.msk [vmem:[%s163 + $0x7c] sm:$0x1] %vm4982, %v6414
        %v6431 = vld [vmem:[#allocation2 + $0x10] sm:$0xff]
        %v6433 = vcombine.high %v6431, %v6431
        %v6435 = vunpack.c.l.s4 1966171168
        %v6436 = vunpack.c.0.s8 %v6435
        %v6437 = vlaneseq
        %v6438 = vshrl.u32 %v6437, 7
        %v6439 = vsub.s32 %v6436, %v6438
        %v6440 = vrot.slane %v6431, %v6439
        %v6442 = vunpack.c.l.s4 1966171168
        %v6443 = vunpack.c.0.s8 %v6442
        %v6444 = vlaneseq
        %v6445 = vshrl.u32 %v6444, 7
        %v6446 = vsub.s32 %v6443, %v6445
        %v6447 = vrot.slane %v6433, %v6446
        %v6448 = vcombine.high %v6440, %v6440
        %v6449 = vcombine.high %v6447, %v6447
        %v6451 = vunpack.c.l.s4 1966171168
        %v6452 = vunpack.c.0.s8 %v6451
        %v6453 = vlaneseq
        %v6454 = vshrl.u32 %v6453, 7
        %v6455 = vsub.s32 %v6452, %v6454
        %v6456 = vrot.slane %v6440, %v6455
        %v6458 = vunpack.c.l.s4 1966171168
        %v6459 = vunpack.c.0.s8 %v6458
        %v6460 = vlaneseq
        %v6461 = vshrl.u32 %v6460, 7
        %v6462 = vsub.s32 %v6459, %v6461
        %v6463 = vrot.slane %v6447, %v6462
        %v6465 = vunpack.c.l.s4 1966171168
        %v6466 = vunpack.c.0.s8 %v6465
        %v6467 = vlaneseq
        %v6468 = vshrl.u32 %v6467, 7
        %v6469 = vsub.s32 %v6466, %v6468
        %v6470 = vrot.slane %v6448, %v6469
        %v6472 = vunpack.c.l.s4 1966171168
        %v6473 = vunpack.c.0.s8 %v6472
        %v6474 = vlaneseq
        %v6475 = vshrl.u32 %v6474, 7
        %v6476 = vsub.s32 %v6473, %v6475
        %v6477 = vrot.slane %v6449, %v6476
        %v6478 = vcombine.high %v6456, %v6456
        %v6479 = vcombine.high %v6463, %v6463
        %v6480 = vcombine.high %v6470, %v6470
        %v6481 = vcombine.high %v6477, %v6477
        %v6482 = vlaneseq
        %v6483 = vshrl.u32 %v6482, 7
        %v6484 = vsub.s32 0, %v6483
        %v6485 = vrot.slane %v6456, %v6484
        %v6486 = vlaneseq
        %v6487 = vshrl.u32 %v6486, 7
        %v6488 = vsub.s32 0, %v6487
        %v6489 = vrot.slane %v6470, %v6488
        %v6490 = vlaneseq
        %v6491 = vshrl.u32 %v6490, 7
        %v6492 = vsub.s32 0, %v6491
        %v6493 = vrot.slane %v6478, %v6492
        %v6494 = vlaneseq
        %v6495 = vshrl.u32 %v6494, 7
        %v6496 = vsub.s32 0, %v6495
        %v6497 = vrot.slane %v6480, %v6496
        %v6498 = vlaneseq
        %v6499 = vshrl.u32 %v6498, 7
        %v6500 = vsub.s32 0, %v6499
        %v6501 = vrot.slane %v6463, %v6500
        %v6502 = vlaneseq
        %v6503 = vshrl.u32 %v6502, 7
        %v6504 = vsub.s32 0, %v6503
        %v6505 = vrot.slane %v6477, %v6504
        %v6506 = vlaneseq
        %v6507 = vshrl.u32 %v6506, 7
        %v6508 = vsub.s32 0, %v6507
        %v6509 = vrot.slane %v6479, %v6508
        %v6510 = vlaneseq
        %v6511 = vshrl.u32 %v6510, 7
        %v6512 = vsub.s32 0, %v6511
        %v6513 = vrot.slane %v6481, %v6512
        %6514 = vrot.lane.b32.xlu0 %v6485, 98
        %v6515 = vpop.permute.xlu0 %6514
        %6516 = vrot.lane.b32.xlu0 %v6489, 98
        %v6517 = vpop.permute.xlu0 %6516
        %6518 = vrot.lane.b32.xlu0 %v6493, 98
        %v6519 = vpop.permute.xlu0 %6518
        %6520 = vrot.lane.b32.xlu0 %v6497, 98
        %v6521 = vpop.permute.xlu0 %6520
        %6522 = vrot.lane.b32.xlu0 %v6501, 98
        %v6523 = vpop.permute.xlu0 %6522
        %6524 = vrot.lane.b32.xlu0 %v6505, 98
        %v6525 = vpop.permute.xlu0 %6524
        %6526 = vrot.lane.b32.xlu0 %v6509, 98
        %v6527 = vpop.permute.xlu0 %6526
        %6528 = vrot.lane.b32.xlu0 %v6513, 98
        %v6529 = vpop.permute.xlu0 %6528
        %6538 = vst.msk [vmem:[%s163 + $0xd] sm:$0x1] %vm4982, %v6515
        %6539 = vst.msk [vmem:[%s163 + $0x1d] sm:$0x1] %vm4982, %v6517
        %6540 = vst.msk [vmem:[%s163 + $0x2d] sm:$0x1] %vm4982, %v6519
        %6541 = vst.msk [vmem:[%s163 + $0x3d] sm:$0x1] %vm4982, %v6521
        %6542 = vst.msk [vmem:[%s163 + $0x4d] sm:$0x1] %vm4982, %v6523
        %6543 = vst.msk [vmem:[%s163 + $0x5d] sm:$0x1] %vm4982, %v6525
        %6544 = vst.msk [vmem:[%s163 + $0x6d] sm:$0x1] %vm4982, %v6527
        %6545 = vst.msk [vmem:[%s163 + $0x7d] sm:$0x1] %vm4982, %v6529
        %v6546 = vld [vmem:[#allocation2 + $0x10] sm:$0xff]
        %v6548 = vcombine.high %v6546, %v6546
        %v6550 = vunpack.c.l.s4 1966171168
        %v6551 = vunpack.c.0.s8 %v6550
        %v6552 = vlaneseq
        %v6553 = vshrl.u32 %v6552, 7
        %v6554 = vsub.s32 %v6551, %v6553
        %v6555 = vrot.slane %v6546, %v6554
        %v6557 = vunpack.c.l.s4 1966171168
        %v6558 = vunpack.c.0.s8 %v6557
        %v6559 = vlaneseq
        %v6560 = vshrl.u32 %v6559, 7
        %v6561 = vsub.s32 %v6558, %v6560
        %v6562 = vrot.slane %v6548, %v6561
        %v6563 = vcombine.high %v6555, %v6555
        %v6564 = vcombine.high %v6562, %v6562
        %v6566 = vunpack.c.l.s4 1966171168
        %v6567 = vunpack.c.0.s8 %v6566
        %v6568 = vlaneseq
        %v6569 = vshrl.u32 %v6568, 7
        %v6570 = vsub.s32 %v6567, %v6569
        %v6571 = vrot.slane %v6555, %v6570
        %v6573 = vunpack.c.l.s4 1966171168
        %v6574 = vunpack.c.0.s8 %v6573
        %v6575 = vlaneseq
        %v6576 = vshrl.u32 %v6575, 7
        %v6577 = vsub.s32 %v6574, %v6576
        %v6578 = vrot.slane %v6562, %v6577
        %v6580 = vunpack.c.l.s4 1966171168
        %v6581 = vunpack.c.0.s8 %v6580
        %v6582 = vlaneseq
        %v6583 = vshrl.u32 %v6582, 7
        %v6584 = vsub.s32 %v6581, %v6583
        %v6585 = vrot.slane %v6563, %v6584
        %v6587 = vunpack.c.l.s4 1966171168
        %v6588 = vunpack.c.0.s8 %v6587
        %v6589 = vlaneseq
        %v6590 = vshrl.u32 %v6589, 7
        %v6591 = vsub.s32 %v6588, %v6590
        %v6592 = vrot.slane %v6564, %v6591
        %v6593 = vcombine.high %v6571, %v6571
        %v6594 = vcombine.high %v6578, %v6578
        %v6595 = vcombine.high %v6585, %v6585
        %v6596 = vcombine.high %v6592, %v6592
        %v6597 = vlaneseq
        %v6598 = vshrl.u32 %v6597, 7
        %v6599 = vsub.s32 0, %v6598
        %v6600 = vrot.slane %v6571, %v6599
        %v6601 = vlaneseq
        %v6602 = vshrl.u32 %v6601, 7
        %v6603 = vsub.s32 0, %v6602
        %v6604 = vrot.slane %v6585, %v6603
        %v6605 = vlaneseq
        %v6606 = vshrl.u32 %v6605, 7
        %v6607 = vsub.s32 0, %v6606
        %v6608 = vrot.slane %v6593, %v6607
        %v6609 = vlaneseq
        %v6610 = vshrl.u32 %v6609, 7
        %v6611 = vsub.s32 0, %v6610
        %v6612 = vrot.slane %v6595, %v6611
        %v6613 = vlaneseq
        %v6614 = vshrl.u32 %v6613, 7
        %v6615 = vsub.s32 0, %v6614
        %v6616 = vrot.slane %v6578, %v6615
        %v6617 = vlaneseq
        %v6618 = vshrl.u32 %v6617, 7
        %v6619 = vsub.s32 0, %v6618
        %v6620 = vrot.slane %v6592, %v6619
        %v6621 = vlaneseq
        %v6622 = vshrl.u32 %v6621, 7
        %v6623 = vsub.s32 0, %v6622
        %v6624 = vrot.slane %v6594, %v6623
        %v6625 = vlaneseq
        %v6626 = vshrl.u32 %v6625, 7
        %v6627 = vsub.s32 0, %v6626
        %v6628 = vrot.slane %v6596, %v6627
        %6629 = vrot.lane.b32.xlu0 %v6600, 76
        %v6630 = vpop.permute.xlu0 %6629
        %6631 = vrot.lane.b32.xlu0 %v6604, 76
        %v6632 = vpop.permute.xlu0 %6631
        %6633 = vrot.lane.b32.xlu0 %v6608, 76
        %v6634 = vpop.permute.xlu0 %6633
        %6635 = vrot.lane.b32.xlu0 %v6612, 76
        %v6636 = vpop.permute.xlu0 %6635
        %6637 = vrot.lane.b32.xlu0 %v6616, 76
        %v6638 = vpop.permute.xlu0 %6637
        %6639 = vrot.lane.b32.xlu0 %v6620, 76
        %v6640 = vpop.permute.xlu0 %6639
        %6641 = vrot.lane.b32.xlu0 %v6624, 76
        %v6642 = vpop.permute.xlu0 %6641
        %6643 = vrot.lane.b32.xlu0 %v6628, 76
        %v6644 = vpop.permute.xlu0 %6643
        %6653 = vst.msk [vmem:[%s163 + $0xe] sm:$0x1] %vm4982, %v6630
        %6654 = vst.msk [vmem:[%s163 + $0x1e] sm:$0x1] %vm4982, %v6632
        %6655 = vst.msk [vmem:[%s163 + $0x2e] sm:$0x1] %vm4982, %v6634
        %6656 = vst.msk [vmem:[%s163 + $0x3e] sm:$0x1] %vm4982, %v6636
        %6657 = vst.msk [vmem:[%s163 + $0x4e] sm:$0x1] %vm4982, %v6638
        %6658 = vst.msk [vmem:[%s163 + $0x5e] sm:$0x1] %vm4982, %v6640
        %6659 = vst.msk [vmem:[%s163 + $0x6e] sm:$0x1] %vm4982, %v6642
        %6660 = vst.msk [vmem:[%s163 + $0x7e] sm:$0x1] %vm4982, %v6644
        %v6661 = vld [vmem:[#allocation2 + $0x10] sm:$0xff]
        %v6663 = vcombine.high %v6661, %v6661
        %v6665 = vunpack.c.l.s4 1966171168
        %v6666 = vunpack.c.0.s8 %v6665
        %v6667 = vlaneseq
        %v6668 = vshrl.u32 %v6667, 7
        %v6669 = vsub.s32 %v6666, %v6668
        %v6670 = vrot.slane %v6661, %v6669
        %v6672 = vunpack.c.l.s4 1966171168
        %v6673 = vunpack.c.0.s8 %v6672
        %v6674 = vlaneseq
        %v6675 = vshrl.u32 %v6674, 7
        %v6676 = vsub.s32 %v6673, %v6675
        %v6677 = vrot.slane %v6663, %v6676
        %v6678 = vcombine.high %v6670, %v6670
        %v6679 = vcombine.high %v6677, %v6677
        %v6681 = vunpack.c.l.s4 1966171168
        %v6682 = vunpack.c.0.s8 %v6681
        %v6683 = vlaneseq
        %v6684 = vshrl.u32 %v6683, 7
        %v6685 = vsub.s32 %v6682, %v6684
        %v6686 = vrot.slane %v6670, %v6685
        %v6688 = vunpack.c.l.s4 1966171168
        %v6689 = vunpack.c.0.s8 %v6688
        %v6690 = vlaneseq
        %v6691 = vshrl.u32 %v6690, 7
        %v6692 = vsub.s32 %v6689, %v6691
        %v6693 = vrot.slane %v6677, %v6692
        %v6695 = vunpack.c.l.s4 1966171168
        %v6696 = vunpack.c.0.s8 %v6695
        %v6697 = vlaneseq
        %v6698 = vshrl.u32 %v6697, 7
        %v6699 = vsub.s32 %v6696, %v6698
        %v6700 = vrot.slane %v6678, %v6699
        %v6702 = vunpack.c.l.s4 1966171168
        %v6703 = vunpack.c.0.s8 %v6702
        %v6704 = vlaneseq
        %v6705 = vshrl.u32 %v6704, 7
        %v6706 = vsub.s32 %v6703, %v6705
        %v6707 = vrot.slane %v6679, %v6706
        %v6708 = vcombine.high %v6686, %v6686
        %v6709 = vcombine.high %v6693, %v6693
        %v6710 = vcombine.high %v6700, %v6700
        %v6711 = vcombine.high %v6707, %v6707
        %v6712 = vlaneseq
        %v6713 = vshrl.u32 %v6712, 7
        %v6714 = vsub.s32 0, %v6713
        %v6715 = vrot.slane %v6686, %v6714
        %v6716 = vlaneseq
        %v6717 = vshrl.u32 %v6716, 7
        %v6718 = vsub.s32 0, %v6717
        %v6719 = vrot.slane %v6700, %v6718
        %v6720 = vlaneseq
        %v6721 = vshrl.u32 %v6720, 7
        %v6722 = vsub.s32 0, %v6721
        %v6723 = vrot.slane %v6708, %v6722
        %v6724 = vlaneseq
        %v6725 = vshrl.u32 %v6724, 7
        %v6726 = vsub.s32 0, %v6725
        %v6727 = vrot.slane %v6710, %v6726
        %v6728 = vlaneseq
        %v6729 = vshrl.u32 %v6728, 7
        %v6730 = vsub.s32 0, %v6729
        %v6731 = vrot.slane %v6693, %v6730
        %v6732 = vlaneseq
        %v6733 = vshrl.u32 %v6732, 7
        %v6734 = vsub.s32 0, %v6733
        %v6735 = vrot.slane %v6707, %v6734
        %v6736 = vlaneseq
        %v6737 = vshrl.u32 %v6736, 7
        %v6738 = vsub.s32 0, %v6737
        %v6739 = vrot.slane %v6709, %v6738
        %v6740 = vlaneseq
        %v6741 = vshrl.u32 %v6740, 7
        %v6742 = vsub.s32 0, %v6741
        %v6743 = vrot.slane %v6711, %v6742
        %6744 = vrot.lane.b32.xlu0 %v6715, 54
        %v6745 = vpop.permute.xlu0 %6744
        %6746 = vrot.lane.b32.xlu0 %v6719, 54
        %v6747 = vpop.permute.xlu0 %6746
        %6748 = vrot.lane.b32.xlu0 %v6723, 54
        %v6749 = vpop.permute.xlu0 %6748
        %6750 = vrot.lane.b32.xlu0 %v6727, 54
        %v6751 = vpop.permute.xlu0 %6750
        %6752 = vrot.lane.b32.xlu0 %v6731, 54
        %v6753 = vpop.permute.xlu0 %6752
        %6754 = vrot.lane.b32.xlu0 %v6735, 54
        %v6755 = vpop.permute.xlu0 %6754
        %6756 = vrot.lane.b32.xlu0 %v6739, 54
        %v6757 = vpop.permute.xlu0 %6756
        %6758 = vrot.lane.b32.xlu0 %v6743, 54
        %v6759 = vpop.permute.xlu0 %6758
        %6768 = vst.msk [vmem:[%s163 + $0xf] sm:$0x1] %vm4982, %v6745
        %6769 = vst.msk [vmem:[%s163 + $0x1f] sm:$0x1] %vm4982, %v6747
        %6770 = vst.msk [vmem:[%s163 + $0x2f] sm:$0x1] %vm4982, %v6749
        %6771 = vst.msk [vmem:[%s163 + $0x3f] sm:$0x1] %vm4982, %v6751
        %6772 = vst.msk [vmem:[%s163 + $0x4f] sm:$0x1] %vm4982, %v6753
        %6773 = vst.msk [vmem:[%s163 + $0x5f] sm:$0x1] %vm4982, %v6755
        %6774 = vst.msk [vmem:[%s163 + $0x6f] sm:$0x1] %vm4982, %v6757
        %6775 = vst.msk [vmem:[%s163 + $0x7f] sm:$0x1] %vm4982, %v6759
        %s6776 = sand.u32 %s93, 1
        %s6777 = scalar_lea.sflag [#allocation4], %s6776
        %s6778 = sand.u32 %s93, 1
        %s6779 = smul.addr %s6778, 128
        %s6780 = scalar_lea.vmem [#allocation3], %s6779
        // Predicated region
        $region33: #{tpu_custom_call.1} parent=31 // pred_check
          %p6781 = pneg %p103
        $region34: #{tpu_custom_call.1} parent=31 // pred_check_branch
          %6783 = sbr.rel (%p6781) target = $region36
        $region35: #{tpu_custom_call.1} parent=31 // pred_region
          %s6785 = ssub.s32 2048, 2048
          %6786 = vsyncadd %s6777, %s6785
          %s6787 = smul.addr %s17, 16
          %s6788 = smul.addr %s6787, 128
          %s6789 = scalar_lea.hbm %s3, %s6788
          %s6790 = sshll.u32 %s6780, 4
          %s6791 = int_to_ptr.vmem [resolvable:$true] %s6790
          %6796 = dma.vmem_to_hbm [thread:$0]  %s6791, 2048, %s6789, %s6777, 128, 128, 8
        $region36: #{tpu_custom_call.1} parent=31 // pred_fallthru
          _
      $region32: #{tpu_custom_call.1} parent=5 // pred_fallthru
        _
      %p6797 = scmp.le.s32.totalorder 2, %s12
      // Predicated region
      $region37: #{tpu_custom_call.1} parent=5 // pred_check
        %p6798 = pneg %p6797
      $region38: #{tpu_custom_call.1} parent=5 // pred_check_branch
        %6800 = sbr.rel (%p6798) target = $region40
      $region39: #{tpu_custom_call.1} parent=5 // pred_region
        %s6801 = ssub.s32 %s12, 2
        // Predicated region
        $region41: #{tpu_custom_call.1} parent=39 // pred_check
          %p6802 = pneg %p109
        $region42: #{tpu_custom_call.1} parent=39 // pred_check_branch
          %6804 = sbr.rel (%p6802) target = $region44
        $region43: #{tpu_custom_call.1} parent=39 // pred_region
          %s6805 = sand.u32 %s94, 1
          %s6806 = scalar_lea.sflag [#allocation4], %s6805
          %s6807 = sand.u32 %s94, 1
          %s6808 = smul.addr %s6807, 128
          %s6809 = scalar_lea.vmem [#allocation3], %s6808
          %6810 = dma.done %s6806, 2048
        $region44: #{tpu_custom_call.1} parent=39 // pred_fallthru
          _
      $region40: #{tpu_custom_call.1} parent=5 // pred_fallthru
        _
    $region6: #{tpu_custom_call.1} parent=1 // loop_footer
      %s16 = sadd.s32 1, %s12
    $region7: #{tpu_custom_call.1} parent=1 // loop_footer_branch
      %11 = sbr.rel target = $region3
    $region8: #{tpu_custom_call.1} parent=1 // loop_exit
      _
    %6811 = vsyncpa [#allocation4], 1
    %s6812 = scalar_lea.sflag [#allocation4], 1
    %6813 = vsyncpa %s6812, 1

</llo_original>
